<compile_context>
chip_gen: v7x
topology: tpu7x:2x2x1
jax: 0.10.0
libtpu: 0.0.40
codegen_flags: <defaults>
</compile_context>

<pallas_src>
import functools

import jax
import jax.numpy as jnp
from jax import lax
from jax.experimental import pallas as pl
from jax.experimental.pallas import tpu as pltpu


# ----------------------------------------------------------------------------
# Fused Conv3d(k=3, s=2, p=1) + BatchNorm(eval) + ReLU kernel.
#
# Input layout (built by prep_conv_input): pad by 1, split every spatial axis
# by parity (space-to-depth by 2), channel-major, and flatten each parity
# sub-volume so the lane axis is spatial:
#     x[b, dt, c, p, qd*HW + qh*wsub + qw],   HW = hsub*wsub
# For stride 2 / pad 1, output (od,oh,ow) + tap (kd,kh,kw) reads padded index
# (2od+kd, 2oh+kh, 2ow+kw)  ->  parity p = (kd%2, kh%2, kw%2), position
# (od+kd//2, oh+kh//2, ow+kw//2).  Inside one parity sub-volume every tap is
# therefore the SAME flat window shifted by the static offset
#     s_t = (kd//2)*HW + (kh//2)*wsub + (kw//2)
# so the whole conv is ONE matmul
#     acc[o, g] = sum_{t,c} Wfold[o, t*cin + c] * x_p_t[c, g + s_t]
# over a constant-length span; results are valid at g = od*HW + oh*wsub + ow
# (the h/w halo positions of acc are junk and are stripped by the wrapper).
# ----------------------------------------------------------------------------
def _conv_bn_relu_kernel(x_ref, w_ref, shift_ref, o_ref, patch_ref, *,
                         cin, span, offsets):
    """x_ref:     (cin, 8, (td+1)*HW)  bf16  parity-split padded input tile
       w_ref:     (cout, 27*cin)       bf16  conv weights with BN scale folded
       shift_ref: (cout, 1)            f32   folded BN shift (incl. conv bias)
       o_ref:     (cout, span)         bf16  lane-dense output (halo junk kept)
       patch_ref: (27*cin, span)       bf16  VMEM scratch: the K = 27*cin slab
    """
    # Stage the 27 tap windows into one contiguous K slab (lane-offset loads,
    # static sublane-offset stores) so the reduction is a single MXU pass
    # instead of 27 nearly-empty K=cin dots.
    for t, (p, s) in enumerate(offsets):
        patch_ref[t * cin:(t + 1) * cin, :] = x_ref[:, p, s:s + span]

    acc = jnp.dot(w_ref[...], patch_ref[...],
                  preferred_element_type=jnp.float32)      # (cout, span) f32
    y = jnp.maximum(acc + shift_ref[...], 0.0)             # BN shift + ReLU (f32)
    o_ref[...] = y.astype(o_ref.dtype)                     # no transpose needed


def conv_bn_relu(x_par, w_fold, shift, *, span, offsets):
    """x_par: (N, n_dt, cin, 8, L) bf16 -> (N, n_dt, cout, span) bf16."""
    n, n_dt, cin, _, blk_l = x_par.shape
    cout = w_fold.shape[0]
    kernel = functools.partial(_conv_bn_relu_kernel, cin=cin, span=span,
                               offsets=offsets)
    return pl.pallas_call(
        kernel,
        out_shape=jax.ShapeDtypeStruct((n, n_dt, cout, span), jnp.bfloat16),
        grid_spec=pltpu.PrefetchScalarGridSpec(
            num_scalar_prefetch=0,
            grid=(n, n_dt),
            in_specs=[
                pl.BlockSpec((None, None, cin, 8, blk_l),
                             lambda b, t: (b, t, 0, 0, 0)),
                pl.BlockSpec((cout, 27 * cin), lambda b, t: (0, 0)),
                pl.BlockSpec((cout, 1), lambda b, t: (0, 0)),
            ],
            out_specs=pl.BlockSpec((None, None, cout, span),
                                   lambda b, t: (b, t, 0, 0)),
            scratch_shapes=[pltpu.VMEM((27 * cin, span), jnp.bfloat16)],
        ),
        compiler_params=pltpu.CompilerParams(
            dimension_semantics=("parallel", "arbitrary"),
            # Above the 16/32 MiB v5e/v6e defaults, below v7x's 64 MiB physical.
            vmem_limit_bytes=48 * 1024 * 1024,
        ),
    )(x_par, w_fold, shift)


# ----------------------------------------------------------------------------
# Wrapper-side layout plumbing (XLA fuses these data-movement chains).
# ----------------------------------------------------------------------------
def choose_depth_tile(do, batch):
    """Pick an output-depth tile that always divides `do` and gives the
    BlockSpec pipeline at least ~2 grid steps per v7x TensorCore."""
    td = do
    while td % 2 == 0 and batch * (do // td) < 4:
        td //= 2
    return td


def tap_offsets(ho, wo):
    """(parity index, flat lane offset) for each of the 27 taps."""
    hsub, wsub = ho + 1, wo + 1
    hw = hsub * wsub
    offs = []
    for kd in range(3):
        for kh in range(3):
            for kw in range(3):
                p = (kd % 2) * 4 + (kh % 2) * 2 + (kw % 2)
                s = (kd // 2) * hw + (kh // 2) * wsub + (kw // 2)
                offs.append((p, s))
    return tuple(offs)


def prep_conv_input(h_ncdhw, td):
    """NCDHW activation -> kernel-native input:
       (N, C, D, H, W) -> (N, n_dt, C, 8, (td+1)*hsub*wsub)  bf16."""
    n, c, d, hh, w = h_ncdhw.shape
    do, ho, wo = d // 2, hh // 2, w // 2
    assert d == 2 * do and hh == 2 * ho and w == 2 * wo and do % td == 0
    n_dt = do // td
    dsub, hsub, wsub = do + 1, ho + 1, wo + 1
    xp = jnp.pad(h_ncdhw, ((0, 0), (0, 0), (1, 1), (1, 1), (1, 1)))
    # padded index i = 2*q + r  ->  (q, r); gather the 8 (r_d, r_h, r_w) parities
    xp = xp.reshape(n, c, dsub, 2, hsub, 2, wsub, 2)
    xp = jnp.transpose(xp, (0, 1, 3, 5, 7, 2, 4, 6))   # (n, c, rd, rh, rw, qd, qh, qw)
    xp = xp.reshape(n, c, 8, dsub, hsub, wsub)
    # Overlapping depth tiles: tile t needs parity planes [t*td, t*td + td].
    xp = jnp.stack([xp[:, :, :, t * td:t * td + td + 1] for t in range(n_dt)],
                   axis=1)                              # (n, n_dt, c, 8, td+1, hsub, wsub)
    xp = xp.reshape(n, n_dt, c, 8, (td + 1) * hsub * wsub)
    return xp.astype(jnp.bfloat16), (do, ho, wo, n_dt)


def strip_output(o, *, td, ho, wo):
    """Kernel output (N, n_dt, cout, span) -> NCDHW (N, cout, do, ho, wo):
       drop the h/w halo junk columns and re-join the depth tiles."""
    n, n_dt, cout, span = o.shape
    hsub, wsub = ho + 1, wo + 1
    hw = hsub * wsub
    o = jnp.pad(o, ((0, 0), (0, 0), (0, 0), (0, td * hw - span)))
    o = o.reshape(n, n_dt, cout, td, hsub, wsub)[:, :, :, :, :ho, :wo]
    o = jnp.transpose(o, (0, 2, 1, 3, 4, 5)).reshape(n, cout, n_dt * td, ho, wo)
    return o


def fold_conv_weight(w_pt, scale):
    """PyTorch (Cout, Cin, 3, 3, 3) -> (Cout, 27*Cin) bf16 with the eval-mode
       BatchNorm scale folded in; K is ordered (tap-major, cin-minor)."""
    cout, cin = w_pt.shape[0], w_pt.shape[1]
    wk = jnp.transpose(w_pt, (0, 2, 3, 4, 1)).reshape(cout, 27 * cin)
    return (wk * scale[:, None]).astype(jnp.bfloat16)


# ----------------------------------------------------------------------------
# Forward pass
# ----------------------------------------------------------------------------
def simple_conv_forward(params, x, *, eps=1e-5):
    """x: (N, D, H, W) float32 (PyTorch input before unsqueeze(1))."""
    n = x.shape[0]
    h = x[:, None].astype(jnp.bfloat16)                 # NCDHW activations, bf16
    for layer in params["conv"]:
        # Fold conv bias + eval-mode BatchNorm into a per-channel scale/shift.
        scale = layer["gamma"] * lax.rsqrt(layer["var"] + eps)
        shift = ((layer["b"] - layer["mean"]) * scale + layer["beta"])
        shift = shift.reshape(-1, 1).astype(jnp.float32)
        w_fold = fold_conv_weight(layer["w"], scale)

        do, ho, wo = h.shape[2] // 2, h.shape[3] // 2, h.shape[4] // 2
        td = choose_depth_tile(do, n)
        offsets = tap_offsets(ho, wo)
        span = (td - 1) * (ho + 1) * (wo + 1) + (ho - 1) * (wo + 1) + wo

        # TODO(synk): emit the next layer's parity-split layout directly from
        # the kernel's output store to drop these wrapper passes entirely.
        x_par, _ = prep_conv_input(h, td)
        o = conv_bn_relu(x_par, w_fold, shift, span=span, offsets=offsets)
        h = strip_output(o, td=td, ho=ho, wo=wo)
        # Dropout3d: identity in eval mode.

    # h is NCDHW, so torch.flatten(x, 1) is a pure reshape.
    flat = h.reshape(n, -1)
    # nn.Linear tail: (2x8)@(8x32) here -- a pallas_call is pure launch
    # overhead at this size (perf review), so it stays a plain XLA dot.
    w_fc_t = jnp.transpose(params["fc_w"]).astype(jnp.bfloat16)
    out = jnp.dot(flat, w_fc_t, preferred_element_type=jnp.float32)
    return out + params["fc_b"][None, :]


# ----------------------------------------------------------------------------
# Independent pure-XLA reference (unfused conv + BatchNorm), same bf16
# activation policy as the kernel path.
# ----------------------------------------------------------------------------
def reference_forward(params, x, *, eps=1e-5):
    h = x[:, None].astype(jnp.bfloat16)
    for layer in params["conv"]:
        y = lax.conv_general_dilated(
            h.astype(jnp.float32), layer["w"],
            window_strides=(2, 2, 2), padding=((1, 1), (1, 1), (1, 1)),
            dimension_numbers=("NCDHW", "OIDHW", "NCDHW"))
        y = y + layer["b"][None, :, None, None, None]
        y = ((y - layer["mean"][None, :, None, None, None])
             * lax.rsqrt(layer["var"] + eps)[None, :, None, None, None]
             * layer["gamma"][None, :, None, None, None]
             + layer["beta"][None, :, None, None, None])
        h = jnp.maximum(y, 0.0).astype(jnp.bfloat16)
    flat = h.reshape(h.shape[0], -1).astype(jnp.float32)
    return flat @ params["fc_w"].T + params["fc_b"][None, :]


# ----------------------------------------------------------------------------
# Parameter initialization (deterministic, synthetic)
# ----------------------------------------------------------------------------
def init_params(key, inter_num_ch, img_dim, feature_dim):
    chans = [(1, inter_num_ch),
             (inter_num_ch, 2 * inter_num_ch),
             (2 * inter_num_ch, 4 * inter_num_ch),
             (4 * inter_num_ch, 2 * inter_num_ch)]
    params = {"conv": []}
    for cin, cout in chans:
        key, k1, k2, k3, k4, k5, k6 = jax.random.split(key, 7)
        params["conv"].append(dict(
            w=jax.random.normal(k1, (cout, cin, 3, 3, 3), jnp.float32)
              * jnp.sqrt(2.0 / (27 * cin)),
            b=0.02 * jax.random.normal(k2, (cout,), jnp.float32),
            gamma=1.0 + 0.1 * jax.random.normal(k3, (cout,), jnp.float32),
            beta=0.05 * jax.random.normal(k4, (cout,), jnp.float32),
            mean=0.05 * jax.random.normal(k5, (cout,), jnp.float32),
            var=0.8 + 0.4 * jax.random.uniform(k6, (cout,), jnp.float32)))
    fc_in = (2 * inter_num_ch * (img_dim[0] // 16) * (img_dim[1] // 16)
             * (img_dim[2] // 16))
    key, k1, k2 = jax.random.split(key, 3)
    params["fc_w"] = (jax.random.normal(k1, (feature_dim, fc_in), jnp.float32)
                      / jnp.sqrt(float(fc_in)))
    params["fc_b"] = 0.02 * jax.random.normal(k2, (feature_dim,), jnp.float32)
    return params


if __name__ == "__main__":
    # Small, module-consistent shapes: batch=2, img_dim=(16,16,16),
    # inter_num_ch=4, feature_dim=32  ->  fc_in = 2*4*(16//16)^3 = 8.
    batch = 2
    img_dim = (16, 16, 16)
    inter_num_ch = 4
    feature_dim = 32

    key = jax.random.PRNGKey(0)
    key, kx = jax.random.split(key)
    x = jax.random.normal(kx, (batch,) + img_dim, jnp.float32)
    params = init_params(key, inter_num_ch, img_dim, feature_dim)

    fwd = jax.jit(simple_conv_forward)
    out = jax.block_until_ready(fwd(params, x))

    assert out.shape == (batch, feature_dim), out.shape
    assert out.dtype == jnp.float32
    assert bool(jnp.all(jnp.isfinite(out)))

    # Correctness vs. an independent XLA reference: remaining differences are
    # bf16 rounding of the folded weights / inter-layer activations only.
    ref = jax.block_until_ready(jax.jit(reference_forward)(params, x))
    assert bool(jnp.allclose(out, ref, rtol=5e-2, atol=5e-2)), (
        "max abs err = %f" % float(jnp.max(jnp.abs(out - ref))))

    print("KERNEL_OK")
</pallas_src>

<mosaic_0001>
module attributes {stable_mosaic.version = 11 : i64} {
  func.func @_conv_bn_relu_kernel(%arg0: i32, %arg1: i32, %arg2: memref<1x1x1x8x405xbf16, #tpu.memory_space<vmem>>, %arg3: memref<4x27xbf16, #tpu.memory_space<vmem>>, %arg4: memref<4x1xf32, #tpu.memory_space<vmem>>, %arg5: memref<1x1x4x314xbf16, #tpu.memory_space<vmem>>, %arg6: memref<27x314xbf16, #tpu.memory_space<vmem>>) attributes {dimension_semantics = [#tpu.dimension_semantics<parallel>, #tpu.dimension_semantics<arbitrary>], iteration_bounds = array<i64: 2, 2>, scalar_prefetch = 0 : i64, scratch_operands = 1 : i64, tpu.core_type = #tpu.core_type<tc>, window_params = [{transform_indices = @transform_0, window_bounds = array<i64: 1, 1, 1, 8, 405>}, {pipeline_mode = #tpu.pipeline_mode<synchronous>, transform_indices = @transform_1, window_bounds = array<i64: 4, 27>}, {pipeline_mode = #tpu.pipeline_mode<synchronous>, transform_indices = @transform_2, window_bounds = array<i64: 4, 1>}, {transform_indices = @transform_3, window_bounds = array<i64: 1, 1, 4, 314>}]} {
    %c0 = arith.constant 0 : index
    %c0_0 = arith.constant 0 : index
    %c0_1 = arith.constant 0 : index
    %c0_2 = arith.constant 0 : index
    %c0_3 = arith.constant 0 : index
    %0 = vector.load %arg2[%c0, %c0_0, %c0_1, %c0_2, %c0_3] : memref<1x1x1x8x405xbf16, #tpu.memory_space<vmem>>, vector<1x1x1x1x314xbf16>
    %1 = vector.shape_cast %0 : vector<1x1x1x1x314xbf16> to vector<1x314xbf16>
    %c0_4 = arith.constant 0 : index
    %c0_5 = arith.constant 0 : index
    %2 = vector.load %arg6[%c0_4, %c0_5] : memref<27x314xbf16, #tpu.memory_space<vmem>>, vector<1x314xbf16>
    tpu.vector_store %arg6[%c0_4, %c0_5], %1 {strides = array<i32>} : memref<27x314xbf16, #tpu.memory_space<vmem>>, vector<1x314xbf16>,
    %c0_6 = arith.constant 0 : index
    %c0_7 = arith.constant 0 : index
    %c0_8 = arith.constant 0 : index
    %c1 = arith.constant 1 : index
    %c0_9 = arith.constant 0 : index
    %3 = vector.load %arg2[%c0_6, %c0_7, %c0_8, %c1, %c0_9] : memref<1x1x1x8x405xbf16, #tpu.memory_space<vmem>>, vector<1x1x1x1x314xbf16>
    %4 = vector.shape_cast %3 : vector<1x1x1x1x314xbf16> to vector<1x314xbf16>
    %c1_10 = arith.constant 1 : index
    %c0_11 = arith.constant 0 : index
    %5 = vector.load %arg6[%c1_10, %c0_11] : memref<27x314xbf16, #tpu.memory_space<vmem>>, vector<1x314xbf16>
    tpu.vector_store %arg6[%c1_10, %c0_11], %4 {strides = array<i32>} : memref<27x314xbf16, #tpu.memory_space<vmem>>, vector<1x314xbf16>,
    %c0_12 = arith.constant 0 : index
    %c0_13 = arith.constant 0 : index
    %c0_14 = arith.constant 0 : index
    %c0_15 = arith.constant 0 : index
    %c1_16 = arith.constant 1 : index
    %6 = vector.load %arg2[%c0_12, %c0_13, %c0_14, %c0_15, %c1_16] : memref<1x1x1x8x405xbf16, #tpu.memory_space<vmem>>, vector<1x1x1x1x314xbf16>
    %7 = vector.shape_cast %6 : vector<1x1x1x1x314xbf16> to vector<1x314xbf16>
    %c2 = arith.constant 2 : index
    %c0_17 = arith.constant 0 : index
    %8 = vector.load %arg6[%c2, %c0_17] : memref<27x314xbf16, #tpu.memory_space<vmem>>, vector<1x314xbf16>
    tpu.vector_store %arg6[%c2, %c0_17], %7 {strides = array<i32>} : memref<27x314xbf16, #tpu.memory_space<vmem>>, vector<1x314xbf16>,
    %c0_18 = arith.constant 0 : index
    %c0_19 = arith.constant 0 : index
    %c0_20 = arith.constant 0 : index
    %c2_21 = arith.constant 2 : index
    %c0_22 = arith.constant 0 : index
    %9 = vector.load %arg2[%c0_18, %c0_19, %c0_20, %c2_21, %c0_22] : memref<1x1x1x8x405xbf16, #tpu.memory_space<vmem>>, vector<1x1x1x1x314xbf16>
    %10 = vector.shape_cast %9 : vector<1x1x1x1x314xbf16> to vector<1x314xbf16>
    %c3 = arith.constant 3 : index
    %c0_23 = arith.constant 0 : index
    %11 = vector.load %arg6[%c3, %c0_23] : memref<27x314xbf16, #tpu.memory_space<vmem>>, vector<1x314xbf16>
    tpu.vector_store %arg6[%c3, %c0_23], %10 {strides = array<i32>} : memref<27x314xbf16, #tpu.memory_space<vmem>>, vector<1x314xbf16>,
    %c0_24 = arith.constant 0 : index
    %c0_25 = arith.constant 0 : index
    %c0_26 = arith.constant 0 : index
    %c3_27 = arith.constant 3 : index
    %c0_28 = arith.constant 0 : index
    %12 = vector.load %arg2[%c0_24, %c0_25, %c0_26, %c3_27, %c0_28] : memref<1x1x1x8x405xbf16, #tpu.memory_space<vmem>>, vector<1x1x1x1x314xbf16>
    %13 = vector.shape_cast %12 : vector<1x1x1x1x314xbf16> to vector<1x314xbf16>
    %c4 = arith.constant 4 : index
    %c0_29 = arith.constant 0 : index
    %14 = vector.load %arg6[%c4, %c0_29] : memref<27x314xbf16, #tpu.memory_space<vmem>>, vector<1x314xbf16>
    tpu.vector_store %arg6[%c4, %c0_29], %13 {strides = array<i32>} : memref<27x314xbf16, #tpu.memory_space<vmem>>, vector<1x314xbf16>,
    %c0_30 = arith.constant 0 : index
    %c0_31 = arith.constant 0 : index
    %c0_32 = arith.constant 0 : index
    %c2_33 = arith.constant 2 : index
    %c1_34 = arith.constant 1 : index
    %15 = vector.load %arg2[%c0_30, %c0_31, %c0_32, %c2_33, %c1_34] : memref<1x1x1x8x405xbf16, #tpu.memory_space<vmem>>, vector<1x1x1x1x314xbf16>
    %16 = vector.shape_cast %15 : vector<1x1x1x1x314xbf16> to vector<1x314xbf16>
    %c5 = arith.constant 5 : index
    %c0_35 = arith.constant 0 : index
    %17 = vector.load %arg6[%c5, %c0_35] : memref<27x314xbf16, #tpu.memory_space<vmem>>, vector<1x314xbf16>
    tpu.vector_store %arg6[%c5, %c0_35], %16 {strides = array<i32>} : memref<27x314xbf16, #tpu.memory_space<vmem>>, vector<1x314xbf16>,
    %c0_36 = arith.constant 0 : index
    %c0_37 = arith.constant 0 : index
    %c0_38 = arith.constant 0 : index
    %c0_39 = arith.constant 0 : index
    %c9 = arith.constant 9 : index
    %18 = vector.load %arg2[%c0_36, %c0_37, %c0_38, %c0_39, %c9] : memref<1x1x1x8x405xbf16, #tpu.memory_space<vmem>>, vector<1x1x1x1x314xbf16>
    %19 = vector.shape_cast %18 : vector<1x1x1x1x314xbf16> to vector<1x314xbf16>
    %c6 = arith.constant 6 : index
    %c0_40 = arith.constant 0 : index
    %20 = vector.load %arg6[%c6, %c0_40] : memref<27x314xbf16, #tpu.memory_space<vmem>>, vector<1x314xbf16>
    tpu.vector_store %arg6[%c6, %c0_40], %19 {strides = array<i32>} : memref<27x314xbf16, #tpu.memory_space<vmem>>, vector<1x314xbf16>,
    %c0_41 = arith.constant 0 : index
    %c0_42 = arith.constant 0 : index
    %c0_43 = arith.constant 0 : index
    %c1_44 = arith.constant 1 : index
    %c9_45 = arith.constant 9 : index
    %21 = vector.load %arg2[%c0_41, %c0_42, %c0_43, %c1_44, %c9_45] : memref<1x1x1x8x405xbf16, #tpu.memory_space<vmem>>, vector<1x1x1x1x314xbf16>
    %22 = vector.shape_cast %21 : vector<1x1x1x1x314xbf16> to vector<1x314xbf16>
    %c7 = arith.constant 7 : index
    %c0_46 = arith.constant 0 : index
    %23 = vector.load %arg6[%c7, %c0_46] : memref<27x314xbf16, #tpu.memory_space<vmem>>, vector<1x314xbf16>
    tpu.vector_store %arg6[%c7, %c0_46], %22 {strides = array<i32>} : memref<27x314xbf16, #tpu.memory_space<vmem>>, vector<1x314xbf16>,
    %c0_47 = arith.constant 0 : index
    %c0_48 = arith.constant 0 : index
    %c0_49 = arith.constant 0 : index
    %c0_50 = arith.constant 0 : index
    %c10 = arith.constant 10 : index
    %24 = vector.load %arg2[%c0_47, %c0_48, %c0_49, %c0_50, %c10] : memref<1x1x1x8x405xbf16, #tpu.memory_space<vmem>>, vector<1x1x1x1x314xbf16>
    %25 = vector.shape_cast %24 : vector<1x1x1x1x314xbf16> to vector<1x314xbf16>
    %c8 = arith.constant 8 : index
    %c0_51 = arith.constant 0 : index
    %26 = vector.load %arg6[%c8, %c0_51] : memref<27x314xbf16, #tpu.memory_space<vmem>>, vector<1x314xbf16>
    tpu.vector_store %arg6[%c8, %c0_51], %25 {strides = array<i32>} : memref<27x314xbf16, #tpu.memory_space<vmem>>, vector<1x314xbf16>,
    %c0_52 = arith.constant 0 : index
    %c0_53 = arith.constant 0 : index
    %c0_54 = arith.constant 0 : index
    %c4_55 = arith.constant 4 : index
    %c0_56 = arith.constant 0 : index
    %27 = vector.load %arg2[%c0_52, %c0_53, %c0_54, %c4_55, %c0_56] : memref<1x1x1x8x405xbf16, #tpu.memory_space<vmem>>, vector<1x1x1x1x314xbf16>
    %28 = vector.shape_cast %27 : vector<1x1x1x1x314xbf16> to vector<1x314xbf16>
    %c9_57 = arith.constant 9 : index
    %c0_58 = arith.constant 0 : index
    %29 = vector.load %arg6[%c9_57, %c0_58] : memref<27x314xbf16, #tpu.memory_space<vmem>>, vector<1x314xbf16>
    tpu.vector_store %arg6[%c9_57, %c0_58], %28 {strides = array<i32>} : memref<27x314xbf16, #tpu.memory_space<vmem>>, vector<1x314xbf16>,
    %c0_59 = arith.constant 0 : index
    %c0_60 = arith.constant 0 : index
    %c0_61 = arith.constant 0 : index
    %c5_62 = arith.constant 5 : index
    %c0_63 = arith.constant 0 : index
    %30 = vector.load %arg2[%c0_59, %c0_60, %c0_61, %c5_62, %c0_63] : memref<1x1x1x8x405xbf16, #tpu.memory_space<vmem>>, vector<1x1x1x1x314xbf16>
    %31 = vector.shape_cast %30 : vector<1x1x1x1x314xbf16> to vector<1x314xbf16>
    %c10_64 = arith.constant 10 : index
    %c0_65 = arith.constant 0 : index
    %32 = vector.load %arg6[%c10_64, %c0_65] : memref<27x314xbf16, #tpu.memory_space<vmem>>, vector<1x314xbf16>
    tpu.vector_store %arg6[%c10_64, %c0_65], %31 {strides = array<i32>} : memref<27x314xbf16, #tpu.memory_space<vmem>>, vector<1x314xbf16>,
    %c0_66 = arith.constant 0 : index
    %c0_67 = arith.constant 0 : index
    %c0_68 = arith.constant 0 : index
    %c4_69 = arith.constant 4 : index
    %c1_70 = arith.constant 1 : index
    %33 = vector.load %arg2[%c0_66, %c0_67, %c0_68, %c4_69, %c1_70] : memref<1x1x1x8x405xbf16, #tpu.memory_space<vmem>>, vector<1x1x1x1x314xbf16>
    %34 = vector.shape_cast %33 : vector<1x1x1x1x314xbf16> to vector<1x314xbf16>
    %c11 = arith.constant 11 : index
    %c0_71 = arith.constant 0 : index
    %35 = vector.load %arg6[%c11, %c0_71] : memref<27x314xbf16, #tpu.memory_space<vmem>>, vector<1x314xbf16>
    tpu.vector_store %arg6[%c11, %c0_71], %34 {strides = array<i32>} : memref<27x314xbf16, #tpu.memory_space<vmem>>, vector<1x314xbf16>,
    %c0_72 = arith.constant 0 : index
    %c0_73 = arith.constant 0 : index
    %c0_74 = arith.constant 0 : index
    %c6_75 = arith.constant 6 : index
    %c0_76 = arith.constant 0 : index
    %36 = vector.load %arg2[%c0_72, %c0_73, %c0_74, %c6_75, %c0_76] : memref<1x1x1x8x405xbf16, #tpu.memory_space<vmem>>, vector<1x1x1x1x314xbf16>
    %37 = vector.shape_cast %36 : vector<1x1x1x1x314xbf16> to vector<1x314xbf16>
    %c12 = arith.constant 12 : index
    %c0_77 = arith.constant 0 : index
    %38 = vector.load %arg6[%c12, %c0_77] : memref<27x314xbf16, #tpu.memory_space<vmem>>, vector<1x314xbf16>
    tpu.vector_store %arg6[%c12, %c0_77], %37 {strides = array<i32>} : memref<27x314xbf16, #tpu.memory_space<vmem>>, vector<1x314xbf16>,
    %c0_78 = arith.constant 0 : index
    %c0_79 = arith.constant 0 : index
    %c0_80 = arith.constant 0 : index
    %c7_81 = arith.constant 7 : index
    %c0_82 = arith.constant 0 : index
    %39 = vector.load %arg2[%c0_78, %c0_79, %c0_80, %c7_81, %c0_82] : memref<1x1x1x8x405xbf16, #tpu.memory_space<vmem>>, vector<1x1x1x1x314xbf16>
    %40 = vector.shape_cast %39 : vector<1x1x1x1x314xbf16> to vector<1x314xbf16>
    %c13 = arith.constant 13 : index
    %c0_83 = arith.constant 0 : index
    %41 = vector.load %arg6[%c13, %c0_83] : memref<27x314xbf16, #tpu.memory_space<vmem>>, vector<1x314xbf16>
    tpu.vector_store %arg6[%c13, %c0_83], %40 {strides = array<i32>} : memref<27x314xbf16, #tpu.memory_space<vmem>>, vector<1x314xbf16>,
    %c0_84 = arith.constant 0 : index
    %c0_85 = arith.constant 0 : index
    %c0_86 = arith.constant 0 : index
    %c6_87 = arith.constant 6 : index
    %c1_88 = arith.constant 1 : index
    %42 = vector.load %arg2[%c0_84, %c0_85, %c0_86, %c6_87, %c1_88] : memref<1x1x1x8x405xbf16, #tpu.memory_space<vmem>>, vector<1x1x1x1x314xbf16>
    %43 = vector.shape_cast %42 : vector<1x1x1x1x314xbf16> to vector<1x314xbf16>
    %c14 = arith.constant 14 : index
    %c0_89 = arith.constant 0 : index
    %44 = vector.load %arg6[%c14, %c0_89] : memref<27x314xbf16, #tpu.memory_space<vmem>>, vector<1x314xbf16>
    tpu.vector_store %arg6[%c14, %c0_89], %43 {strides = array<i32>} : memref<27x314xbf16, #tpu.memory_space<vmem>>, vector<1x314xbf16>,
    %c0_90 = arith.constant 0 : index
    %c0_91 = arith.constant 0 : index
    %c0_92 = arith.constant 0 : index
    %c4_93 = arith.constant 4 : index
    %c9_94 = arith.constant 9 : index
    %45 = vector.load %arg2[%c0_90, %c0_91, %c0_92, %c4_93, %c9_94] : memref<1x1x1x8x405xbf16, #tpu.memory_space<vmem>>, vector<1x1x1x1x314xbf16>
    %46 = vector.shape_cast %45 : vector<1x1x1x1x314xbf16> to vector<1x314xbf16>
    %c15 = arith.constant 15 : index
    %c0_95 = arith.constant 0 : index
    %47 = vector.load %arg6[%c15, %c0_95] : memref<27x314xbf16, #tpu.memory_space<vmem>>, vector<1x314xbf16>
    tpu.vector_store %arg6[%c15, %c0_95], %46 {strides = array<i32>} : memref<27x314xbf16, #tpu.memory_space<vmem>>, vector<1x314xbf16>,
    %c0_96 = arith.constant 0 : index
    %c0_97 = arith.constant 0 : index
    %c0_98 = arith.constant 0 : index
    %c5_99 = arith.constant 5 : index
    %c9_100 = arith.constant 9 : index
    %48 = vector.load %arg2[%c0_96, %c0_97, %c0_98, %c5_99, %c9_100] : memref<1x1x1x8x405xbf16, #tpu.memory_space<vmem>>, vector<1x1x1x1x314xbf16>
    %49 = vector.shape_cast %48 : vector<1x1x1x1x314xbf16> to vector<1x314xbf16>
    %c16 = arith.constant 16 : index
    %c0_101 = arith.constant 0 : index
    %50 = vector.load %arg6[%c16, %c0_101] : memref<27x314xbf16, #tpu.memory_space<vmem>>, vector<1x314xbf16>
    tpu.vector_store %arg6[%c16, %c0_101], %49 {strides = array<i32>} : memref<27x314xbf16, #tpu.memory_space<vmem>>, vector<1x314xbf16>,
    %c0_102 = arith.constant 0 : index
    %c0_103 = arith.constant 0 : index
    %c0_104 = arith.constant 0 : index
    %c4_105 = arith.constant 4 : index
    %c10_106 = arith.constant 10 : index
    %51 = vector.load %arg2[%c0_102, %c0_103, %c0_104, %c4_105, %c10_106] : memref<1x1x1x8x405xbf16, #tpu.memory_space<vmem>>, vector<1x1x1x1x314xbf16>
    %52 = vector.shape_cast %51 : vector<1x1x1x1x314xbf16> to vector<1x314xbf16>
    %c17 = arith.constant 17 : index
    %c0_107 = arith.constant 0 : index
    %53 = vector.load %arg6[%c17, %c0_107] : memref<27x314xbf16, #tpu.memory_space<vmem>>, vector<1x314xbf16>
    tpu.vector_store %arg6[%c17, %c0_107], %52 {strides = array<i32>} : memref<27x314xbf16, #tpu.memory_space<vmem>>, vector<1x314xbf16>,
    %c0_108 = arith.constant 0 : index
    %c0_109 = arith.constant 0 : index
    %c0_110 = arith.constant 0 : index
    %c0_111 = arith.constant 0 : index
    %c81 = arith.constant 81 : index
    %54 = vector.load %arg2[%c0_108, %c0_109, %c0_110, %c0_111, %c81] : memref<1x1x1x8x405xbf16, #tpu.memory_space<vmem>>, vector<1x1x1x1x314xbf16>
    %55 = vector.shape_cast %54 : vector<1x1x1x1x314xbf16> to vector<1x314xbf16>
    %c18 = arith.constant 18 : index
    %c0_112 = arith.constant 0 : index
    %56 = vector.load %arg6[%c18, %c0_112] : memref<27x314xbf16, #tpu.memory_space<vmem>>, vector<1x314xbf16>
    tpu.vector_store %arg6[%c18, %c0_112], %55 {strides = array<i32>} : memref<27x314xbf16, #tpu.memory_space<vmem>>, vector<1x314xbf16>,
    %c0_113 = arith.constant 0 : index
    %c0_114 = arith.constant 0 : index
    %c0_115 = arith.constant 0 : index
    %c1_116 = arith.constant 1 : index
    %c81_117 = arith.constant 81 : index
    %57 = vector.load %arg2[%c0_113, %c0_114, %c0_115, %c1_116, %c81_117] : memref<1x1x1x8x405xbf16, #tpu.memory_space<vmem>>, vector<1x1x1x1x314xbf16>
    %58 = vector.shape_cast %57 : vector<1x1x1x1x314xbf16> to vector<1x314xbf16>
    %c19 = arith.constant 19 : index
    %c0_118 = arith.constant 0 : index
    %59 = vector.load %arg6[%c19, %c0_118] : memref<27x314xbf16, #tpu.memory_space<vmem>>, vector<1x314xbf16>
    tpu.vector_store %arg6[%c19, %c0_118], %58 {strides = array<i32>} : memref<27x314xbf16, #tpu.memory_space<vmem>>, vector<1x314xbf16>,
    %c0_119 = arith.constant 0 : index
    %c0_120 = arith.constant 0 : index
    %c0_121 = arith.constant 0 : index
    %c0_122 = arith.constant 0 : index
    %c82 = arith.constant 82 : index
    %60 = vector.load %arg2[%c0_119, %c0_120, %c0_121, %c0_122, %c82] : memref<1x1x1x8x405xbf16, #tpu.memory_space<vmem>>, vector<1x1x1x1x314xbf16>
    %61 = vector.shape_cast %60 : vector<1x1x1x1x314xbf16> to vector<1x314xbf16>
    %c20 = arith.constant 20 : index
    %c0_123 = arith.constant 0 : index
    %62 = vector.load %arg6[%c20, %c0_123] : memref<27x314xbf16, #tpu.memory_space<vmem>>, vector<1x314xbf16>
    tpu.vector_store %arg6[%c20, %c0_123], %61 {strides = array<i32>} : memref<27x314xbf16, #tpu.memory_space<vmem>>, vector<1x314xbf16>,
    %c0_124 = arith.constant 0 : index
    %c0_125 = arith.constant 0 : index
    %c0_126 = arith.constant 0 : index
    %c2_127 = arith.constant 2 : index
    %c81_128 = arith.constant 81 : index
    %63 = vector.load %arg2[%c0_124, %c0_125, %c0_126, %c2_127, %c81_128] : memref<1x1x1x8x405xbf16, #tpu.memory_space<vmem>>, vector<1x1x1x1x314xbf16>
    %64 = vector.shape_cast %63 : vector<1x1x1x1x314xbf16> to vector<1x314xbf16>
    %c21 = arith.constant 21 : index
    %c0_129 = arith.constant 0 : index
    %65 = vector.load %arg6[%c21, %c0_129] : memref<27x314xbf16, #tpu.memory_space<vmem>>, vector<1x314xbf16>
    tpu.vector_store %arg6[%c21, %c0_129], %64 {strides = array<i32>} : memref<27x314xbf16, #tpu.memory_space<vmem>>, vector<1x314xbf16>,
    %c0_130 = arith.constant 0 : index
    %c0_131 = arith.constant 0 : index
    %c0_132 = arith.constant 0 : index
    %c3_133 = arith.constant 3 : index
    %c81_134 = arith.constant 81 : index
    %66 = vector.load %arg2[%c0_130, %c0_131, %c0_132, %c3_133, %c81_134] : memref<1x1x1x8x405xbf16, #tpu.memory_space<vmem>>, vector<1x1x1x1x314xbf16>
    %67 = vector.shape_cast %66 : vector<1x1x1x1x314xbf16> to vector<1x314xbf16>
    %c22 = arith.constant 22 : index
    %c0_135 = arith.constant 0 : index
    %68 = vector.load %arg6[%c22, %c0_135] : memref<27x314xbf16, #tpu.memory_space<vmem>>, vector<1x314xbf16>
    tpu.vector_store %arg6[%c22, %c0_135], %67 {strides = array<i32>} : memref<27x314xbf16, #tpu.memory_space<vmem>>, vector<1x314xbf16>,
    %c0_136 = arith.constant 0 : index
    %c0_137 = arith.constant 0 : index
    %c0_138 = arith.constant 0 : index
    %c2_139 = arith.constant 2 : index
    %c82_140 = arith.constant 82 : index
    %69 = vector.load %arg2[%c0_136, %c0_137, %c0_138, %c2_139, %c82_140] : memref<1x1x1x8x405xbf16, #tpu.memory_space<vmem>>, vector<1x1x1x1x314xbf16>
    %70 = vector.shape_cast %69 : vector<1x1x1x1x314xbf16> to vector<1x314xbf16>
    %c23 = arith.constant 23 : index
    %c0_141 = arith.constant 0 : index
    %71 = vector.load %arg6[%c23, %c0_141] : memref<27x314xbf16, #tpu.memory_space<vmem>>, vector<1x314xbf16>
    tpu.vector_store %arg6[%c23, %c0_141], %70 {strides = array<i32>} : memref<27x314xbf16, #tpu.memory_space<vmem>>, vector<1x314xbf16>,
    %c0_142 = arith.constant 0 : index
    %c0_143 = arith.constant 0 : index
    %c0_144 = arith.constant 0 : index
    %c0_145 = arith.constant 0 : index
    %c90 = arith.constant 90 : index
    %72 = vector.load %arg2[%c0_142, %c0_143, %c0_144, %c0_145, %c90] : memref<1x1x1x8x405xbf16, #tpu.memory_space<vmem>>, vector<1x1x1x1x314xbf16>
    %73 = vector.shape_cast %72 : vector<1x1x1x1x314xbf16> to vector<1x314xbf16>
    %c24 = arith.constant 24 : index
    %c0_146 = arith.constant 0 : index
    %74 = vector.load %arg6[%c24, %c0_146] : memref<27x314xbf16, #tpu.memory_space<vmem>>, vector<1x314xbf16>
    tpu.vector_store %arg6[%c24, %c0_146], %73 {strides = array<i32>} : memref<27x314xbf16, #tpu.memory_space<vmem>>, vector<1x314xbf16>,
    %c0_147 = arith.constant 0 : index
    %c0_148 = arith.constant 0 : index
    %c0_149 = arith.constant 0 : index
    %c1_150 = arith.constant 1 : index
    %c90_151 = arith.constant 90 : index
    %75 = vector.load %arg2[%c0_147, %c0_148, %c0_149, %c1_150, %c90_151] : memref<1x1x1x8x405xbf16, #tpu.memory_space<vmem>>, vector<1x1x1x1x314xbf16>
    %76 = vector.shape_cast %75 : vector<1x1x1x1x314xbf16> to vector<1x314xbf16>
    %c25 = arith.constant 25 : index
    %c0_152 = arith.constant 0 : index
    %77 = vector.load %arg6[%c25, %c0_152] : memref<27x314xbf16, #tpu.memory_space<vmem>>, vector<1x314xbf16>
    tpu.vector_store %arg6[%c25, %c0_152], %76 {strides = array<i32>} : memref<27x314xbf16, #tpu.memory_space<vmem>>, vector<1x314xbf16>,
    %c0_153 = arith.constant 0 : index
    %c0_154 = arith.constant 0 : index
    %c0_155 = arith.constant 0 : index
    %c0_156 = arith.constant 0 : index
    %c91 = arith.constant 91 : index
    %78 = vector.load %arg2[%c0_153, %c0_154, %c0_155, %c0_156, %c91] : memref<1x1x1x8x405xbf16, #tpu.memory_space<vmem>>, vector<1x1x1x1x314xbf16>
    %79 = vector.shape_cast %78 : vector<1x1x1x1x314xbf16> to vector<1x314xbf16>
    %c26 = arith.constant 26 : index
    %c0_157 = arith.constant 0 : index
    %80 = vector.load %arg6[%c26, %c0_157] : memref<27x314xbf16, #tpu.memory_space<vmem>>, vector<1x314xbf16>
    tpu.vector_store %arg6[%c26, %c0_157], %79 {strides = array<i32>} : memref<27x314xbf16, #tpu.memory_space<vmem>>, vector<1x314xbf16>,
    %c0_158 = arith.constant 0 : index
    %c0_159 = arith.constant 0 : index
    %81 = vector.load %arg3[%c0_158, %c0_159] : memref<4x27xbf16, #tpu.memory_space<vmem>>, vector<4x27xbf16>
    %c0_160 = arith.constant 0 : index
    %c0_161 = arith.constant 0 : index
    %82 = vector.load %arg6[%c0_160, %c0_161] : memref<27x314xbf16, #tpu.memory_space<vmem>>, vector<27x314xbf16>
    %cst = arith.constant dense<0.000000e+00> : vector<4x314xf32>
    %83 = tpu.matmul %81, %82, %cst {dimension_numbers = #tpu.dot_dimension_numbers<[1], [0], [0], [1], [0, 0, 1, 1], [], []>} : vector<4x27xbf16>, vector<27x314xbf16>, vector<4x314xf32> -> vector<4x314xf32>
    %c0_162 = arith.constant 0 : index
    %c0_163 = arith.constant 0 : index
    %84 = vector.load %arg4[%c0_162, %c0_163] : memref<4x1xf32, #tpu.memory_space<vmem>>, vector<4x1xf32>
    %85 = vector.broadcast %84 : vector<4x1xf32> to vector<4x314xf32>
    %86 = arith.addf %83, %85 : vector<4x314xf32>
    %cst_164 = arith.constant 0.000000e+00 : f32
    %87 = vector.broadcast %cst_164 : f32 to vector<4x314xf32>
    %88 = arith.maximumf %86, %87 : vector<4x314xf32>
    %89 = arith.truncf %88 : vector<4x314xf32> to vector<4x314xbf16>
    %c0_165 = arith.constant 0 : index
    %c0_166 = arith.constant 0 : index
    %c0_167 = arith.constant 0 : index
    %c0_168 = arith.constant 0 : index
    %90 = vector.load %arg5[%c0_165, %c0_166, %c0_167, %c0_168] : memref<1x1x4x314xbf16, #tpu.memory_space<vmem>>, vector<1x1x4x314xbf16>
    %91 = vector.shape_cast %90 : vector<1x1x4x314xbf16> to vector<4x314xbf16>
    %92 = vector.shape_cast %89 : vector<4x314xbf16> to vector<1x1x4x314xbf16>
    tpu.vector_store %arg5[%c0_165, %c0_166, %c0_167, %c0_168], %92 {strides = array<i32>} : memref<1x1x4x314xbf16, #tpu.memory_space<vmem>>, vector<1x1x4x314xbf16>,
    return
  }
  func.func @transform_0(%arg0: i32, %arg1: i32) -> (i32, i32, i32, i32, i32) {
    %c0_i32 = arith.constant 0 : i32
    %c0_i32_0 = arith.constant 0 : i32
    %c0_i32_1 = arith.constant 0 : i32
    %c0_i32_2 = arith.constant 0 : i32
    return %arg0, %arg1, %c0_i32, %c0_i32_0, %c0_i32_1 : i32, i32, i32, i32, i32
  }
  func.func @transform_1(%arg0: i32, %arg1: i32) -> (i32, i32) {
    %c0_i32 = arith.constant 0 : i32
    %c0_i32_0 = arith.constant 0 : i32
    %c0_i32_1 = arith.constant 0 : i32
    return %c0_i32, %c0_i32_0 : i32, i32
  }
  func.func @transform_2(%arg0: i32, %arg1: i32) -> (i32, i32) {
    %c0_i32 = arith.constant 0 : i32
    %c0_i32_0 = arith.constant 0 : i32
    %c0_i32_1 = arith.constant 0 : i32
    return %c0_i32, %c0_i32_0 : i32, i32
  }
  func.func @transform_3(%arg0: i32, %arg1: i32) -> (i32, i32, i32, i32) {
    %c0_i32 = arith.constant 0 : i32
    %c0_i32_0 = arith.constant 0 : i32
    %c0_i32_1 = arith.constant 0 : i32
    return %arg0, %arg1, %c0_i32, %c0_i32_0 : i32, i32, i32, i32
  }
}

module attributes {stable_mosaic.version = 11 : i64} {
  func.func @_conv_bn_relu_kernel(%arg0: i32, %arg1: i32, %arg2: memref<1x1x4x8x75xbf16, #tpu.memory_space<vmem>>, %arg3: memref<8x108xbf16, #tpu.memory_space<vmem>>, %arg4: memref<8x1xf32, #tpu.memory_space<vmem>>, %arg5: memref<1x1x8x44xbf16, #tpu.memory_space<vmem>>, %arg6: memref<108x44xbf16, #tpu.memory_space<vmem>>) attributes {dimension_semantics = [#tpu.dimension_semantics<parallel>, #tpu.dimension_semantics<arbitrary>], iteration_bounds = array<i64: 2, 2>, scalar_prefetch = 0 : i64, scratch_operands = 1 : i64, tpu.core_type = #tpu.core_type<tc>, window_params = [{transform_indices = @transform_0, window_bounds = array<i64: 1, 1, 4, 8, 75>}, {pipeline_mode = #tpu.pipeline_mode<synchronous>, transform_indices = @transform_1, window_bounds = array<i64: 8, 108>}, {pipeline_mode = #tpu.pipeline_mode<synchronous>, transform_indices = @transform_2, window_bounds = array<i64: 8, 1>}, {transform_indices = @transform_3, window_bounds = array<i64: 1, 1, 8, 44>}]} {
    %c0 = arith.constant 0 : index
    %c0_0 = arith.constant 0 : index
    %c0_1 = arith.constant 0 : index
    %c0_2 = arith.constant 0 : index
    %c0_3 = arith.constant 0 : index
    %0 = vector.load %arg2[%c0, %c0_0, %c0_1, %c0_2, %c0_3] : memref<1x1x4x8x75xbf16, #tpu.memory_space<vmem>>, vector<1x1x4x1x44xbf16>
    %1 = vector.shape_cast %0 : vector<1x1x4x1x44xbf16> to vector<4x44xbf16>
    %c0_4 = arith.constant 0 : index
    %c0_5 = arith.constant 0 : index
    %2 = vector.load %arg6[%c0_4, %c0_5] : memref<108x44xbf16, #tpu.memory_space<vmem>>, vector<4x44xbf16>
    tpu.vector_store %arg6[%c0_4, %c0_5], %1 {strides = array<i32>} : memref<108x44xbf16, #tpu.memory_space<vmem>>, vector<4x44xbf16>,
    %c0_6 = arith.constant 0 : index
    %c0_7 = arith.constant 0 : index
    %c0_8 = arith.constant 0 : index
    %c1 = arith.constant 1 : index
    %c0_9 = arith.constant 0 : index
    %3 = vector.load %arg2[%c0_6, %c0_7, %c0_8, %c1, %c0_9] : memref<1x1x4x8x75xbf16, #tpu.memory_space<vmem>>, vector<1x1x4x1x44xbf16>
    %4 = vector.shape_cast %3 : vector<1x1x4x1x44xbf16> to vector<4x44xbf16>
    %c4 = arith.constant 4 : index
    %c0_10 = arith.constant 0 : index
    %5 = vector.load %arg6[%c4, %c0_10] : memref<108x44xbf16, #tpu.memory_space<vmem>>, vector<4x44xbf16>
    tpu.vector_store %arg6[%c4, %c0_10], %4 {strides = array<i32>} : memref<108x44xbf16, #tpu.memory_space<vmem>>, vector<4x44xbf16>,
    %c0_11 = arith.constant 0 : index
    %c0_12 = arith.constant 0 : index
    %c0_13 = arith.constant 0 : index
    %c0_14 = arith.constant 0 : index
    %c1_15 = arith.constant 1 : index
    %6 = vector.load %arg2[%c0_11, %c0_12, %c0_13, %c0_14, %c1_15] : memref<1x1x4x8x75xbf16, #tpu.memory_space<vmem>>, vector<1x1x4x1x44xbf16>
    %7 = vector.shape_cast %6 : vector<1x1x4x1x44xbf16> to vector<4x44xbf16>
    %c8 = arith.constant 8 : index
    %c0_16 = arith.constant 0 : index
    %8 = vector.load %arg6[%c8, %c0_16] : memref<108x44xbf16, #tpu.memory_space<vmem>>, vector<4x44xbf16>
    tpu.vector_store %arg6[%c8, %c0_16], %7 {strides = array<i32>} : memref<108x44xbf16, #tpu.memory_space<vmem>>, vector<4x44xbf16>,
    %c0_17 = arith.constant 0 : index
    %c0_18 = arith.constant 0 : index
    %c0_19 = arith.constant 0 : index
    %c2 = arith.constant 2 : index
    %c0_20 = arith.constant 0 : index
    %9 = vector.load %arg2[%c0_17, %c0_18, %c0_19, %c2, %c0_20] : memref<1x1x4x8x75xbf16, #tpu.memory_space<vmem>>, vector<1x1x4x1x44xbf16>
    %10 = vector.shape_cast %9 : vector<1x1x4x1x44xbf16> to vector<4x44xbf16>
    %c12 = arith.constant 12 : index
    %c0_21 = arith.constant 0 : index
    %11 = vector.load %arg6[%c12, %c0_21] : memref<108x44xbf16, #tpu.memory_space<vmem>>, vector<4x44xbf16>
    tpu.vector_store %arg6[%c12, %c0_21], %10 {strides = array<i32>} : memref<108x44xbf16, #tpu.memory_space<vmem>>, vector<4x44xbf16>,
    %c0_22 = arith.constant 0 : index
    %c0_23 = arith.constant 0 : index
    %c0_24 = arith.constant 0 : index
    %c3 = arith.constant 3 : index
    %c0_25 = arith.constant 0 : index
    %12 = vector.load %arg2[%c0_22, %c0_23, %c0_24, %c3, %c0_25] : memref<1x1x4x8x75xbf16, #tpu.memory_space<vmem>>, vector<1x1x4x1x44xbf16>
    %13 = vector.shape_cast %12 : vector<1x1x4x1x44xbf16> to vector<4x44xbf16>
    %c16 = arith.constant 16 : index
    %c0_26 = arith.constant 0 : index
    %14 = vector.load %arg6[%c16, %c0_26] : memref<108x44xbf16, #tpu.memory_space<vmem>>, vector<4x44xbf16>
    tpu.vector_store %arg6[%c16, %c0_26], %13 {strides = array<i32>} : memref<108x44xbf16, #tpu.memory_space<vmem>>, vector<4x44xbf16>,
    %c0_27 = arith.constant 0 : index
    %c0_28 = arith.constant 0 : index
    %c0_29 = arith.constant 0 : index
    %c2_30 = arith.constant 2 : index
    %c1_31 = arith.constant 1 : index
    %15 = vector.load %arg2[%c0_27, %c0_28, %c0_29, %c2_30, %c1_31] : memref<1x1x4x8x75xbf16, #tpu.memory_space<vmem>>, vector<1x1x4x1x44xbf16>
    %16 = vector.shape_cast %15 : vector<1x1x4x1x44xbf16> to vector<4x44xbf16>
    %c20 = arith.constant 20 : index
    %c0_32 = arith.constant 0 : index
    %17 = vector.load %arg6[%c20, %c0_32] : memref<108x44xbf16, #tpu.memory_space<vmem>>, vector<4x44xbf16>
    tpu.vector_store %arg6[%c20, %c0_32], %16 {strides = array<i32>} : memref<108x44xbf16, #tpu.memory_space<vmem>>, vector<4x44xbf16>,
    %c0_33 = arith.constant 0 : index
    %c0_34 = arith.constant 0 : index
    %c0_35 = arith.constant 0 : index
    %c0_36 = arith.constant 0 : index
    %c5 = arith.constant 5 : index
    %18 = vector.load %arg2[%c0_33, %c0_34, %c0_35, %c0_36, %c5] : memref<1x1x4x8x75xbf16, #tpu.memory_space<vmem>>, vector<1x1x4x1x44xbf16>
    %19 = vector.shape_cast %18 : vector<1x1x4x1x44xbf16> to vector<4x44xbf16>
    %c24 = arith.constant 24 : index
    %c0_37 = arith.constant 0 : index
    %20 = vector.load %arg6[%c24, %c0_37] : memref<108x44xbf16, #tpu.memory_space<vmem>>, vector<4x44xbf16>
    tpu.vector_store %arg6[%c24, %c0_37], %19 {strides = array<i32>} : memref<108x44xbf16, #tpu.memory_space<vmem>>, vector<4x44xbf16>,
    %c0_38 = arith.constant 0 : index
    %c0_39 = arith.constant 0 : index
    %c0_40 = arith.constant 0 : index
    %c1_41 = arith.constant 1 : index
    %c5_42 = arith.constant 5 : index
    %21 = vector.load %arg2[%c0_38, %c0_39, %c0_40, %c1_41, %c5_42] : memref<1x1x4x8x75xbf16, #tpu.memory_space<vmem>>, vector<1x1x4x1x44xbf16>
    %22 = vector.shape_cast %21 : vector<1x1x4x1x44xbf16> to vector<4x44xbf16>
    %c28 = arith.constant 28 : index
    %c0_43 = arith.constant 0 : index
    %23 = vector.load %arg6[%c28, %c0_43] : memref<108x44xbf16, #tpu.memory_space<vmem>>, vector<4x44xbf16>
    tpu.vector_store %arg6[%c28, %c0_43], %22 {strides = array<i32>} : memref<108x44xbf16, #tpu.memory_space<vmem>>, vector<4x44xbf16>,
    %c0_44 = arith.constant 0 : index
    %c0_45 = arith.constant 0 : index
    %c0_46 = arith.constant 0 : index
    %c0_47 = arith.constant 0 : index
    %c6 = arith.constant 6 : index
    %24 = vector.load %arg2[%c0_44, %c0_45, %c0_46, %c0_47, %c6] : memref<1x1x4x8x75xbf16, #tpu.memory_space<vmem>>, vector<1x1x4x1x44xbf16>
    %25 = vector.shape_cast %24 : vector<1x1x4x1x44xbf16> to vector<4x44xbf16>
    %c32 = arith.constant 32 : index
    %c0_48 = arith.constant 0 : index
    %26 = vector.load %arg6[%c32, %c0_48] : memref<108x44xbf16, #tpu.memory_space<vmem>>, vector<4x44xbf16>
    tpu.vector_store %arg6[%c32, %c0_48], %25 {strides = array<i32>} : memref<108x44xbf16, #tpu.memory_space<vmem>>, vector<4x44xbf16>,
    %c0_49 = arith.constant 0 : index
    %c0_50 = arith.constant 0 : index
    %c0_51 = arith.constant 0 : index
    %c4_52 = arith.constant 4 : index
    %c0_53 = arith.constant 0 : index
    %27 = vector.load %arg2[%c0_49, %c0_50, %c0_51, %c4_52, %c0_53] : memref<1x1x4x8x75xbf16, #tpu.memory_space<vmem>>, vector<1x1x4x1x44xbf16>
    %28 = vector.shape_cast %27 : vector<1x1x4x1x44xbf16> to vector<4x44xbf16>
    %c36 = arith.constant 36 : index
    %c0_54 = arith.constant 0 : index
    %29 = vector.load %arg6[%c36, %c0_54] : memref<108x44xbf16, #tpu.memory_space<vmem>>, vector<4x44xbf16>
    tpu.vector_store %arg6[%c36, %c0_54], %28 {strides = array<i32>} : memref<108x44xbf16, #tpu.memory_space<vmem>>, vector<4x44xbf16>,
    %c0_55 = arith.constant 0 : index
    %c0_56 = arith.constant 0 : index
    %c0_57 = arith.constant 0 : index
    %c5_58 = arith.constant 5 : index
    %c0_59 = arith.constant 0 : index
    %30 = vector.load %arg2[%c0_55, %c0_56, %c0_57, %c5_58, %c0_59] : memref<1x1x4x8x75xbf16, #tpu.memory_space<vmem>>, vector<1x1x4x1x44xbf16>
    %31 = vector.shape_cast %30 : vector<1x1x4x1x44xbf16> to vector<4x44xbf16>
    %c40 = arith.constant 40 : index
    %c0_60 = arith.constant 0 : index
    %32 = vector.load %arg6[%c40, %c0_60] : memref<108x44xbf16, #tpu.memory_space<vmem>>, vector<4x44xbf16>
    tpu.vector_store %arg6[%c40, %c0_60], %31 {strides = array<i32>} : memref<108x44xbf16, #tpu.memory_space<vmem>>, vector<4x44xbf16>,
    %c0_61 = arith.constant 0 : index
    %c0_62 = arith.constant 0 : index
    %c0_63 = arith.constant 0 : index
    %c4_64 = arith.constant 4 : index
    %c1_65 = arith.constant 1 : index
    %33 = vector.load %arg2[%c0_61, %c0_62, %c0_63, %c4_64, %c1_65] : memref<1x1x4x8x75xbf16, #tpu.memory_space<vmem>>, vector<1x1x4x1x44xbf16>
    %34 = vector.shape_cast %33 : vector<1x1x4x1x44xbf16> to vector<4x44xbf16>
    %c44 = arith.constant 44 : index
    %c0_66 = arith.constant 0 : index
    %35 = vector.load %arg6[%c44, %c0_66] : memref<108x44xbf16, #tpu.memory_space<vmem>>, vector<4x44xbf16>
    tpu.vector_store %arg6[%c44, %c0_66], %34 {strides = array<i32>} : memref<108x44xbf16, #tpu.memory_space<vmem>>, vector<4x44xbf16>,
    %c0_67 = arith.constant 0 : index
    %c0_68 = arith.constant 0 : index
    %c0_69 = arith.constant 0 : index
    %c6_70 = arith.constant 6 : index
    %c0_71 = arith.constant 0 : index
    %36 = vector.load %arg2[%c0_67, %c0_68, %c0_69, %c6_70, %c0_71] : memref<1x1x4x8x75xbf16, #tpu.memory_space<vmem>>, vector<1x1x4x1x44xbf16>
    %37 = vector.shape_cast %36 : vector<1x1x4x1x44xbf16> to vector<4x44xbf16>
    %c48 = arith.constant 48 : index
    %c0_72 = arith.constant 0 : index
    %38 = vector.load %arg6[%c48, %c0_72] : memref<108x44xbf16, #tpu.memory_space<vmem>>, vector<4x44xbf16>
    tpu.vector_store %arg6[%c48, %c0_72], %37 {strides = array<i32>} : memref<108x44xbf16, #tpu.memory_space<vmem>>, vector<4x44xbf16>,
    %c0_73 = arith.constant 0 : index
    %c0_74 = arith.constant 0 : index
    %c0_75 = arith.constant 0 : index
    %c7 = arith.constant 7 : index
    %c0_76 = arith.constant 0 : index
    %39 = vector.load %arg2[%c0_73, %c0_74, %c0_75, %c7, %c0_76] : memref<1x1x4x8x75xbf16, #tpu.memory_space<vmem>>, vector<1x1x4x1x44xbf16>
    %40 = vector.shape_cast %39 : vector<1x1x4x1x44xbf16> to vector<4x44xbf16>
    %c52 = arith.constant 52 : index
    %c0_77 = arith.constant 0 : index
    %41 = vector.load %arg6[%c52, %c0_77] : memref<108x44xbf16, #tpu.memory_space<vmem>>, vector<4x44xbf16>
    tpu.vector_store %arg6[%c52, %c0_77], %40 {strides = array<i32>} : memref<108x44xbf16, #tpu.memory_space<vmem>>, vector<4x44xbf16>,
    %c0_78 = arith.constant 0 : index
    %c0_79 = arith.constant 0 : index
    %c0_80 = arith.constant 0 : index
    %c6_81 = arith.constant 6 : index
    %c1_82 = arith.constant 1 : index
    %42 = vector.load %arg2[%c0_78, %c0_79, %c0_80, %c6_81, %c1_82] : memref<1x1x4x8x75xbf16, #tpu.memory_space<vmem>>, vector<1x1x4x1x44xbf16>
    %43 = vector.shape_cast %42 : vector<1x1x4x1x44xbf16> to vector<4x44xbf16>
    %c56 = arith.constant 56 : index
    %c0_83 = arith.constant 0 : index
    %44 = vector.load %arg6[%c56, %c0_83] : memref<108x44xbf16, #tpu.memory_space<vmem>>, vector<4x44xbf16>
    tpu.vector_store %arg6[%c56, %c0_83], %43 {strides = array<i32>} : memref<108x44xbf16, #tpu.memory_space<vmem>>, vector<4x44xbf16>,
    %c0_84 = arith.constant 0 : index
    %c0_85 = arith.constant 0 : index
    %c0_86 = arith.constant 0 : index
    %c4_87 = arith.constant 4 : index
    %c5_88 = arith.constant 5 : index
    %45 = vector.load %arg2[%c0_84, %c0_85, %c0_86, %c4_87, %c5_88] : memref<1x1x4x8x75xbf16, #tpu.memory_space<vmem>>, vector<1x1x4x1x44xbf16>
    %46 = vector.shape_cast %45 : vector<1x1x4x1x44xbf16> to vector<4x44xbf16>
    %c60 = arith.constant 60 : index
    %c0_89 = arith.constant 0 : index
    %47 = vector.load %arg6[%c60, %c0_89] : memref<108x44xbf16, #tpu.memory_space<vmem>>, vector<4x44xbf16>
    tpu.vector_store %arg6[%c60, %c0_89], %46 {strides = array<i32>} : memref<108x44xbf16, #tpu.memory_space<vmem>>, vector<4x44xbf16>,
    %c0_90 = arith.constant 0 : index
    %c0_91 = arith.constant 0 : index
    %c0_92 = arith.constant 0 : index
    %c5_93 = arith.constant 5 : index
    %c5_94 = arith.constant 5 : index
    %48 = vector.load %arg2[%c0_90, %c0_91, %c0_92, %c5_93, %c5_94] : memref<1x1x4x8x75xbf16, #tpu.memory_space<vmem>>, vector<1x1x4x1x44xbf16>
    %49 = vector.shape_cast %48 : vector<1x1x4x1x44xbf16> to vector<4x44xbf16>
    %c64 = arith.constant 64 : index
    %c0_95 = arith.constant 0 : index
    %50 = vector.load %arg6[%c64, %c0_95] : memref<108x44xbf16, #tpu.memory_space<vmem>>, vector<4x44xbf16>
    tpu.vector_store %arg6[%c64, %c0_95], %49 {strides = array<i32>} : memref<108x44xbf16, #tpu.memory_space<vmem>>, vector<4x44xbf16>,
    %c0_96 = arith.constant 0 : index
    %c0_97 = arith.constant 0 : index
    %c0_98 = arith.constant 0 : index
    %c4_99 = arith.constant 4 : index
    %c6_100 = arith.constant 6 : index
    %51 = vector.load %arg2[%c0_96, %c0_97, %c0_98, %c4_99, %c6_100] : memref<1x1x4x8x75xbf16, #tpu.memory_space<vmem>>, vector<1x1x4x1x44xbf16>
    %52 = vector.shape_cast %51 : vector<1x1x4x1x44xbf16> to vector<4x44xbf16>
    %c68 = arith.constant 68 : index
    %c0_101 = arith.constant 0 : index
    %53 = vector.load %arg6[%c68, %c0_101] : memref<108x44xbf16, #tpu.memory_space<vmem>>, vector<4x44xbf16>
    tpu.vector_store %arg6[%c68, %c0_101], %52 {strides = array<i32>} : memref<108x44xbf16, #tpu.memory_space<vmem>>, vector<4x44xbf16>,
    %c0_102 = arith.constant 0 : index
    %c0_103 = arith.constant 0 : index
    %c0_104 = arith.constant 0 : index
    %c0_105 = arith.constant 0 : index
    %c25 = arith.constant 25 : index
    %54 = vector.load %arg2[%c0_102, %c0_103, %c0_104, %c0_105, %c25] : memref<1x1x4x8x75xbf16, #tpu.memory_space<vmem>>, vector<1x1x4x1x44xbf16>
    %55 = vector.shape_cast %54 : vector<1x1x4x1x44xbf16> to vector<4x44xbf16>
    %c72 = arith.constant 72 : index
    %c0_106 = arith.constant 0 : index
    %56 = vector.load %arg6[%c72, %c0_106] : memref<108x44xbf16, #tpu.memory_space<vmem>>, vector<4x44xbf16>
    tpu.vector_store %arg6[%c72, %c0_106], %55 {strides = array<i32>} : memref<108x44xbf16, #tpu.memory_space<vmem>>, vector<4x44xbf16>,
    %c0_107 = arith.constant 0 : index
    %c0_108 = arith.constant 0 : index
    %c0_109 = arith.constant 0 : index
    %c1_110 = arith.constant 1 : index
    %c25_111 = arith.constant 25 : index
    %57 = vector.load %arg2[%c0_107, %c0_108, %c0_109, %c1_110, %c25_111] : memref<1x1x4x8x75xbf16, #tpu.memory_space<vmem>>, vector<1x1x4x1x44xbf16>
    %58 = vector.shape_cast %57 : vector<1x1x4x1x44xbf16> to vector<4x44xbf16>
    %c76 = arith.constant 76 : index
    %c0_112 = arith.constant 0 : index
    %59 = vector.load %arg6[%c76, %c0_112] : memref<108x44xbf16, #tpu.memory_space<vmem>>, vector<4x44xbf16>
    tpu.vector_store %arg6[%c76, %c0_112], %58 {strides = array<i32>} : memref<108x44xbf16, #tpu.memory_space<vmem>>, vector<4x44xbf16>,
    %c0_113 = arith.constant 0 : index
    %c0_114 = arith.constant 0 : index
    %c0_115 = arith.constant 0 : index
    %c0_116 = arith.constant 0 : index
    %c26 = arith.constant 26 : index
    %60 = vector.load %arg2[%c0_113, %c0_114, %c0_115, %c0_116, %c26] : memref<1x1x4x8x75xbf16, #tpu.memory_space<vmem>>, vector<1x1x4x1x44xbf16>
    %61 = vector.shape_cast %60 : vector<1x1x4x1x44xbf16> to vector<4x44xbf16>
    %c80 = arith.constant 80 : index
    %c0_117 = arith.constant 0 : index
    %62 = vector.load %arg6[%c80, %c0_117] : memref<108x44xbf16, #tpu.memory_space<vmem>>, vector<4x44xbf16>
    tpu.vector_store %arg6[%c80, %c0_117], %61 {strides = array<i32>} : memref<108x44xbf16, #tpu.memory_space<vmem>>, vector<4x44xbf16>,
    %c0_118 = arith.constant 0 : index
    %c0_119 = arith.constant 0 : index
    %c0_120 = arith.constant 0 : index
    %c2_121 = arith.constant 2 : index
    %c25_122 = arith.constant 25 : index
    %63 = vector.load %arg2[%c0_118, %c0_119, %c0_120, %c2_121, %c25_122] : memref<1x1x4x8x75xbf16, #tpu.memory_space<vmem>>, vector<1x1x4x1x44xbf16>
    %64 = vector.shape_cast %63 : vector<1x1x4x1x44xbf16> to vector<4x44xbf16>
    %c84 = arith.constant 84 : index
    %c0_123 = arith.constant 0 : index
    %65 = vector.load %arg6[%c84, %c0_123] : memref<108x44xbf16, #tpu.memory_space<vmem>>, vector<4x44xbf16>
    tpu.vector_store %arg6[%c84, %c0_123], %64 {strides = array<i32>} : memref<108x44xbf16, #tpu.memory_space<vmem>>, vector<4x44xbf16>,
    %c0_124 = arith.constant 0 : index
    %c0_125 = arith.constant 0 : index
    %c0_126 = arith.constant 0 : index
    %c3_127 = arith.constant 3 : index
    %c25_128 = arith.constant 25 : index
    %66 = vector.load %arg2[%c0_124, %c0_125, %c0_126, %c3_127, %c25_128] : memref<1x1x4x8x75xbf16, #tpu.memory_space<vmem>>, vector<1x1x4x1x44xbf16>
    %67 = vector.shape_cast %66 : vector<1x1x4x1x44xbf16> to vector<4x44xbf16>
    %c88 = arith.constant 88 : index
    %c0_129 = arith.constant 0 : index
    %68 = vector.load %arg6[%c88, %c0_129] : memref<108x44xbf16, #tpu.memory_space<vmem>>, vector<4x44xbf16>
    tpu.vector_store %arg6[%c88, %c0_129], %67 {strides = array<i32>} : memref<108x44xbf16, #tpu.memory_space<vmem>>, vector<4x44xbf16>,
    %c0_130 = arith.constant 0 : index
    %c0_131 = arith.constant 0 : index
    %c0_132 = arith.constant 0 : index
    %c2_133 = arith.constant 2 : index
    %c26_134 = arith.constant 26 : index
    %69 = vector.load %arg2[%c0_130, %c0_131, %c0_132, %c2_133, %c26_134] : memref<1x1x4x8x75xbf16, #tpu.memory_space<vmem>>, vector<1x1x4x1x44xbf16>
    %70 = vector.shape_cast %69 : vector<1x1x4x1x44xbf16> to vector<4x44xbf16>
    %c92 = arith.constant 92 : index
    %c0_135 = arith.constant 0 : index
    %71 = vector.load %arg6[%c92, %c0_135] : memref<108x44xbf16, #tpu.memory_space<vmem>>, vector<4x44xbf16>
    tpu.vector_store %arg6[%c92, %c0_135], %70 {strides = array<i32>} : memref<108x44xbf16, #tpu.memory_space<vmem>>, vector<4x44xbf16>,
    %c0_136 = arith.constant 0 : index
    %c0_137 = arith.constant 0 : index
    %c0_138 = arith.constant 0 : index
    %c0_139 = arith.constant 0 : index
    %c30 = arith.constant 30 : index
    %72 = vector.load %arg2[%c0_136, %c0_137, %c0_138, %c0_139, %c30] : memref<1x1x4x8x75xbf16, #tpu.memory_space<vmem>>, vector<1x1x4x1x44xbf16>
    %73 = vector.shape_cast %72 : vector<1x1x4x1x44xbf16> to vector<4x44xbf16>
    %c96 = arith.constant 96 : index
    %c0_140 = arith.constant 0 : index
    %74 = vector.load %arg6[%c96, %c0_140] : memref<108x44xbf16, #tpu.memory_space<vmem>>, vector<4x44xbf16>
    tpu.vector_store %arg6[%c96, %c0_140], %73 {strides = array<i32>} : memref<108x44xbf16, #tpu.memory_space<vmem>>, vector<4x44xbf16>,
    %c0_141 = arith.constant 0 : index
    %c0_142 = arith.constant 0 : index
    %c0_143 = arith.constant 0 : index
    %c1_144 = arith.constant 1 : index
    %c30_145 = arith.constant 30 : index
    %75 = vector.load %arg2[%c0_141, %c0_142, %c0_143, %c1_144, %c30_145] : memref<1x1x4x8x75xbf16, #tpu.memory_space<vmem>>, vector<1x1x4x1x44xbf16>
    %76 = vector.shape_cast %75 : vector<1x1x4x1x44xbf16> to vector<4x44xbf16>
    %c100 = arith.constant 100 : index
    %c0_146 = arith.constant 0 : index
    %77 = vector.load %arg6[%c100, %c0_146] : memref<108x44xbf16, #tpu.memory_space<vmem>>, vector<4x44xbf16>
    tpu.vector_store %arg6[%c100, %c0_146], %76 {strides = array<i32>} : memref<108x44xbf16, #tpu.memory_space<vmem>>, vector<4x44xbf16>,
    %c0_147 = arith.constant 0 : index
    %c0_148 = arith.constant 0 : index
    %c0_149 = arith.constant 0 : index
    %c0_150 = arith.constant 0 : index
    %c31 = arith.constant 31 : index
    %78 = vector.load %arg2[%c0_147, %c0_148, %c0_149, %c0_150, %c31] : memref<1x1x4x8x75xbf16, #tpu.memory_space<vmem>>, vector<1x1x4x1x44xbf16>
    %79 = vector.shape_cast %78 : vector<1x1x4x1x44xbf16> to vector<4x44xbf16>
    %c104 = arith.constant 104 : index
    %c0_151 = arith.constant 0 : index
    %80 = vector.load %arg6[%c104, %c0_151] : memref<108x44xbf16, #tpu.memory_space<vmem>>, vector<4x44xbf16>
    tpu.vector_store %arg6[%c104, %c0_151], %79 {strides = array<i32>} : memref<108x44xbf16, #tpu.memory_space<vmem>>, vector<4x44xbf16>,
    %c0_152 = arith.constant 0 : index
    %c0_153 = arith.constant 0 : index
    %81 = vector.load %arg3[%c0_152, %c0_153] : memref<8x108xbf16, #tpu.memory_space<vmem>>, vector<8x108xbf16>
    %c0_154 = arith.constant 0 : index
    %c0_155 = arith.constant 0 : index
    %82 = vector.load %arg6[%c0_154, %c0_155] : memref<108x44xbf16, #tpu.memory_space<vmem>>, vector<108x44xbf16>
    %cst = arith.constant dense<0.000000e+00> : vector<8x44xf32>
    %83 = tpu.matmul %81, %82, %cst {dimension_numbers = #tpu.dot_dimension_numbers<[1], [0], [0], [1], [0, 0, 1, 1], [], []>} : vector<8x108xbf16>, vector<108x44xbf16>, vector<8x44xf32> -> vector<8x44xf32>
    %c0_156 = arith.constant 0 : index
    %c0_157 = arith.constant 0 : index
    %84 = vector.load %arg4[%c0_156, %c0_157] : memref<8x1xf32, #tpu.memory_space<vmem>>, vector<8x1xf32>
    %85 = vector.broadcast %84 : vector<8x1xf32> to vector<8x44xf32>
    %86 = arith.addf %83, %85 : vector<8x44xf32>
    %cst_158 = arith.constant 0.000000e+00 : f32
    %87 = vector.broadcast %cst_158 : f32 to vector<8x44xf32>
    %88 = arith.maximumf %86, %87 : vector<8x44xf32>
    %89 = arith.truncf %88 : vector<8x44xf32> to vector<8x44xbf16>
    %c0_159 = arith.constant 0 : index
    %c0_160 = arith.constant 0 : index
    %c0_161 = arith.constant 0 : index
    %c0_162 = arith.constant 0 : index
    %90 = vector.load %arg5[%c0_159, %c0_160, %c0_161, %c0_162] : memref<1x1x8x44xbf16, #tpu.memory_space<vmem>>, vector<1x1x8x44xbf16>
    %91 = vector.shape_cast %90 : vector<1x1x8x44xbf16> to vector<8x44xbf16>
    %92 = vector.shape_cast %89 : vector<8x44xbf16> to vector<1x1x8x44xbf16>
    tpu.vector_store %arg5[%c0_159, %c0_160, %c0_161, %c0_162], %92 {strides = array<i32>} : memref<1x1x8x44xbf16, #tpu.memory_space<vmem>>, vector<1x1x8x44xbf16>,
    return
  }
  func.func @transform_0(%arg0: i32, %arg1: i32) -> (i32, i32, i32, i32, i32) {
    %c0_i32 = arith.constant 0 : i32
    %c0_i32_0 = arith.constant 0 : i32
    %c0_i32_1 = arith.constant 0 : i32
    %c0_i32_2 = arith.constant 0 : i32
    return %arg0, %arg1, %c0_i32, %c0_i32_0, %c0_i32_1 : i32, i32, i32, i32, i32
  }
  func.func @transform_1(%arg0: i32, %arg1: i32) -> (i32, i32) {
    %c0_i32 = arith.constant 0 : i32
    %c0_i32_0 = arith.constant 0 : i32
    %c0_i32_1 = arith.constant 0 : i32
    return %c0_i32, %c0_i32_0 : i32, i32
  }
  func.func @transform_2(%arg0: i32, %arg1: i32) -> (i32, i32) {
    %c0_i32 = arith.constant 0 : i32
    %c0_i32_0 = arith.constant 0 : i32
    %c0_i32_1 = arith.constant 0 : i32
    return %c0_i32, %c0_i32_0 : i32, i32
  }
  func.func @transform_3(%arg0: i32, %arg1: i32) -> (i32, i32, i32, i32) {
    %c0_i32 = arith.constant 0 : i32
    %c0_i32_0 = arith.constant 0 : i32
    %c0_i32_1 = arith.constant 0 : i32
    return %arg0, %arg1, %c0_i32, %c0_i32_0 : i32, i32, i32, i32
  }
}

module attributes {stable_mosaic.version = 11 : i64} {
  func.func @_conv_bn_relu_kernel(%arg0: i32, %arg1: i32, %arg2: memref<1x1x8x8x18xbf16, #tpu.memory_space<vmem>>, %arg3: memref<16x216xbf16, #tpu.memory_space<vmem>>, %arg4: memref<16x1xf32, #tpu.memory_space<vmem>>, %arg5: memref<1x1x16x5xbf16, #tpu.memory_space<vmem>>, %arg6: memref<216x5xbf16, #tpu.memory_space<vmem>>) attributes {dimension_semantics = [#tpu.dimension_semantics<parallel>, #tpu.dimension_semantics<arbitrary>], iteration_bounds = array<i64: 2, 2>, scalar_prefetch = 0 : i64, scratch_operands = 1 : i64, tpu.core_type = #tpu.core_type<tc>, window_params = [{transform_indices = @transform_0, window_bounds = array<i64: 1, 1, 8, 8, 18>}, {pipeline_mode = #tpu.pipeline_mode<synchronous>, transform_indices = @transform_1, window_bounds = array<i64: 16, 216>}, {pipeline_mode = #tpu.pipeline_mode<synchronous>, transform_indices = @transform_2, window_bounds = array<i64: 16, 1>}, {transform_indices = @transform_3, window_bounds = array<i64: 1, 1, 16, 5>}]} {
    %c0 = arith.constant 0 : index
    %c0_0 = arith.constant 0 : index
    %c0_1 = arith.constant 0 : index
    %c0_2 = arith.constant 0 : index
    %c0_3 = arith.constant 0 : index
    %0 = vector.load %arg2[%c0, %c0_0, %c0_1, %c0_2, %c0_3] : memref<1x1x8x8x18xbf16, #tpu.memory_space<vmem>>, vector<1x1x8x1x5xbf16>
    %1 = vector.shape_cast %0 : vector<1x1x8x1x5xbf16> to vector<8x5xbf16>
    %c0_4 = arith.constant 0 : index
    %c0_5 = arith.constant 0 : index
    %2 = vector.load %arg6[%c0_4, %c0_5] : memref<216x5xbf16, #tpu.memory_space<vmem>>, vector<8x5xbf16>
    tpu.vector_store %arg6[%c0_4, %c0_5], %1 {strides = array<i32>} : memref<216x5xbf16, #tpu.memory_space<vmem>>, vector<8x5xbf16>,
    %c0_6 = arith.constant 0 : index
    %c0_7 = arith.constant 0 : index
    %c0_8 = arith.constant 0 : index
    %c1 = arith.constant 1 : index
    %c0_9 = arith.constant 0 : index
    %3 = vector.load %arg2[%c0_6, %c0_7, %c0_8, %c1, %c0_9] : memref<1x1x8x8x18xbf16, #tpu.memory_space<vmem>>, vector<1x1x8x1x5xbf16>
    %4 = vector.shape_cast %3 : vector<1x1x8x1x5xbf16> to vector<8x5xbf16>
    %c8 = arith.constant 8 : index
    %c0_10 = arith.constant 0 : index
    %5 = vector.load %arg6[%c8, %c0_10] : memref<216x5xbf16, #tpu.memory_space<vmem>>, vector<8x5xbf16>
    tpu.vector_store %arg6[%c8, %c0_10], %4 {strides = array<i32>} : memref<216x5xbf16, #tpu.memory_space<vmem>>, vector<8x5xbf16>,
    %c0_11 = arith.constant 0 : index
    %c0_12 = arith.constant 0 : index
    %c0_13 = arith.constant 0 : index
    %c0_14 = arith.constant 0 : index
    %c1_15 = arith.constant 1 : index
    %6 = vector.load %arg2[%c0_11, %c0_12, %c0_13, %c0_14, %c1_15] : memref<1x1x8x8x18xbf16, #tpu.memory_space<vmem>>, vector<1x1x8x1x5xbf16>
    %7 = vector.shape_cast %6 : vector<1x1x8x1x5xbf16> to vector<8x5xbf16>
    %c16 = arith.constant 16 : index
    %c0_16 = arith.constant 0 : index
    %8 = vector.load %arg6[%c16, %c0_16] : memref<216x5xbf16, #tpu.memory_space<vmem>>, vector<8x5xbf16>
    tpu.vector_store %arg6[%c16, %c0_16], %7 {strides = array<i32>} : memref<216x5xbf16, #tpu.memory_space<vmem>>, vector<8x5xbf16>,
    %c0_17 = arith.constant 0 : index
    %c0_18 = arith.constant 0 : index
    %c0_19 = arith.constant 0 : index
    %c2 = arith.constant 2 : index
    %c0_20 = arith.constant 0 : index
    %9 = vector.load %arg2[%c0_17, %c0_18, %c0_19, %c2, %c0_20] : memref<1x1x8x8x18xbf16, #tpu.memory_space<vmem>>, vector<1x1x8x1x5xbf16>
    %10 = vector.shape_cast %9 : vector<1x1x8x1x5xbf16> to vector<8x5xbf16>
    %c24 = arith.constant 24 : index
    %c0_21 = arith.constant 0 : index
    %11 = vector.load %arg6[%c24, %c0_21] : memref<216x5xbf16, #tpu.memory_space<vmem>>, vector<8x5xbf16>
    tpu.vector_store %arg6[%c24, %c0_21], %10 {strides = array<i32>} : memref<216x5xbf16, #tpu.memory_space<vmem>>, vector<8x5xbf16>,
    %c0_22 = arith.constant 0 : index
    %c0_23 = arith.constant 0 : index
    %c0_24 = arith.constant 0 : index
    %c3 = arith.constant 3 : index
    %c0_25 = arith.constant 0 : index
    %12 = vector.load %arg2[%c0_22, %c0_23, %c0_24, %c3, %c0_25] : memref<1x1x8x8x18xbf16, #tpu.memory_space<vmem>>, vector<1x1x8x1x5xbf16>
    %13 = vector.shape_cast %12 : vector<1x1x8x1x5xbf16> to vector<8x5xbf16>
    %c32 = arith.constant 32 : index
    %c0_26 = arith.constant 0 : index
    %14 = vector.load %arg6[%c32, %c0_26] : memref<216x5xbf16, #tpu.memory_space<vmem>>, vector<8x5xbf16>
    tpu.vector_store %arg6[%c32, %c0_26], %13 {strides = array<i32>} : memref<216x5xbf16, #tpu.memory_space<vmem>>, vector<8x5xbf16>,
    %c0_27 = arith.constant 0 : index
    %c0_28 = arith.constant 0 : index
    %c0_29 = arith.constant 0 : index
    %c2_30 = arith.constant 2 : index
    %c1_31 = arith.constant 1 : index
    %15 = vector.load %arg2[%c0_27, %c0_28, %c0_29, %c2_30, %c1_31] : memref<1x1x8x8x18xbf16, #tpu.memory_space<vmem>>, vector<1x1x8x1x5xbf16>
    %16 = vector.shape_cast %15 : vector<1x1x8x1x5xbf16> to vector<8x5xbf16>
    %c40 = arith.constant 40 : index
    %c0_32 = arith.constant 0 : index
    %17 = vector.load %arg6[%c40, %c0_32] : memref<216x5xbf16, #tpu.memory_space<vmem>>, vector<8x5xbf16>
    tpu.vector_store %arg6[%c40, %c0_32], %16 {strides = array<i32>} : memref<216x5xbf16, #tpu.memory_space<vmem>>, vector<8x5xbf16>,
    %c0_33 = arith.constant 0 : index
    %c0_34 = arith.constant 0 : index
    %c0_35 = arith.constant 0 : index
    %c0_36 = arith.constant 0 : index
    %c3_37 = arith.constant 3 : index
    %18 = vector.load %arg2[%c0_33, %c0_34, %c0_35, %c0_36, %c3_37] : memref<1x1x8x8x18xbf16, #tpu.memory_space<vmem>>, vector<1x1x8x1x5xbf16>
    %19 = vector.shape_cast %18 : vector<1x1x8x1x5xbf16> to vector<8x5xbf16>
    %c48 = arith.constant 48 : index
    %c0_38 = arith.constant 0 : index
    %20 = vector.load %arg6[%c48, %c0_38] : memref<216x5xbf16, #tpu.memory_space<vmem>>, vector<8x5xbf16>
    tpu.vector_store %arg6[%c48, %c0_38], %19 {strides = array<i32>} : memref<216x5xbf16, #tpu.memory_space<vmem>>, vector<8x5xbf16>,
    %c0_39 = arith.constant 0 : index
    %c0_40 = arith.constant 0 : index
    %c0_41 = arith.constant 0 : index
    %c1_42 = arith.constant 1 : index
    %c3_43 = arith.constant 3 : index
    %21 = vector.load %arg2[%c0_39, %c0_40, %c0_41, %c1_42, %c3_43] : memref<1x1x8x8x18xbf16, #tpu.memory_space<vmem>>, vector<1x1x8x1x5xbf16>
    %22 = vector.shape_cast %21 : vector<1x1x8x1x5xbf16> to vector<8x5xbf16>
    %c56 = arith.constant 56 : index
    %c0_44 = arith.constant 0 : index
    %23 = vector.load %arg6[%c56, %c0_44] : memref<216x5xbf16, #tpu.memory_space<vmem>>, vector<8x5xbf16>
    tpu.vector_store %arg6[%c56, %c0_44], %22 {strides = array<i32>} : memref<216x5xbf16, #tpu.memory_space<vmem>>, vector<8x5xbf16>,
    %c0_45 = arith.constant 0 : index
    %c0_46 = arith.constant 0 : index
    %c0_47 = arith.constant 0 : index
    %c0_48 = arith.constant 0 : index
    %c4 = arith.constant 4 : index
    %24 = vector.load %arg2[%c0_45, %c0_46, %c0_47, %c0_48, %c4] : memref<1x1x8x8x18xbf16, #tpu.memory_space<vmem>>, vector<1x1x8x1x5xbf16>
    %25 = vector.shape_cast %24 : vector<1x1x8x1x5xbf16> to vector<8x5xbf16>
    %c64 = arith.constant 64 : index
    %c0_49 = arith.constant 0 : index
    %26 = vector.load %arg6[%c64, %c0_49] : memref<216x5xbf16, #tpu.memory_space<vmem>>, vector<8x5xbf16>
    tpu.vector_store %arg6[%c64, %c0_49], %25 {strides = array<i32>} : memref<216x5xbf16, #tpu.memory_space<vmem>>, vector<8x5xbf16>,
    %c0_50 = arith.constant 0 : index
    %c0_51 = arith.constant 0 : index
    %c0_52 = arith.constant 0 : index
    %c4_53 = arith.constant 4 : index
    %c0_54 = arith.constant 0 : index
    %27 = vector.load %arg2[%c0_50, %c0_51, %c0_52, %c4_53, %c0_54] : memref<1x1x8x8x18xbf16, #tpu.memory_space<vmem>>, vector<1x1x8x1x5xbf16>
    %28 = vector.shape_cast %27 : vector<1x1x8x1x5xbf16> to vector<8x5xbf16>
    %c72 = arith.constant 72 : index
    %c0_55 = arith.constant 0 : index
    %29 = vector.load %arg6[%c72, %c0_55] : memref<216x5xbf16, #tpu.memory_space<vmem>>, vector<8x5xbf16>
    tpu.vector_store %arg6[%c72, %c0_55], %28 {strides = array<i32>} : memref<216x5xbf16, #tpu.memory_space<vmem>>, vector<8x5xbf16>,
    %c0_56 = arith.constant 0 : index
    %c0_57 = arith.constant 0 : index
    %c0_58 = arith.constant 0 : index
    %c5 = arith.constant 5 : index
    %c0_59 = arith.constant 0 : index
    %30 = vector.load %arg2[%c0_56, %c0_57, %c0_58, %c5, %c0_59] : memref<1x1x8x8x18xbf16, #tpu.memory_space<vmem>>, vector<1x1x8x1x5xbf16>
    %31 = vector.shape_cast %30 : vector<1x1x8x1x5xbf16> to vector<8x5xbf16>
    %c80 = arith.constant 80 : index
    %c0_60 = arith.constant 0 : index
    %32 = vector.load %arg6[%c80, %c0_60] : memref<216x5xbf16, #tpu.memory_space<vmem>>, vector<8x5xbf16>
    tpu.vector_store %arg6[%c80, %c0_60], %31 {strides = array<i32>} : memref<216x5xbf16, #tpu.memory_space<vmem>>, vector<8x5xbf16>,
    %c0_61 = arith.constant 0 : index
    %c0_62 = arith.constant 0 : index
    %c0_63 = arith.constant 0 : index
    %c4_64 = arith.constant 4 : index
    %c1_65 = arith.constant 1 : index
    %33 = vector.load %arg2[%c0_61, %c0_62, %c0_63, %c4_64, %c1_65] : memref<1x1x8x8x18xbf16, #tpu.memory_space<vmem>>, vector<1x1x8x1x5xbf16>
    %34 = vector.shape_cast %33 : vector<1x1x8x1x5xbf16> to vector<8x5xbf16>
    %c88 = arith.constant 88 : index
    %c0_66 = arith.constant 0 : index
    %35 = vector.load %arg6[%c88, %c0_66] : memref<216x5xbf16, #tpu.memory_space<vmem>>, vector<8x5xbf16>
    tpu.vector_store %arg6[%c88, %c0_66], %34 {strides = array<i32>} : memref<216x5xbf16, #tpu.memory_space<vmem>>, vector<8x5xbf16>,
    %c0_67 = arith.constant 0 : index
    %c0_68 = arith.constant 0 : index
    %c0_69 = arith.constant 0 : index
    %c6 = arith.constant 6 : index
    %c0_70 = arith.constant 0 : index
    %36 = vector.load %arg2[%c0_67, %c0_68, %c0_69, %c6, %c0_70] : memref<1x1x8x8x18xbf16, #tpu.memory_space<vmem>>, vector<1x1x8x1x5xbf16>
    %37 = vector.shape_cast %36 : vector<1x1x8x1x5xbf16> to vector<8x5xbf16>
    %c96 = arith.constant 96 : index
    %c0_71 = arith.constant 0 : index
    %38 = vector.load %arg6[%c96, %c0_71] : memref<216x5xbf16, #tpu.memory_space<vmem>>, vector<8x5xbf16>
    tpu.vector_store %arg6[%c96, %c0_71], %37 {strides = array<i32>} : memref<216x5xbf16, #tpu.memory_space<vmem>>, vector<8x5xbf16>,
    %c0_72 = arith.constant 0 : index
    %c0_73 = arith.constant 0 : index
    %c0_74 = arith.constant 0 : index
    %c7 = arith.constant 7 : index
    %c0_75 = arith.constant 0 : index
    %39 = vector.load %arg2[%c0_72, %c0_73, %c0_74, %c7, %c0_75] : memref<1x1x8x8x18xbf16, #tpu.memory_space<vmem>>, vector<1x1x8x1x5xbf16>
    %40 = vector.shape_cast %39 : vector<1x1x8x1x5xbf16> to vector<8x5xbf16>
    %c104 = arith.constant 104 : index
    %c0_76 = arith.constant 0 : index
    %41 = vector.load %arg6[%c104, %c0_76] : memref<216x5xbf16, #tpu.memory_space<vmem>>, vector<8x5xbf16>
    tpu.vector_store %arg6[%c104, %c0_76], %40 {strides = array<i32>} : memref<216x5xbf16, #tpu.memory_space<vmem>>, vector<8x5xbf16>,
    %c0_77 = arith.constant 0 : index
    %c0_78 = arith.constant 0 : index
    %c0_79 = arith.constant 0 : index
    %c6_80 = arith.constant 6 : index
    %c1_81 = arith.constant 1 : index
    %42 = vector.load %arg2[%c0_77, %c0_78, %c0_79, %c6_80, %c1_81] : memref<1x1x8x8x18xbf16, #tpu.memory_space<vmem>>, vector<1x1x8x1x5xbf16>
    %43 = vector.shape_cast %42 : vector<1x1x8x1x5xbf16> to vector<8x5xbf16>
    %c112 = arith.constant 112 : index
    %c0_82 = arith.constant 0 : index
    %44 = vector.load %arg6[%c112, %c0_82] : memref<216x5xbf16, #tpu.memory_space<vmem>>, vector<8x5xbf16>
    tpu.vector_store %arg6[%c112, %c0_82], %43 {strides = array<i32>} : memref<216x5xbf16, #tpu.memory_space<vmem>>, vector<8x5xbf16>,
    %c0_83 = arith.constant 0 : index
    %c0_84 = arith.constant 0 : index
    %c0_85 = arith.constant 0 : index
    %c4_86 = arith.constant 4 : index
    %c3_87 = arith.constant 3 : index
    %45 = vector.load %arg2[%c0_83, %c0_84, %c0_85, %c4_86, %c3_87] : memref<1x1x8x8x18xbf16, #tpu.memory_space<vmem>>, vector<1x1x8x1x5xbf16>
    %46 = vector.shape_cast %45 : vector<1x1x8x1x5xbf16> to vector<8x5xbf16>
    %c120 = arith.constant 120 : index
    %c0_88 = arith.constant 0 : index
    %47 = vector.load %arg6[%c120, %c0_88] : memref<216x5xbf16, #tpu.memory_space<vmem>>, vector<8x5xbf16>
    tpu.vector_store %arg6[%c120, %c0_88], %46 {strides = array<i32>} : memref<216x5xbf16, #tpu.memory_space<vmem>>, vector<8x5xbf16>,
    %c0_89 = arith.constant 0 : index
    %c0_90 = arith.constant 0 : index
    %c0_91 = arith.constant 0 : index
    %c5_92 = arith.constant 5 : index
    %c3_93 = arith.constant 3 : index
    %48 = vector.load %arg2[%c0_89, %c0_90, %c0_91, %c5_92, %c3_93] : memref<1x1x8x8x18xbf16, #tpu.memory_space<vmem>>, vector<1x1x8x1x5xbf16>
    %49 = vector.shape_cast %48 : vector<1x1x8x1x5xbf16> to vector<8x5xbf16>
    %c128 = arith.constant 128 : index
    %c0_94 = arith.constant 0 : index
    %50 = vector.load %arg6[%c128, %c0_94] : memref<216x5xbf16, #tpu.memory_space<vmem>>, vector<8x5xbf16>
    tpu.vector_store %arg6[%c128, %c0_94], %49 {strides = array<i32>} : memref<216x5xbf16, #tpu.memory_space<vmem>>, vector<8x5xbf16>,
    %c0_95 = arith.constant 0 : index
    %c0_96 = arith.constant 0 : index
    %c0_97 = arith.constant 0 : index
    %c4_98 = arith.constant 4 : index
    %c4_99 = arith.constant 4 : index
    %51 = vector.load %arg2[%c0_95, %c0_96, %c0_97, %c4_98, %c4_99] : memref<1x1x8x8x18xbf16, #tpu.memory_space<vmem>>, vector<1x1x8x1x5xbf16>
    %52 = vector.shape_cast %51 : vector<1x1x8x1x5xbf16> to vector<8x5xbf16>
    %c136 = arith.constant 136 : index
    %c0_100 = arith.constant 0 : index
    %53 = vector.load %arg6[%c136, %c0_100] : memref<216x5xbf16, #tpu.memory_space<vmem>>, vector<8x5xbf16>
    tpu.vector_store %arg6[%c136, %c0_100], %52 {strides = array<i32>} : memref<216x5xbf16, #tpu.memory_space<vmem>>, vector<8x5xbf16>,
    %c0_101 = arith.constant 0 : index
    %c0_102 = arith.constant 0 : index
    %c0_103 = arith.constant 0 : index
    %c0_104 = arith.constant 0 : index
    %c9 = arith.constant 9 : index
    %54 = vector.load %arg2[%c0_101, %c0_102, %c0_103, %c0_104, %c9] : memref<1x1x8x8x18xbf16, #tpu.memory_space<vmem>>, vector<1x1x8x1x5xbf16>
    %55 = vector.shape_cast %54 : vector<1x1x8x1x5xbf16> to vector<8x5xbf16>
    %c144 = arith.constant 144 : index
    %c0_105 = arith.constant 0 : index
    %56 = vector.load %arg6[%c144, %c0_105] : memref<216x5xbf16, #tpu.memory_space<vmem>>, vector<8x5xbf16>
    tpu.vector_store %arg6[%c144, %c0_105], %55 {strides = array<i32>} : memref<216x5xbf16, #tpu.memory_space<vmem>>, vector<8x5xbf16>,
    %c0_106 = arith.constant 0 : index
    %c0_107 = arith.constant 0 : index
    %c0_108 = arith.constant 0 : index
    %c1_109 = arith.constant 1 : index
    %c9_110 = arith.constant 9 : index
    %57 = vector.load %arg2[%c0_106, %c0_107, %c0_108, %c1_109, %c9_110] : memref<1x1x8x8x18xbf16, #tpu.memory_space<vmem>>, vector<1x1x8x1x5xbf16>
    %58 = vector.shape_cast %57 : vector<1x1x8x1x5xbf16> to vector<8x5xbf16>
    %c152 = arith.constant 152 : index
    %c0_111 = arith.constant 0 : index
    %59 = vector.load %arg6[%c152, %c0_111] : memref<216x5xbf16, #tpu.memory_space<vmem>>, vector<8x5xbf16>
    tpu.vector_store %arg6[%c152, %c0_111], %58 {strides = array<i32>} : memref<216x5xbf16, #tpu.memory_space<vmem>>, vector<8x5xbf16>,
    %c0_112 = arith.constant 0 : index
    %c0_113 = arith.constant 0 : index
    %c0_114 = arith.constant 0 : index
    %c0_115 = arith.constant 0 : index
    %c10 = arith.constant 10 : index
    %60 = vector.load %arg2[%c0_112, %c0_113, %c0_114, %c0_115, %c10] : memref<1x1x8x8x18xbf16, #tpu.memory_space<vmem>>, vector<1x1x8x1x5xbf16>
    %61 = vector.shape_cast %60 : vector<1x1x8x1x5xbf16> to vector<8x5xbf16>
    %c160 = arith.constant 160 : index
    %c0_116 = arith.constant 0 : index
    %62 = vector.load %arg6[%c160, %c0_116] : memref<216x5xbf16, #tpu.memory_space<vmem>>, vector<8x5xbf16>
    tpu.vector_store %arg6[%c160, %c0_116], %61 {strides = array<i32>} : memref<216x5xbf16, #tpu.memory_space<vmem>>, vector<8x5xbf16>,
    %c0_117 = arith.constant 0 : index
    %c0_118 = arith.constant 0 : index
    %c0_119 = arith.constant 0 : index
    %c2_120 = arith.constant 2 : index
    %c9_121 = arith.constant 9 : index
    %63 = vector.load %arg2[%c0_117, %c0_118, %c0_119, %c2_120, %c9_121] : memref<1x1x8x8x18xbf16, #tpu.memory_space<vmem>>, vector<1x1x8x1x5xbf16>
    %64 = vector.shape_cast %63 : vector<1x1x8x1x5xbf16> to vector<8x5xbf16>
    %c168 = arith.constant 168 : index
    %c0_122 = arith.constant 0 : index
    %65 = vector.load %arg6[%c168, %c0_122] : memref<216x5xbf16, #tpu.memory_space<vmem>>, vector<8x5xbf16>
    tpu.vector_store %arg6[%c168, %c0_122], %64 {strides = array<i32>} : memref<216x5xbf16, #tpu.memory_space<vmem>>, vector<8x5xbf16>,
    %c0_123 = arith.constant 0 : index
    %c0_124 = arith.constant 0 : index
    %c0_125 = arith.constant 0 : index
    %c3_126 = arith.constant 3 : index
    %c9_127 = arith.constant 9 : index
    %66 = vector.load %arg2[%c0_123, %c0_124, %c0_125, %c3_126, %c9_127] : memref<1x1x8x8x18xbf16, #tpu.memory_space<vmem>>, vector<1x1x8x1x5xbf16>
    %67 = vector.shape_cast %66 : vector<1x1x8x1x5xbf16> to vector<8x5xbf16>
    %c176 = arith.constant 176 : index
    %c0_128 = arith.constant 0 : index
    %68 = vector.load %arg6[%c176, %c0_128] : memref<216x5xbf16, #tpu.memory_space<vmem>>, vector<8x5xbf16>
    tpu.vector_store %arg6[%c176, %c0_128], %67 {strides = array<i32>} : memref<216x5xbf16, #tpu.memory_space<vmem>>, vector<8x5xbf16>,
    %c0_129 = arith.constant 0 : index
    %c0_130 = arith.constant 0 : index
    %c0_131 = arith.constant 0 : index
    %c2_132 = arith.constant 2 : index
    %c10_133 = arith.constant 10 : index
    %69 = vector.load %arg2[%c0_129, %c0_130, %c0_131, %c2_132, %c10_133] : memref<1x1x8x8x18xbf16, #tpu.memory_space<vmem>>, vector<1x1x8x1x5xbf16>
    %70 = vector.shape_cast %69 : vector<1x1x8x1x5xbf16> to vector<8x5xbf16>
    %c184 = arith.constant 184 : index
    %c0_134 = arith.constant 0 : index
    %71 = vector.load %arg6[%c184, %c0_134] : memref<216x5xbf16, #tpu.memory_space<vmem>>, vector<8x5xbf16>
    tpu.vector_store %arg6[%c184, %c0_134], %70 {strides = array<i32>} : memref<216x5xbf16, #tpu.memory_space<vmem>>, vector<8x5xbf16>,
    %c0_135 = arith.constant 0 : index
    %c0_136 = arith.constant 0 : index
    %c0_137 = arith.constant 0 : index
    %c0_138 = arith.constant 0 : index
    %c12 = arith.constant 12 : index
    %72 = vector.load %arg2[%c0_135, %c0_136, %c0_137, %c0_138, %c12] : memref<1x1x8x8x18xbf16, #tpu.memory_space<vmem>>, vector<1x1x8x1x5xbf16>
    %73 = vector.shape_cast %72 : vector<1x1x8x1x5xbf16> to vector<8x5xbf16>
    %c192 = arith.constant 192 : index
    %c0_139 = arith.constant 0 : index
    %74 = vector.load %arg6[%c192, %c0_139] : memref<216x5xbf16, #tpu.memory_space<vmem>>, vector<8x5xbf16>
    tpu.vector_store %arg6[%c192, %c0_139], %73 {strides = array<i32>} : memref<216x5xbf16, #tpu.memory_space<vmem>>, vector<8x5xbf16>,
    %c0_140 = arith.constant 0 : index
    %c0_141 = arith.constant 0 : index
    %c0_142 = arith.constant 0 : index
    %c1_143 = arith.constant 1 : index
    %c12_144 = arith.constant 12 : index
    %75 = vector.load %arg2[%c0_140, %c0_141, %c0_142, %c1_143, %c12_144] : memref<1x1x8x8x18xbf16, #tpu.memory_space<vmem>>, vector<1x1x8x1x5xbf16>
    %76 = vector.shape_cast %75 : vector<1x1x8x1x5xbf16> to vector<8x5xbf16>
    %c200 = arith.constant 200 : index
    %c0_145 = arith.constant 0 : index
    %77 = vector.load %arg6[%c200, %c0_145] : memref<216x5xbf16, #tpu.memory_space<vmem>>, vector<8x5xbf16>
    tpu.vector_store %arg6[%c200, %c0_145], %76 {strides = array<i32>} : memref<216x5xbf16, #tpu.memory_space<vmem>>, vector<8x5xbf16>,
    %c0_146 = arith.constant 0 : index
    %c0_147 = arith.constant 0 : index
    %c0_148 = arith.constant 0 : index
    %c0_149 = arith.constant 0 : index
    %c13 = arith.constant 13 : index
    %78 = vector.load %arg2[%c0_146, %c0_147, %c0_148, %c0_149, %c13] : memref<1x1x8x8x18xbf16, #tpu.memory_space<vmem>>, vector<1x1x8x1x5xbf16>
    %79 = vector.shape_cast %78 : vector<1x1x8x1x5xbf16> to vector<8x5xbf16>
    %c208 = arith.constant 208 : index
    %c0_150 = arith.constant 0 : index
    %80 = vector.load %arg6[%c208, %c0_150] : memref<216x5xbf16, #tpu.memory_space<vmem>>, vector<8x5xbf16>
    tpu.vector_store %arg6[%c208, %c0_150], %79 {strides = array<i32>} : memref<216x5xbf16, #tpu.memory_space<vmem>>, vector<8x5xbf16>,
    %c0_151 = arith.constant 0 : index
    %c0_152 = arith.constant 0 : index
    %81 = vector.load %arg3[%c0_151, %c0_152] : memref<16x216xbf16, #tpu.memory_space<vmem>>, vector<16x216xbf16>
    %c0_153 = arith.constant 0 : index
    %c0_154 = arith.constant 0 : index
    %82 = vector.load %arg6[%c0_153, %c0_154] : memref<216x5xbf16, #tpu.memory_space<vmem>>, vector<216x5xbf16>
    %cst = arith.constant dense<0.000000e+00> : vector<16x5xf32>
    %83 = tpu.matmul %81, %82, %cst {dimension_numbers = #tpu.dot_dimension_numbers<[1], [0], [0], [1], [0, 0, 1, 1], [], []>} : vector<16x216xbf16>, vector<216x5xbf16>, vector<16x5xf32> -> vector<16x5xf32>
    %c0_155 = arith.constant 0 : index
    %c0_156 = arith.constant 0 : index
    %84 = vector.load %arg4[%c0_155, %c0_156] : memref<16x1xf32, #tpu.memory_space<vmem>>, vector<16x1xf32>
    %85 = vector.broadcast %84 : vector<16x1xf32> to vector<16x5xf32>
    %86 = arith.addf %83, %85 : vector<16x5xf32>
    %cst_157 = arith.constant 0.000000e+00 : f32
    %87 = vector.broadcast %cst_157 : f32 to vector<16x5xf32>
    %88 = arith.maximumf %86, %87 : vector<16x5xf32>
    %89 = arith.truncf %88 : vector<16x5xf32> to vector<16x5xbf16>
    %c0_158 = arith.constant 0 : index
    %c0_159 = arith.constant 0 : index
    %c0_160 = arith.constant 0 : index
    %c0_161 = arith.constant 0 : index
    %90 = vector.load %arg5[%c0_158, %c0_159, %c0_160, %c0_161] : memref<1x1x16x5xbf16, #tpu.memory_space<vmem>>, vector<1x1x16x5xbf16>
    %91 = vector.shape_cast %90 : vector<1x1x16x5xbf16> to vector<16x5xbf16>
    %92 = vector.shape_cast %89 : vector<16x5xbf16> to vector<1x1x16x5xbf16>
    tpu.vector_store %arg5[%c0_158, %c0_159, %c0_160, %c0_161], %92 {strides = array<i32>} : memref<1x1x16x5xbf16, #tpu.memory_space<vmem>>, vector<1x1x16x5xbf16>,
    return
  }
  func.func @transform_0(%arg0: i32, %arg1: i32) -> (i32, i32, i32, i32, i32) {
    %c0_i32 = arith.constant 0 : i32
    %c0_i32_0 = arith.constant 0 : i32
    %c0_i32_1 = arith.constant 0 : i32
    %c0_i32_2 = arith.constant 0 : i32
    return %arg0, %arg1, %c0_i32, %c0_i32_0, %c0_i32_1 : i32, i32, i32, i32, i32
  }
  func.func @transform_1(%arg0: i32, %arg1: i32) -> (i32, i32) {
    %c0_i32 = arith.constant 0 : i32
    %c0_i32_0 = arith.constant 0 : i32
    %c0_i32_1 = arith.constant 0 : i32
    return %c0_i32, %c0_i32_0 : i32, i32
  }
  func.func @transform_2(%arg0: i32, %arg1: i32) -> (i32, i32) {
    %c0_i32 = arith.constant 0 : i32
    %c0_i32_0 = arith.constant 0 : i32
    %c0_i32_1 = arith.constant 0 : i32
    return %c0_i32, %c0_i32_0 : i32, i32
  }
  func.func @transform_3(%arg0: i32, %arg1: i32) -> (i32, i32, i32, i32) {
    %c0_i32 = arith.constant 0 : i32
    %c0_i32_0 = arith.constant 0 : i32
    %c0_i32_1 = arith.constant 0 : i32
    return %arg0, %arg1, %c0_i32, %c0_i32_0 : i32, i32, i32, i32
  }
}

module attributes {stable_mosaic.version = 11 : i64} {
  func.func @_conv_bn_relu_kernel(%arg0: i32, %arg1: i32, %arg2: memref<1x1x16x8x8xbf16, #tpu.memory_space<vmem>>, %arg3: memref<8x432xbf16, #tpu.memory_space<vmem>>, %arg4: memref<8x1xf32, #tpu.memory_space<vmem>>, %arg5: memref<1x1x8x1xbf16, #tpu.memory_space<vmem>>, %arg6: memref<432x1xbf16, #tpu.memory_space<vmem>>) attributes {dimension_semantics = [#tpu.dimension_semantics<parallel>, #tpu.dimension_semantics<arbitrary>], iteration_bounds = array<i64: 2, 1>, scalar_prefetch = 0 : i64, scratch_operands = 1 : i64, tpu.core_type = #tpu.core_type<tc>, window_params = [{transform_indices = @transform_0, window_bounds = array<i64: 1, 1, 16, 8, 8>}, {pipeline_mode = #tpu.pipeline_mode<synchronous>, transform_indices = @transform_1, window_bounds = array<i64: 8, 432>}, {pipeline_mode = #tpu.pipeline_mode<synchronous>, transform_indices = @transform_2, window_bounds = array<i64: 8, 1>}, {transform_indices = @transform_3, window_bounds = array<i64: 1, 1, 8, 1>}]} {
    %c0 = arith.constant 0 : index
    %c0_0 = arith.constant 0 : index
    %c0_1 = arith.constant 0 : index
    %c0_2 = arith.constant 0 : index
    %c0_3 = arith.constant 0 : index
    %0 = vector.load %arg2[%c0, %c0_0, %c0_1, %c0_2, %c0_3] : memref<1x1x16x8x8xbf16, #tpu.memory_space<vmem>>, vector<1x1x16x1x1xbf16>
    %1 = vector.shape_cast %0 : vector<1x1x16x1x1xbf16> to vector<16x1xbf16>
    %c0_4 = arith.constant 0 : index
    %c0_5 = arith.constant 0 : index
    %2 = vector.load %arg6[%c0_4, %c0_5] : memref<432x1xbf16, #tpu.memory_space<vmem>>, vector<16x1xbf16>
    tpu.vector_store %arg6[%c0_4, %c0_5], %1 {strides = array<i32>} : memref<432x1xbf16, #tpu.memory_space<vmem>>, vector<16x1xbf16>,
    %c0_6 = arith.constant 0 : index
    %c0_7 = arith.constant 0 : index
    %c0_8 = arith.constant 0 : index
    %c1 = arith.constant 1 : index
    %c0_9 = arith.constant 0 : index
    %3 = vector.load %arg2[%c0_6, %c0_7, %c0_8, %c1, %c0_9] : memref<1x1x16x8x8xbf16, #tpu.memory_space<vmem>>, vector<1x1x16x1x1xbf16>
    %4 = vector.shape_cast %3 : vector<1x1x16x1x1xbf16> to vector<16x1xbf16>
    %c16 = arith.constant 16 : index
    %c0_10 = arith.constant 0 : index
    %5 = vector.load %arg6[%c16, %c0_10] : memref<432x1xbf16, #tpu.memory_space<vmem>>, vector<16x1xbf16>
    tpu.vector_store %arg6[%c16, %c0_10], %4 {strides = array<i32>} : memref<432x1xbf16, #tpu.memory_space<vmem>>, vector<16x1xbf16>,
    %c0_11 = arith.constant 0 : index
    %c0_12 = arith.constant 0 : index
    %c0_13 = arith.constant 0 : index
    %c0_14 = arith.constant 0 : index
    %c1_15 = arith.constant 1 : index
    %6 = vector.load %arg2[%c0_11, %c0_12, %c0_13, %c0_14, %c1_15] : memref<1x1x16x8x8xbf16, #tpu.memory_space<vmem>>, vector<1x1x16x1x1xbf16>
    %7 = vector.shape_cast %6 : vector<1x1x16x1x1xbf16> to vector<16x1xbf16>
    %c32 = arith.constant 32 : index
    %c0_16 = arith.constant 0 : index
    %8 = vector.load %arg6[%c32, %c0_16] : memref<432x1xbf16, #tpu.memory_space<vmem>>, vector<16x1xbf16>
    tpu.vector_store %arg6[%c32, %c0_16], %7 {strides = array<i32>} : memref<432x1xbf16, #tpu.memory_space<vmem>>, vector<16x1xbf16>,
    %c0_17 = arith.constant 0 : index
    %c0_18 = arith.constant 0 : index
    %c0_19 = arith.constant 0 : index
    %c2 = arith.constant 2 : index
    %c0_20 = arith.constant 0 : index
    %9 = vector.load %arg2[%c0_17, %c0_18, %c0_19, %c2, %c0_20] : memref<1x1x16x8x8xbf16, #tpu.memory_space<vmem>>, vector<1x1x16x1x1xbf16>
    %10 = vector.shape_cast %9 : vector<1x1x16x1x1xbf16> to vector<16x1xbf16>
    %c48 = arith.constant 48 : index
    %c0_21 = arith.constant 0 : index
    %11 = vector.load %arg6[%c48, %c0_21] : memref<432x1xbf16, #tpu.memory_space<vmem>>, vector<16x1xbf16>
    tpu.vector_store %arg6[%c48, %c0_21], %10 {strides = array<i32>} : memref<432x1xbf16, #tpu.memory_space<vmem>>, vector<16x1xbf16>,
    %c0_22 = arith.constant 0 : index
    %c0_23 = arith.constant 0 : index
    %c0_24 = arith.constant 0 : index
    %c3 = arith.constant 3 : index
    %c0_25 = arith.constant 0 : index
    %12 = vector.load %arg2[%c0_22, %c0_23, %c0_24, %c3, %c0_25] : memref<1x1x16x8x8xbf16, #tpu.memory_space<vmem>>, vector<1x1x16x1x1xbf16>
    %13 = vector.shape_cast %12 : vector<1x1x16x1x1xbf16> to vector<16x1xbf16>
    %c64 = arith.constant 64 : index
    %c0_26 = arith.constant 0 : index
    %14 = vector.load %arg6[%c64, %c0_26] : memref<432x1xbf16, #tpu.memory_space<vmem>>, vector<16x1xbf16>
    tpu.vector_store %arg6[%c64, %c0_26], %13 {strides = array<i32>} : memref<432x1xbf16, #tpu.memory_space<vmem>>, vector<16x1xbf16>,
    %c0_27 = arith.constant 0 : index
    %c0_28 = arith.constant 0 : index
    %c0_29 = arith.constant 0 : index
    %c2_30 = arith.constant 2 : index
    %c1_31 = arith.constant 1 : index
    %15 = vector.load %arg2[%c0_27, %c0_28, %c0_29, %c2_30, %c1_31] : memref<1x1x16x8x8xbf16, #tpu.memory_space<vmem>>, vector<1x1x16x1x1xbf16>
    %16 = vector.shape_cast %15 : vector<1x1x16x1x1xbf16> to vector<16x1xbf16>
    %c80 = arith.constant 80 : index
    %c0_32 = arith.constant 0 : index
    %17 = vector.load %arg6[%c80, %c0_32] : memref<432x1xbf16, #tpu.memory_space<vmem>>, vector<16x1xbf16>
    tpu.vector_store %arg6[%c80, %c0_32], %16 {strides = array<i32>} : memref<432x1xbf16, #tpu.memory_space<vmem>>, vector<16x1xbf16>,
    %c0_33 = arith.constant 0 : index
    %c0_34 = arith.constant 0 : index
    %c0_35 = arith.constant 0 : index
    %c0_36 = arith.constant 0 : index
    %c2_37 = arith.constant 2 : index
    %18 = vector.load %arg2[%c0_33, %c0_34, %c0_35, %c0_36, %c2_37] : memref<1x1x16x8x8xbf16, #tpu.memory_space<vmem>>, vector<1x1x16x1x1xbf16>
    %19 = vector.shape_cast %18 : vector<1x1x16x1x1xbf16> to vector<16x1xbf16>
    %c96 = arith.constant 96 : index
    %c0_38 = arith.constant 0 : index
    %20 = vector.load %arg6[%c96, %c0_38] : memref<432x1xbf16, #tpu.memory_space<vmem>>, vector<16x1xbf16>
    tpu.vector_store %arg6[%c96, %c0_38], %19 {strides = array<i32>} : memref<432x1xbf16, #tpu.memory_space<vmem>>, vector<16x1xbf16>,
    %c0_39 = arith.constant 0 : index
    %c0_40 = arith.constant 0 : index
    %c0_41 = arith.constant 0 : index
    %c1_42 = arith.constant 1 : index
    %c2_43 = arith.constant 2 : index
    %21 = vector.load %arg2[%c0_39, %c0_40, %c0_41, %c1_42, %c2_43] : memref<1x1x16x8x8xbf16, #tpu.memory_space<vmem>>, vector<1x1x16x1x1xbf16>
    %22 = vector.shape_cast %21 : vector<1x1x16x1x1xbf16> to vector<16x1xbf16>
    %c112 = arith.constant 112 : index
    %c0_44 = arith.constant 0 : index
    %23 = vector.load %arg6[%c112, %c0_44] : memref<432x1xbf16, #tpu.memory_space<vmem>>, vector<16x1xbf16>
    tpu.vector_store %arg6[%c112, %c0_44], %22 {strides = array<i32>} : memref<432x1xbf16, #tpu.memory_space<vmem>>, vector<16x1xbf16>,
    %c0_45 = arith.constant 0 : index
    %c0_46 = arith.constant 0 : index
    %c0_47 = arith.constant 0 : index
    %c0_48 = arith.constant 0 : index
    %c3_49 = arith.constant 3 : index
    %24 = vector.load %arg2[%c0_45, %c0_46, %c0_47, %c0_48, %c3_49] : memref<1x1x16x8x8xbf16, #tpu.memory_space<vmem>>, vector<1x1x16x1x1xbf16>
    %25 = vector.shape_cast %24 : vector<1x1x16x1x1xbf16> to vector<16x1xbf16>
    %c128 = arith.constant 128 : index
    %c0_50 = arith.constant 0 : index
    %26 = vector.load %arg6[%c128, %c0_50] : memref<432x1xbf16, #tpu.memory_space<vmem>>, vector<16x1xbf16>
    tpu.vector_store %arg6[%c128, %c0_50], %25 {strides = array<i32>} : memref<432x1xbf16, #tpu.memory_space<vmem>>, vector<16x1xbf16>,
    %c0_51 = arith.constant 0 : index
    %c0_52 = arith.constant 0 : index
    %c0_53 = arith.constant 0 : index
    %c4 = arith.constant 4 : index
    %c0_54 = arith.constant 0 : index
    %27 = vector.load %arg2[%c0_51, %c0_52, %c0_53, %c4, %c0_54] : memref<1x1x16x8x8xbf16, #tpu.memory_space<vmem>>, vector<1x1x16x1x1xbf16>
    %28 = vector.shape_cast %27 : vector<1x1x16x1x1xbf16> to vector<16x1xbf16>
    %c144 = arith.constant 144 : index
    %c0_55 = arith.constant 0 : index
    %29 = vector.load %arg6[%c144, %c0_55] : memref<432x1xbf16, #tpu.memory_space<vmem>>, vector<16x1xbf16>
    tpu.vector_store %arg6[%c144, %c0_55], %28 {strides = array<i32>} : memref<432x1xbf16, #tpu.memory_space<vmem>>, vector<16x1xbf16>,
    %c0_56 = arith.constant 0 : index
    %c0_57 = arith.constant 0 : index
    %c0_58 = arith.constant 0 : index
    %c5 = arith.constant 5 : index
    %c0_59 = arith.constant 0 : index
    %30 = vector.load %arg2[%c0_56, %c0_57, %c0_58, %c5, %c0_59] : memref<1x1x16x8x8xbf16, #tpu.memory_space<vmem>>, vector<1x1x16x1x1xbf16>
    %31 = vector.shape_cast %30 : vector<1x1x16x1x1xbf16> to vector<16x1xbf16>
    %c160 = arith.constant 160 : index
    %c0_60 = arith.constant 0 : index
    %32 = vector.load %arg6[%c160, %c0_60] : memref<432x1xbf16, #tpu.memory_space<vmem>>, vector<16x1xbf16>
    tpu.vector_store %arg6[%c160, %c0_60], %31 {strides = array<i32>} : memref<432x1xbf16, #tpu.memory_space<vmem>>, vector<16x1xbf16>,
    %c0_61 = arith.constant 0 : index
    %c0_62 = arith.constant 0 : index
    %c0_63 = arith.constant 0 : index
    %c4_64 = arith.constant 4 : index
    %c1_65 = arith.constant 1 : index
    %33 = vector.load %arg2[%c0_61, %c0_62, %c0_63, %c4_64, %c1_65] : memref<1x1x16x8x8xbf16, #tpu.memory_space<vmem>>, vector<1x1x16x1x1xbf16>
    %34 = vector.shape_cast %33 : vector<1x1x16x1x1xbf16> to vector<16x1xbf16>
    %c176 = arith.constant 176 : index
    %c0_66 = arith.constant 0 : index
    %35 = vector.load %arg6[%c176, %c0_66] : memref<432x1xbf16, #tpu.memory_space<vmem>>, vector<16x1xbf16>
    tpu.vector_store %arg6[%c176, %c0_66], %34 {strides = array<i32>} : memref<432x1xbf16, #tpu.memory_space<vmem>>, vector<16x1xbf16>,
    %c0_67 = arith.constant 0 : index
    %c0_68 = arith.constant 0 : index
    %c0_69 = arith.constant 0 : index
    %c6 = arith.constant 6 : index
    %c0_70 = arith.constant 0 : index
    %36 = vector.load %arg2[%c0_67, %c0_68, %c0_69, %c6, %c0_70] : memref<1x1x16x8x8xbf16, #tpu.memory_space<vmem>>, vector<1x1x16x1x1xbf16>
    %37 = vector.shape_cast %36 : vector<1x1x16x1x1xbf16> to vector<16x1xbf16>
    %c192 = arith.constant 192 : index
    %c0_71 = arith.constant 0 : index
    %38 = vector.load %arg6[%c192, %c0_71] : memref<432x1xbf16, #tpu.memory_space<vmem>>, vector<16x1xbf16>
    tpu.vector_store %arg6[%c192, %c0_71], %37 {strides = array<i32>} : memref<432x1xbf16, #tpu.memory_space<vmem>>, vector<16x1xbf16>,
    %c0_72 = arith.constant 0 : index
    %c0_73 = arith.constant 0 : index
    %c0_74 = arith.constant 0 : index
    %c7 = arith.constant 7 : index
    %c0_75 = arith.constant 0 : index
    %39 = vector.load %arg2[%c0_72, %c0_73, %c0_74, %c7, %c0_75] : memref<1x1x16x8x8xbf16, #tpu.memory_space<vmem>>, vector<1x1x16x1x1xbf16>
    %40 = vector.shape_cast %39 : vector<1x1x16x1x1xbf16> to vector<16x1xbf16>
    %c208 = arith.constant 208 : index
    %c0_76 = arith.constant 0 : index
    %41 = vector.load %arg6[%c208, %c0_76] : memref<432x1xbf16, #tpu.memory_space<vmem>>, vector<16x1xbf16>
    tpu.vector_store %arg6[%c208, %c0_76], %40 {strides = array<i32>} : memref<432x1xbf16, #tpu.memory_space<vmem>>, vector<16x1xbf16>,
    %c0_77 = arith.constant 0 : index
    %c0_78 = arith.constant 0 : index
    %c0_79 = arith.constant 0 : index
    %c6_80 = arith.constant 6 : index
    %c1_81 = arith.constant 1 : index
    %42 = vector.load %arg2[%c0_77, %c0_78, %c0_79, %c6_80, %c1_81] : memref<1x1x16x8x8xbf16, #tpu.memory_space<vmem>>, vector<1x1x16x1x1xbf16>
    %43 = vector.shape_cast %42 : vector<1x1x16x1x1xbf16> to vector<16x1xbf16>
    %c224 = arith.constant 224 : index
    %c0_82 = arith.constant 0 : index
    %44 = vector.load %arg6[%c224, %c0_82] : memref<432x1xbf16, #tpu.memory_space<vmem>>, vector<16x1xbf16>
    tpu.vector_store %arg6[%c224, %c0_82], %43 {strides = array<i32>} : memref<432x1xbf16, #tpu.memory_space<vmem>>, vector<16x1xbf16>,
    %c0_83 = arith.constant 0 : index
    %c0_84 = arith.constant 0 : index
    %c0_85 = arith.constant 0 : index
    %c4_86 = arith.constant 4 : index
    %c2_87 = arith.constant 2 : index
    %45 = vector.load %arg2[%c0_83, %c0_84, %c0_85, %c4_86, %c2_87] : memref<1x1x16x8x8xbf16, #tpu.memory_space<vmem>>, vector<1x1x16x1x1xbf16>
    %46 = vector.shape_cast %45 : vector<1x1x16x1x1xbf16> to vector<16x1xbf16>
    %c240 = arith.constant 240 : index
    %c0_88 = arith.constant 0 : index
    %47 = vector.load %arg6[%c240, %c0_88] : memref<432x1xbf16, #tpu.memory_space<vmem>>, vector<16x1xbf16>
    tpu.vector_store %arg6[%c240, %c0_88], %46 {strides = array<i32>} : memref<432x1xbf16, #tpu.memory_space<vmem>>, vector<16x1xbf16>,
    %c0_89 = arith.constant 0 : index
    %c0_90 = arith.constant 0 : index
    %c0_91 = arith.constant 0 : index
    %c5_92 = arith.constant 5 : index
    %c2_93 = arith.constant 2 : index
    %48 = vector.load %arg2[%c0_89, %c0_90, %c0_91, %c5_92, %c2_93] : memref<1x1x16x8x8xbf16, #tpu.memory_space<vmem>>, vector<1x1x16x1x1xbf16>
    %49 = vector.shape_cast %48 : vector<1x1x16x1x1xbf16> to vector<16x1xbf16>
    %c256 = arith.constant 256 : index
    %c0_94 = arith.constant 0 : index
    %50 = vector.load %arg6[%c256, %c0_94] : memref<432x1xbf16, #tpu.memory_space<vmem>>, vector<16x1xbf16>
    tpu.vector_store %arg6[%c256, %c0_94], %49 {strides = array<i32>} : memref<432x1xbf16, #tpu.memory_space<vmem>>, vector<16x1xbf16>,
    %c0_95 = arith.constant 0 : index
    %c0_96 = arith.constant 0 : index
    %c0_97 = arith.constant 0 : index
    %c4_98 = arith.constant 4 : index
    %c3_99 = arith.constant 3 : index
    %51 = vector.load %arg2[%c0_95, %c0_96, %c0_97, %c4_98, %c3_99] : memref<1x1x16x8x8xbf16, #tpu.memory_space<vmem>>, vector<1x1x16x1x1xbf16>
    %52 = vector.shape_cast %51 : vector<1x1x16x1x1xbf16> to vector<16x1xbf16>
    %c272 = arith.constant 272 : index
    %c0_100 = arith.constant 0 : index
    %53 = vector.load %arg6[%c272, %c0_100] : memref<432x1xbf16, #tpu.memory_space<vmem>>, vector<16x1xbf16>
    tpu.vector_store %arg6[%c272, %c0_100], %52 {strides = array<i32>} : memref<432x1xbf16, #tpu.memory_space<vmem>>, vector<16x1xbf16>,
    %c0_101 = arith.constant 0 : index
    %c0_102 = arith.constant 0 : index
    %c0_103 = arith.constant 0 : index
    %c0_104 = arith.constant 0 : index
    %c4_105 = arith.constant 4 : index
    %54 = vector.load %arg2[%c0_101, %c0_102, %c0_103, %c0_104, %c4_105] : memref<1x1x16x8x8xbf16, #tpu.memory_space<vmem>>, vector<1x1x16x1x1xbf16>
    %55 = vector.shape_cast %54 : vector<1x1x16x1x1xbf16> to vector<16x1xbf16>
    %c288 = arith.constant 288 : index
    %c0_106 = arith.constant 0 : index
    %56 = vector.load %arg6[%c288, %c0_106] : memref<432x1xbf16, #tpu.memory_space<vmem>>, vector<16x1xbf16>
    tpu.vector_store %arg6[%c288, %c0_106], %55 {strides = array<i32>} : memref<432x1xbf16, #tpu.memory_space<vmem>>, vector<16x1xbf16>,
    %c0_107 = arith.constant 0 : index
    %c0_108 = arith.constant 0 : index
    %c0_109 = arith.constant 0 : index
    %c1_110 = arith.constant 1 : index
    %c4_111 = arith.constant 4 : index
    %57 = vector.load %arg2[%c0_107, %c0_108, %c0_109, %c1_110, %c4_111] : memref<1x1x16x8x8xbf16, #tpu.memory_space<vmem>>, vector<1x1x16x1x1xbf16>
    %58 = vector.shape_cast %57 : vector<1x1x16x1x1xbf16> to vector<16x1xbf16>
    %c304 = arith.constant 304 : index
    %c0_112 = arith.constant 0 : index
    %59 = vector.load %arg6[%c304, %c0_112] : memref<432x1xbf16, #tpu.memory_space<vmem>>, vector<16x1xbf16>
    tpu.vector_store %arg6[%c304, %c0_112], %58 {strides = array<i32>} : memref<432x1xbf16, #tpu.memory_space<vmem>>, vector<16x1xbf16>,
    %c0_113 = arith.constant 0 : index
    %c0_114 = arith.constant 0 : index
    %c0_115 = arith.constant 0 : index
    %c0_116 = arith.constant 0 : index
    %c5_117 = arith.constant 5 : index
    %60 = vector.load %arg2[%c0_113, %c0_114, %c0_115, %c0_116, %c5_117] : memref<1x1x16x8x8xbf16, #tpu.memory_space<vmem>>, vector<1x1x16x1x1xbf16>
    %61 = vector.shape_cast %60 : vector<1x1x16x1x1xbf16> to vector<16x1xbf16>
    %c320 = arith.constant 320 : index
    %c0_118 = arith.constant 0 : index
    %62 = vector.load %arg6[%c320, %c0_118] : memref<432x1xbf16, #tpu.memory_space<vmem>>, vector<16x1xbf16>
    tpu.vector_store %arg6[%c320, %c0_118], %61 {strides = array<i32>} : memref<432x1xbf16, #tpu.memory_space<vmem>>, vector<16x1xbf16>,
    %c0_119 = arith.constant 0 : index
    %c0_120 = arith.constant 0 : index
    %c0_121 = arith.constant 0 : index
    %c2_122 = arith.constant 2 : index
    %c4_123 = arith.constant 4 : index
    %63 = vector.load %arg2[%c0_119, %c0_120, %c0_121, %c2_122, %c4_123] : memref<1x1x16x8x8xbf16, #tpu.memory_space<vmem>>, vector<1x1x16x1x1xbf16>
    %64 = vector.shape_cast %63 : vector<1x1x16x1x1xbf16> to vector<16x1xbf16>
    %c336 = arith.constant 336 : index
    %c0_124 = arith.constant 0 : index
    %65 = vector.load %arg6[%c336, %c0_124] : memref<432x1xbf16, #tpu.memory_space<vmem>>, vector<16x1xbf16>
    tpu.vector_store %arg6[%c336, %c0_124], %64 {strides = array<i32>} : memref<432x1xbf16, #tpu.memory_space<vmem>>, vector<16x1xbf16>,
    %c0_125 = arith.constant 0 : index
    %c0_126 = arith.constant 0 : index
    %c0_127 = arith.constant 0 : index
    %c3_128 = arith.constant 3 : index
    %c4_129 = arith.constant 4 : index
    %66 = vector.load %arg2[%c0_125, %c0_126, %c0_127, %c3_128, %c4_129] : memref<1x1x16x8x8xbf16, #tpu.memory_space<vmem>>, vector<1x1x16x1x1xbf16>
    %67 = vector.shape_cast %66 : vector<1x1x16x1x1xbf16> to vector<16x1xbf16>
    %c352 = arith.constant 352 : index
    %c0_130 = arith.constant 0 : index
    %68 = vector.load %arg6[%c352, %c0_130] : memref<432x1xbf16, #tpu.memory_space<vmem>>, vector<16x1xbf16>
    tpu.vector_store %arg6[%c352, %c0_130], %67 {strides = array<i32>} : memref<432x1xbf16, #tpu.memory_space<vmem>>, vector<16x1xbf16>,
    %c0_131 = arith.constant 0 : index
    %c0_132 = arith.constant 0 : index
    %c0_133 = arith.constant 0 : index
    %c2_134 = arith.constant 2 : index
    %c5_135 = arith.constant 5 : index
    %69 = vector.load %arg2[%c0_131, %c0_132, %c0_133, %c2_134, %c5_135] : memref<1x1x16x8x8xbf16, #tpu.memory_space<vmem>>, vector<1x1x16x1x1xbf16>
    %70 = vector.shape_cast %69 : vector<1x1x16x1x1xbf16> to vector<16x1xbf16>
    %c368 = arith.constant 368 : index
    %c0_136 = arith.constant 0 : index
    %71 = vector.load %arg6[%c368, %c0_136] : memref<432x1xbf16, #tpu.memory_space<vmem>>, vector<16x1xbf16>
    tpu.vector_store %arg6[%c368, %c0_136], %70 {strides = array<i32>} : memref<432x1xbf16, #tpu.memory_space<vmem>>, vector<16x1xbf16>,
    %c0_137 = arith.constant 0 : index
    %c0_138 = arith.constant 0 : index
    %c0_139 = arith.constant 0 : index
    %c0_140 = arith.constant 0 : index
    %c6_141 = arith.constant 6 : index
    %72 = vector.load %arg2[%c0_137, %c0_138, %c0_139, %c0_140, %c6_141] : memref<1x1x16x8x8xbf16, #tpu.memory_space<vmem>>, vector<1x1x16x1x1xbf16>
    %73 = vector.shape_cast %72 : vector<1x1x16x1x1xbf16> to vector<16x1xbf16>
    %c384 = arith.constant 384 : index
    %c0_142 = arith.constant 0 : index
    %74 = vector.load %arg6[%c384, %c0_142] : memref<432x1xbf16, #tpu.memory_space<vmem>>, vector<16x1xbf16>
    tpu.vector_store %arg6[%c384, %c0_142], %73 {strides = array<i32>} : memref<432x1xbf16, #tpu.memory_space<vmem>>, vector<16x1xbf16>,
    %c0_143 = arith.constant 0 : index
    %c0_144 = arith.constant 0 : index
    %c0_145 = arith.constant 0 : index
    %c1_146 = arith.constant 1 : index
    %c6_147 = arith.constant 6 : index
    %75 = vector.load %arg2[%c0_143, %c0_144, %c0_145, %c1_146, %c6_147] : memref<1x1x16x8x8xbf16, #tpu.memory_space<vmem>>, vector<1x1x16x1x1xbf16>
    %76 = vector.shape_cast %75 : vector<1x1x16x1x1xbf16> to vector<16x1xbf16>
    %c400 = arith.constant 400 : index
    %c0_148 = arith.constant 0 : index
    %77 = vector.load %arg6[%c400, %c0_148] : memref<432x1xbf16, #tpu.memory_space<vmem>>, vector<16x1xbf16>
    tpu.vector_store %arg6[%c400, %c0_148], %76 {strides = array<i32>} : memref<432x1xbf16, #tpu.memory_space<vmem>>, vector<16x1xbf16>,
    %c0_149 = arith.constant 0 : index
    %c0_150 = arith.constant 0 : index
    %c0_151 = arith.constant 0 : index
    %c0_152 = arith.constant 0 : index
    %c7_153 = arith.constant 7 : index
    %78 = vector.load %arg2[%c0_149, %c0_150, %c0_151, %c0_152, %c7_153] : memref<1x1x16x8x8xbf16, #tpu.memory_space<vmem>>, vector<1x1x16x1x1xbf16>
    %79 = vector.shape_cast %78 : vector<1x1x16x1x1xbf16> to vector<16x1xbf16>
    %c416 = arith.constant 416 : index
    %c0_154 = arith.constant 0 : index
    %80 = vector.load %arg6[%c416, %c0_154] : memref<432x1xbf16, #tpu.memory_space<vmem>>, vector<16x1xbf16>
    tpu.vector_store %arg6[%c416, %c0_154], %79 {strides = array<i32>} : memref<432x1xbf16, #tpu.memory_space<vmem>>, vector<16x1xbf16>,
    %c0_155 = arith.constant 0 : index
    %c0_156 = arith.constant 0 : index
    %81 = vector.load %arg3[%c0_155, %c0_156] : memref<8x432xbf16, #tpu.memory_space<vmem>>, vector<8x432xbf16>
    %c0_157 = arith.constant 0 : index
    %c0_158 = arith.constant 0 : index
    %82 = vector.load %arg6[%c0_157, %c0_158] : memref<432x1xbf16, #tpu.memory_space<vmem>>, vector<432x1xbf16>
    %cst = arith.constant dense<0.000000e+00> : vector<8x1xf32>
    %83 = tpu.matmul %81, %82, %cst {dimension_numbers = #tpu.dot_dimension_numbers<[1], [0], [0], [1], [0, 0, 1, 1], [], []>} : vector<8x432xbf16>, vector<432x1xbf16>, vector<8x1xf32> -> vector<8x1xf32>
    %c0_159 = arith.constant 0 : index
    %c0_160 = arith.constant 0 : index
    %84 = vector.load %arg4[%c0_159, %c0_160] : memref<8x1xf32, #tpu.memory_space<vmem>>, vector<8x1xf32>
    %85 = arith.addf %83, %84 : vector<8x1xf32>
    %cst_161 = arith.constant 0.000000e+00 : f32
    %86 = vector.broadcast %cst_161 : f32 to vector<8x1xf32>
    %87 = arith.maximumf %85, %86 : vector<8x1xf32>
    %88 = arith.truncf %87 : vector<8x1xf32> to vector<8x1xbf16>
    %c0_162 = arith.constant 0 : index
    %c0_163 = arith.constant 0 : index
    %c0_164 = arith.constant 0 : index
    %c0_165 = arith.constant 0 : index
    %89 = vector.load %arg5[%c0_162, %c0_163, %c0_164, %c0_165] : memref<1x1x8x1xbf16, #tpu.memory_space<vmem>>, vector<1x1x8x1xbf16>
    %90 = vector.shape_cast %89 : vector<1x1x8x1xbf16> to vector<8x1xbf16>
    %91 = vector.shape_cast %88 : vector<8x1xbf16> to vector<1x1x8x1xbf16>
    tpu.vector_store %arg5[%c0_162, %c0_163, %c0_164, %c0_165], %91 {strides = array<i32>} : memref<1x1x8x1xbf16, #tpu.memory_space<vmem>>, vector<1x1x8x1xbf16>,
    return
  }
  func.func @transform_0(%arg0: i32, %arg1: i32) -> (i32, i32, i32, i32, i32) {
    %c0_i32 = arith.constant 0 : i32
    %c0_i32_0 = arith.constant 0 : i32
    %c0_i32_1 = arith.constant 0 : i32
    %c0_i32_2 = arith.constant 0 : i32
    return %arg0, %arg1, %c0_i32, %c0_i32_0, %c0_i32_1 : i32, i32, i32, i32, i32
  }
  func.func @transform_1(%arg0: i32, %arg1: i32) -> (i32, i32) {
    %c0_i32 = arith.constant 0 : i32
    %c0_i32_0 = arith.constant 0 : i32
    %c0_i32_1 = arith.constant 0 : i32
    return %c0_i32, %c0_i32_0 : i32, i32
  }
  func.func @transform_2(%arg0: i32, %arg1: i32) -> (i32, i32) {
    %c0_i32 = arith.constant 0 : i32
    %c0_i32_0 = arith.constant 0 : i32
    %c0_i32_1 = arith.constant 0 : i32
    return %c0_i32, %c0_i32_0 : i32, i32
  }
  func.func @transform_3(%arg0: i32, %arg1: i32) -> (i32, i32, i32, i32) {
    %c0_i32 = arith.constant 0 : i32
    %c0_i32_0 = arith.constant 0 : i32
    %c0_i32_1 = arith.constant 0 : i32
    return %arg0, %arg1, %c0_i32, %c0_i32_0 : i32, i32, i32, i32
  }
}

</mosaic_0001>

<llo_original>
// kernel: simple_conv_forward.4
$region0: #{simple_conv_forward.4}
  #allocation0 [shape = 'u32[]', space=smem, size = 0x4, offset = 0x4, fixed_abs, tag = 'smem constant byte address 0x4 - core index']
  #allocation1 [shape = 'u32[144,128]{1,0:T(1,128)}', space=vmem, size = 0x12000, scoped, tag = 'internal scratch']
  #allocation2 [shape = 'bf16[27,314]{1,0:T(8,128)(2,1)}', space=vmem, size = 0x6000, scoped, tag = 'scratch operand']
  %s0 = inlined_call_operand.vmem [shape: bf16[2,2,1,8,405], index: 0, kind: input, shape index: {}]
  %s1 = inlined_call_operand.vmem [shape: bf16[4,27], index: 1, kind: input, shape index: {}]
  %s2 = inlined_call_operand.vmem [shape: f32[4,1], index: 2, kind: input, shape index: {}]
  %s3 = inlined_call_operand.vmem [shape: bf16[2,2,4,314], index: 3, kind: output, shape index: {}]
  %s4 = sld [smem:[#allocation0]]
  $region45: #{simple_conv_forward.4} parent=0
    _
  %s6 = ssub.s32 1, %s4
  %s7 = scalar_select 0, %s6, %s4
  loop: start=0, step=1, limit=6
  $region2: #{simple_conv_forward.4} parent=0 // loop_pre_header
    _
  $region3: #{simple_conv_forward.4} parent=0 // loop_header
    %s9 = sphi 0, %s13
    %p10 = scmp.ge.s32.totalorder %s9, 6
    %s16 = sphi 0, %s28
    %s17 = sphi 0, %s24
    %s18 = sphi 0, %s16
    %s19 = sphi 0, %s17
    %s20 = sphi 0, %s18
    %s21 = sphi 0, %s19
    %s33 = sphi 0, %s35
    %s36 = sphi 0, %s33
    %s37 = sphi 0, %s36
    %s53 = sphi 0, %s37
    %s57 = sphi 0, %s57
    %s59 = sphi 0, %s57
    %s60 = sphi 0, %s59
    %s74 = sphi 0, %s60
    %s78 = sphi 0, %s78
    %s80 = sphi 0, %s78
    %s81 = sphi 0, %s80
    %s95 = sphi 0, %s81
    %s103 = sphi 0, %s105
    %s106 = sphi 0, %s103
    %s107 = sphi 0, %s106
    %s123 = sphi 0, %s107
  $region4: #{simple_conv_forward.4} parent=0 // loop_header_branch
    %12 = sbr.rel (%p10) target = $region8
  $region5: #{simple_conv_forward.4} parent=0 // loop_body
    %s14 = ssub.s32 %s9, 1
    %s15 = ssub.s32 %s9, 2
    %s22 = sadd.s32 1, %s17
    %p23 = scmp.ge.s32.totalorder %s22, 2
    %s24 = scalar_select %p23, 0, %s22
    %s25 = sadd.s32 1, %s16
    %s26 = scalar_select %p23, %s25, %s16
    %p27 = scmp.ge.s32.totalorder %s26, 2
    %s28 = scalar_select %p27, 0, %s26
    %s29 = ssub.s32 %s16, %s28
    %s30 = ssub.s32 %s17, %s24
    %s31 = sor.u32 %s29, %s30
    %p32 = scmp.eq.s32.totalorder %s31, 0
    %s34 = sadd.s32 %s33, 1
    %s35 = scalar_select %p32, %s33, %s34
    %p38 = pneg %p32
    %p39 = scmp.eq.s32.totalorder %s9, 3
    %p40 = por %p38, %p39
    %p41 = scmp.ne.s32.totalorder %s33, %s36
    %p42 = scmp.eq.s32.totalorder %s9, 0
    %p43 = por %p41, %p42
    %p44 = scmp.ne.s32.totalorder %s33, %s36
    %p45 = scmp.eq.s32.totalorder %s14, 3
    %p46 = por %p44, %p45
    %p47 = scmp.ne.s32.totalorder %s36, %s37
    %p48 = scmp.eq.s32.totalorder %s14, 0
    %p49 = por %p47, %p48
    %p50 = scmp.ne.s32.totalorder %s36, %s37
    %p51 = scmp.eq.s32.totalorder %s15, 3
    %p52 = por %p50, %p51
    %p54 = scmp.ne.s32.totalorder %s37, %s53
    %p55 = scmp.eq.s32.totalorder %s15, 0
    %p56 = por %p54, %p55
    %s58 = sadd.s32 %s57, 1
    %p61 = scmp.eq.s32.totalorder %s9, 3
    %p62 = scmp.ne.s32.totalorder %s57, %s59
    %p63 = scmp.eq.s32.totalorder %s9, 0
    %p64 = por %p62, %p63
    %p65 = scmp.ne.s32.totalorder %s57, %s59
    %p66 = scmp.eq.s32.totalorder %s14, 3
    %p67 = por %p65, %p66
    %p68 = scmp.ne.s32.totalorder %s59, %s60
    %p69 = scmp.eq.s32.totalorder %s14, 0
    %p70 = por %p68, %p69
    %p71 = scmp.ne.s32.totalorder %s59, %s60
    %p72 = scmp.eq.s32.totalorder %s15, 3
    %p73 = por %p71, %p72
    %p75 = scmp.ne.s32.totalorder %s60, %s74
    %p76 = scmp.eq.s32.totalorder %s15, 0
    %p77 = por %p75, %p76
    %s79 = sadd.s32 %s78, 1
    %p82 = scmp.eq.s32.totalorder %s9, 3
    %p83 = scmp.ne.s32.totalorder %s78, %s80
    %p84 = scmp.eq.s32.totalorder %s9, 0
    %p85 = por %p83, %p84
    %p86 = scmp.ne.s32.totalorder %s78, %s80
    %p87 = scmp.eq.s32.totalorder %s14, 3
    %p88 = por %p86, %p87
    %p89 = scmp.ne.s32.totalorder %s80, %s81
    %p90 = scmp.eq.s32.totalorder %s14, 0
    %p91 = por %p89, %p90
    %p92 = scmp.ne.s32.totalorder %s80, %s81
    %p93 = scmp.eq.s32.totalorder %s15, 3
    %p94 = por %p92, %p93
    %p96 = scmp.ne.s32.totalorder %s81, %s95
    %p97 = scmp.eq.s32.totalorder %s15, 0
    %p98 = por %p96, %p97
    %s99 = ssub.s32 %s16, %s28
    %s100 = ssub.s32 %s17, %s24
    %s101 = sor.u32 %s99, %s100
    %p102 = scmp.eq.s32.totalorder %s101, 0
    %s104 = sadd.s32 %s103, 1
    %s105 = scalar_select %p102, %s103, %s104
    %p108 = pneg %p102
    %p109 = scmp.eq.s32.totalorder %s9, 3
    %p110 = por %p108, %p109
    %p111 = scmp.ne.s32.totalorder %s103, %s106
    %p112 = scmp.eq.s32.totalorder %s9, 0
    %p113 = por %p111, %p112
    %p114 = scmp.ne.s32.totalorder %s103, %s106
    %p115 = scmp.eq.s32.totalorder %s14, 3
    %p116 = por %p114, %p115
    %p117 = scmp.ne.s32.totalorder %s106, %s107
    %p118 = scmp.eq.s32.totalorder %s14, 0
    %p119 = por %p117, %p118
    %p120 = scmp.ne.s32.totalorder %s106, %s107
    %p121 = scmp.eq.s32.totalorder %s15, 3
    %p122 = por %p120, %p121
    %p124 = scmp.ne.s32.totalorder %s107, %s123
    %p125 = scmp.eq.s32.totalorder %s15, 0
    %p126 = por %p124, %p125
    %p127 = scmp.le.s32.totalorder 1, %s9
    %p128 = scmp.lt.s32.totalorder %s9, 5
    %p129 = pnand %p127, %p128
    %p130 = pneg %p129
    // Predicated region
    $region9: #{simple_conv_forward.4} parent=5 // pred_check
      _
    $region10: #{simple_conv_forward.4} parent=5 // pred_check_branch
      %132 = sbr.rel (%p129) target = $region12
    $region11: #{simple_conv_forward.4} parent=5 // pred_region
      %s133 = ssub.s32 %s9, 1
      // Predicated region
      $region13: #{simple_conv_forward.4} parent=11 // pred_check
        %p134 = pneg %p70
      $region14: #{simple_conv_forward.4} parent=11 // pred_check_branch
        %136 = sbr.rel (%p134) target = $region16
      $region15: #{simple_conv_forward.4} parent=11 // pred_region
        _
      $region16: #{simple_conv_forward.4} parent=11 // pred_fallthru
        _
      // Predicated region
      $region17: #{simple_conv_forward.4} parent=11 // pred_check
        %p137 = pneg %p91
      $region18: #{simple_conv_forward.4} parent=11 // pred_check_branch
        %139 = sbr.rel (%p137) target = $region20
      $region19: #{simple_conv_forward.4} parent=11 // pred_region
        _
      $region20: #{simple_conv_forward.4} parent=11 // pred_fallthru
        _
    $region12: #{simple_conv_forward.4} parent=5 // pred_fallthru
      _
    %p140 = scmp.lt.s32.totalorder %s9, 4
    // Predicated region
    $region21: #{simple_conv_forward.4} parent=5 // pred_check
      %p141 = pneg %p140
    $region22: #{simple_conv_forward.4} parent=5 // pred_check_branch
      %143 = sbr.rel (%p141) target = $region24
    $region23: #{simple_conv_forward.4} parent=5 // pred_region
      // Predicated region
      $region25: #{simple_conv_forward.4} parent=23 // pred_check
        %p144 = pneg %p43
      $region26: #{simple_conv_forward.4} parent=23 // pred_check_branch
        %146 = sbr.rel (%p144) target = $region28
      $region27: #{simple_conv_forward.4} parent=23 // pred_region
        %p147 = scmp.lt.s32.totalorder %s16, 1
        %s148 = scalar_select %p147, %s16, 1
        %p149 = scmp.lt.s32.totalorder %s17, 1
        %s150 = scalar_select %p149, %s17, 1
        %s151 = smul.addr %s150, 4
        %s152 = smul.addr %s148, 8
        %s153 = sadd.s32 %s151, %s152
        %s154 = smul.addr %s153, 4
        %s155 = scalar_lea.vmem %s0, %s154
      $region28: #{simple_conv_forward.4} parent=23 // pred_fallthru
        _
    $region24: #{simple_conv_forward.4} parent=5 // pred_fallthru
      _
    %p156 = scmp.le.s32.totalorder 1, %s9
    %p157 = scmp.lt.s32.totalorder %s9, 5
    %p158 = pnand %p156, %p157
    %p159 = pneg %p158
    // Predicated region
    $region29: #{simple_conv_forward.4} parent=5 // pred_check
      _
    $region30: #{simple_conv_forward.4} parent=5 // pred_check_branch
      %161 = sbr.rel (%p158) target = $region32
    $region31: #{simple_conv_forward.4} parent=5 // pred_region
      %s162 = ssub.s32 %s9, 1
      %p163 = scmp.lt.s32.totalorder %s18, 1
      %s164 = scalar_select %p163, %s18, 1
      %p165 = scmp.lt.s32.totalorder %s19, 1
      %s166 = scalar_select %p165, %s19, 1
      %s167 = smul.addr %s166, 4
      %s168 = smul.addr %s164, 8
      %s169 = sadd.s32 %s167, %s168
      %s170 = smul.addr %s169, 4
      %s171 = scalar_lea.vmem %s0, %s170
      %p172 = pneg %p49
      %p173 = pneg %p46
      %p174 = pneg %p70
      %p175 = pneg %p67
      %p176 = pneg %p91
      %p177 = pneg %p88
      %p178 = pneg %p119
      %p179 = pneg %p116
      %p180 = scmp.lt.s32.totalorder %s18, 1
      %s181 = scalar_select %p180, %s18, 1
      %p182 = scmp.lt.s32.totalorder %s19, 1
      %s183 = scalar_select %p182, %s19, 1
      %s184 = smul.addr %s183, 3
      %s185 = smul.addr %s181, 6
      %s186 = sadd.s32 %s184, %s185
      %s187 = smul.addr %s186, 2
      %s188 = scalar_lea.vmem %s3, %s187
      %p189 = scmp.lt.s32.totalorder %s18, 1
      %s190 = scalar_select %p189, %s18, 1
      %p191 = scmp.lt.s32.totalorder %s19, 1
      %s192 = scalar_select %p191, %s19, 1
      %s193 = smul.addr %s192, 4
      %s194 = smul.addr %s190, 8
      %s195 = sadd.s32 %s193, %s194
      %s196 = smul.addr %s195, 4
      %s197 = scalar_lea.vmem %s0, %s196
      %p198 = scmp.lt.s32.totalorder %s18, 1
      %s199 = scalar_select %p198, %s18, 1
      %p200 = scmp.lt.s32.totalorder %s19, 1
      %s201 = scalar_select %p200, %s19, 1
      %s202 = smul.addr %s201, 3
      %s203 = smul.addr %s199, 6
      %s204 = sadd.s32 %s202, %s203
      %s205 = smul.addr %s204, 2
      %s206 = scalar_lea.vmem %s3, %s205
      %v208 = vld [vmem:[%s197] sm:$0x11]
      %v209 = vld [vmem:[%s197 + $0x8] sm:$0x1]
      %vm210 = vcmask 1040384
      %vm211 = vsmask.f32 256
      %vm212 = vmand %vm210, %vm211
      %vm213 = vcmask 1044484
      %vm214 = vsmask.f32 4352
      %vm215 = vmand %vm213, %vm214
      %vm216 = vmor %vm215, %vm212
      %v217 = vld [vmem:[#allocation2] sm:$0x11]
      %v218 = vsel %vm216, %v208, %v217
      %219 = vst [vmem:[#allocation2] sm:$0x11] %v218
      %vm220 = vcmask 466944
      %vm221 = vmand %vm220, %vm211
      %v222 = vld [vmem:[#allocation2 + $0x8] sm:$0x1]
      %v223 = vsel %vm221, %v209, %v222
      %224 = vst [vmem:[#allocation2 + $0x8] sm:$0x1] %v223
      %v225 = vld [vmem:[%s197] sm:$0x11]
      %v226 = vld [vmem:[%s197 + $0x8] sm:$0x1]
      %vm227 = vsmask.f32 7938
      %vm228 = vmand %vm210, %vm227
      %vm229 = vsmask.f32 7954
      %vm230 = vmand %vm213, %vm229
      %vm231 = vmor %vm230, %vm228
      %v232 = vld [vmem:[#allocation2] sm:$0x11]
      %v233 = vsel %vm231, %v225, %v232
      %234 = vst [vmem:[#allocation2] sm:$0x11] %v233
      %vm235 = vmand %vm220, %vm227
      %v236 = vld [vmem:[#allocation2 + $0x8] sm:$0x1]
      %v237 = vsel %vm235, %v226, %v236
      %238 = vst [vmem:[#allocation2 + $0x8] sm:$0x1] %v237
      %v239 = vld [vmem:[%s197] sm:$0x11]
      %v240 = vld [vmem:[%s197 + $0x8] sm:$0x1]
      %v243 = vrot.slane %v239, 7
      %v244 = vrot.slane %v240, 7
      %245 = vrot.lane.b32.xlu0 %v243, 127
      %v246 = vpop.permute.xlu0 %245
      %247 = vrot.lane.b32.xlu0 %v244, 127
      %v248 = vpop.permute.xlu0 %247
      %v249 = vrot.slane %v246, 4
      %v250 = vrot.slane %v248, 4
      %vm251 = vcmask 1043456
      %v252 = vsel %vm251, %v249, %v250
      %vm253 = vcmask 1039360
      %v254 = vsel %vm253, %v246, %v252
      %vm257 = vcmask 1041409
      %vm258 = vsmask.f32 1280
      %vm259 = vmand %vm257, %vm258
      %vm260 = vcmask 1045509
      %vm261 = vsmask.f32 5376
      %vm262 = vmand %vm260, %vm261
      %vm263 = vmor %vm262, %vm259
      %v264 = vld [vmem:[#allocation2] sm:$0x22]
      %v265 = vsel %vm263, %v254, %v264
      %266 = vst [vmem:[#allocation2] sm:$0x22] %v265
      %vm267 = vcmask 467969
      %vm268 = vmand %vm267, %vm258
      %v269 = vld [vmem:[#allocation2 + $0x8] sm:$0x2]
      %v270 = vsel %vm268, %v248, %v269
      %271 = vst [vmem:[#allocation2 + $0x8] sm:$0x2] %v270
      %v272 = vld [vmem:[%s197] sm:$0x22]
      %v273 = vld [vmem:[%s197 + $0x8] sm:$0x2]
      %v275 = vshll.u32 %v272, 16
      %v278 = vshll.u32 %v273, 16
      %vm282 = vsmask.f32 7942
      %vm283 = vmand %vm257, %vm282
      %vm284 = vsmask.f32 7958
      %vm285 = vmand %vm260, %vm284
      %vm286 = vmor %vm285, %vm283
      %v287 = vld [vmem:[#allocation2] sm:$0x22]
      %v288 = vsel %vm286, %v275, %v287
      %289 = vst [vmem:[#allocation2] sm:$0x22] %v288
      %vm290 = vmand %vm267, %vm282
      %v291 = vld [vmem:[#allocation2 + $0x8] sm:$0x2]
      %v292 = vsel %vm290, %v278, %v291
      %293 = vst [vmem:[#allocation2 + $0x8] sm:$0x2] %v292
      %v294 = vld [vmem:[%s197] sm:$0x22]
      %v295 = vld [vmem:[%s197 + $0x8] sm:$0x2]
      %v297 = vshrl.u32 %v294, 16
      %v299 = vrot.slane %v297, 7
      %v301 = vshrl.u32 %v295, 16
      %v303 = vrot.slane %v301, 7
      %vm306 = vcmask 1042434
      %vm307 = vsmask.f32 2304
      %vm308 = vmand %vm306, %vm307
      %vm309 = vcmask 1046534
      %vm310 = vsmask.f32 6400
      %vm311 = vmand %vm309, %vm310
      %vm312 = vmor %vm311, %vm308
      %v313 = vld [vmem:[#allocation2] sm:$0x44]
      %v314 = vsel %vm312, %v299, %v313
      %315 = vst [vmem:[#allocation2] sm:$0x44] %v314
      %vm316 = vcmask 468994
      %vm317 = vmand %vm316, %vm307
      %v318 = vld [vmem:[#allocation2 + $0x8] sm:$0x4]
      %v319 = vsel %vm317, %v303, %v318
      %320 = vst [vmem:[#allocation2 + $0x8] sm:$0x4] %v319
      %v321 = vld [vmem:[%s197] sm:$0x22]
      %v322 = vld [vmem:[%s197 + $0x8] sm:$0x2]
      %v324 = vshll.u32 %v321, 16
      %v326 = vrot.slane %v324, 7
      %v328 = vshll.u32 %v322, 16
      %v330 = vrot.slane %v328, 7
      %331 = vrot.lane.b32.xlu0 %v326, 127
      %v332 = vpop.permute.xlu0 %331
      %333 = vrot.lane.b32.xlu0 %v330, 127
      %v334 = vpop.permute.xlu0 %333
      %v335 = vrot.slane %v332, 4
      %v336 = vrot.slane %v334, 4
      %v337 = vsel %vm251, %v335, %v336
      %v338 = vsel %vm253, %v332, %v337
      %vm341 = vsmask.f32 7946
      %vm342 = vmand %vm306, %vm341
      %vm343 = vsmask.f32 7962
      %vm344 = vmand %vm309, %vm343
      %vm345 = vmor %vm344, %vm342
      %v346 = vld [vmem:[#allocation2] sm:$0x44]
      %v347 = vsel %vm345, %v338, %v346
      %348 = vst [vmem:[#allocation2] sm:$0x44] %v347
      %vm349 = vmand %vm316, %vm341
      %v350 = vld [vmem:[#allocation2 + $0x8] sm:$0x4]
      %v351 = vsel %vm349, %v334, %v350
      %352 = vst [vmem:[#allocation2 + $0x8] sm:$0x4] %v351
      %v353 = vld [vmem:[%s197] sm:$0x11]
      %v354 = vld [vmem:[%s197 + $0x8] sm:$0x1]
      %v357 = vrot.slane %v353, 5
      %v358 = vrot.slane %v354, 5
      %359 = vrot.lane.b32.xlu0 %v357, 119
      %v360 = vpop.permute.xlu0 %359
      %361 = vrot.lane.b32.xlu0 %v358, 119
      %v362 = vpop.permute.xlu0 %361
      %v363 = vrot.slane %v360, 4
      %v364 = vrot.slane %v362, 4
      %v365 = vsel %vm251, %v363, %v364
      %vm366 = vcmask 973824
      %v367 = vsel %vm366, %v360, %v365
      %vm370 = vcmask 1043459
      %vm371 = vsmask.f32 3328
      %vm372 = vmand %vm370, %vm371
      %vm373 = vcmask 1047559
      %vm374 = vsmask.f32 7424
      %vm375 = vmand %vm373, %vm374
      %vm376 = vmor %vm375, %vm372
      %v377 = vld [vmem:[#allocation2] sm:$0x88]
      %v378 = vsel %vm376, %v367, %v377
      %379 = vst [vmem:[#allocation2] sm:$0x88] %v378
      %vm380 = vcmask 470019
      %vm381 = vmand %vm380, %vm371
      %v382 = vld [vmem:[#allocation2 + $0x8] sm:$0x8]
      %v383 = vsel %vm381, %v362, %v382
      %384 = vst [vmem:[#allocation2 + $0x8] sm:$0x8] %v383
      %v385 = vld [vmem:[%s197] sm:$0x11]
      %v386 = vld [vmem:[%s197 + $0x8] sm:$0x1]
      %v389 = vrot.slane %v385, 5
      %v390 = vrot.slane %v386, 5
      %391 = vrot.lane.b32.xlu0 %v389, 119
      %v392 = vpop.permute.xlu0 %391
      %393 = vrot.lane.b32.xlu0 %v390, 119
      %v394 = vpop.permute.xlu0 %393
      %v395 = vrot.slane %v392, 4
      %v396 = vrot.slane %v394, 4
      %v397 = vsel %vm251, %v395, %v396
      %v398 = vsel %vm366, %v392, %v397
      %vm401 = vsmask.f32 7950
      %vm402 = vmand %vm370, %vm401
      %vm403 = vsmask.f32 7966
      %vm404 = vmand %vm373, %vm403
      %vm405 = vmor %vm404, %vm402
      %v406 = vld [vmem:[#allocation2] sm:$0x88]
      %v407 = vsel %vm405, %v398, %v406
      %408 = vst [vmem:[#allocation2] sm:$0x88] %v407
      %vm409 = vmand %vm380, %vm401
      %v410 = vld [vmem:[#allocation2 + $0x8] sm:$0x8]
      %v411 = vsel %vm409, %v394, %v410
      %412 = vst [vmem:[#allocation2 + $0x8] sm:$0x8] %v411
      %v413 = vld [vmem:[%s197] sm:$0x11]
      %v414 = vld [vmem:[%s197 + $0x8] sm:$0x1]
      %417 = vrot.lane.b32.xlu0 %v413, 118
      %v418 = vpop.permute.xlu0 %417
      %419 = vrot.lane.b32.xlu0 %v414, 118
      %v420 = vpop.permute.xlu0 %419
      %v421 = vrot.slane %v418, 4
      %v422 = vrot.slane %v420, 4
      %v423 = vsel %vm251, %v421, %v422
      %vm424 = vcmask 965632
      %v425 = vsel %vm424, %v418, %v423
      %v428 = vld [vmem:[#allocation2 + $0xc] sm:$0x11]
      %v429 = vsel %vm216, %v425, %v428
      %430 = vst [vmem:[#allocation2 + $0xc] sm:$0x11] %v429
      %v431 = vld [vmem:[#allocation2 + $0x14] sm:$0x1]
      %v432 = vsel %vm221, %v420, %v431
      %433 = vst [vmem:[#allocation2 + $0x14] sm:$0x1] %v432
      %v434 = vld [vmem:[%s197] sm:$0x44]
      %v435 = vld [vmem:[%s197 + $0x8] sm:$0x4]
      %v437 = vshll.u32 %v434, 16
      %v439 = vrot.slane %v437, 6
      %v440 = vrot.slane %v439, 4
      %v442 = vshll.u32 %v435, 16
      %v444 = vrot.slane %v442, 6
      %v445 = vrot.slane %v444, 4
      %v448 = vld [vmem:[#allocation2 + $0xc] sm:$0x11]
      %v449 = vsel %vm231, %v440, %v448
      %450 = vst [vmem:[#allocation2 + $0xc] sm:$0x11] %v449
      %v451 = vld [vmem:[#allocation2 + $0x14] sm:$0x1]
      %v452 = vsel %vm235, %v445, %v451
      %453 = vst [vmem:[#allocation2 + $0x14] sm:$0x1] %v452
      %v454 = vld [vmem:[%s197] sm:$0x44]
      %v455 = vld [vmem:[%s197 + $0x8] sm:$0x4]
      %v457 = vshrl.u32 %v454, 16
      %v459 = vrot.slane %v457, 5
      %v460 = vrot.slane %v459, 4
      %v462 = vshrl.u32 %v455, 16
      %v464 = vrot.slane %v462, 5
      %v465 = vrot.slane %v464, 4
      %v468 = vld [vmem:[#allocation2 + $0xc] sm:$0x22]
      %v469 = vsel %vm263, %v460, %v468
      %470 = vst [vmem:[#allocation2 + $0xc] sm:$0x22] %v469
      %v471 = vld [vmem:[#allocation2 + $0x14] sm:$0x2]
      %v472 = vsel %vm268, %v465, %v471
      %473 = vst [vmem:[#allocation2 + $0x14] sm:$0x2] %v472
      %v474 = vld [vmem:[%s197] sm:$0x44]
      %v475 = vld [vmem:[%s197 + $0x8] sm:$0x4]
      %v477 = vshll.u32 %v474, 16
      %v479 = vrot.slane %v477, 5
      %v480 = vrot.slane %v479, 4
      %v482 = vshll.u32 %v475, 16
      %v484 = vrot.slane %v482, 5
      %v485 = vrot.slane %v484, 4
      %486 = vrot.lane.b32.xlu0 %v480, 127
      %v487 = vpop.permute.xlu0 %486
      %488 = vrot.lane.b32.xlu0 %v485, 127
      %v489 = vpop.permute.xlu0 %488
      %v490 = vrot.slane %v487, 4
      %v491 = vrot.slane %v489, 4
      %v492 = vsel %vm251, %v490, %v491
      %v493 = vsel %vm253, %v487, %v492
      %v496 = vld [vmem:[#allocation2 + $0xc] sm:$0x22]
      %v497 = vsel %vm286, %v493, %v496
      %498 = vst [vmem:[#allocation2 + $0xc] sm:$0x22] %v497
      %v499 = vld [vmem:[#allocation2 + $0x14] sm:$0x2]
      %v500 = vsel %vm290, %v489, %v499
      %501 = vst [vmem:[#allocation2 + $0x14] sm:$0x2] %v500
      %v502 = vld [vmem:[%s197] sm:$0x88]
      %v503 = vld [vmem:[%s197 + $0x8] sm:$0x8]
      %v506 = vrot.slane %v502, 5
      %v507 = vrot.slane %v506, 4
      %v508 = vrot.slane %v503, 5
      %v509 = vrot.slane %v508, 4
      %v512 = vld [vmem:[#allocation2 + $0xc] sm:$0x44]
      %v513 = vsel %vm312, %v507, %v512
      %514 = vst [vmem:[#allocation2 + $0xc] sm:$0x44] %v513
      %v515 = vld [vmem:[#allocation2 + $0x14] sm:$0x4]
      %v516 = vsel %vm317, %v509, %v515
      %517 = vst [vmem:[#allocation2 + $0x14] sm:$0x4] %v516
      %v518 = vld [vmem:[%s197] sm:$0x88]
      %v519 = vld [vmem:[%s197 + $0x8] sm:$0x8]
      %v522 = vrot.slane %v518, 5
      %v523 = vrot.slane %v522, 4
      %v524 = vrot.slane %v519, 5
      %v525 = vrot.slane %v524, 4
      %v528 = vld [vmem:[#allocation2 + $0xc] sm:$0x44]
      %v529 = vsel %vm345, %v523, %v528
      %530 = vst [vmem:[#allocation2 + $0xc] sm:$0x44] %v529
      %v531 = vld [vmem:[#allocation2 + $0x14] sm:$0x4]
      %v532 = vsel %vm349, %v525, %v531
      %533 = vst [vmem:[#allocation2 + $0x14] sm:$0x4] %v532
      %v534 = vld [vmem:[%s197] sm:$0x88]
      %v535 = vld [vmem:[%s197 + $0x8] sm:$0x8]
      %538 = vrot.lane.b32.xlu0 %v534, 127
      %v539 = vpop.permute.xlu0 %538
      %540 = vrot.lane.b32.xlu0 %v535, 127
      %v541 = vpop.permute.xlu0 %540
      %v542 = vrot.slane %v539, 4
      %v543 = vrot.slane %v541, 4
      %v544 = vsel %vm251, %v542, %v543
      %v545 = vsel %vm253, %v539, %v544
      %v548 = vld [vmem:[#allocation2 + $0xc] sm:$0x88]
      %v549 = vsel %vm376, %v545, %v548
      %550 = vst [vmem:[#allocation2 + $0xc] sm:$0x88] %v549
      %v551 = vld [vmem:[#allocation2 + $0x14] sm:$0x8]
      %v552 = vsel %vm381, %v541, %v551
      %553 = vst [vmem:[#allocation2 + $0x14] sm:$0x8] %v552
      %v554 = vld [vmem:[%s197] sm:$0x44]
      %v555 = vld [vmem:[%s197 + $0x8] sm:$0x4]
      %v557 = vshll.u32 %v554, 16
      %v559 = vrot.slane %v557, 7
      %v561 = vshll.u32 %v555, 16
      %v563 = vrot.slane %v561, 7
      %564 = vrot.lane.b32.xlu0 %v559, 119
      %v565 = vpop.permute.xlu0 %564
      %566 = vrot.lane.b32.xlu0 %v563, 119
      %v567 = vpop.permute.xlu0 %566
      %v568 = vrot.slane %v565, 4
      %v569 = vrot.slane %v567, 4
      %v570 = vsel %vm251, %v568, %v569
      %v571 = vsel %vm366, %v565, %v570
      %v574 = vld [vmem:[#allocation2 + $0xc] sm:$0x88]
      %v575 = vsel %vm405, %v571, %v574
      %576 = vst [vmem:[#allocation2 + $0xc] sm:$0x88] %v575
      %v577 = vld [vmem:[#allocation2 + $0x14] sm:$0x8]
      %v578 = vsel %vm409, %v567, %v577
      %579 = vst [vmem:[#allocation2 + $0x14] sm:$0x8] %v578
      %v580 = vld [vmem:[%s197] sm:$0x44]
      %v581 = vld [vmem:[%s197 + $0x8] sm:$0x4]
      %v583 = vshrl.u32 %v580, 16
      %v585 = vrot.slane %v583, 6
      %v586 = vrot.slane %v585, 4
      %v588 = vshrl.u32 %v581, 16
      %v590 = vrot.slane %v588, 6
      %v591 = vrot.slane %v590, 4
      %592 = vrot.lane.b32.xlu0 %v586, 119
      %v593 = vpop.permute.xlu0 %592
      %594 = vrot.lane.b32.xlu0 %v591, 119
      %v595 = vpop.permute.xlu0 %594
      %v596 = vrot.slane %v593, 4
      %v597 = vrot.slane %v595, 4
      %v598 = vsel %vm251, %v596, %v597
      %v599 = vsel %vm366, %v593, %v598
      %v602 = vld [vmem:[#allocation2 + $0x18] sm:$0x11]
      %v603 = vsel %vm216, %v599, %v602
      %604 = vst [vmem:[#allocation2 + $0x18] sm:$0x11] %v603
      %v605 = vld [vmem:[#allocation2 + $0x20] sm:$0x1]
      %v606 = vsel %vm221, %v595, %v605
      %607 = vst [vmem:[#allocation2 + $0x20] sm:$0x1] %v606
      %v608 = vld [vmem:[%s197] sm:$0x44]
      %v609 = vld [vmem:[%s197 + $0x8] sm:$0x4]
      %v611 = vshll.u32 %v608, 16
      %v613 = vrot.slane %v611, 6
      %v614 = vrot.slane %v613, 4
      %v616 = vshll.u32 %v609, 16
      %v618 = vrot.slane %v616, 6
      %v619 = vrot.slane %v618, 4
      %620 = vrot.lane.b32.xlu0 %v614, 118
      %v621 = vpop.permute.xlu0 %620
      %622 = vrot.lane.b32.xlu0 %v619, 118
      %v623 = vpop.permute.xlu0 %622
      %v624 = vrot.slane %v621, 4
      %v625 = vrot.slane %v623, 4
      %v626 = vsel %vm251, %v624, %v625
      %v627 = vsel %vm424, %v621, %v626
      %v630 = vld [vmem:[#allocation2 + $0x18] sm:$0x11]
      %v631 = vsel %vm231, %v627, %v630
      %632 = vst [vmem:[#allocation2 + $0x18] sm:$0x11] %v631
      %v633 = vld [vmem:[#allocation2 + $0x20] sm:$0x1]
      %v634 = vsel %vm235, %v623, %v633
      %635 = vst [vmem:[#allocation2 + $0x20] sm:$0x1] %v634
      %v636 = vld [vmem:[%s197] sm:$0x11]
      %v637 = vld [vmem:[%s197 + $0x8] sm:$0x11]
      %v640 = vrot.slane %v636, 7
      %v641 = vrot.slane %v637, 7
      %642 = vrot.lane.b32.xlu0 %v640, 47
      %v643 = vpop.permute.xlu0 %642
      %644 = vrot.lane.b32.xlu0 %v641, 47
      %v645 = vpop.permute.xlu0 %644
      %v646 = vrot.slane %v643, 4
      %v647 = vrot.slane %v645, 4
      %v648 = vsel %vm251, %v646, %v647
      %vm649 = vcmask 384000
      %v650 = vsel %vm649, %v643, %v648
      %v651 = vsel %vm649, %v645, %v647
      %v654 = vld [vmem:[#allocation2 + $0x18] sm:$0x22]
      %v655 = vsel %vm263, %v650, %v654
      %656 = vst [vmem:[#allocation2 + $0x18] sm:$0x22] %v655
      %v657 = vld [vmem:[#allocation2 + $0x20] sm:$0x2]
      %v658 = vsel %vm268, %v651, %v657
      %659 = vst [vmem:[#allocation2 + $0x20] sm:$0x2] %v658
      %v660 = vld [vmem:[%s197] sm:$0x11]
      %v661 = vld [vmem:[%s197 + $0x8] sm:$0x11]
      %v664 = vrot.slane %v660, 7
      %v665 = vrot.slane %v661, 7
      %666 = vrot.lane.b32.xlu0 %v664, 47
      %v667 = vpop.permute.xlu0 %666
      %668 = vrot.lane.b32.xlu0 %v665, 47
      %v669 = vpop.permute.xlu0 %668
      %v670 = vrot.slane %v667, 4
      %v671 = vrot.slane %v669, 4
      %v672 = vsel %vm251, %v670, %v671
      %v673 = vsel %vm649, %v667, %v672
      %v674 = vsel %vm649, %v669, %v671
      %v677 = vld [vmem:[#allocation2 + $0x18] sm:$0x22]
      %v678 = vsel %vm286, %v673, %v677
      %679 = vst [vmem:[#allocation2 + $0x18] sm:$0x22] %v678
      %v680 = vld [vmem:[#allocation2 + $0x20] sm:$0x2]
      %v681 = vsel %vm290, %v674, %v680
      %682 = vst [vmem:[#allocation2 + $0x20] sm:$0x2] %v681
      %v683 = vld [vmem:[%s197] sm:$0x11]
      %v684 = vld [vmem:[%s197 + $0x8] sm:$0x11]
      %v687 = vrot.slane %v683, 6
      %v688 = vrot.slane %v684, 6
      %689 = vrot.lane.b32.xlu0 %v687, 46
      %v690 = vpop.permute.xlu0 %689
      %691 = vrot.lane.b32.xlu0 %v688, 46
      %v692 = vpop.permute.xlu0 %691
      %v693 = vrot.slane %v690, 4
      %v694 = vrot.slane %v692, 4
      %v695 = vsel %vm251, %v693, %v694
      %vm696 = vcmask 375808
      %v697 = vsel %vm696, %v690, %v695
      %v698 = vsel %vm696, %v692, %v694
      %v701 = vld [vmem:[#allocation2 + $0x18] sm:$0x44]
      %v702 = vsel %vm312, %v697, %v701
      %703 = vst [vmem:[#allocation2 + $0x18] sm:$0x44] %v702
      %v704 = vld [vmem:[#allocation2 + $0x20] sm:$0x4]
      %v705 = vsel %vm317, %v698, %v704
      %706 = vst [vmem:[#allocation2 + $0x20] sm:$0x4] %v705
      %v707 = vld [vmem:[%s197] sm:$0x22]
      %v708 = vld [vmem:[%s197 + $0x8] sm:$0x22]
      %v710 = vshll.u32 %v707, 16
      %v712 = vrot.slane %v710, 7
      %v714 = vshll.u32 %v708, 16
      %v716 = vrot.slane %v714, 7
      %717 = vrot.lane.b32.xlu0 %v712, 47
      %v718 = vpop.permute.xlu0 %717
      %719 = vrot.lane.b32.xlu0 %v716, 47
      %v720 = vpop.permute.xlu0 %719
      %v721 = vrot.slane %v718, 4
      %v722 = vrot.slane %v720, 4
      %v723 = vsel %vm251, %v721, %v722
      %v724 = vsel %vm649, %v718, %v723
      %v725 = vsel %vm649, %v720, %v722
      %v728 = vld [vmem:[#allocation2 + $0x18] sm:$0x44]
      %v729 = vsel %vm345, %v724, %v728
      %730 = vst [vmem:[#allocation2 + $0x18] sm:$0x44] %v729
      %v731 = vld [vmem:[#allocation2 + $0x20] sm:$0x4]
      %v732 = vsel %vm349, %v725, %v731
      %733 = vst [vmem:[#allocation2 + $0x20] sm:$0x4] %v732
      %v734 = vld [vmem:[%s197] sm:$0x22]
      %v735 = vld [vmem:[%s197 + $0x8] sm:$0x22]
      %v737 = vshrl.u32 %v734, 16
      %v739 = vrot.slane %v737, 6
      %v741 = vshrl.u32 %v735, 16
      %v743 = vrot.slane %v741, 6
      %744 = vrot.lane.b32.xlu0 %v739, 47
      %v745 = vpop.permute.xlu0 %744
      %746 = vrot.lane.b32.xlu0 %v743, 47
      %v747 = vpop.permute.xlu0 %746
      %v748 = vrot.slane %v745, 4
      %v749 = vrot.slane %v747, 4
      %v750 = vsel %vm251, %v748, %v749
      %v751 = vsel %vm649, %v745, %v750
      %v752 = vsel %vm649, %v747, %v749
      %v755 = vld [vmem:[#allocation2 + $0x18] sm:$0x88]
      %v756 = vsel %vm376, %v751, %v755
      %757 = vst [vmem:[#allocation2 + $0x18] sm:$0x88] %v756
      %v758 = vld [vmem:[#allocation2 + $0x20] sm:$0x8]
      %v759 = vsel %vm381, %v752, %v758
      %760 = vst [vmem:[#allocation2 + $0x20] sm:$0x8] %v759
      %v761 = vld [vmem:[%s197] sm:$0x22]
      %v762 = vld [vmem:[%s197 + $0x8] sm:$0x22]
      %v764 = vshll.u32 %v761, 16
      %v766 = vrot.slane %v764, 6
      %v768 = vshll.u32 %v762, 16
      %v770 = vrot.slane %v768, 6
      %771 = vrot.lane.b32.xlu0 %v766, 46
      %v772 = vpop.permute.xlu0 %771
      %773 = vrot.lane.b32.xlu0 %v770, 46
      %v774 = vpop.permute.xlu0 %773
      %v775 = vrot.slane %v772, 4
      %v776 = vrot.slane %v774, 4
      %v777 = vsel %vm251, %v775, %v776
      %v778 = vsel %vm696, %v772, %v777
      %v779 = vsel %vm696, %v774, %v776
      %v782 = vld [vmem:[#allocation2 + $0x18] sm:$0x88]
      %v783 = vsel %vm405, %v778, %v782
      %784 = vst [vmem:[#allocation2 + $0x18] sm:$0x88] %v783
      %v785 = vld [vmem:[#allocation2 + $0x20] sm:$0x8]
      %v786 = vsel %vm409, %v779, %v785
      %787 = vst [vmem:[#allocation2 + $0x20] sm:$0x8] %v786
      %v788 = vld [vmem:[%s197] sm:$0x11]
      %v789 = vld [vmem:[%s197 + $0x8] sm:$0x11]
      %792 = vrot.lane.b32.xlu0 %v788, 38
      %v793 = vpop.permute.xlu0 %792
      %794 = vrot.lane.b32.xlu0 %v789, 38
      %v795 = vpop.permute.xlu0 %794
      %v796 = vrot.slane %v793, 4
      %v797 = vrot.slane %v795, 4
      %v798 = vsel %vm251, %v796, %v797
      %vm799 = vcmask 310272
      %v800 = vsel %vm799, %v793, %v798
      %v801 = vsel %vm799, %v795, %v797
      %v804 = vld [vmem:[#allocation2 + $0x24] sm:$0x11]
      %v805 = vsel %vm216, %v800, %v804
      %806 = vst [vmem:[#allocation2 + $0x24] sm:$0x11] %v805
      %v807 = vld [vmem:[#allocation2 + $0x2c] sm:$0x1]
      %v808 = vsel %vm221, %v801, %v807
      %809 = vst [vmem:[#allocation2 + $0x2c] sm:$0x1] %v808
      %v810 = vld [vmem:[%s197] sm:$0x11]
      %v811 = vld [vmem:[%s197 + $0x8] sm:$0x11]
      %814 = vrot.lane.b32.xlu0 %v810, 38
      %v815 = vpop.permute.xlu0 %814
      %816 = vrot.lane.b32.xlu0 %v811, 38
      %v817 = vpop.permute.xlu0 %816
      %v818 = vrot.slane %v815, 4
      %v819 = vrot.slane %v817, 4
      %v820 = vsel %vm251, %v818, %v819
      %v821 = vsel %vm799, %v815, %v820
      %v822 = vsel %vm799, %v817, %v819
      %v825 = vld [vmem:[#allocation2 + $0x24] sm:$0x11]
      %v826 = vsel %vm231, %v821, %v825
      %827 = vst [vmem:[#allocation2 + $0x24] sm:$0x11] %v826
      %v828 = vld [vmem:[#allocation2 + $0x2c] sm:$0x1]
      %v829 = vsel %vm235, %v822, %v828
      %830 = vst [vmem:[#allocation2 + $0x2c] sm:$0x1] %v829
      %v831 = vld [vmem:[%s197] sm:$0x11]
      %v832 = vld [vmem:[%s197 + $0x8] sm:$0x11]
      %v835 = vrot.slane %v831, 7
      %v836 = vrot.slane %v832, 7
      %837 = vrot.lane.b32.xlu0 %v835, 37
      %v838 = vpop.permute.xlu0 %837
      %839 = vrot.lane.b32.xlu0 %v836, 37
      %v840 = vpop.permute.xlu0 %839
      %v841 = vrot.slane %v838, 4
      %v842 = vrot.slane %v840, 4
      %v843 = vsel %vm251, %v841, %v842
      %vm844 = vcmask 302080
      %v845 = vsel %vm844, %v838, %v843
      %v846 = vsel %vm844, %v840, %v842
      %v849 = vld [vmem:[#allocation2 + $0x24] sm:$0x22]
      %v850 = vsel %vm263, %v845, %v849
      %851 = vst [vmem:[#allocation2 + $0x24] sm:$0x22] %v850
      %v852 = vld [vmem:[#allocation2 + $0x2c] sm:$0x2]
      %v853 = vsel %vm268, %v846, %v852
      %854 = vst [vmem:[#allocation2 + $0x2c] sm:$0x2] %v853
      %v855 = vld [vmem:[%s1] sm:$0x3]
      %v856 = vld [vmem:[#allocation2] sm:$0xff]
      %v857 = vld [vmem:[#allocation2 + $0x8] sm:$0xf]
      %v858 = vld [vmem:[#allocation2 + $0xc] sm:$0xff]
      %v859 = vld [vmem:[#allocation2 + $0x14] sm:$0xf]
      %v860 = vld [vmem:[#allocation2 + $0x18] sm:$0xff]
      %v861 = vld [vmem:[#allocation2 + $0x20] sm:$0xf]
      %v862 = vld [vmem:[#allocation2 + $0x24] sm:$0x33]
      %v863 = vld [vmem:[#allocation2 + $0x2c] sm:$0x3]
      %v864 = vld [vmem:[%s2] sm:$0xf]
      %866 = vset.pattern.permute.xlu0 0
      %867 = vperm.xlu0 %866, %v864
      %v868 = vpop.permute.xlu0 %867
      %v878 = vunpack.c.l.b16 %v856
      %v879 = vunpack.c.h.b16 %v856
      %v880 = vunpack.c.l.b16 %v857
      %v881 = vunpack.c.l.b16 %v858
      %v882 = vunpack.c.h.b16 %v858
      %v883 = vunpack.c.l.b16 %v859
      %v884 = vunpack.c.l.b16 %v860
      %v885 = vunpack.c.h.b16 %v860
      %v886 = vunpack.c.l.b16 %v861
      %v887 = vunpack.c.l.b16 %v862
      %v888 = vunpack.c.h.b16 %v862
      %v889 = vunpack.c.l.b16 %v863
      %v890 = vpack.c.b16 %v881, %v878
      %v891 = vpack.c.b16 %v882, %v879
      %v892 = vpack.c.b16 %v883, %v880
      %v893 = vpack.c.b16 %v887, %v884
      %v894 = vpack.c.b16 %v888, %v885
      %v895 = vpack.c.b16 %v889, %v886
      %vm899 = vcmask 220160
      %v901 = vsel %vm899, %v855, 0
      %vm903 = vcmask 1044480
      %vm904 = vcmask 1045504
      %v905 = vsel %vm903, 4294967295, 65535
      %v906 = vsel %vm904, %v905, 0
      %v908 = vand.u32 %v893, %v906
      %v911 = vand.u32 %v894, %v906
      %v914 = vand.u32 %v895, %v906
      %916 = vmatprep.subr.bf16.mxu0 %v891
      %917 = vmatpush1.bf16.msra.mxu0 %v890
      %918 = vmatprep.subr.bf16.mxu0 %v911
      %919 = vmatpush1.bf16.msra.mxu0 %v908
      %920 = vmatprep.subr.bf16.mxu0 0
      %921 = vmatpush1.bf16.msra.mxu0 0
      %922 = vmatprep.subr.bf16.mxu0 0
      %923 = vmatpush1.bf16.msra.mxu0 0
      %924 = vmatprep.subr.bf16.mxu0 0
      %925 = vmatpush1.bf16.msra.mxu0 0
      %926 = vmatprep.subr.bf16.mxu0 0
      %927 = vmatpush1.bf16.msra.mxu0 0
      %928 = vmatprep.subr.bf16.mxu0 0
      %929 = vmatpush1.bf16.msra.mxu0 0
      %930 = vmatprep.subr.bf16.mxu0 0
      %931 = vmatpush1.bf16.msra.mxu0 0
      %932 = vmatprep.subr.bf16.mxu0 0
      %933 = vmatpush1.bf16.msra.mxu0 0
      %934 = vmatprep.subr.bf16.mxu0 0
      %935 = vmatpush1.bf16.msra.mxu0 0
      %936 = vmatprep.subr.bf16.mxu0 0
      %937 = vmatpush1.bf16.msra.mxu0 0
      %938 = vmatprep.subr.bf16.mxu0 0
      %939 = vmatpush1.bf16.msra.mxu0 0
      %940 = vmatprep.subr.bf16.mxu0 0
      %941 = vmatpush1.bf16.msra.mxu0 0
      %942 = vmatprep.subr.bf16.mxu0 0
      %943 = vmatpush1.bf16.msra.mxu0 0
      %944 = vmatprep.subr.bf16.mxu0 0
      %945 = vmatpush1.bf16.msra.mxu0 0
      %946 = vmatprep.subr.bf16.mxu0 0
      %947 = vmatpush1.bf16.msra.mxu0 0
      %948 = vmatprep.mubr.bf16.mxu0 0
      %949 = vmatmul.mubr.bf16.gmra.mrb[0].mxu0 %v901
      %v950 = vpop.f32.mrb[0].mxu0
      %v951 = vadd.f32 %v868, %v950
      %v952 = vpop.f32.mrb[0].mxu0
      %v953 = vadd.f32 %v868, %v952
      %v954 = vpop.f32.mrb[0].mxu0
      %v955 = vpop.f32.mrb[0].mxu0
      %956 = vdwg.mxu0
      %957 = vmatprep.subr.bf16.mxu0 0
      %958 = vmatpush1.bf16.msra.mxu0 %v892
      %959 = vmatprep.subr.bf16.mxu0 0
      %960 = vmatpush1.bf16.msra.mxu0 %v914
      %961 = vmatprep.subr.bf16.mxu0 0
      %962 = vmatpush1.bf16.msra.mxu0 0
      %963 = vmatprep.subr.bf16.mxu0 0
      %964 = vmatpush1.bf16.msra.mxu0 0
      %965 = vmatprep.subr.bf16.mxu0 0
      %966 = vmatpush1.bf16.msra.mxu0 0
      %967 = vmatprep.subr.bf16.mxu0 0
      %968 = vmatpush1.bf16.msra.mxu0 0
      %969 = vmatprep.subr.bf16.mxu0 0
      %970 = vmatpush1.bf16.msra.mxu0 0
      %971 = vmatprep.subr.bf16.mxu0 0
      %972 = vmatpush1.bf16.msra.mxu0 0
      %973 = vmatprep.subr.bf16.mxu0 0
      %974 = vmatpush1.bf16.msra.mxu0 0
      %975 = vmatprep.subr.bf16.mxu0 0
      %976 = vmatpush1.bf16.msra.mxu0 0
      %977 = vmatprep.subr.bf16.mxu0 0
      %978 = vmatpush1.bf16.msra.mxu0 0
      %979 = vmatprep.subr.bf16.mxu0 0
      %980 = vmatpush1.bf16.msra.mxu0 0
      %981 = vmatprep.subr.bf16.mxu0 0
      %982 = vmatpush1.bf16.msra.mxu0 0
      %983 = vmatprep.subr.bf16.mxu0 0
      %984 = vmatpush1.bf16.msra.mxu0 0
      %985 = vmatprep.subr.bf16.mxu0 0
      %986 = vmatpush1.bf16.msra.mxu0 0
      %987 = vmatprep.subr.bf16.mxu0 0
      %988 = vmatpush1.bf16.msra.mxu0 0
      %989 = vmatprep.mubr.bf16.mxu0 0
      %990 = vmatmul.mubr.bf16.gmra.mrb[0].mxu0 %v901
      %v991 = vpop.f32.mrb[0].mxu0
      %v992 = vadd.f32 %v868, %v991
      %v993 = vpop.f32.mrb[0].mxu0
      %v994 = vpop.f32.mrb[0].mxu0
      %v995 = vpop.f32.mrb[0].mxu0
      %996 = vdwg.mxu0
      %v997 = vmax.f32 %v951, 0.0
      %v998 = vmax.f32 %v953, 0.0
      %v999 = vmax.f32 %v992, 0.0
      %v1000 = vpack.c.bf16 %v997, %v997
      %v1001 = vpack.c.bf16 %v998, %v998
      %v1002 = vpack.c.bf16 %v999, %v999
      %v1006 = vcombine.low %v1000, %v1001
      %v1008 = vunpack.c.l.s4 1983009808
      %v1009 = vunpack.c.0.s8 %v1008
      %v1010 = vlaneseq
      %v1011 = vshrl.u32 %v1010, 7
      %v1012 = vsub.s32 %v1009, %v1011
      %v1013 = vrot.slane %v1006, %v1012
      %v1015 = vunpack.c.l.s4 1983009808
      %v1016 = vunpack.c.0.s8 %v1015
      %v1017 = vlaneseq
      %v1018 = vshrl.u32 %v1017, 7
      %v1019 = vsub.s32 %v1016, %v1018
      %v1020 = vrot.slane %v1002, %v1019
      %v1021 = vcombine.low %v1013, %v1020
      %vm1023 = vcmask 1041408
      %vm1024 = vcmask 1043458
      %vm1025 = vmor %vm1024, %vm1023
      %vm1026 = vcmask 472068
      %vm1027 = vmor %vm1026, %vm1025
      %1028 = vst.msk [vmem:[%s206] sm:$0x3f] %vm1027, %v1021
      %p1029 = scmp.lt.s32.totalorder %s18, 1
      %s1030 = scalar_select %p1029, %s18, 1
      %p1031 = scmp.lt.s32.totalorder %s19, 1
      %s1032 = scalar_select %p1031, %s19, 1
      %s1033 = smul.addr %s1032, 3
      %s1034 = smul.addr %s1030, 6
      %s1035 = sadd.s32 %s1033, %s1034
      %s1036 = smul.addr %s1035, 2
      %s1037 = scalar_lea.vmem %s3, %s1036
      // Predicated region
      $region33: #{simple_conv_forward.4} parent=31 // pred_check
        %p1038 = pneg %p116
      $region34: #{simple_conv_forward.4} parent=31 // pred_check_branch
        %1040 = sbr.rel (%p1038) target = $region36
      $region35: #{simple_conv_forward.4} parent=31 // pred_region
        _
      $region36: #{simple_conv_forward.4} parent=31 // pred_fallthru
        _
    $region32: #{simple_conv_forward.4} parent=5 // pred_fallthru
      _
    %p1041 = scmp.le.s32.totalorder 2, %s9
    // Predicated region
    $region37: #{simple_conv_forward.4} parent=5 // pred_check
      %p1042 = pneg %p1041
    $region38: #{simple_conv_forward.4} parent=5 // pred_check_branch
      %1044 = sbr.rel (%p1042) target = $region40
    $region39: #{simple_conv_forward.4} parent=5 // pred_region
      %s1045 = ssub.s32 %s9, 2
      // Predicated region
      $region41: #{simple_conv_forward.4} parent=39 // pred_check
        %p1046 = pneg %p122
      $region42: #{simple_conv_forward.4} parent=39 // pred_check_branch
        %1048 = sbr.rel (%p1046) target = $region44
      $region43: #{simple_conv_forward.4} parent=39 // pred_region
        %p1049 = scmp.lt.s32.totalorder %s20, 1
        %s1050 = scalar_select %p1049, %s20, 1
        %p1051 = scmp.lt.s32.totalorder %s21, 1
        %s1052 = scalar_select %p1051, %s21, 1
        %s1053 = smul.addr %s1052, 3
        %s1054 = smul.addr %s1050, 6
        %s1055 = sadd.s32 %s1053, %s1054
        %s1056 = smul.addr %s1055, 2
        %s1057 = scalar_lea.vmem %s3, %s1056
      $region44: #{simple_conv_forward.4} parent=39 // pred_fallthru
        _
    $region40: #{simple_conv_forward.4} parent=5 // pred_fallthru
      _
  $region6: #{simple_conv_forward.4} parent=0 // loop_footer
    %s13 = sadd.s32 1, %s9
  $region7: #{simple_conv_forward.4} parent=0 // loop_footer_branch
    %8 = sbr.rel target = $region3
  $region8: #{simple_conv_forward.4} parent=0 // loop_exit
    _

// kernel: simple_conv_forward.5
$region0: #{simple_conv_forward.5}
  #allocation0 [shape = 'u32[]', space=smem, size = 0x4, offset = 0x4, fixed_abs, tag = 'smem constant byte address 0x4 - core index']
  #allocation1 [shape = 'u32[144,128]{1,0:T(1,128)}', space=vmem, size = 0x12000, scoped, tag = 'internal scratch']
  #allocation2 [shape = 'bf16[108,44]{1,0:T(8,128)(2,1)}', space=vmem, size = 0x7000, scoped, tag = 'scratch operand']
  %s0 = inlined_call_operand.vmem [shape: bf16[2,2,4,8,75], index: 0, kind: input, shape index: {}]
  %s1 = inlined_call_operand.vmem [shape: bf16[8,108], index: 1, kind: input, shape index: {}]
  %s2 = inlined_call_operand.vmem [shape: f32[8,1], index: 2, kind: input, shape index: {}]
  %s3 = inlined_call_operand.vmem [shape: bf16[2,2,8,44], index: 3, kind: output, shape index: {}]
  %s4 = sld [smem:[#allocation0]]
  $region45: #{simple_conv_forward.5} parent=0
    _
  %s6 = ssub.s32 1, %s4
  %s7 = scalar_select 0, %s6, %s4
  loop: start=0, step=1, limit=6
  $region2: #{simple_conv_forward.5} parent=0 // loop_pre_header
    _
  $region3: #{simple_conv_forward.5} parent=0 // loop_header
    %s9 = sphi 0, %s13
    %p10 = scmp.ge.s32.totalorder %s9, 6
    %s16 = sphi 0, %s28
    %s17 = sphi 0, %s24
    %s18 = sphi 0, %s16
    %s19 = sphi 0, %s17
    %s20 = sphi 0, %s18
    %s21 = sphi 0, %s19
    %s33 = sphi 0, %s35
    %s36 = sphi 0, %s33
    %s37 = sphi 0, %s36
    %s53 = sphi 0, %s37
    %s57 = sphi 0, %s57
    %s59 = sphi 0, %s57
    %s60 = sphi 0, %s59
    %s74 = sphi 0, %s60
    %s78 = sphi 0, %s78
    %s80 = sphi 0, %s78
    %s81 = sphi 0, %s80
    %s95 = sphi 0, %s81
    %s103 = sphi 0, %s105
    %s106 = sphi 0, %s103
    %s107 = sphi 0, %s106
    %s123 = sphi 0, %s107
  $region4: #{simple_conv_forward.5} parent=0 // loop_header_branch
    %12 = sbr.rel (%p10) target = $region8
  $region5: #{simple_conv_forward.5} parent=0 // loop_body
    %s14 = ssub.s32 %s9, 1
    %s15 = ssub.s32 %s9, 2
    %s22 = sadd.s32 1, %s17
    %p23 = scmp.ge.s32.totalorder %s22, 2
    %s24 = scalar_select %p23, 0, %s22
    %s25 = sadd.s32 1, %s16
    %s26 = scalar_select %p23, %s25, %s16
    %p27 = scmp.ge.s32.totalorder %s26, 2
    %s28 = scalar_select %p27, 0, %s26
    %s29 = ssub.s32 %s16, %s28
    %s30 = ssub.s32 %s17, %s24
    %s31 = sor.u32 %s29, %s30
    %p32 = scmp.eq.s32.totalorder %s31, 0
    %s34 = sadd.s32 %s33, 1
    %s35 = scalar_select %p32, %s33, %s34
    %p38 = pneg %p32
    %p39 = scmp.eq.s32.totalorder %s9, 3
    %p40 = por %p38, %p39
    %p41 = scmp.ne.s32.totalorder %s33, %s36
    %p42 = scmp.eq.s32.totalorder %s9, 0
    %p43 = por %p41, %p42
    %p44 = scmp.ne.s32.totalorder %s33, %s36
    %p45 = scmp.eq.s32.totalorder %s14, 3
    %p46 = por %p44, %p45
    %p47 = scmp.ne.s32.totalorder %s36, %s37
    %p48 = scmp.eq.s32.totalorder %s14, 0
    %p49 = por %p47, %p48
    %p50 = scmp.ne.s32.totalorder %s36, %s37
    %p51 = scmp.eq.s32.totalorder %s15, 3
    %p52 = por %p50, %p51
    %p54 = scmp.ne.s32.totalorder %s37, %s53
    %p55 = scmp.eq.s32.totalorder %s15, 0
    %p56 = por %p54, %p55
    %s58 = sadd.s32 %s57, 1
    %p61 = scmp.eq.s32.totalorder %s9, 3
    %p62 = scmp.ne.s32.totalorder %s57, %s59
    %p63 = scmp.eq.s32.totalorder %s9, 0
    %p64 = por %p62, %p63
    %p65 = scmp.ne.s32.totalorder %s57, %s59
    %p66 = scmp.eq.s32.totalorder %s14, 3
    %p67 = por %p65, %p66
    %p68 = scmp.ne.s32.totalorder %s59, %s60
    %p69 = scmp.eq.s32.totalorder %s14, 0
    %p70 = por %p68, %p69
    %p71 = scmp.ne.s32.totalorder %s59, %s60
    %p72 = scmp.eq.s32.totalorder %s15, 3
    %p73 = por %p71, %p72
    %p75 = scmp.ne.s32.totalorder %s60, %s74
    %p76 = scmp.eq.s32.totalorder %s15, 0
    %p77 = por %p75, %p76
    %s79 = sadd.s32 %s78, 1
    %p82 = scmp.eq.s32.totalorder %s9, 3
    %p83 = scmp.ne.s32.totalorder %s78, %s80
    %p84 = scmp.eq.s32.totalorder %s9, 0
    %p85 = por %p83, %p84
    %p86 = scmp.ne.s32.totalorder %s78, %s80
    %p87 = scmp.eq.s32.totalorder %s14, 3
    %p88 = por %p86, %p87
    %p89 = scmp.ne.s32.totalorder %s80, %s81
    %p90 = scmp.eq.s32.totalorder %s14, 0
    %p91 = por %p89, %p90
    %p92 = scmp.ne.s32.totalorder %s80, %s81
    %p93 = scmp.eq.s32.totalorder %s15, 3
    %p94 = por %p92, %p93
    %p96 = scmp.ne.s32.totalorder %s81, %s95
    %p97 = scmp.eq.s32.totalorder %s15, 0
    %p98 = por %p96, %p97
    %s99 = ssub.s32 %s16, %s28
    %s100 = ssub.s32 %s17, %s24
    %s101 = sor.u32 %s99, %s100
    %p102 = scmp.eq.s32.totalorder %s101, 0
    %s104 = sadd.s32 %s103, 1
    %s105 = scalar_select %p102, %s103, %s104
    %p108 = pneg %p102
    %p109 = scmp.eq.s32.totalorder %s9, 3
    %p110 = por %p108, %p109
    %p111 = scmp.ne.s32.totalorder %s103, %s106
    %p112 = scmp.eq.s32.totalorder %s9, 0
    %p113 = por %p111, %p112
    %p114 = scmp.ne.s32.totalorder %s103, %s106
    %p115 = scmp.eq.s32.totalorder %s14, 3
    %p116 = por %p114, %p115
    %p117 = scmp.ne.s32.totalorder %s106, %s107
    %p118 = scmp.eq.s32.totalorder %s14, 0
    %p119 = por %p117, %p118
    %p120 = scmp.ne.s32.totalorder %s106, %s107
    %p121 = scmp.eq.s32.totalorder %s15, 3
    %p122 = por %p120, %p121
    %p124 = scmp.ne.s32.totalorder %s107, %s123
    %p125 = scmp.eq.s32.totalorder %s15, 0
    %p126 = por %p124, %p125
    %p127 = scmp.le.s32.totalorder 1, %s9
    %p128 = scmp.lt.s32.totalorder %s9, 5
    %p129 = pnand %p127, %p128
    %p130 = pneg %p129
    // Predicated region
    $region9: #{simple_conv_forward.5} parent=5 // pred_check
      _
    $region10: #{simple_conv_forward.5} parent=5 // pred_check_branch
      %132 = sbr.rel (%p129) target = $region12
    $region11: #{simple_conv_forward.5} parent=5 // pred_region
      %s133 = ssub.s32 %s9, 1
      // Predicated region
      $region13: #{simple_conv_forward.5} parent=11 // pred_check
        %p134 = pneg %p70
      $region14: #{simple_conv_forward.5} parent=11 // pred_check_branch
        %136 = sbr.rel (%p134) target = $region16
      $region15: #{simple_conv_forward.5} parent=11 // pred_region
        _
      $region16: #{simple_conv_forward.5} parent=11 // pred_fallthru
        _
      // Predicated region
      $region17: #{simple_conv_forward.5} parent=11 // pred_check
        %p137 = pneg %p91
      $region18: #{simple_conv_forward.5} parent=11 // pred_check_branch
        %139 = sbr.rel (%p137) target = $region20
      $region19: #{simple_conv_forward.5} parent=11 // pred_region
        _
      $region20: #{simple_conv_forward.5} parent=11 // pred_fallthru
        _
    $region12: #{simple_conv_forward.5} parent=5 // pred_fallthru
      _
    %p140 = scmp.lt.s32.totalorder %s9, 4
    // Predicated region
    $region21: #{simple_conv_forward.5} parent=5 // pred_check
      %p141 = pneg %p140
    $region22: #{simple_conv_forward.5} parent=5 // pred_check_branch
      %143 = sbr.rel (%p141) target = $region24
    $region23: #{simple_conv_forward.5} parent=5 // pred_region
      // Predicated region
      $region25: #{simple_conv_forward.5} parent=23 // pred_check
        %p144 = pneg %p43
      $region26: #{simple_conv_forward.5} parent=23 // pred_check_branch
        %146 = sbr.rel (%p144) target = $region28
      $region27: #{simple_conv_forward.5} parent=23 // pred_region
        %p147 = scmp.lt.s32.totalorder %s16, 1
        %s148 = scalar_select %p147, %s16, 1
        %p149 = scmp.lt.s32.totalorder %s17, 1
        %s150 = scalar_select %p149, %s17, 1
        %s151 = smul.addr %s150, 4
        %s152 = smul.addr %s148, 8
        %s153 = sadd.s32 %s151, %s152
        %s154 = smul.addr %s153, 4
        %s155 = scalar_lea.vmem %s0, %s154
      $region28: #{simple_conv_forward.5} parent=23 // pred_fallthru
        _
    $region24: #{simple_conv_forward.5} parent=5 // pred_fallthru
      _
    %p156 = scmp.le.s32.totalorder 1, %s9
    %p157 = scmp.lt.s32.totalorder %s9, 5
    %p158 = pnand %p156, %p157
    %p159 = pneg %p158
    // Predicated region
    $region29: #{simple_conv_forward.5} parent=5 // pred_check
      _
    $region30: #{simple_conv_forward.5} parent=5 // pred_check_branch
      %161 = sbr.rel (%p158) target = $region32
    $region31: #{simple_conv_forward.5} parent=5 // pred_region
      %s162 = ssub.s32 %s9, 1
      %p163 = scmp.lt.s32.totalorder %s18, 1
      %s164 = scalar_select %p163, %s18, 1
      %p165 = scmp.lt.s32.totalorder %s19, 1
      %s166 = scalar_select %p165, %s19, 1
      %s167 = smul.addr %s166, 4
      %s168 = smul.addr %s164, 8
      %s169 = sadd.s32 %s167, %s168
      %s170 = smul.addr %s169, 4
      %s171 = scalar_lea.vmem %s0, %s170
      %p172 = pneg %p49
      %p173 = pneg %p46
      %p174 = pneg %p70
      %p175 = pneg %p67
      %p176 = pneg %p91
      %p177 = pneg %p88
      %p178 = pneg %p119
      %p179 = pneg %p116
      %p180 = scmp.lt.s32.totalorder %s18, 1
      %s181 = scalar_select %p180, %s18, 1
      %p182 = scmp.lt.s32.totalorder %s19, 1
      %s183 = scalar_select %p182, %s19, 1
      %s184 = smul.addr %s181, 2
      %s185 = sadd.s32 %s183, %s184
      %s186 = smul.addr %s185, 4
      %s187 = scalar_lea.vmem %s3, %s186
      %p188 = scmp.lt.s32.totalorder %s18, 1
      %s189 = scalar_select %p188, %s18, 1
      %p190 = scmp.lt.s32.totalorder %s19, 1
      %s191 = scalar_select %p190, %s19, 1
      %s192 = smul.addr %s191, 4
      %s193 = smul.addr %s189, 8
      %s194 = sadd.s32 %s192, %s193
      %s195 = smul.addr %s194, 4
      %s196 = scalar_lea.vmem %s0, %s195
      %p197 = scmp.lt.s32.totalorder %s18, 1
      %s198 = scalar_select %p197, %s18, 1
      %p199 = scmp.lt.s32.totalorder %s19, 1
      %s200 = scalar_select %p199, %s19, 1
      %s201 = smul.addr %s198, 2
      %s202 = sadd.s32 %s200, %s201
      %s203 = smul.addr %s202, 4
      %s204 = scalar_lea.vmem %s3, %s203
      %v206 = vld [vmem:[%s196] sm:$0x1]
      %v207 = vld [vmem:[%s196 + $0x4] sm:$0x1]
      %v208 = vld [vmem:[%s196 + $0x8] sm:$0x1]
      %v209 = vld [vmem:[%s196 + $0xc] sm:$0x1]
      %v214 = vunpack.c.l.b16 %v206
      %v215 = vunpack.c.l.b16 %v207
      %v216 = vunpack.c.l.b16 %v208
      %v217 = vunpack.c.l.b16 %v209
      %v218 = vrot.slane %v215, 7
      %vm219 = vcmask 1041409
      %v220 = vsel %vm219, %v218, %v214
      %v221 = vrot.slane %v216, 6
      %vm222 = vcmask 1042434
      %v223 = vsel %vm222, %v221, %v220
      %v224 = vrot.slane %v217, 5
      %vm225 = vcmask 1043459
      %v226 = vsel %vm225, %v224, %v223
      %v227 = vpack.c.b16 %v226, %v226
      %vm229 = vcmask 353280
      %230 = vst.msk [vmem:[#allocation2] sm:$0x3] %vm229, %v227
      %v231 = vld [vmem:[%s196] sm:$0x1]
      %v232 = vld [vmem:[%s196 + $0x4] sm:$0x1]
      %v233 = vld [vmem:[%s196 + $0x8] sm:$0x1]
      %v234 = vld [vmem:[%s196 + $0xc] sm:$0x1]
      %v239 = vunpack.c.l.b16 %v231
      %v240 = vunpack.c.l.b16 %v232
      %v241 = vunpack.c.l.b16 %v233
      %v242 = vunpack.c.l.b16 %v234
      %v243 = vrot.slane %v239, 5
      %v244 = vrot.slane %v240, 4
      %vm245 = vcmask 1045509
      %v246 = vsel %vm245, %v244, %v243
      %v247 = vrot.slane %v241, 3
      %vm248 = vcmask 1046534
      %v249 = vsel %vm248, %v247, %v246
      %v250 = vrot.slane %v242, 2
      %vm251 = vcmask 1047559
      %v252 = vsel %vm251, %v250, %v249
      %v253 = vpack.c.b16 %v252, %v252
      %vm255 = vcmask 355330
      %256 = vst.msk [vmem:[#allocation2] sm:$0xc] %vm255, %v253
      %v257 = vld [vmem:[%s196] sm:$0x1]
      %v258 = vld [vmem:[%s196 + $0x4] sm:$0x1]
      %v259 = vld [vmem:[%s196 + $0x8] sm:$0x1]
      %v260 = vld [vmem:[%s196 + $0xc] sm:$0x1]
      %v265 = vunpack.c.l.b16 %v257
      %v266 = vunpack.c.l.b16 %v258
      %v267 = vunpack.c.l.b16 %v259
      %v268 = vunpack.c.l.b16 %v260
      %v269 = vrot.slane %v266, 7
      %v270 = vsel %vm219, %v269, %v265
      %v271 = vrot.slane %v267, 6
      %v272 = vsel %vm222, %v271, %v270
      %v273 = vrot.slane %v268, 5
      %v274 = vsel %vm225, %v273, %v272
      %v275 = vpack.c.b16 %v274, %v274
      %276 = vrot.lane.b32.xlu0 %v275, 127
      %v277 = vpop.permute.xlu0 %276
      %279 = vst.msk [vmem:[#allocation2 + $0x4] sm:$0x3] %vm229, %v277
      %v280 = vld [vmem:[%s196] sm:$0x2]
      %v281 = vld [vmem:[%s196 + $0x4] sm:$0x2]
      %v282 = vld [vmem:[%s196 + $0x8] sm:$0x2]
      %v283 = vld [vmem:[%s196 + $0xc] sm:$0x2]
      %v288 = vunpack.c.l.b16 %v280
      %v289 = vunpack.c.l.b16 %v281
      %v290 = vunpack.c.l.b16 %v282
      %v291 = vunpack.c.l.b16 %v283
      %v292 = vrot.slane %v288, 6
      %v293 = vrot.slane %v289, 5
      %v294 = vsel %vm245, %v293, %v292
      %v295 = vrot.slane %v290, 4
      %v296 = vsel %vm248, %v295, %v294
      %v297 = vrot.slane %v291, 3
      %v298 = vsel %vm251, %v297, %v296
      %v299 = vpack.c.b16 %v298, %v298
      %301 = vst.msk [vmem:[#allocation2 + $0x4] sm:$0xc] %vm255, %v299
      %v302 = vld [vmem:[%s196] sm:$0x2]
      %v303 = vld [vmem:[%s196 + $0x4] sm:$0x2]
      %v304 = vld [vmem:[%s196 + $0x8] sm:$0x2]
      %v305 = vld [vmem:[%s196 + $0xc] sm:$0x2]
      %v310 = vunpack.c.l.b16 %v302
      %v311 = vunpack.c.l.b16 %v303
      %v312 = vunpack.c.l.b16 %v304
      %v313 = vunpack.c.l.b16 %v305
      %v314 = vrot.slane %v310, 3
      %v315 = vrot.slane %v311, 2
      %v316 = vsel %vm219, %v315, %v314
      %v317 = vrot.slane %v312, 1
      %v318 = vsel %vm222, %v317, %v316
      %v319 = vsel %vm225, %v313, %v318
      %v320 = vpack.c.b16 %v319, %v319
      %322 = vst.msk [vmem:[#allocation2 + $0x8] sm:$0x3] %vm229, %v320
      %v323 = vld [vmem:[%s196] sm:$0x2]
      %v324 = vld [vmem:[%s196 + $0x4] sm:$0x2]
      %v325 = vld [vmem:[%s196 + $0x8] sm:$0x2]
      %v326 = vld [vmem:[%s196 + $0xc] sm:$0x2]
      %v331 = vunpack.c.l.b16 %v323
      %v332 = vunpack.c.l.b16 %v324
      %v333 = vunpack.c.l.b16 %v325
      %v334 = vunpack.c.l.b16 %v326
      %v335 = vrot.slane %v331, 6
      %v336 = vrot.slane %v332, 5
      %v337 = vsel %vm245, %v336, %v335
      %v338 = vrot.slane %v333, 4
      %v339 = vsel %vm248, %v338, %v337
      %v340 = vrot.slane %v334, 3
      %v341 = vsel %vm251, %v340, %v339
      %v342 = vpack.c.b16 %v341, %v341
      %343 = vrot.lane.b32.xlu0 %v342, 127
      %v344 = vpop.permute.xlu0 %343
      %346 = vst.msk [vmem:[#allocation2 + $0x8] sm:$0xc] %vm255, %v344
      %v347 = vld [vmem:[%s196] sm:$0x1]
      %v348 = vld [vmem:[%s196 + $0x4] sm:$0x1]
      %v349 = vld [vmem:[%s196 + $0x8] sm:$0x1]
      %v350 = vld [vmem:[%s196 + $0xc] sm:$0x1]
      %v355 = vunpack.c.l.b16 %v347
      %v356 = vunpack.c.l.b16 %v348
      %v357 = vunpack.c.l.b16 %v349
      %v358 = vunpack.c.l.b16 %v350
      %v359 = vrot.slane %v356, 7
      %v360 = vsel %vm219, %v359, %v355
      %v361 = vrot.slane %v357, 6
      %v362 = vsel %vm222, %v361, %v360
      %v363 = vrot.slane %v358, 5
      %v364 = vsel %vm225, %v363, %v362
      %v365 = vpack.c.b16 %v364, %v364
      %366 = vrot.lane.b32.xlu0 %v365, 123
      %v367 = vpop.permute.xlu0 %366
      %369 = vst.msk [vmem:[#allocation2 + $0xc] sm:$0x3] %vm229, %v367
      %v370 = vld [vmem:[%s196] sm:$0x1]
      %v371 = vld [vmem:[%s196 + $0x4] sm:$0x1]
      %v372 = vld [vmem:[%s196 + $0x8] sm:$0x1]
      %v373 = vld [vmem:[%s196 + $0xc] sm:$0x1]
      %v378 = vunpack.c.l.b16 %v370
      %v379 = vunpack.c.l.b16 %v371
      %v380 = vunpack.c.l.b16 %v372
      %v381 = vunpack.c.l.b16 %v373
      %v382 = vrot.slane %v378, 5
      %v383 = vrot.slane %v379, 4
      %v384 = vsel %vm245, %v383, %v382
      %v385 = vrot.slane %v380, 3
      %v386 = vsel %vm248, %v385, %v384
      %v387 = vrot.slane %v381, 2
      %v388 = vsel %vm251, %v387, %v386
      %v389 = vpack.c.b16 %v388, %v388
      %390 = vrot.lane.b32.xlu0 %v389, 123
      %v391 = vpop.permute.xlu0 %390
      %393 = vst.msk [vmem:[#allocation2 + $0xc] sm:$0xc] %vm255, %v391
      %v394 = vld [vmem:[%s196] sm:$0x1]
      %v395 = vld [vmem:[%s196 + $0x4] sm:$0x1]
      %v396 = vld [vmem:[%s196 + $0x8] sm:$0x1]
      %v397 = vld [vmem:[%s196 + $0xc] sm:$0x1]
      %v402 = vunpack.c.l.b16 %v394
      %v403 = vunpack.c.l.b16 %v395
      %v404 = vunpack.c.l.b16 %v396
      %v405 = vunpack.c.l.b16 %v397
      %v406 = vrot.slane %v403, 7
      %v407 = vsel %vm219, %v406, %v402
      %v408 = vrot.slane %v404, 6
      %v409 = vsel %vm222, %v408, %v407
      %v410 = vrot.slane %v405, 5
      %v411 = vsel %vm225, %v410, %v409
      %v412 = vpack.c.b16 %v411, %v411
      %413 = vrot.lane.b32.xlu0 %v412, 122
      %v414 = vpop.permute.xlu0 %413
      %416 = vst.msk [vmem:[#allocation2 + $0x10] sm:$0x3] %vm229, %v414
      %v417 = vld [vmem:[%s196] sm:$0x4]
      %v418 = vld [vmem:[%s196 + $0x4] sm:$0x4]
      %v419 = vld [vmem:[%s196 + $0x8] sm:$0x4]
      %v420 = vld [vmem:[%s196 + $0xc] sm:$0x4]
      %v425 = vunpack.c.l.b16 %v417
      %v426 = vunpack.c.l.b16 %v418
      %v427 = vunpack.c.l.b16 %v419
      %v428 = vunpack.c.l.b16 %v420
      %v429 = vrot.slane %v426, 7
      %v430 = vsel %vm245, %v429, %v425
      %v431 = vrot.slane %v427, 6
      %v432 = vsel %vm248, %v431, %v430
      %v433 = vrot.slane %v428, 5
      %v434 = vsel %vm251, %v433, %v432
      %v435 = vpack.c.b16 %v434, %v434
      %437 = vst.msk [vmem:[#allocation2 + $0x10] sm:$0xc] %vm255, %v435
      %v438 = vld [vmem:[%s196] sm:$0x4]
      %v439 = vld [vmem:[%s196 + $0x4] sm:$0x4]
      %v440 = vld [vmem:[%s196 + $0x8] sm:$0x4]
      %v441 = vld [vmem:[%s196 + $0xc] sm:$0x4]
      %v446 = vunpack.c.l.b16 %v438
      %v447 = vunpack.c.l.b16 %v439
      %v448 = vunpack.c.l.b16 %v440
      %v449 = vunpack.c.l.b16 %v441
      %v450 = vrot.slane %v446, 5
      %v451 = vrot.slane %v447, 4
      %v452 = vsel %vm219, %v451, %v450
      %v453 = vrot.slane %v448, 3
      %v454 = vsel %vm222, %v453, %v452
      %v455 = vrot.slane %v449, 2
      %v456 = vsel %vm225, %v455, %v454
      %v457 = vpack.c.b16 %v456, %v456
      %459 = vst.msk [vmem:[#allocation2 + $0x14] sm:$0x3] %vm229, %v457
      %v460 = vld [vmem:[%s196] sm:$0x4]
      %v461 = vld [vmem:[%s196 + $0x4] sm:$0x4]
      %v462 = vld [vmem:[%s196 + $0x8] sm:$0x4]
      %v463 = vld [vmem:[%s196 + $0xc] sm:$0x4]
      %v468 = vunpack.c.l.b16 %v460
      %v469 = vunpack.c.l.b16 %v461
      %v470 = vunpack.c.l.b16 %v462
      %v471 = vunpack.c.l.b16 %v463
      %v472 = vrot.slane %v469, 7
      %v473 = vsel %vm245, %v472, %v468
      %v474 = vrot.slane %v470, 6
      %v475 = vsel %vm248, %v474, %v473
      %v476 = vrot.slane %v471, 5
      %v477 = vsel %vm251, %v476, %v475
      %v478 = vpack.c.b16 %v477, %v477
      %479 = vrot.lane.b32.xlu0 %v478, 127
      %v480 = vpop.permute.xlu0 %479
      %482 = vst.msk [vmem:[#allocation2 + $0x14] sm:$0xc] %vm255, %v480
      %v483 = vld [vmem:[%s196] sm:$0x8]
      %v484 = vld [vmem:[%s196 + $0x4] sm:$0x8]
      %v485 = vld [vmem:[%s196 + $0x8] sm:$0x8]
      %v486 = vld [vmem:[%s196 + $0xc] sm:$0x8]
      %v491 = vunpack.c.l.b16 %v483
      %v492 = vunpack.c.l.b16 %v484
      %v493 = vunpack.c.l.b16 %v485
      %v494 = vunpack.c.l.b16 %v486
      %v495 = vrot.slane %v491, 6
      %v496 = vrot.slane %v492, 5
      %v497 = vsel %vm219, %v496, %v495
      %v498 = vrot.slane %v493, 4
      %v499 = vsel %vm222, %v498, %v497
      %v500 = vrot.slane %v494, 3
      %v501 = vsel %vm225, %v500, %v499
      %v502 = vpack.c.b16 %v501, %v501
      %504 = vst.msk [vmem:[#allocation2 + $0x18] sm:$0x3] %vm229, %v502
      %v505 = vld [vmem:[%s196] sm:$0x8]
      %v506 = vld [vmem:[%s196 + $0x4] sm:$0x8]
      %v507 = vld [vmem:[%s196 + $0x8] sm:$0x8]
      %v508 = vld [vmem:[%s196 + $0xc] sm:$0x8]
      %v513 = vunpack.c.l.b16 %v505
      %v514 = vunpack.c.l.b16 %v506
      %v515 = vunpack.c.l.b16 %v507
      %v516 = vunpack.c.l.b16 %v508
      %v517 = vrot.slane %v513, 3
      %v518 = vrot.slane %v514, 2
      %v519 = vsel %vm245, %v518, %v517
      %v520 = vrot.slane %v515, 1
      %v521 = vsel %vm248, %v520, %v519
      %v522 = vsel %vm251, %v516, %v521
      %v523 = vpack.c.b16 %v522, %v522
      %525 = vst.msk [vmem:[#allocation2 + $0x18] sm:$0xc] %vm255, %v523
      %v526 = vld [vmem:[%s196] sm:$0x8]
      %v527 = vld [vmem:[%s196 + $0x4] sm:$0x8]
      %v528 = vld [vmem:[%s196 + $0x8] sm:$0x8]
      %v529 = vld [vmem:[%s196 + $0xc] sm:$0x8]
      %v534 = vunpack.c.l.b16 %v526
      %v535 = vunpack.c.l.b16 %v527
      %v536 = vunpack.c.l.b16 %v528
      %v537 = vunpack.c.l.b16 %v529
      %v538 = vrot.slane %v534, 6
      %v539 = vrot.slane %v535, 5
      %v540 = vsel %vm219, %v539, %v538
      %v541 = vrot.slane %v536, 4
      %v542 = vsel %vm222, %v541, %v540
      %v543 = vrot.slane %v537, 3
      %v544 = vsel %vm225, %v543, %v542
      %v545 = vpack.c.b16 %v544, %v544
      %546 = vrot.lane.b32.xlu0 %v545, 127
      %v547 = vpop.permute.xlu0 %546
      %549 = vst.msk [vmem:[#allocation2 + $0x1c] sm:$0x3] %vm229, %v547
      %v550 = vld [vmem:[%s196] sm:$0x4]
      %v551 = vld [vmem:[%s196 + $0x4] sm:$0x4]
      %v552 = vld [vmem:[%s196 + $0x8] sm:$0x4]
      %v553 = vld [vmem:[%s196 + $0xc] sm:$0x4]
      %v558 = vunpack.c.l.b16 %v550
      %v559 = vunpack.c.l.b16 %v551
      %v560 = vunpack.c.l.b16 %v552
      %v561 = vunpack.c.l.b16 %v553
      %v562 = vrot.slane %v559, 7
      %v563 = vsel %vm245, %v562, %v558
      %v564 = vrot.slane %v560, 6
      %v565 = vsel %vm248, %v564, %v563
      %v566 = vrot.slane %v561, 5
      %v567 = vsel %vm251, %v566, %v565
      %v568 = vpack.c.b16 %v567, %v567
      %569 = vrot.lane.b32.xlu0 %v568, 123
      %v570 = vpop.permute.xlu0 %569
      %572 = vst.msk [vmem:[#allocation2 + $0x1c] sm:$0xc] %vm255, %v570
      %v573 = vld [vmem:[%s196] sm:$0x4]
      %v574 = vld [vmem:[%s196 + $0x4] sm:$0x4]
      %v575 = vld [vmem:[%s196 + $0x8] sm:$0x4]
      %v576 = vld [vmem:[%s196 + $0xc] sm:$0x4]
      %v581 = vunpack.c.l.b16 %v573
      %v582 = vunpack.c.l.b16 %v574
      %v583 = vunpack.c.l.b16 %v575
      %v584 = vunpack.c.l.b16 %v576
      %v585 = vrot.slane %v581, 5
      %v586 = vrot.slane %v582, 4
      %v587 = vsel %vm219, %v586, %v585
      %v588 = vrot.slane %v583, 3
      %v589 = vsel %vm222, %v588, %v587
      %v590 = vrot.slane %v584, 2
      %v591 = vsel %vm225, %v590, %v589
      %v592 = vpack.c.b16 %v591, %v591
      %593 = vrot.lane.b32.xlu0 %v592, 123
      %v594 = vpop.permute.xlu0 %593
      %596 = vst.msk [vmem:[#allocation2 + $0x20] sm:$0x3] %vm229, %v594
      %v597 = vld [vmem:[%s196] sm:$0x4]
      %v598 = vld [vmem:[%s196 + $0x4] sm:$0x4]
      %v599 = vld [vmem:[%s196 + $0x8] sm:$0x4]
      %v600 = vld [vmem:[%s196 + $0xc] sm:$0x4]
      %v605 = vunpack.c.l.b16 %v597
      %v606 = vunpack.c.l.b16 %v598
      %v607 = vunpack.c.l.b16 %v599
      %v608 = vunpack.c.l.b16 %v600
      %v609 = vrot.slane %v606, 7
      %v610 = vsel %vm245, %v609, %v605
      %v611 = vrot.slane %v607, 6
      %v612 = vsel %vm248, %v611, %v610
      %v613 = vrot.slane %v608, 5
      %v614 = vsel %vm251, %v613, %v612
      %v615 = vpack.c.b16 %v614, %v614
      %616 = vrot.lane.b32.xlu0 %v615, 122
      %v617 = vpop.permute.xlu0 %616
      %619 = vst.msk [vmem:[#allocation2 + $0x20] sm:$0xc] %vm255, %v617
      %v620 = vld [vmem:[%s196] sm:$0x1]
      %v621 = vld [vmem:[%s196 + $0x4] sm:$0x1]
      %v622 = vld [vmem:[%s196 + $0x8] sm:$0x1]
      %v623 = vld [vmem:[%s196 + $0xc] sm:$0x1]
      %v628 = vunpack.c.l.b16 %v620
      %v629 = vunpack.c.l.b16 %v621
      %v630 = vunpack.c.l.b16 %v622
      %v631 = vunpack.c.l.b16 %v623
      %v632 = vrot.slane %v629, 7
      %v633 = vsel %vm219, %v632, %v628
      %v634 = vrot.slane %v630, 6
      %v635 = vsel %vm222, %v634, %v633
      %v636 = vrot.slane %v631, 5
      %v637 = vsel %vm225, %v636, %v635
      %v638 = vpack.c.b16 %v637, %v637
      %639 = vrot.lane.b32.xlu0 %v638, 103
      %v640 = vpop.permute.xlu0 %639
      %642 = vst.msk [vmem:[#allocation2 + $0x24] sm:$0x3] %vm229, %v640
      %v643 = vld [vmem:[%s196] sm:$0x1]
      %v644 = vld [vmem:[%s196 + $0x4] sm:$0x1]
      %v645 = vld [vmem:[%s196 + $0x8] sm:$0x1]
      %v646 = vld [vmem:[%s196 + $0xc] sm:$0x1]
      %v651 = vunpack.c.l.b16 %v643
      %v652 = vunpack.c.l.b16 %v644
      %v653 = vunpack.c.l.b16 %v645
      %v654 = vunpack.c.l.b16 %v646
      %v655 = vrot.slane %v651, 5
      %v656 = vrot.slane %v652, 4
      %v657 = vsel %vm245, %v656, %v655
      %v658 = vrot.slane %v653, 3
      %v659 = vsel %vm248, %v658, %v657
      %v660 = vrot.slane %v654, 2
      %v661 = vsel %vm251, %v660, %v659
      %v662 = vpack.c.b16 %v661, %v661
      %663 = vrot.lane.b32.xlu0 %v662, 103
      %v664 = vpop.permute.xlu0 %663
      %666 = vst.msk [vmem:[#allocation2 + $0x24] sm:$0xc] %vm255, %v664
      %v667 = vld [vmem:[%s196] sm:$0x1]
      %v668 = vld [vmem:[%s196 + $0x4] sm:$0x1]
      %v669 = vld [vmem:[%s196 + $0x8] sm:$0x1]
      %v670 = vld [vmem:[%s196 + $0xc] sm:$0x1]
      %v675 = vunpack.c.l.b16 %v667
      %v676 = vunpack.c.l.b16 %v668
      %v677 = vunpack.c.l.b16 %v669
      %v678 = vunpack.c.l.b16 %v670
      %v679 = vrot.slane %v676, 7
      %v680 = vsel %vm219, %v679, %v675
      %v681 = vrot.slane %v677, 6
      %v682 = vsel %vm222, %v681, %v680
      %v683 = vrot.slane %v678, 5
      %v684 = vsel %vm225, %v683, %v682
      %v685 = vpack.c.b16 %v684, %v684
      %686 = vrot.lane.b32.xlu0 %v685, 102
      %v687 = vpop.permute.xlu0 %686
      %689 = vst.msk [vmem:[#allocation2 + $0x28] sm:$0x3] %vm229, %v687
      %v690 = vld [vmem:[%s196] sm:$0x2]
      %v691 = vld [vmem:[%s196 + $0x4] sm:$0x2]
      %v692 = vld [vmem:[%s196 + $0x8] sm:$0x2]
      %v693 = vld [vmem:[%s196 + $0xc] sm:$0x2]
      %v698 = vunpack.c.l.b16 %v690
      %v699 = vunpack.c.l.b16 %v691
      %v700 = vunpack.c.l.b16 %v692
      %v701 = vunpack.c.l.b16 %v693
      %v702 = vrot.slane %v698, 6
      %v703 = vrot.slane %v699, 5
      %v704 = vsel %vm245, %v703, %v702
      %v705 = vrot.slane %v700, 4
      %v706 = vsel %vm248, %v705, %v704
      %v707 = vrot.slane %v701, 3
      %v708 = vsel %vm251, %v707, %v706
      %v709 = vpack.c.b16 %v708, %v708
      %710 = vrot.lane.b32.xlu0 %v709, 103
      %v711 = vpop.permute.xlu0 %710
      %713 = vst.msk [vmem:[#allocation2 + $0x28] sm:$0xc] %vm255, %v711
      %v714 = vld [vmem:[%s196] sm:$0x2]
      %v715 = vld [vmem:[%s196 + $0x4] sm:$0x2]
      %v716 = vld [vmem:[%s196 + $0x8] sm:$0x2]
      %v717 = vld [vmem:[%s196 + $0xc] sm:$0x2]
      %v722 = vunpack.c.l.b16 %v714
      %v723 = vunpack.c.l.b16 %v715
      %v724 = vunpack.c.l.b16 %v716
      %v725 = vunpack.c.l.b16 %v717
      %v726 = vrot.slane %v722, 3
      %v727 = vrot.slane %v723, 2
      %v728 = vsel %vm219, %v727, %v726
      %v729 = vrot.slane %v724, 1
      %v730 = vsel %vm222, %v729, %v728
      %v731 = vsel %vm225, %v725, %v730
      %v732 = vpack.c.b16 %v731, %v731
      %733 = vrot.lane.b32.xlu0 %v732, 103
      %v734 = vpop.permute.xlu0 %733
      %736 = vst.msk [vmem:[#allocation2 + $0x2c] sm:$0x3] %vm229, %v734
      %v737 = vld [vmem:[%s196] sm:$0x2]
      %v738 = vld [vmem:[%s196 + $0x4] sm:$0x2]
      %v739 = vld [vmem:[%s196 + $0x8] sm:$0x2]
      %v740 = vld [vmem:[%s196 + $0xc] sm:$0x2]
      %v745 = vunpack.c.l.b16 %v737
      %v746 = vunpack.c.l.b16 %v738
      %v747 = vunpack.c.l.b16 %v739
      %v748 = vunpack.c.l.b16 %v740
      %v749 = vrot.slane %v745, 6
      %v750 = vrot.slane %v746, 5
      %v751 = vsel %vm245, %v750, %v749
      %v752 = vrot.slane %v747, 4
      %v753 = vsel %vm248, %v752, %v751
      %v754 = vrot.slane %v748, 3
      %v755 = vsel %vm251, %v754, %v753
      %v756 = vpack.c.b16 %v755, %v755
      %757 = vrot.lane.b32.xlu0 %v756, 102
      %v758 = vpop.permute.xlu0 %757
      %760 = vst.msk [vmem:[#allocation2 + $0x2c] sm:$0xc] %vm255, %v758
      %v761 = vld [vmem:[%s196] sm:$0x1]
      %v762 = vld [vmem:[%s196 + $0x4] sm:$0x1]
      %v763 = vld [vmem:[%s196 + $0x8] sm:$0x1]
      %v764 = vld [vmem:[%s196 + $0xc] sm:$0x1]
      %v769 = vunpack.c.l.b16 %v761
      %v770 = vunpack.c.l.b16 %v762
      %v771 = vunpack.c.l.b16 %v763
      %v772 = vunpack.c.l.b16 %v764
      %v773 = vrot.slane %v770, 7
      %v774 = vsel %vm219, %v773, %v769
      %v775 = vrot.slane %v771, 6
      %v776 = vsel %vm222, %v775, %v774
      %v777 = vrot.slane %v772, 5
      %v778 = vsel %vm225, %v777, %v776
      %v779 = vpack.c.b16 %v778, %v778
      %780 = vrot.lane.b32.xlu0 %v779, 98
      %v781 = vpop.permute.xlu0 %780
      %783 = vst.msk [vmem:[#allocation2 + $0x30] sm:$0x3] %vm229, %v781
      %v784 = vld [vmem:[%s196] sm:$0x1]
      %v785 = vld [vmem:[%s196 + $0x4] sm:$0x1]
      %v786 = vld [vmem:[%s196 + $0x8] sm:$0x1]
      %v787 = vld [vmem:[%s196 + $0xc] sm:$0x1]
      %v792 = vunpack.c.l.b16 %v784
      %v793 = vunpack.c.l.b16 %v785
      %v794 = vunpack.c.l.b16 %v786
      %v795 = vunpack.c.l.b16 %v787
      %v796 = vrot.slane %v792, 5
      %v797 = vrot.slane %v793, 4
      %v798 = vsel %vm245, %v797, %v796
      %v799 = vrot.slane %v794, 3
      %v800 = vsel %vm248, %v799, %v798
      %v801 = vrot.slane %v795, 2
      %v802 = vsel %vm251, %v801, %v800
      %v803 = vpack.c.b16 %v802, %v802
      %804 = vrot.lane.b32.xlu0 %v803, 98
      %v805 = vpop.permute.xlu0 %804
      %807 = vst.msk [vmem:[#allocation2 + $0x30] sm:$0xc] %vm255, %v805
      %v808 = vld [vmem:[%s196] sm:$0x1]
      %v809 = vld [vmem:[%s196 + $0x4] sm:$0x1]
      %v810 = vld [vmem:[%s196 + $0x8] sm:$0x1]
      %v811 = vld [vmem:[%s196 + $0xc] sm:$0x1]
      %v816 = vunpack.c.l.b16 %v808
      %v817 = vunpack.c.l.b16 %v809
      %v818 = vunpack.c.l.b16 %v810
      %v819 = vunpack.c.l.b16 %v811
      %v820 = vrot.slane %v817, 7
      %v821 = vsel %vm219, %v820, %v816
      %v822 = vrot.slane %v818, 6
      %v823 = vsel %vm222, %v822, %v821
      %v824 = vrot.slane %v819, 5
      %v825 = vsel %vm225, %v824, %v823
      %v826 = vpack.c.b16 %v825, %v825
      %827 = vrot.lane.b32.xlu0 %v826, 97
      %v828 = vpop.permute.xlu0 %827
      %830 = vst.msk [vmem:[#allocation2 + $0x34] sm:$0x3] %vm229, %v828
      %v831 = vld [vmem:[%s1] sm:$0xf]
      %v832 = vld [vmem:[#allocation2] sm:$0xf]
      %v833 = vld [vmem:[#allocation2 + $0x4] sm:$0xf]
      %v834 = vld [vmem:[#allocation2 + $0x8] sm:$0xf]
      %v835 = vld [vmem:[#allocation2 + $0xc] sm:$0xf]
      %v836 = vld [vmem:[#allocation2 + $0x10] sm:$0xf]
      %v837 = vld [vmem:[#allocation2 + $0x14] sm:$0xf]
      %v838 = vld [vmem:[#allocation2 + $0x18] sm:$0xf]
      %v839 = vld [vmem:[#allocation2 + $0x1c] sm:$0xf]
      %v840 = vld [vmem:[#allocation2 + $0x20] sm:$0xf]
      %v841 = vld [vmem:[#allocation2 + $0x24] sm:$0xf]
      %v842 = vld [vmem:[#allocation2 + $0x28] sm:$0xf]
      %v843 = vld [vmem:[#allocation2 + $0x2c] sm:$0xf]
      %v844 = vld [vmem:[#allocation2 + $0x30] sm:$0xf]
      %v845 = vld [vmem:[#allocation2 + $0x34] sm:$0x3]
      %v846 = vld [vmem:[%s2] sm:$0xff]
      %848 = vset.pattern.permute.xlu0 0
      %849 = vperm.xlu0 %848, %v846
      %v850 = vpop.permute.xlu0 %849
      %v866 = vunpack.c.l.b16 %v832
      %v867 = vunpack.c.l.b16 %v833
      %v868 = vunpack.c.l.b16 %v834
      %v869 = vunpack.c.l.b16 %v835
      %v870 = vunpack.c.l.b16 %v836
      %v871 = vunpack.c.l.b16 %v837
      %v872 = vunpack.c.l.b16 %v838
      %v873 = vunpack.c.l.b16 %v839
      %v874 = vunpack.c.l.b16 %v840
      %v875 = vunpack.c.l.b16 %v841
      %v876 = vunpack.c.l.b16 %v842
      %v877 = vunpack.c.l.b16 %v843
      %v878 = vunpack.c.l.b16 %v844
      %v879 = vunpack.c.l.b16 %v845
      %v880 = vpack.c.b16 %v867, %v866
      %v881 = vpack.c.b16 %v869, %v868
      %v882 = vpack.c.b16 %v871, %v870
      %v883 = vpack.c.b16 %v873, %v872
      %v884 = vpack.c.b16 %v875, %v874
      %v885 = vpack.c.b16 %v877, %v876
      %v886 = vpack.c.b16 %v879, %v878
      %vm893 = vcmask 883712
      %v895 = vsel %vm893, %v831, 0
      %vm897 = vcmask 1045504
      %v899 = vsel %vm897, %v886, 0
      %901 = vmatprep.subr.bf16.mxu0 0
      %902 = vmatpush1.bf16.msra.mxu0 %v880
      %903 = vmatprep.subr.bf16.mxu0 0
      %904 = vmatpush1.bf16.msra.mxu0 %v881
      %905 = vmatprep.subr.bf16.mxu0 0
      %906 = vmatpush1.bf16.msra.mxu0 %v882
      %907 = vmatprep.subr.bf16.mxu0 0
      %908 = vmatpush1.bf16.msra.mxu0 %v883
      %909 = vmatprep.subr.bf16.mxu0 0
      %910 = vmatpush1.bf16.msra.mxu0 %v884
      %911 = vmatprep.subr.bf16.mxu0 0
      %912 = vmatpush1.bf16.msra.mxu0 %v885
      %913 = vmatprep.subr.bf16.mxu0 0
      %914 = vmatpush1.bf16.msra.mxu0 %v899
      %915 = vmatprep.subr.bf16.mxu0 0
      %916 = vmatpush1.bf16.msra.mxu0 0
      %917 = vmatprep.subr.bf16.mxu0 0
      %918 = vmatpush1.bf16.msra.mxu0 0
      %919 = vmatprep.subr.bf16.mxu0 0
      %920 = vmatpush1.bf16.msra.mxu0 0
      %921 = vmatprep.subr.bf16.mxu0 0
      %922 = vmatpush1.bf16.msra.mxu0 0
      %923 = vmatprep.subr.bf16.mxu0 0
      %924 = vmatpush1.bf16.msra.mxu0 0
      %925 = vmatprep.subr.bf16.mxu0 0
      %926 = vmatpush1.bf16.msra.mxu0 0
      %927 = vmatprep.subr.bf16.mxu0 0
      %928 = vmatpush1.bf16.msra.mxu0 0
      %929 = vmatprep.subr.bf16.mxu0 0
      %930 = vmatpush1.bf16.msra.mxu0 0
      %931 = vmatprep.subr.bf16.mxu0 0
      %932 = vmatpush1.bf16.msra.mxu0 0
      %933 = vmatprep.mubr.bf16.mxu0 0
      %934 = vmatmul.mubr.bf16.gmra.mrb[0].mxu0 %v895
      %v935 = vpop.f32.mrb[0].mxu0
      %v936 = vadd.f32 %v850, %v935
      %v937 = vpop.f32.mrb[0].mxu0
      %v938 = vpop.f32.mrb[0].mxu0
      %v939 = vpop.f32.mrb[0].mxu0
      %940 = vdwg.mxu0
      %v941 = vmax.f32 %v936, 0.0
      %v942 = vpack.c.bf16 %v941, %v941
      %vm943 = vcmask 355328
      %944 = vst.msk [vmem:[%s204] sm:$0xf] %vm943, %v942
      %p945 = scmp.lt.s32.totalorder %s18, 1
      %s946 = scalar_select %p945, %s18, 1
      %p947 = scmp.lt.s32.totalorder %s19, 1
      %s948 = scalar_select %p947, %s19, 1
      %s949 = smul.addr %s946, 2
      %s950 = sadd.s32 %s948, %s949
      %s951 = smul.addr %s950, 4
      %s952 = scalar_lea.vmem %s3, %s951
      // Predicated region
      $region33: #{simple_conv_forward.5} parent=31 // pred_check
        %p953 = pneg %p116
      $region34: #{simple_conv_forward.5} parent=31 // pred_check_branch
        %955 = sbr.rel (%p953) target = $region36
      $region35: #{simple_conv_forward.5} parent=31 // pred_region
        _
      $region36: #{simple_conv_forward.5} parent=31 // pred_fallthru
        _
    $region32: #{simple_conv_forward.5} parent=5 // pred_fallthru
      _
    %p956 = scmp.le.s32.totalorder 2, %s9
    // Predicated region
    $region37: #{simple_conv_forward.5} parent=5 // pred_check
      %p957 = pneg %p956
    $region38: #{simple_conv_forward.5} parent=5 // pred_check_branch
      %959 = sbr.rel (%p957) target = $region40
    $region39: #{simple_conv_forward.5} parent=5 // pred_region
      %s960 = ssub.s32 %s9, 2
      // Predicated region
      $region41: #{simple_conv_forward.5} parent=39 // pred_check
        %p961 = pneg %p122
      $region42: #{simple_conv_forward.5} parent=39 // pred_check_branch
        %963 = sbr.rel (%p961) target = $region44
      $region43: #{simple_conv_forward.5} parent=39 // pred_region
        %p964 = scmp.lt.s32.totalorder %s20, 1
        %s965 = scalar_select %p964, %s20, 1
        %p966 = scmp.lt.s32.totalorder %s21, 1
        %s967 = scalar_select %p966, %s21, 1
        %s968 = smul.addr %s965, 2
        %s969 = sadd.s32 %s967, %s968
        %s970 = smul.addr %s969, 4
        %s971 = scalar_lea.vmem %s3, %s970
      $region44: #{simple_conv_forward.5} parent=39 // pred_fallthru
        _
    $region40: #{simple_conv_forward.5} parent=5 // pred_fallthru
      _
  $region6: #{simple_conv_forward.5} parent=0 // loop_footer
    %s13 = sadd.s32 1, %s9
  $region7: #{simple_conv_forward.5} parent=0 // loop_footer_branch
    %8 = sbr.rel target = $region3
  $region8: #{simple_conv_forward.5} parent=0 // loop_exit
    _

// kernel: simple_conv_forward.6
$region0: #{simple_conv_forward.6}
  #allocation0 [shape = 'u32[]', space=smem, size = 0x4, offset = 0x4, fixed_abs, tag = 'smem constant byte address 0x4 - core index']
  #allocation1 [shape = 'u32[144,128]{1,0:T(1,128)}', space=vmem, size = 0x12000, scoped, tag = 'internal scratch']
  #allocation2 [shape = 'bf16[216,5]{1,0:T(8,128)(2,1)}', space=vmem, size = 0xd800, scoped, tag = 'scratch operand']
  %s0 = inlined_call_operand.vmem [shape: bf16[2,2,8,8,18], index: 0, kind: input, shape index: {}]
  %s1 = inlined_call_operand.vmem [shape: bf16[16,216], index: 1, kind: input, shape index: {}]
  %s2 = inlined_call_operand.vmem [shape: f32[16,1], index: 2, kind: input, shape index: {}]
  %s3 = inlined_call_operand.vmem [shape: bf16[2,2,16,5], index: 3, kind: output, shape index: {}]
  %s4 = sld [smem:[#allocation0]]
  $region45: #{simple_conv_forward.6} parent=0
    _
  %s6 = ssub.s32 1, %s4
  %s7 = scalar_select 0, %s6, %s4
  loop: start=0, step=1, limit=6
  $region2: #{simple_conv_forward.6} parent=0 // loop_pre_header
    _
  $region3: #{simple_conv_forward.6} parent=0 // loop_header
    %s9 = sphi 0, %s13
    %p10 = scmp.ge.s32.totalorder %s9, 6
    %s16 = sphi 0, %s28
    %s17 = sphi 0, %s24
    %s18 = sphi 0, %s16
    %s19 = sphi 0, %s17
    %s20 = sphi 0, %s18
    %s21 = sphi 0, %s19
    %s33 = sphi 0, %s35
    %s36 = sphi 0, %s33
    %s37 = sphi 0, %s36
    %s53 = sphi 0, %s37
    %s57 = sphi 0, %s57
    %s59 = sphi 0, %s57
    %s60 = sphi 0, %s59
    %s74 = sphi 0, %s60
    %s78 = sphi 0, %s78
    %s80 = sphi 0, %s78
    %s81 = sphi 0, %s80
    %s95 = sphi 0, %s81
    %s103 = sphi 0, %s105
    %s106 = sphi 0, %s103
    %s107 = sphi 0, %s106
    %s123 = sphi 0, %s107
  $region4: #{simple_conv_forward.6} parent=0 // loop_header_branch
    %12 = sbr.rel (%p10) target = $region8
  $region5: #{simple_conv_forward.6} parent=0 // loop_body
    %s14 = ssub.s32 %s9, 1
    %s15 = ssub.s32 %s9, 2
    %s22 = sadd.s32 1, %s17
    %p23 = scmp.ge.s32.totalorder %s22, 2
    %s24 = scalar_select %p23, 0, %s22
    %s25 = sadd.s32 1, %s16
    %s26 = scalar_select %p23, %s25, %s16
    %p27 = scmp.ge.s32.totalorder %s26, 2
    %s28 = scalar_select %p27, 0, %s26
    %s29 = ssub.s32 %s16, %s28
    %s30 = ssub.s32 %s17, %s24
    %s31 = sor.u32 %s29, %s30
    %p32 = scmp.eq.s32.totalorder %s31, 0
    %s34 = sadd.s32 %s33, 1
    %s35 = scalar_select %p32, %s33, %s34
    %p38 = pneg %p32
    %p39 = scmp.eq.s32.totalorder %s9, 3
    %p40 = por %p38, %p39
    %p41 = scmp.ne.s32.totalorder %s33, %s36
    %p42 = scmp.eq.s32.totalorder %s9, 0
    %p43 = por %p41, %p42
    %p44 = scmp.ne.s32.totalorder %s33, %s36
    %p45 = scmp.eq.s32.totalorder %s14, 3
    %p46 = por %p44, %p45
    %p47 = scmp.ne.s32.totalorder %s36, %s37
    %p48 = scmp.eq.s32.totalorder %s14, 0
    %p49 = por %p47, %p48
    %p50 = scmp.ne.s32.totalorder %s36, %s37
    %p51 = scmp.eq.s32.totalorder %s15, 3
    %p52 = por %p50, %p51
    %p54 = scmp.ne.s32.totalorder %s37, %s53
    %p55 = scmp.eq.s32.totalorder %s15, 0
    %p56 = por %p54, %p55
    %s58 = sadd.s32 %s57, 1
    %p61 = scmp.eq.s32.totalorder %s9, 3
    %p62 = scmp.ne.s32.totalorder %s57, %s59
    %p63 = scmp.eq.s32.totalorder %s9, 0
    %p64 = por %p62, %p63
    %p65 = scmp.ne.s32.totalorder %s57, %s59
    %p66 = scmp.eq.s32.totalorder %s14, 3
    %p67 = por %p65, %p66
    %p68 = scmp.ne.s32.totalorder %s59, %s60
    %p69 = scmp.eq.s32.totalorder %s14, 0
    %p70 = por %p68, %p69
    %p71 = scmp.ne.s32.totalorder %s59, %s60
    %p72 = scmp.eq.s32.totalorder %s15, 3
    %p73 = por %p71, %p72
    %p75 = scmp.ne.s32.totalorder %s60, %s74
    %p76 = scmp.eq.s32.totalorder %s15, 0
    %p77 = por %p75, %p76
    %s79 = sadd.s32 %s78, 1
    %p82 = scmp.eq.s32.totalorder %s9, 3
    %p83 = scmp.ne.s32.totalorder %s78, %s80
    %p84 = scmp.eq.s32.totalorder %s9, 0
    %p85 = por %p83, %p84
    %p86 = scmp.ne.s32.totalorder %s78, %s80
    %p87 = scmp.eq.s32.totalorder %s14, 3
    %p88 = por %p86, %p87
    %p89 = scmp.ne.s32.totalorder %s80, %s81
    %p90 = scmp.eq.s32.totalorder %s14, 0
    %p91 = por %p89, %p90
    %p92 = scmp.ne.s32.totalorder %s80, %s81
    %p93 = scmp.eq.s32.totalorder %s15, 3
    %p94 = por %p92, %p93
    %p96 = scmp.ne.s32.totalorder %s81, %s95
    %p97 = scmp.eq.s32.totalorder %s15, 0
    %p98 = por %p96, %p97
    %s99 = ssub.s32 %s16, %s28
    %s100 = ssub.s32 %s17, %s24
    %s101 = sor.u32 %s99, %s100
    %p102 = scmp.eq.s32.totalorder %s101, 0
    %s104 = sadd.s32 %s103, 1
    %s105 = scalar_select %p102, %s103, %s104
    %p108 = pneg %p102
    %p109 = scmp.eq.s32.totalorder %s9, 3
    %p110 = por %p108, %p109
    %p111 = scmp.ne.s32.totalorder %s103, %s106
    %p112 = scmp.eq.s32.totalorder %s9, 0
    %p113 = por %p111, %p112
    %p114 = scmp.ne.s32.totalorder %s103, %s106
    %p115 = scmp.eq.s32.totalorder %s14, 3
    %p116 = por %p114, %p115
    %p117 = scmp.ne.s32.totalorder %s106, %s107
    %p118 = scmp.eq.s32.totalorder %s14, 0
    %p119 = por %p117, %p118
    %p120 = scmp.ne.s32.totalorder %s106, %s107
    %p121 = scmp.eq.s32.totalorder %s15, 3
    %p122 = por %p120, %p121
    %p124 = scmp.ne.s32.totalorder %s107, %s123
    %p125 = scmp.eq.s32.totalorder %s15, 0
    %p126 = por %p124, %p125
    %p127 = scmp.le.s32.totalorder 1, %s9
    %p128 = scmp.lt.s32.totalorder %s9, 5
    %p129 = pnand %p127, %p128
    %p130 = pneg %p129
    // Predicated region
    $region9: #{simple_conv_forward.6} parent=5 // pred_check
      _
    $region10: #{simple_conv_forward.6} parent=5 // pred_check_branch
      %132 = sbr.rel (%p129) target = $region12
    $region11: #{simple_conv_forward.6} parent=5 // pred_region
      %s133 = ssub.s32 %s9, 1
      // Predicated region
      $region13: #{simple_conv_forward.6} parent=11 // pred_check
        %p134 = pneg %p70
      $region14: #{simple_conv_forward.6} parent=11 // pred_check_branch
        %136 = sbr.rel (%p134) target = $region16
      $region15: #{simple_conv_forward.6} parent=11 // pred_region
        _
      $region16: #{simple_conv_forward.6} parent=11 // pred_fallthru
        _
      // Predicated region
      $region17: #{simple_conv_forward.6} parent=11 // pred_check
        %p137 = pneg %p91
      $region18: #{simple_conv_forward.6} parent=11 // pred_check_branch
        %139 = sbr.rel (%p137) target = $region20
      $region19: #{simple_conv_forward.6} parent=11 // pred_region
        _
      $region20: #{simple_conv_forward.6} parent=11 // pred_fallthru
        _
    $region12: #{simple_conv_forward.6} parent=5 // pred_fallthru
      _
    %p140 = scmp.lt.s32.totalorder %s9, 4
    // Predicated region
    $region21: #{simple_conv_forward.6} parent=5 // pred_check
      %p141 = pneg %p140
    $region22: #{simple_conv_forward.6} parent=5 // pred_check_branch
      %143 = sbr.rel (%p141) target = $region24
    $region23: #{simple_conv_forward.6} parent=5 // pred_region
      // Predicated region
      $region25: #{simple_conv_forward.6} parent=23 // pred_check
        %p144 = pneg %p43
      $region26: #{simple_conv_forward.6} parent=23 // pred_check_branch
        %146 = sbr.rel (%p144) target = $region28
      $region27: #{simple_conv_forward.6} parent=23 // pred_region
        %p147 = scmp.lt.s32.totalorder %s16, 1
        %s148 = scalar_select %p147, %s16, 1
        %p149 = scmp.lt.s32.totalorder %s17, 1
        %s150 = scalar_select %p149, %s17, 1
        %s151 = smul.addr %s150, 8
        %s152 = smul.addr %s148, 16
        %s153 = sadd.s32 %s151, %s152
        %s154 = smul.addr %s153, 4
        %s155 = scalar_lea.vmem %s0, %s154
      $region28: #{simple_conv_forward.6} parent=23 // pred_fallthru
        _
    $region24: #{simple_conv_forward.6} parent=5 // pred_fallthru
      _
    %p156 = scmp.le.s32.totalorder 1, %s9
    %p157 = scmp.lt.s32.totalorder %s9, 5
    %p158 = pnand %p156, %p157
    %p159 = pneg %p158
    // Predicated region
    $region29: #{simple_conv_forward.6} parent=5 // pred_check
      _
    $region30: #{simple_conv_forward.6} parent=5 // pred_check_branch
      %161 = sbr.rel (%p158) target = $region32
    $region31: #{simple_conv_forward.6} parent=5 // pred_region
      %s162 = ssub.s32 %s9, 1
      %p163 = scmp.lt.s32.totalorder %s18, 1
      %s164 = scalar_select %p163, %s18, 1
      %p165 = scmp.lt.s32.totalorder %s19, 1
      %s166 = scalar_select %p165, %s19, 1
      %s167 = smul.addr %s166, 8
      %s168 = smul.addr %s164, 16
      %s169 = sadd.s32 %s167, %s168
      %s170 = smul.addr %s169, 4
      %s171 = scalar_lea.vmem %s0, %s170
      %p172 = pneg %p49
      %p173 = pneg %p46
      %p174 = pneg %p70
      %p175 = pneg %p67
      %p176 = pneg %p91
      %p177 = pneg %p88
      %p178 = pneg %p119
      %p179 = pneg %p116
      %p180 = scmp.lt.s32.totalorder %s18, 1
      %s181 = scalar_select %p180, %s18, 1
      %p182 = scmp.lt.s32.totalorder %s19, 1
      %s183 = scalar_select %p182, %s19, 1
      %s184 = smul.addr %s183, 2
      %s185 = smul.addr %s181, 4
      %s186 = sadd.s32 %s184, %s185
      %s187 = smul.addr %s186, 4
      %s188 = scalar_lea.vmem %s3, %s187
      %p189 = scmp.lt.s32.totalorder %s18, 1
      %s190 = scalar_select %p189, %s18, 1
      %p191 = scmp.lt.s32.totalorder %s19, 1
      %s192 = scalar_select %p191, %s19, 1
      %s193 = smul.addr %s192, 8
      %s194 = smul.addr %s190, 16
      %s195 = sadd.s32 %s193, %s194
      %s196 = smul.addr %s195, 4
      %s197 = scalar_lea.vmem %s0, %s196
      %p198 = scmp.lt.s32.totalorder %s18, 1
      %s199 = scalar_select %p198, %s18, 1
      %p200 = scmp.lt.s32.totalorder %s19, 1
      %s201 = scalar_select %p200, %s19, 1
      %s202 = smul.addr %s201, 2
      %s203 = smul.addr %s199, 4
      %s204 = sadd.s32 %s202, %s203
      %s205 = smul.addr %s204, 4
      %s206 = scalar_lea.vmem %s3, %s205
      %v208 = vld [vmem:[%s197] sm:$0x1]
      %v209 = vld [vmem:[%s197 + $0x4] sm:$0x1]
      %v210 = vld [vmem:[%s197 + $0x8] sm:$0x1]
      %v211 = vld [vmem:[%s197 + $0xc] sm:$0x1]
      %v212 = vld [vmem:[%s197 + $0x10] sm:$0x1]
      %v213 = vld [vmem:[%s197 + $0x14] sm:$0x1]
      %v214 = vld [vmem:[%s197 + $0x18] sm:$0x1]
      %v215 = vld [vmem:[%s197 + $0x1c] sm:$0x1]
      %v224 = vunpack.c.l.b16 %v208
      %v225 = vunpack.c.l.b16 %v209
      %v226 = vunpack.c.l.b16 %v210
      %v227 = vunpack.c.l.b16 %v211
      %v228 = vunpack.c.l.b16 %v212
      %v229 = vunpack.c.l.b16 %v213
      %v230 = vunpack.c.l.b16 %v214
      %v231 = vunpack.c.l.b16 %v215
      %v232 = vrot.slane %v225, 7
      %vm233 = vcmask 1041409
      %v234 = vsel %vm233, %v232, %v224
      %v235 = vrot.slane %v226, 6
      %vm236 = vcmask 1042434
      %v237 = vsel %vm236, %v235, %v234
      %v238 = vrot.slane %v227, 5
      %vm239 = vcmask 1043459
      %v240 = vsel %vm239, %v238, %v237
      %v241 = vrot.slane %v228, 4
      %vm242 = vcmask 1044484
      %v243 = vsel %vm242, %v241, %v240
      %v244 = vrot.slane %v229, 3
      %vm245 = vcmask 1045509
      %v246 = vsel %vm245, %v244, %v243
      %v247 = vrot.slane %v230, 2
      %vm248 = vcmask 1046534
      %v249 = vsel %vm248, %v247, %v246
      %v250 = vrot.slane %v231, 1
      %vm251 = vcmask 1047559
      %v252 = vsel %vm251, %v250, %v249
      %v253 = vpack.c.b16 %v252, %v252
      %vm255 = vcmask 35840
      %256 = vst.msk [vmem:[#allocation2] sm:$0xf] %vm255, %v253
      %v257 = vld [vmem:[%s197] sm:$0x1]
      %v258 = vld [vmem:[%s197 + $0x4] sm:$0x1]
      %v259 = vld [vmem:[%s197 + $0x8] sm:$0x1]
      %v260 = vld [vmem:[%s197 + $0xc] sm:$0x1]
      %v261 = vld [vmem:[%s197 + $0x10] sm:$0x1]
      %v262 = vld [vmem:[%s197 + $0x14] sm:$0x1]
      %v263 = vld [vmem:[%s197 + $0x18] sm:$0x1]
      %v264 = vld [vmem:[%s197 + $0x1c] sm:$0x1]
      %v273 = vunpack.c.l.b16 %v257
      %v274 = vunpack.c.l.b16 %v258
      %v275 = vunpack.c.l.b16 %v259
      %v276 = vunpack.c.l.b16 %v260
      %v277 = vunpack.c.l.b16 %v261
      %v278 = vunpack.c.l.b16 %v262
      %v279 = vunpack.c.l.b16 %v263
      %v280 = vunpack.c.l.b16 %v264
      %v281 = vrot.slane %v273, 1
      %v282 = vsel %vm233, %v274, %v281
      %v283 = vrot.slane %v275, 7
      %v284 = vsel %vm236, %v283, %v282
      %v285 = vrot.slane %v276, 6
      %v286 = vsel %vm239, %v285, %v284
      %v287 = vrot.slane %v277, 5
      %v288 = vsel %vm242, %v287, %v286
      %v289 = vrot.slane %v278, 4
      %v290 = vsel %vm245, %v289, %v288
      %v291 = vrot.slane %v279, 3
      %v292 = vsel %vm248, %v291, %v290
      %v293 = vrot.slane %v280, 2
      %v294 = vsel %vm251, %v293, %v292
      %v295 = vpack.c.b16 %v294, %v294
      %297 = vst.msk [vmem:[#allocation2 + $0x4] sm:$0xf] %vm255, %v295
      %v298 = vld [vmem:[%s197] sm:$0x1]
      %v299 = vld [vmem:[%s197 + $0x4] sm:$0x1]
      %v300 = vld [vmem:[%s197 + $0x8] sm:$0x1]
      %v301 = vld [vmem:[%s197 + $0xc] sm:$0x1]
      %v302 = vld [vmem:[%s197 + $0x10] sm:$0x1]
      %v303 = vld [vmem:[%s197 + $0x14] sm:$0x1]
      %v304 = vld [vmem:[%s197 + $0x18] sm:$0x1]
      %v305 = vld [vmem:[%s197 + $0x1c] sm:$0x1]
      %v314 = vunpack.c.l.b16 %v298
      %v315 = vunpack.c.l.b16 %v299
      %v316 = vunpack.c.l.b16 %v300
      %v317 = vunpack.c.l.b16 %v301
      %v318 = vunpack.c.l.b16 %v302
      %v319 = vunpack.c.l.b16 %v303
      %v320 = vunpack.c.l.b16 %v304
      %v321 = vunpack.c.l.b16 %v305
      %v322 = vrot.slane %v315, 7
      %v323 = vsel %vm233, %v322, %v314
      %v324 = vrot.slane %v316, 6
      %v325 = vsel %vm236, %v324, %v323
      %v326 = vrot.slane %v317, 5
      %v327 = vsel %vm239, %v326, %v325
      %v328 = vrot.slane %v318, 4
      %v329 = vsel %vm242, %v328, %v327
      %v330 = vrot.slane %v319, 3
      %v331 = vsel %vm245, %v330, %v329
      %v332 = vrot.slane %v320, 2
      %v333 = vsel %vm248, %v332, %v331
      %v334 = vrot.slane %v321, 1
      %v335 = vsel %vm251, %v334, %v333
      %v336 = vpack.c.b16 %v335, %v335
      %337 = vrot.lane.b32.xlu0 %v336, 127
      %v338 = vpop.permute.xlu0 %337
      %340 = vst.msk [vmem:[#allocation2 + $0x8] sm:$0xf] %vm255, %v338
      %v341 = vld [vmem:[%s197] sm:$0x2]
      %v342 = vld [vmem:[%s197 + $0x4] sm:$0x2]
      %v343 = vld [vmem:[%s197 + $0x8] sm:$0x2]
      %v344 = vld [vmem:[%s197 + $0xc] sm:$0x2]
      %v345 = vld [vmem:[%s197 + $0x10] sm:$0x2]
      %v346 = vld [vmem:[%s197 + $0x14] sm:$0x2]
      %v347 = vld [vmem:[%s197 + $0x18] sm:$0x2]
      %v348 = vld [vmem:[%s197 + $0x1c] sm:$0x2]
      %v357 = vunpack.c.l.b16 %v341
      %v358 = vunpack.c.l.b16 %v342
      %v359 = vunpack.c.l.b16 %v343
      %v360 = vunpack.c.l.b16 %v344
      %v361 = vunpack.c.l.b16 %v345
      %v362 = vunpack.c.l.b16 %v346
      %v363 = vunpack.c.l.b16 %v347
      %v364 = vunpack.c.l.b16 %v348
      %v365 = vrot.slane %v357, 2
      %v366 = vrot.slane %v358, 1
      %v367 = vsel %vm233, %v366, %v365
      %v368 = vsel %vm236, %v359, %v367
      %v369 = vrot.slane %v360, 7
      %v370 = vsel %vm239, %v369, %v368
      %v371 = vrot.slane %v361, 6
      %v372 = vsel %vm242, %v371, %v370
      %v373 = vrot.slane %v362, 5
      %v374 = vsel %vm245, %v373, %v372
      %v375 = vrot.slane %v363, 4
      %v376 = vsel %vm248, %v375, %v374
      %v377 = vrot.slane %v364, 3
      %v378 = vsel %vm251, %v377, %v376
      %v379 = vpack.c.b16 %v378, %v378
      %381 = vst.msk [vmem:[#allocation2 + $0xc] sm:$0xf] %vm255, %v379
      %v382 = vld [vmem:[%s197] sm:$0x2]
      %v383 = vld [vmem:[%s197 + $0x4] sm:$0x2]
      %v384 = vld [vmem:[%s197 + $0x8] sm:$0x2]
      %v385 = vld [vmem:[%s197 + $0xc] sm:$0x2]
      %v386 = vld [vmem:[%s197 + $0x10] sm:$0x2]
      %v387 = vld [vmem:[%s197 + $0x14] sm:$0x2]
      %v388 = vld [vmem:[%s197 + $0x18] sm:$0x2]
      %v389 = vld [vmem:[%s197 + $0x1c] sm:$0x2]
      %v398 = vunpack.c.l.b16 %v382
      %v399 = vunpack.c.l.b16 %v383
      %v400 = vunpack.c.l.b16 %v384
      %v401 = vunpack.c.l.b16 %v385
      %v402 = vunpack.c.l.b16 %v386
      %v403 = vunpack.c.l.b16 %v387
      %v404 = vunpack.c.l.b16 %v388
      %v405 = vunpack.c.l.b16 %v389
      %v406 = vrot.slane %v398, 3
      %v407 = vrot.slane %v399, 2
      %v408 = vsel %vm233, %v407, %v406
      %v409 = vrot.slane %v400, 1
      %v410 = vsel %vm236, %v409, %v408
      %v411 = vsel %vm239, %v401, %v410
      %v412 = vrot.slane %v402, 7
      %v413 = vsel %vm242, %v412, %v411
      %v414 = vrot.slane %v403, 6
      %v415 = vsel %vm245, %v414, %v413
      %v416 = vrot.slane %v404, 5
      %v417 = vsel %vm248, %v416, %v415
      %v418 = vrot.slane %v405, 4
      %v419 = vsel %vm251, %v418, %v417
      %v420 = vpack.c.b16 %v419, %v419
      %422 = vst.msk [vmem:[#allocation2 + $0x10] sm:$0xf] %vm255, %v420
      %v423 = vld [vmem:[%s197] sm:$0x2]
      %v424 = vld [vmem:[%s197 + $0x4] sm:$0x2]
      %v425 = vld [vmem:[%s197 + $0x8] sm:$0x2]
      %v426 = vld [vmem:[%s197 + $0xc] sm:$0x2]
      %v427 = vld [vmem:[%s197 + $0x10] sm:$0x2]
      %v428 = vld [vmem:[%s197 + $0x14] sm:$0x2]
      %v429 = vld [vmem:[%s197 + $0x18] sm:$0x2]
      %v430 = vld [vmem:[%s197 + $0x1c] sm:$0x2]
      %v439 = vunpack.c.l.b16 %v423
      %v440 = vunpack.c.l.b16 %v424
      %v441 = vunpack.c.l.b16 %v425
      %v442 = vunpack.c.l.b16 %v426
      %v443 = vunpack.c.l.b16 %v427
      %v444 = vunpack.c.l.b16 %v428
      %v445 = vunpack.c.l.b16 %v429
      %v446 = vunpack.c.l.b16 %v430
      %v447 = vrot.slane %v439, 2
      %v448 = vrot.slane %v440, 1
      %v449 = vsel %vm233, %v448, %v447
      %v450 = vsel %vm236, %v441, %v449
      %v451 = vrot.slane %v442, 7
      %v452 = vsel %vm239, %v451, %v450
      %v453 = vrot.slane %v443, 6
      %v454 = vsel %vm242, %v453, %v452
      %v455 = vrot.slane %v444, 5
      %v456 = vsel %vm245, %v455, %v454
      %v457 = vrot.slane %v445, 4
      %v458 = vsel %vm248, %v457, %v456
      %v459 = vrot.slane %v446, 3
      %v460 = vsel %vm251, %v459, %v458
      %v461 = vpack.c.b16 %v460, %v460
      %462 = vrot.lane.b32.xlu0 %v461, 127
      %v463 = vpop.permute.xlu0 %462
      %465 = vst.msk [vmem:[#allocation2 + $0x14] sm:$0xf] %vm255, %v463
      %v466 = vld [vmem:[%s197] sm:$0x1]
      %v467 = vld [vmem:[%s197 + $0x4] sm:$0x1]
      %v468 = vld [vmem:[%s197 + $0x8] sm:$0x1]
      %v469 = vld [vmem:[%s197 + $0xc] sm:$0x1]
      %v470 = vld [vmem:[%s197 + $0x10] sm:$0x1]
      %v471 = vld [vmem:[%s197 + $0x14] sm:$0x1]
      %v472 = vld [vmem:[%s197 + $0x18] sm:$0x1]
      %v473 = vld [vmem:[%s197 + $0x1c] sm:$0x1]
      %v482 = vunpack.c.l.b16 %v466
      %v483 = vunpack.c.l.b16 %v467
      %v484 = vunpack.c.l.b16 %v468
      %v485 = vunpack.c.l.b16 %v469
      %v486 = vunpack.c.l.b16 %v470
      %v487 = vunpack.c.l.b16 %v471
      %v488 = vunpack.c.l.b16 %v472
      %v489 = vunpack.c.l.b16 %v473
      %v490 = vrot.slane %v483, 7
      %v491 = vsel %vm233, %v490, %v482
      %v492 = vrot.slane %v484, 6
      %v493 = vsel %vm236, %v492, %v491
      %v494 = vrot.slane %v485, 5
      %v495 = vsel %vm239, %v494, %v493
      %v496 = vrot.slane %v486, 4
      %v497 = vsel %vm242, %v496, %v495
      %v498 = vrot.slane %v487, 3
      %v499 = vsel %vm245, %v498, %v497
      %v500 = vrot.slane %v488, 2
      %v501 = vsel %vm248, %v500, %v499
      %v502 = vrot.slane %v489, 1
      %v503 = vsel %vm251, %v502, %v501
      %v504 = vpack.c.b16 %v503, %v503
      %505 = vrot.lane.b32.xlu0 %v504, 125
      %v506 = vpop.permute.xlu0 %505
      %508 = vst.msk [vmem:[#allocation2 + $0x18] sm:$0xf] %vm255, %v506
      %v509 = vld [vmem:[%s197] sm:$0x1]
      %v510 = vld [vmem:[%s197 + $0x4] sm:$0x1]
      %v511 = vld [vmem:[%s197 + $0x8] sm:$0x1]
      %v512 = vld [vmem:[%s197 + $0xc] sm:$0x1]
      %v513 = vld [vmem:[%s197 + $0x10] sm:$0x1]
      %v514 = vld [vmem:[%s197 + $0x14] sm:$0x1]
      %v515 = vld [vmem:[%s197 + $0x18] sm:$0x1]
      %v516 = vld [vmem:[%s197 + $0x1c] sm:$0x1]
      %v525 = vunpack.c.l.b16 %v509
      %v526 = vunpack.c.l.b16 %v510
      %v527 = vunpack.c.l.b16 %v511
      %v528 = vunpack.c.l.b16 %v512
      %v529 = vunpack.c.l.b16 %v513
      %v530 = vunpack.c.l.b16 %v514
      %v531 = vunpack.c.l.b16 %v515
      %v532 = vunpack.c.l.b16 %v516
      %v533 = vrot.slane %v525, 1
      %v534 = vsel %vm233, %v526, %v533
      %v535 = vrot.slane %v527, 7
      %v536 = vsel %vm236, %v535, %v534
      %v537 = vrot.slane %v528, 6
      %v538 = vsel %vm239, %v537, %v536
      %v539 = vrot.slane %v529, 5
      %v540 = vsel %vm242, %v539, %v538
      %v541 = vrot.slane %v530, 4
      %v542 = vsel %vm245, %v541, %v540
      %v543 = vrot.slane %v531, 3
      %v544 = vsel %vm248, %v543, %v542
      %v545 = vrot.slane %v532, 2
      %v546 = vsel %vm251, %v545, %v544
      %v547 = vpack.c.b16 %v546, %v546
      %548 = vrot.lane.b32.xlu0 %v547, 125
      %v549 = vpop.permute.xlu0 %548
      %551 = vst.msk [vmem:[#allocation2 + $0x1c] sm:$0xf] %vm255, %v549
      %v552 = vld [vmem:[%s197] sm:$0x1]
      %v553 = vld [vmem:[%s197 + $0x4] sm:$0x1]
      %v554 = vld [vmem:[%s197 + $0x8] sm:$0x1]
      %v555 = vld [vmem:[%s197 + $0xc] sm:$0x1]
      %v556 = vld [vmem:[%s197 + $0x10] sm:$0x1]
      %v557 = vld [vmem:[%s197 + $0x14] sm:$0x1]
      %v558 = vld [vmem:[%s197 + $0x18] sm:$0x1]
      %v559 = vld [vmem:[%s197 + $0x1c] sm:$0x1]
      %v568 = vunpack.c.l.b16 %v552
      %v569 = vunpack.c.l.b16 %v553
      %v570 = vunpack.c.l.b16 %v554
      %v571 = vunpack.c.l.b16 %v555
      %v572 = vunpack.c.l.b16 %v556
      %v573 = vunpack.c.l.b16 %v557
      %v574 = vunpack.c.l.b16 %v558
      %v575 = vunpack.c.l.b16 %v559
      %v576 = vrot.slane %v569, 7
      %v577 = vsel %vm233, %v576, %v568
      %v578 = vrot.slane %v570, 6
      %v579 = vsel %vm236, %v578, %v577
      %v580 = vrot.slane %v571, 5
      %v581 = vsel %vm239, %v580, %v579
      %v582 = vrot.slane %v572, 4
      %v583 = vsel %vm242, %v582, %v581
      %v584 = vrot.slane %v573, 3
      %v585 = vsel %vm245, %v584, %v583
      %v586 = vrot.slane %v574, 2
      %v587 = vsel %vm248, %v586, %v585
      %v588 = vrot.slane %v575, 1
      %v589 = vsel %vm251, %v588, %v587
      %v590 = vpack.c.b16 %v589, %v589
      %591 = vrot.lane.b32.xlu0 %v590, 124
      %v592 = vpop.permute.xlu0 %591
      %594 = vst.msk [vmem:[#allocation2 + $0x20] sm:$0xf] %vm255, %v592
      %v595 = vld [vmem:[%s197] sm:$0x4]
      %v596 = vld [vmem:[%s197 + $0x4] sm:$0x4]
      %v597 = vld [vmem:[%s197 + $0x8] sm:$0x4]
      %v598 = vld [vmem:[%s197 + $0xc] sm:$0x4]
      %v599 = vld [vmem:[%s197 + $0x10] sm:$0x4]
      %v600 = vld [vmem:[%s197 + $0x14] sm:$0x4]
      %v601 = vld [vmem:[%s197 + $0x18] sm:$0x4]
      %v602 = vld [vmem:[%s197 + $0x1c] sm:$0x4]
      %v611 = vunpack.c.l.b16 %v595
      %v612 = vunpack.c.l.b16 %v596
      %v613 = vunpack.c.l.b16 %v597
      %v614 = vunpack.c.l.b16 %v598
      %v615 = vunpack.c.l.b16 %v599
      %v616 = vunpack.c.l.b16 %v600
      %v617 = vunpack.c.l.b16 %v601
      %v618 = vunpack.c.l.b16 %v602
      %v619 = vrot.slane %v611, 4
      %v620 = vrot.slane %v612, 3
      %v621 = vsel %vm233, %v620, %v619
      %v622 = vrot.slane %v613, 2
      %v623 = vsel %vm236, %v622, %v621
      %v624 = vrot.slane %v614, 1
      %v625 = vsel %vm239, %v624, %v623
      %v626 = vsel %vm242, %v615, %v625
      %v627 = vrot.slane %v616, 7
      %v628 = vsel %vm245, %v627, %v626
      %v629 = vrot.slane %v617, 6
      %v630 = vsel %vm248, %v629, %v628
      %v631 = vrot.slane %v618, 5
      %v632 = vsel %vm251, %v631, %v630
      %v633 = vpack.c.b16 %v632, %v632
      %635 = vst.msk [vmem:[#allocation2 + $0x24] sm:$0xf] %vm255, %v633
      %v636 = vld [vmem:[%s197] sm:$0x4]
      %v637 = vld [vmem:[%s197 + $0x4] sm:$0x4]
      %v638 = vld [vmem:[%s197 + $0x8] sm:$0x4]
      %v639 = vld [vmem:[%s197 + $0xc] sm:$0x4]
      %v640 = vld [vmem:[%s197 + $0x10] sm:$0x4]
      %v641 = vld [vmem:[%s197 + $0x14] sm:$0x4]
      %v642 = vld [vmem:[%s197 + $0x18] sm:$0x4]
      %v643 = vld [vmem:[%s197 + $0x1c] sm:$0x4]
      %v652 = vunpack.c.l.b16 %v636
      %v653 = vunpack.c.l.b16 %v637
      %v654 = vunpack.c.l.b16 %v638
      %v655 = vunpack.c.l.b16 %v639
      %v656 = vunpack.c.l.b16 %v640
      %v657 = vunpack.c.l.b16 %v641
      %v658 = vunpack.c.l.b16 %v642
      %v659 = vunpack.c.l.b16 %v643
      %v660 = vrot.slane %v652, 5
      %v661 = vrot.slane %v653, 4
      %v662 = vsel %vm233, %v661, %v660
      %v663 = vrot.slane %v654, 3
      %v664 = vsel %vm236, %v663, %v662
      %v665 = vrot.slane %v655, 2
      %v666 = vsel %vm239, %v665, %v664
      %v667 = vrot.slane %v656, 1
      %v668 = vsel %vm242, %v667, %v666
      %v669 = vsel %vm245, %v657, %v668
      %v670 = vrot.slane %v658, 7
      %v671 = vsel %vm248, %v670, %v669
      %v672 = vrot.slane %v659, 6
      %v673 = vsel %vm251, %v672, %v671
      %v674 = vpack.c.b16 %v673, %v673
      %676 = vst.msk [vmem:[#allocation2 + $0x28] sm:$0xf] %vm255, %v674
      %v677 = vld [vmem:[%s197] sm:$0x4]
      %v678 = vld [vmem:[%s197 + $0x4] sm:$0x4]
      %v679 = vld [vmem:[%s197 + $0x8] sm:$0x4]
      %v680 = vld [vmem:[%s197 + $0xc] sm:$0x4]
      %v681 = vld [vmem:[%s197 + $0x10] sm:$0x4]
      %v682 = vld [vmem:[%s197 + $0x14] sm:$0x4]
      %v683 = vld [vmem:[%s197 + $0x18] sm:$0x4]
      %v684 = vld [vmem:[%s197 + $0x1c] sm:$0x4]
      %v693 = vunpack.c.l.b16 %v677
      %v694 = vunpack.c.l.b16 %v678
      %v695 = vunpack.c.l.b16 %v679
      %v696 = vunpack.c.l.b16 %v680
      %v697 = vunpack.c.l.b16 %v681
      %v698 = vunpack.c.l.b16 %v682
      %v699 = vunpack.c.l.b16 %v683
      %v700 = vunpack.c.l.b16 %v684
      %v701 = vrot.slane %v693, 4
      %v702 = vrot.slane %v694, 3
      %v703 = vsel %vm233, %v702, %v701
      %v704 = vrot.slane %v695, 2
      %v705 = vsel %vm236, %v704, %v703
      %v706 = vrot.slane %v696, 1
      %v707 = vsel %vm239, %v706, %v705
      %v708 = vsel %vm242, %v697, %v707
      %v709 = vrot.slane %v698, 7
      %v710 = vsel %vm245, %v709, %v708
      %v711 = vrot.slane %v699, 6
      %v712 = vsel %vm248, %v711, %v710
      %v713 = vrot.slane %v700, 5
      %v714 = vsel %vm251, %v713, %v712
      %v715 = vpack.c.b16 %v714, %v714
      %716 = vrot.lane.b32.xlu0 %v715, 127
      %v717 = vpop.permute.xlu0 %716
      %719 = vst.msk [vmem:[#allocation2 + $0x2c] sm:$0xf] %vm255, %v717
      %v720 = vld [vmem:[%s197] sm:$0x8]
      %v721 = vld [vmem:[%s197 + $0x4] sm:$0x8]
      %v722 = vld [vmem:[%s197 + $0x8] sm:$0x8]
      %v723 = vld [vmem:[%s197 + $0xc] sm:$0x8]
      %v724 = vld [vmem:[%s197 + $0x10] sm:$0x8]
      %v725 = vld [vmem:[%s197 + $0x14] sm:$0x8]
      %v726 = vld [vmem:[%s197 + $0x18] sm:$0x8]
      %v727 = vld [vmem:[%s197 + $0x1c] sm:$0x8]
      %v736 = vunpack.c.l.b16 %v720
      %v737 = vunpack.c.l.b16 %v721
      %v738 = vunpack.c.l.b16 %v722
      %v739 = vunpack.c.l.b16 %v723
      %v740 = vunpack.c.l.b16 %v724
      %v741 = vunpack.c.l.b16 %v725
      %v742 = vunpack.c.l.b16 %v726
      %v743 = vunpack.c.l.b16 %v727
      %v744 = vrot.slane %v736, 6
      %v745 = vrot.slane %v737, 5
      %v746 = vsel %vm233, %v745, %v744
      %v747 = vrot.slane %v738, 4
      %v748 = vsel %vm236, %v747, %v746
      %v749 = vrot.slane %v739, 3
      %v750 = vsel %vm239, %v749, %v748
      %v751 = vrot.slane %v740, 2
      %v752 = vsel %vm242, %v751, %v750
      %v753 = vrot.slane %v741, 1
      %v754 = vsel %vm245, %v753, %v752
      %v755 = vsel %vm248, %v742, %v754
      %v756 = vrot.slane %v743, 7
      %v757 = vsel %vm251, %v756, %v755
      %v758 = vpack.c.b16 %v757, %v757
      %760 = vst.msk [vmem:[#allocation2 + $0x30] sm:$0xf] %vm255, %v758
      %v761 = vld [vmem:[%s197] sm:$0x8]
      %v762 = vld [vmem:[%s197 + $0x4] sm:$0x8]
      %v763 = vld [vmem:[%s197 + $0x8] sm:$0x8]
      %v764 = vld [vmem:[%s197 + $0xc] sm:$0x8]
      %v765 = vld [vmem:[%s197 + $0x10] sm:$0x8]
      %v766 = vld [vmem:[%s197 + $0x14] sm:$0x8]
      %v767 = vld [vmem:[%s197 + $0x18] sm:$0x8]
      %v768 = vld [vmem:[%s197 + $0x1c] sm:$0x8]
      %v777 = vunpack.c.l.b16 %v761
      %v778 = vunpack.c.l.b16 %v762
      %v779 = vunpack.c.l.b16 %v763
      %v780 = vunpack.c.l.b16 %v764
      %v781 = vunpack.c.l.b16 %v765
      %v782 = vunpack.c.l.b16 %v766
      %v783 = vunpack.c.l.b16 %v767
      %v784 = vunpack.c.l.b16 %v768
      %v785 = vrot.slane %v777, 7
      %v786 = vrot.slane %v778, 6
      %v787 = vsel %vm233, %v786, %v785
      %v788 = vrot.slane %v779, 5
      %v789 = vsel %vm236, %v788, %v787
      %v790 = vrot.slane %v780, 4
      %v791 = vsel %vm239, %v790, %v789
      %v792 = vrot.slane %v781, 3
      %v793 = vsel %vm242, %v792, %v791
      %v794 = vrot.slane %v782, 2
      %v795 = vsel %vm245, %v794, %v793
      %v796 = vrot.slane %v783, 1
      %v797 = vsel %vm248, %v796, %v795
      %v798 = vsel %vm251, %v784, %v797
      %v799 = vpack.c.b16 %v798, %v798
      %801 = vst.msk [vmem:[#allocation2 + $0x34] sm:$0xf] %vm255, %v799
      %v802 = vld [vmem:[%s197] sm:$0x8]
      %v803 = vld [vmem:[%s197 + $0x4] sm:$0x8]
      %v804 = vld [vmem:[%s197 + $0x8] sm:$0x8]
      %v805 = vld [vmem:[%s197 + $0xc] sm:$0x8]
      %v806 = vld [vmem:[%s197 + $0x10] sm:$0x8]
      %v807 = vld [vmem:[%s197 + $0x14] sm:$0x8]
      %v808 = vld [vmem:[%s197 + $0x18] sm:$0x8]
      %v809 = vld [vmem:[%s197 + $0x1c] sm:$0x8]
      %v818 = vunpack.c.l.b16 %v802
      %v819 = vunpack.c.l.b16 %v803
      %v820 = vunpack.c.l.b16 %v804
      %v821 = vunpack.c.l.b16 %v805
      %v822 = vunpack.c.l.b16 %v806
      %v823 = vunpack.c.l.b16 %v807
      %v824 = vunpack.c.l.b16 %v808
      %v825 = vunpack.c.l.b16 %v809
      %v826 = vrot.slane %v818, 6
      %v827 = vrot.slane %v819, 5
      %v828 = vsel %vm233, %v827, %v826
      %v829 = vrot.slane %v820, 4
      %v830 = vsel %vm236, %v829, %v828
      %v831 = vrot.slane %v821, 3
      %v832 = vsel %vm239, %v831, %v830
      %v833 = vrot.slane %v822, 2
      %v834 = vsel %vm242, %v833, %v832
      %v835 = vrot.slane %v823, 1
      %v836 = vsel %vm245, %v835, %v834
      %v837 = vsel %vm248, %v824, %v836
      %v838 = vrot.slane %v825, 7
      %v839 = vsel %vm251, %v838, %v837
      %v840 = vpack.c.b16 %v839, %v839
      %841 = vrot.lane.b32.xlu0 %v840, 127
      %v842 = vpop.permute.xlu0 %841
      %844 = vst.msk [vmem:[#allocation2 + $0x38] sm:$0xf] %vm255, %v842
      %v845 = vld [vmem:[%s197] sm:$0x4]
      %v846 = vld [vmem:[%s197 + $0x4] sm:$0x4]
      %v847 = vld [vmem:[%s197 + $0x8] sm:$0x4]
      %v848 = vld [vmem:[%s197 + $0xc] sm:$0x4]
      %v849 = vld [vmem:[%s197 + $0x10] sm:$0x4]
      %v850 = vld [vmem:[%s197 + $0x14] sm:$0x4]
      %v851 = vld [vmem:[%s197 + $0x18] sm:$0x4]
      %v852 = vld [vmem:[%s197 + $0x1c] sm:$0x4]
      %v861 = vunpack.c.l.b16 %v845
      %v862 = vunpack.c.l.b16 %v846
      %v863 = vunpack.c.l.b16 %v847
      %v864 = vunpack.c.l.b16 %v848
      %v865 = vunpack.c.l.b16 %v849
      %v866 = vunpack.c.l.b16 %v850
      %v867 = vunpack.c.l.b16 %v851
      %v868 = vunpack.c.l.b16 %v852
      %v869 = vrot.slane %v861, 4
      %v870 = vrot.slane %v862, 3
      %v871 = vsel %vm233, %v870, %v869
      %v872 = vrot.slane %v863, 2
      %v873 = vsel %vm236, %v872, %v871
      %v874 = vrot.slane %v864, 1
      %v875 = vsel %vm239, %v874, %v873
      %v876 = vsel %vm242, %v865, %v875
      %v877 = vrot.slane %v866, 7
      %v878 = vsel %vm245, %v877, %v876
      %v879 = vrot.slane %v867, 6
      %v880 = vsel %vm248, %v879, %v878
      %v881 = vrot.slane %v868, 5
      %v882 = vsel %vm251, %v881, %v880
      %v883 = vpack.c.b16 %v882, %v882
      %884 = vrot.lane.b32.xlu0 %v883, 125
      %v885 = vpop.permute.xlu0 %884
      %887 = vst.msk [vmem:[#allocation2 + $0x3c] sm:$0xf] %vm255, %v885
      %v888 = vld [vmem:[%s197] sm:$0x4]
      %v889 = vld [vmem:[%s197 + $0x4] sm:$0x4]
      %v890 = vld [vmem:[%s197 + $0x8] sm:$0x4]
      %v891 = vld [vmem:[%s197 + $0xc] sm:$0x4]
      %v892 = vld [vmem:[%s197 + $0x10] sm:$0x4]
      %v893 = vld [vmem:[%s197 + $0x14] sm:$0x4]
      %v894 = vld [vmem:[%s197 + $0x18] sm:$0x4]
      %v895 = vld [vmem:[%s197 + $0x1c] sm:$0x4]
      %v904 = vunpack.c.l.b16 %v888
      %v905 = vunpack.c.l.b16 %v889
      %v906 = vunpack.c.l.b16 %v890
      %v907 = vunpack.c.l.b16 %v891
      %v908 = vunpack.c.l.b16 %v892
      %v909 = vunpack.c.l.b16 %v893
      %v910 = vunpack.c.l.b16 %v894
      %v911 = vunpack.c.l.b16 %v895
      %v912 = vrot.slane %v904, 5
      %v913 = vrot.slane %v905, 4
      %v914 = vsel %vm233, %v913, %v912
      %v915 = vrot.slane %v906, 3
      %v916 = vsel %vm236, %v915, %v914
      %v917 = vrot.slane %v907, 2
      %v918 = vsel %vm239, %v917, %v916
      %v919 = vrot.slane %v908, 1
      %v920 = vsel %vm242, %v919, %v918
      %v921 = vsel %vm245, %v909, %v920
      %v922 = vrot.slane %v910, 7
      %v923 = vsel %vm248, %v922, %v921
      %v924 = vrot.slane %v911, 6
      %v925 = vsel %vm251, %v924, %v923
      %v926 = vpack.c.b16 %v925, %v925
      %927 = vrot.lane.b32.xlu0 %v926, 125
      %v928 = vpop.permute.xlu0 %927
      %930 = vst.msk [vmem:[#allocation2 + $0x40] sm:$0xf] %vm255, %v928
      %v931 = vld [vmem:[%s197] sm:$0x4]
      %v932 = vld [vmem:[%s197 + $0x4] sm:$0x4]
      %v933 = vld [vmem:[%s197 + $0x8] sm:$0x4]
      %v934 = vld [vmem:[%s197 + $0xc] sm:$0x4]
      %v935 = vld [vmem:[%s197 + $0x10] sm:$0x4]
      %v936 = vld [vmem:[%s197 + $0x14] sm:$0x4]
      %v937 = vld [vmem:[%s197 + $0x18] sm:$0x4]
      %v938 = vld [vmem:[%s197 + $0x1c] sm:$0x4]
      %v947 = vunpack.c.l.b16 %v931
      %v948 = vunpack.c.l.b16 %v932
      %v949 = vunpack.c.l.b16 %v933
      %v950 = vunpack.c.l.b16 %v934
      %v951 = vunpack.c.l.b16 %v935
      %v952 = vunpack.c.l.b16 %v936
      %v953 = vunpack.c.l.b16 %v937
      %v954 = vunpack.c.l.b16 %v938
      %v955 = vrot.slane %v947, 4
      %v956 = vrot.slane %v948, 3
      %v957 = vsel %vm233, %v956, %v955
      %v958 = vrot.slane %v949, 2
      %v959 = vsel %vm236, %v958, %v957
      %v960 = vrot.slane %v950, 1
      %v961 = vsel %vm239, %v960, %v959
      %v962 = vsel %vm242, %v951, %v961
      %v963 = vrot.slane %v952, 7
      %v964 = vsel %vm245, %v963, %v962
      %v965 = vrot.slane %v953, 6
      %v966 = vsel %vm248, %v965, %v964
      %v967 = vrot.slane %v954, 5
      %v968 = vsel %vm251, %v967, %v966
      %v969 = vpack.c.b16 %v968, %v968
      %970 = vrot.lane.b32.xlu0 %v969, 124
      %v971 = vpop.permute.xlu0 %970
      %973 = vst.msk [vmem:[#allocation2 + $0x44] sm:$0xf] %vm255, %v971
      %v974 = vld [vmem:[%s197] sm:$0x1]
      %v975 = vld [vmem:[%s197 + $0x4] sm:$0x1]
      %v976 = vld [vmem:[%s197 + $0x8] sm:$0x1]
      %v977 = vld [vmem:[%s197 + $0xc] sm:$0x1]
      %v978 = vld [vmem:[%s197 + $0x10] sm:$0x1]
      %v979 = vld [vmem:[%s197 + $0x14] sm:$0x1]
      %v980 = vld [vmem:[%s197 + $0x18] sm:$0x1]
      %v981 = vld [vmem:[%s197 + $0x1c] sm:$0x1]
      %v990 = vunpack.c.l.b16 %v974
      %v991 = vunpack.c.l.b16 %v975
      %v992 = vunpack.c.l.b16 %v976
      %v993 = vunpack.c.l.b16 %v977
      %v994 = vunpack.c.l.b16 %v978
      %v995 = vunpack.c.l.b16 %v979
      %v996 = vunpack.c.l.b16 %v980
      %v997 = vunpack.c.l.b16 %v981
      %v998 = vrot.slane %v991, 7
      %v999 = vsel %vm233, %v998, %v990
      %v1000 = vrot.slane %v992, 6
      %v1001 = vsel %vm236, %v1000, %v999
      %v1002 = vrot.slane %v993, 5
      %v1003 = vsel %vm239, %v1002, %v1001
      %v1004 = vrot.slane %v994, 4
      %v1005 = vsel %vm242, %v1004, %v1003
      %v1006 = vrot.slane %v995, 3
      %v1007 = vsel %vm245, %v1006, %v1005
      %v1008 = vrot.slane %v996, 2
      %v1009 = vsel %vm248, %v1008, %v1007
      %v1010 = vrot.slane %v997, 1
      %v1011 = vsel %vm251, %v1010, %v1009
      %v1012 = vpack.c.b16 %v1011, %v1011
      %1013 = vrot.lane.b32.xlu0 %v1012, 119
      %v1014 = vpop.permute.xlu0 %1013
      %1016 = vst.msk [vmem:[#allocation2 + $0x48] sm:$0xf] %vm255, %v1014
      %v1017 = vld [vmem:[%s197] sm:$0x1]
      %v1018 = vld [vmem:[%s197 + $0x4] sm:$0x1]
      %v1019 = vld [vmem:[%s197 + $0x8] sm:$0x1]
      %v1020 = vld [vmem:[%s197 + $0xc] sm:$0x1]
      %v1021 = vld [vmem:[%s197 + $0x10] sm:$0x1]
      %v1022 = vld [vmem:[%s197 + $0x14] sm:$0x1]
      %v1023 = vld [vmem:[%s197 + $0x18] sm:$0x1]
      %v1024 = vld [vmem:[%s197 + $0x1c] sm:$0x1]
      %v1033 = vunpack.c.l.b16 %v1017
      %v1034 = vunpack.c.l.b16 %v1018
      %v1035 = vunpack.c.l.b16 %v1019
      %v1036 = vunpack.c.l.b16 %v1020
      %v1037 = vunpack.c.l.b16 %v1021
      %v1038 = vunpack.c.l.b16 %v1022
      %v1039 = vunpack.c.l.b16 %v1023
      %v1040 = vunpack.c.l.b16 %v1024
      %v1041 = vrot.slane %v1033, 1
      %v1042 = vsel %vm233, %v1034, %v1041
      %v1043 = vrot.slane %v1035, 7
      %v1044 = vsel %vm236, %v1043, %v1042
      %v1045 = vrot.slane %v1036, 6
      %v1046 = vsel %vm239, %v1045, %v1044
      %v1047 = vrot.slane %v1037, 5
      %v1048 = vsel %vm242, %v1047, %v1046
      %v1049 = vrot.slane %v1038, 4
      %v1050 = vsel %vm245, %v1049, %v1048
      %v1051 = vrot.slane %v1039, 3
      %v1052 = vsel %vm248, %v1051, %v1050
      %v1053 = vrot.slane %v1040, 2
      %v1054 = vsel %vm251, %v1053, %v1052
      %v1055 = vpack.c.b16 %v1054, %v1054
      %1056 = vrot.lane.b32.xlu0 %v1055, 119
      %v1057 = vpop.permute.xlu0 %1056
      %1059 = vst.msk [vmem:[#allocation2 + $0x4c] sm:$0xf] %vm255, %v1057
      %v1060 = vld [vmem:[%s197] sm:$0x1]
      %v1061 = vld [vmem:[%s197 + $0x4] sm:$0x1]
      %v1062 = vld [vmem:[%s197 + $0x8] sm:$0x1]
      %v1063 = vld [vmem:[%s197 + $0xc] sm:$0x1]
      %v1064 = vld [vmem:[%s197 + $0x10] sm:$0x1]
      %v1065 = vld [vmem:[%s197 + $0x14] sm:$0x1]
      %v1066 = vld [vmem:[%s197 + $0x18] sm:$0x1]
      %v1067 = vld [vmem:[%s197 + $0x1c] sm:$0x1]
      %v1076 = vunpack.c.l.b16 %v1060
      %v1077 = vunpack.c.l.b16 %v1061
      %v1078 = vunpack.c.l.b16 %v1062
      %v1079 = vunpack.c.l.b16 %v1063
      %v1080 = vunpack.c.l.b16 %v1064
      %v1081 = vunpack.c.l.b16 %v1065
      %v1082 = vunpack.c.l.b16 %v1066
      %v1083 = vunpack.c.l.b16 %v1067
      %v1084 = vrot.slane %v1077, 7
      %v1085 = vsel %vm233, %v1084, %v1076
      %v1086 = vrot.slane %v1078, 6
      %v1087 = vsel %vm236, %v1086, %v1085
      %v1088 = vrot.slane %v1079, 5
      %v1089 = vsel %vm239, %v1088, %v1087
      %v1090 = vrot.slane %v1080, 4
      %v1091 = vsel %vm242, %v1090, %v1089
      %v1092 = vrot.slane %v1081, 3
      %v1093 = vsel %vm245, %v1092, %v1091
      %v1094 = vrot.slane %v1082, 2
      %v1095 = vsel %vm248, %v1094, %v1093
      %v1096 = vrot.slane %v1083, 1
      %v1097 = vsel %vm251, %v1096, %v1095
      %v1098 = vpack.c.b16 %v1097, %v1097
      %1099 = vrot.lane.b32.xlu0 %v1098, 118
      %v1100 = vpop.permute.xlu0 %1099
      %1102 = vst.msk [vmem:[#allocation2 + $0x50] sm:$0xf] %vm255, %v1100
      %v1103 = vld [vmem:[%s197] sm:$0x2]
      %v1104 = vld [vmem:[%s197 + $0x4] sm:$0x2]
      %v1105 = vld [vmem:[%s197 + $0x8] sm:$0x2]
      %v1106 = vld [vmem:[%s197 + $0xc] sm:$0x2]
      %v1107 = vld [vmem:[%s197 + $0x10] sm:$0x2]
      %v1108 = vld [vmem:[%s197 + $0x14] sm:$0x2]
      %v1109 = vld [vmem:[%s197 + $0x18] sm:$0x2]
      %v1110 = vld [vmem:[%s197 + $0x1c] sm:$0x2]
      %v1119 = vunpack.c.l.b16 %v1103
      %v1120 = vunpack.c.l.b16 %v1104
      %v1121 = vunpack.c.l.b16 %v1105
      %v1122 = vunpack.c.l.b16 %v1106
      %v1123 = vunpack.c.l.b16 %v1107
      %v1124 = vunpack.c.l.b16 %v1108
      %v1125 = vunpack.c.l.b16 %v1109
      %v1126 = vunpack.c.l.b16 %v1110
      %v1127 = vrot.slane %v1119, 2
      %v1128 = vrot.slane %v1120, 1
      %v1129 = vsel %vm233, %v1128, %v1127
      %v1130 = vsel %vm236, %v1121, %v1129
      %v1131 = vrot.slane %v1122, 7
      %v1132 = vsel %vm239, %v1131, %v1130
      %v1133 = vrot.slane %v1123, 6
      %v1134 = vsel %vm242, %v1133, %v1132
      %v1135 = vrot.slane %v1124, 5
      %v1136 = vsel %vm245, %v1135, %v1134
      %v1137 = vrot.slane %v1125, 4
      %v1138 = vsel %vm248, %v1137, %v1136
      %v1139 = vrot.slane %v1126, 3
      %v1140 = vsel %vm251, %v1139, %v1138
      %v1141 = vpack.c.b16 %v1140, %v1140
      %1142 = vrot.lane.b32.xlu0 %v1141, 119
      %v1143 = vpop.permute.xlu0 %1142
      %1145 = vst.msk [vmem:[#allocation2 + $0x54] sm:$0xf] %vm255, %v1143
      %v1146 = vld [vmem:[%s197] sm:$0x2]
      %v1147 = vld [vmem:[%s197 + $0x4] sm:$0x2]
      %v1148 = vld [vmem:[%s197 + $0x8] sm:$0x2]
      %v1149 = vld [vmem:[%s197 + $0xc] sm:$0x2]
      %v1150 = vld [vmem:[%s197 + $0x10] sm:$0x2]
      %v1151 = vld [vmem:[%s197 + $0x14] sm:$0x2]
      %v1152 = vld [vmem:[%s197 + $0x18] sm:$0x2]
      %v1153 = vld [vmem:[%s197 + $0x1c] sm:$0x2]
      %v1162 = vunpack.c.l.b16 %v1146
      %v1163 = vunpack.c.l.b16 %v1147
      %v1164 = vunpack.c.l.b16 %v1148
      %v1165 = vunpack.c.l.b16 %v1149
      %v1166 = vunpack.c.l.b16 %v1150
      %v1167 = vunpack.c.l.b16 %v1151
      %v1168 = vunpack.c.l.b16 %v1152
      %v1169 = vunpack.c.l.b16 %v1153
      %v1170 = vrot.slane %v1162, 3
      %v1171 = vrot.slane %v1163, 2
      %v1172 = vsel %vm233, %v1171, %v1170
      %v1173 = vrot.slane %v1164, 1
      %v1174 = vsel %vm236, %v1173, %v1172
      %v1175 = vsel %vm239, %v1165, %v1174
      %v1176 = vrot.slane %v1166, 7
      %v1177 = vsel %vm242, %v1176, %v1175
      %v1178 = vrot.slane %v1167, 6
      %v1179 = vsel %vm245, %v1178, %v1177
      %v1180 = vrot.slane %v1168, 5
      %v1181 = vsel %vm248, %v1180, %v1179
      %v1182 = vrot.slane %v1169, 4
      %v1183 = vsel %vm251, %v1182, %v1181
      %v1184 = vpack.c.b16 %v1183, %v1183
      %1185 = vrot.lane.b32.xlu0 %v1184, 119
      %v1186 = vpop.permute.xlu0 %1185
      %1188 = vst.msk [vmem:[#allocation2 + $0x58] sm:$0xf] %vm255, %v1186
      %v1189 = vld [vmem:[%s197] sm:$0x2]
      %v1190 = vld [vmem:[%s197 + $0x4] sm:$0x2]
      %v1191 = vld [vmem:[%s197 + $0x8] sm:$0x2]
      %v1192 = vld [vmem:[%s197 + $0xc] sm:$0x2]
      %v1193 = vld [vmem:[%s197 + $0x10] sm:$0x2]
      %v1194 = vld [vmem:[%s197 + $0x14] sm:$0x2]
      %v1195 = vld [vmem:[%s197 + $0x18] sm:$0x2]
      %v1196 = vld [vmem:[%s197 + $0x1c] sm:$0x2]
      %v1205 = vunpack.c.l.b16 %v1189
      %v1206 = vunpack.c.l.b16 %v1190
      %v1207 = vunpack.c.l.b16 %v1191
      %v1208 = vunpack.c.l.b16 %v1192
      %v1209 = vunpack.c.l.b16 %v1193
      %v1210 = vunpack.c.l.b16 %v1194
      %v1211 = vunpack.c.l.b16 %v1195
      %v1212 = vunpack.c.l.b16 %v1196
      %v1213 = vrot.slane %v1205, 2
      %v1214 = vrot.slane %v1206, 1
      %v1215 = vsel %vm233, %v1214, %v1213
      %v1216 = vsel %vm236, %v1207, %v1215
      %v1217 = vrot.slane %v1208, 7
      %v1218 = vsel %vm239, %v1217, %v1216
      %v1219 = vrot.slane %v1209, 6
      %v1220 = vsel %vm242, %v1219, %v1218
      %v1221 = vrot.slane %v1210, 5
      %v1222 = vsel %vm245, %v1221, %v1220
      %v1223 = vrot.slane %v1211, 4
      %v1224 = vsel %vm248, %v1223, %v1222
      %v1225 = vrot.slane %v1212, 3
      %v1226 = vsel %vm251, %v1225, %v1224
      %v1227 = vpack.c.b16 %v1226, %v1226
      %1228 = vrot.lane.b32.xlu0 %v1227, 118
      %v1229 = vpop.permute.xlu0 %1228
      %1231 = vst.msk [vmem:[#allocation2 + $0x5c] sm:$0xf] %vm255, %v1229
      %v1232 = vld [vmem:[%s197] sm:$0x1]
      %v1233 = vld [vmem:[%s197 + $0x4] sm:$0x1]
      %v1234 = vld [vmem:[%s197 + $0x8] sm:$0x1]
      %v1235 = vld [vmem:[%s197 + $0xc] sm:$0x1]
      %v1236 = vld [vmem:[%s197 + $0x10] sm:$0x1]
      %v1237 = vld [vmem:[%s197 + $0x14] sm:$0x1]
      %v1238 = vld [vmem:[%s197 + $0x18] sm:$0x1]
      %v1239 = vld [vmem:[%s197 + $0x1c] sm:$0x1]
      %v1248 = vunpack.c.l.b16 %v1232
      %v1249 = vunpack.c.l.b16 %v1233
      %v1250 = vunpack.c.l.b16 %v1234
      %v1251 = vunpack.c.l.b16 %v1235
      %v1252 = vunpack.c.l.b16 %v1236
      %v1253 = vunpack.c.l.b16 %v1237
      %v1254 = vunpack.c.l.b16 %v1238
      %v1255 = vunpack.c.l.b16 %v1239
      %v1256 = vrot.slane %v1249, 7
      %v1257 = vsel %vm233, %v1256, %v1248
      %v1258 = vrot.slane %v1250, 6
      %v1259 = vsel %vm236, %v1258, %v1257
      %v1260 = vrot.slane %v1251, 5
      %v1261 = vsel %vm239, %v1260, %v1259
      %v1262 = vrot.slane %v1252, 4
      %v1263 = vsel %vm242, %v1262, %v1261
      %v1264 = vrot.slane %v1253, 3
      %v1265 = vsel %vm245, %v1264, %v1263
      %v1266 = vrot.slane %v1254, 2
      %v1267 = vsel %vm248, %v1266, %v1265
      %v1268 = vrot.slane %v1255, 1
      %v1269 = vsel %vm251, %v1268, %v1267
      %v1270 = vpack.c.b16 %v1269, %v1269
      %1271 = vrot.lane.b32.xlu0 %v1270, 116
      %v1272 = vpop.permute.xlu0 %1271
      %1274 = vst.msk [vmem:[#allocation2 + $0x60] sm:$0xf] %vm255, %v1272
      %v1275 = vld [vmem:[%s197] sm:$0x1]
      %v1276 = vld [vmem:[%s197 + $0x4] sm:$0x1]
      %v1277 = vld [vmem:[%s197 + $0x8] sm:$0x1]
      %v1278 = vld [vmem:[%s197 + $0xc] sm:$0x1]
      %v1279 = vld [vmem:[%s197 + $0x10] sm:$0x1]
      %v1280 = vld [vmem:[%s197 + $0x14] sm:$0x1]
      %v1281 = vld [vmem:[%s197 + $0x18] sm:$0x1]
      %v1282 = vld [vmem:[%s197 + $0x1c] sm:$0x1]
      %v1291 = vunpack.c.l.b16 %v1275
      %v1292 = vunpack.c.l.b16 %v1276
      %v1293 = vunpack.c.l.b16 %v1277
      %v1294 = vunpack.c.l.b16 %v1278
      %v1295 = vunpack.c.l.b16 %v1279
      %v1296 = vunpack.c.l.b16 %v1280
      %v1297 = vunpack.c.l.b16 %v1281
      %v1298 = vunpack.c.l.b16 %v1282
      %v1299 = vrot.slane %v1291, 1
      %v1300 = vsel %vm233, %v1292, %v1299
      %v1301 = vrot.slane %v1293, 7
      %v1302 = vsel %vm236, %v1301, %v1300
      %v1303 = vrot.slane %v1294, 6
      %v1304 = vsel %vm239, %v1303, %v1302
      %v1305 = vrot.slane %v1295, 5
      %v1306 = vsel %vm242, %v1305, %v1304
      %v1307 = vrot.slane %v1296, 4
      %v1308 = vsel %vm245, %v1307, %v1306
      %v1309 = vrot.slane %v1297, 3
      %v1310 = vsel %vm248, %v1309, %v1308
      %v1311 = vrot.slane %v1298, 2
      %v1312 = vsel %vm251, %v1311, %v1310
      %v1313 = vpack.c.b16 %v1312, %v1312
      %1314 = vrot.lane.b32.xlu0 %v1313, 116
      %v1315 = vpop.permute.xlu0 %1314
      %1317 = vst.msk [vmem:[#allocation2 + $0x64] sm:$0xf] %vm255, %v1315
      %v1318 = vld [vmem:[%s197] sm:$0x1]
      %v1319 = vld [vmem:[%s197 + $0x4] sm:$0x1]
      %v1320 = vld [vmem:[%s197 + $0x8] sm:$0x1]
      %v1321 = vld [vmem:[%s197 + $0xc] sm:$0x1]
      %v1322 = vld [vmem:[%s197 + $0x10] sm:$0x1]
      %v1323 = vld [vmem:[%s197 + $0x14] sm:$0x1]
      %v1324 = vld [vmem:[%s197 + $0x18] sm:$0x1]
      %v1325 = vld [vmem:[%s197 + $0x1c] sm:$0x1]
      %v1334 = vunpack.c.l.b16 %v1318
      %v1335 = vunpack.c.l.b16 %v1319
      %v1336 = vunpack.c.l.b16 %v1320
      %v1337 = vunpack.c.l.b16 %v1321
      %v1338 = vunpack.c.l.b16 %v1322
      %v1339 = vunpack.c.l.b16 %v1323
      %v1340 = vunpack.c.l.b16 %v1324
      %v1341 = vunpack.c.l.b16 %v1325
      %v1342 = vrot.slane %v1335, 7
      %v1343 = vsel %vm233, %v1342, %v1334
      %v1344 = vrot.slane %v1336, 6
      %v1345 = vsel %vm236, %v1344, %v1343
      %v1346 = vrot.slane %v1337, 5
      %v1347 = vsel %vm239, %v1346, %v1345
      %v1348 = vrot.slane %v1338, 4
      %v1349 = vsel %vm242, %v1348, %v1347
      %v1350 = vrot.slane %v1339, 3
      %v1351 = vsel %vm245, %v1350, %v1349
      %v1352 = vrot.slane %v1340, 2
      %v1353 = vsel %vm248, %v1352, %v1351
      %v1354 = vrot.slane %v1341, 1
      %v1355 = vsel %vm251, %v1354, %v1353
      %v1356 = vpack.c.b16 %v1355, %v1355
      %1357 = vrot.lane.b32.xlu0 %v1356, 115
      %v1358 = vpop.permute.xlu0 %1357
      %1360 = vst.msk [vmem:[#allocation2 + $0x68] sm:$0xf] %vm255, %v1358
      %v1361 = vld [vmem:[%s1] sm:$0xff]
      %v1362 = vld [vmem:[%s1 + $0x8] sm:$0xff]
      %v1363 = vld [vmem:[#allocation2] sm:$0xf]
      %v1364 = vld [vmem:[#allocation2 + $0x4] sm:$0xf]
      %v1365 = vld [vmem:[#allocation2 + $0x8] sm:$0xf]
      %v1366 = vld [vmem:[#allocation2 + $0xc] sm:$0xf]
      %v1367 = vld [vmem:[#allocation2 + $0x10] sm:$0xf]
      %v1368 = vld [vmem:[#allocation2 + $0x14] sm:$0xf]
      %v1369 = vld [vmem:[#allocation2 + $0x18] sm:$0xf]
      %v1370 = vld [vmem:[#allocation2 + $0x1c] sm:$0xf]
      %v1371 = vld [vmem:[#allocation2 + $0x20] sm:$0xf]
      %v1372 = vld [vmem:[#allocation2 + $0x24] sm:$0xf]
      %v1373 = vld [vmem:[#allocation2 + $0x28] sm:$0xf]
      %v1374 = vld [vmem:[#allocation2 + $0x2c] sm:$0xf]
      %v1375 = vld [vmem:[#allocation2 + $0x30] sm:$0xf]
      %v1376 = vld [vmem:[#allocation2 + $0x34] sm:$0xf]
      %v1377 = vld [vmem:[#allocation2 + $0x38] sm:$0xf]
      %v1378 = vld [vmem:[#allocation2 + $0x3c] sm:$0xf]
      %v1379 = vld [vmem:[#allocation2 + $0x40] sm:$0xf]
      %v1380 = vld [vmem:[#allocation2 + $0x44] sm:$0xf]
      %v1381 = vld [vmem:[#allocation2 + $0x48] sm:$0xf]
      %v1382 = vld [vmem:[#allocation2 + $0x4c] sm:$0xf]
      %v1383 = vld [vmem:[#allocation2 + $0x50] sm:$0xf]
      %v1384 = vld [vmem:[#allocation2 + $0x54] sm:$0xf]
      %v1385 = vld [vmem:[#allocation2 + $0x58] sm:$0xf]
      %v1386 = vld [vmem:[#allocation2 + $0x5c] sm:$0xf]
      %v1387 = vld [vmem:[#allocation2 + $0x60] sm:$0xf]
      %v1388 = vld [vmem:[#allocation2 + $0x64] sm:$0xf]
      %v1389 = vld [vmem:[#allocation2 + $0x68] sm:$0xf]
      %v1390 = vld [vmem:[%s2] sm:$0xff]
      %v1391 = vld [vmem:[%s2 + $0x8] sm:$0xff]
      %1393 = vset.pattern.permute.xlu0 0
      %1394 = vperm.xlu0 %1393, %v1390
      %v1395 = vpop.permute.xlu0 %1394
      %1398 = vset.pattern.permute.xlu0 0
      %1399 = vperm.xlu0 %1398, %v1391
      %v1400 = vpop.permute.xlu0 %1399
      %v1404 = vunpack.c.l.b16 %v1361
      %v1405 = vunpack.c.h.b16 %v1361
      %v1406 = vunpack.c.l.b16 %v1362
      %v1407 = vunpack.c.h.b16 %v1362
      %v1408 = vpack.c.b16 %v1406, %v1404
      %v1409 = vpack.c.b16 %v1407, %v1405
      %v1438 = vunpack.c.l.b16 %v1363
      %v1439 = vunpack.c.l.b16 %v1364
      %v1440 = vunpack.c.l.b16 %v1365
      %v1441 = vunpack.c.l.b16 %v1366
      %v1442 = vunpack.c.l.b16 %v1367
      %v1443 = vunpack.c.l.b16 %v1368
      %v1444 = vunpack.c.l.b16 %v1369
      %v1445 = vunpack.c.l.b16 %v1370
      %v1446 = vunpack.c.l.b16 %v1371
      %v1447 = vunpack.c.l.b16 %v1372
      %v1448 = vunpack.c.l.b16 %v1373
      %v1449 = vunpack.c.l.b16 %v1374
      %v1450 = vunpack.c.l.b16 %v1375
      %v1451 = vunpack.c.l.b16 %v1376
      %v1452 = vunpack.c.l.b16 %v1377
      %v1453 = vunpack.c.l.b16 %v1378
      %v1454 = vunpack.c.l.b16 %v1379
      %v1455 = vunpack.c.l.b16 %v1380
      %v1456 = vunpack.c.l.b16 %v1381
      %v1457 = vunpack.c.l.b16 %v1382
      %v1458 = vunpack.c.l.b16 %v1383
      %v1459 = vunpack.c.l.b16 %v1384
      %v1460 = vunpack.c.l.b16 %v1385
      %v1461 = vunpack.c.l.b16 %v1386
      %v1462 = vunpack.c.l.b16 %v1387
      %v1463 = vunpack.c.l.b16 %v1388
      %v1464 = vunpack.c.l.b16 %v1389
      %v1465 = vpack.c.b16 %v1439, %v1438
      %v1466 = vpack.c.b16 %v1441, %v1440
      %v1467 = vpack.c.b16 %v1443, %v1442
      %v1468 = vpack.c.b16 %v1445, %v1444
      %v1469 = vpack.c.b16 %v1447, %v1446
      %v1470 = vpack.c.b16 %v1449, %v1448
      %v1471 = vpack.c.b16 %v1451, %v1450
      %v1472 = vpack.c.b16 %v1453, %v1452
      %v1473 = vpack.c.b16 %v1455, %v1454
      %v1474 = vpack.c.b16 %v1457, %v1456
      %v1475 = vpack.c.b16 %v1459, %v1458
      %v1476 = vpack.c.b16 %v1461, %v1460
      %v1477 = vpack.c.b16 %v1463, %v1462
      %v1478 = vpack.c.b16 %v1464, %v1464
      %vm1492 = vcmask 719872
      %v1494 = vsel %vm1492, %v1409, 0
      %vm1496 = vcmask 1043456
      %v1498 = vsel %vm1496, %v1478, 0
      %1500 = vmatprep.subr.bf16.mxu0 0
      %1501 = vmatpush1.bf16.msra.mxu0 %v1465
      %1502 = vmatprep.subr.bf16.mxu0 0
      %1503 = vmatpush1.bf16.msra.mxu0 %v1466
      %1504 = vmatprep.subr.bf16.mxu0 0
      %1505 = vmatpush1.bf16.msra.mxu0 %v1467
      %1506 = vmatprep.subr.bf16.mxu0 0
      %1507 = vmatpush1.bf16.msra.mxu0 %v1468
      %1508 = vmatprep.subr.bf16.mxu0 0
      %1509 = vmatpush1.bf16.msra.mxu0 %v1469
      %1510 = vmatprep.subr.bf16.mxu0 0
      %1511 = vmatpush1.bf16.msra.mxu0 %v1470
      %1512 = vmatprep.subr.bf16.mxu0 0
      %1513 = vmatpush1.bf16.msra.mxu0 %v1471
      %1514 = vmatprep.subr.bf16.mxu0 0
      %1515 = vmatpush1.bf16.msra.mxu0 %v1472
      %1516 = vmatprep.subr.bf16.mxu0 0
      %1517 = vmatpush1.bf16.msra.mxu0 %v1473
      %1518 = vmatprep.subr.bf16.mxu0 0
      %1519 = vmatpush1.bf16.msra.mxu0 %v1474
      %1520 = vmatprep.subr.bf16.mxu0 0
      %1521 = vmatpush1.bf16.msra.mxu0 %v1475
      %1522 = vmatprep.subr.bf16.mxu0 0
      %1523 = vmatpush1.bf16.msra.mxu0 %v1476
      %1524 = vmatprep.subr.bf16.mxu0 0
      %1525 = vmatpush1.bf16.msra.mxu0 %v1477
      %1526 = vmatprep.subr.bf16.mxu0 0
      %1527 = vmatpush1.bf16.msra.mxu0 %v1498
      %1528 = vmatprep.subr.bf16.mxu0 0
      %1529 = vmatpush1.bf16.msra.mxu0 0
      %1530 = vmatprep.subr.bf16.mxu0 0
      %1531 = vmatpush1.bf16.msra.mxu0 0
      %1532 = vmatprep.mubr.bf16.mxu0 %v1494
      %1533 = vmatmul.mubr.bf16.gmra.mrb[0].mxu0 %v1408
      %v1534 = vpop.f32.mrb[0].mxu0
      %v1535 = vadd.f32 %v1395, %v1534
      %v1536 = vpop.f32.mrb[0].mxu0
      %v1537 = vpop.f32.mrb[0].mxu0
      %v1538 = vadd.f32 %v1400, %v1537
      %v1539 = vpop.f32.mrb[0].mxu0
      %1540 = vdwg.mxu0
      %v1541 = vmax.f32 %v1535, 0.0
      %v1542 = vmax.f32 %v1538, 0.0
      %v1543 = vpack.c.bf16 %v1542, %v1541
      %v1545 = vunpack.c.l.b16 %v1543
      %v1546 = vunpack.c.h.b16 %v1543
      %v1547 = vpack.c.b16 %v1545, %v1545
      %v1548 = vpack.c.b16 %v1546, %v1546
      %1551 = vst.msk [vmem:[%s206] sm:$0xf] %vm255, %v1547
      %1552 = vst.msk [vmem:[%s206 + $0x4] sm:$0xf] %vm255, %v1548
      %p1553 = scmp.lt.s32.totalorder %s18, 1
      %s1554 = scalar_select %p1553, %s18, 1
      %p1555 = scmp.lt.s32.totalorder %s19, 1
      %s1556 = scalar_select %p1555, %s19, 1
      %s1557 = smul.addr %s1556, 2
      %s1558 = smul.addr %s1554, 4
      %s1559 = sadd.s32 %s1557, %s1558
      %s1560 = smul.addr %s1559, 4
      %s1561 = scalar_lea.vmem %s3, %s1560
      // Predicated region
      $region33: #{simple_conv_forward.6} parent=31 // pred_check
        %p1562 = pneg %p116
      $region34: #{simple_conv_forward.6} parent=31 // pred_check_branch
        %1564 = sbr.rel (%p1562) target = $region36
      $region35: #{simple_conv_forward.6} parent=31 // pred_region
        _
      $region36: #{simple_conv_forward.6} parent=31 // pred_fallthru
        _
    $region32: #{simple_conv_forward.6} parent=5 // pred_fallthru
      _
    %p1565 = scmp.le.s32.totalorder 2, %s9
    // Predicated region
    $region37: #{simple_conv_forward.6} parent=5 // pred_check
      %p1566 = pneg %p1565
    $region38: #{simple_conv_forward.6} parent=5 // pred_check_branch
      %1568 = sbr.rel (%p1566) target = $region40
    $region39: #{simple_conv_forward.6} parent=5 // pred_region
      %s1569 = ssub.s32 %s9, 2
      // Predicated region
      $region41: #{simple_conv_forward.6} parent=39 // pred_check
        %p1570 = pneg %p122
      $region42: #{simple_conv_forward.6} parent=39 // pred_check_branch
        %1572 = sbr.rel (%p1570) target = $region44
      $region43: #{simple_conv_forward.6} parent=39 // pred_region
        %p1573 = scmp.lt.s32.totalorder %s20, 1
        %s1574 = scalar_select %p1573, %s20, 1
        %p1575 = scmp.lt.s32.totalorder %s21, 1
        %s1576 = scalar_select %p1575, %s21, 1
        %s1577 = smul.addr %s1576, 2
        %s1578 = smul.addr %s1574, 4
        %s1579 = sadd.s32 %s1577, %s1578
        %s1580 = smul.addr %s1579, 4
        %s1581 = scalar_lea.vmem %s3, %s1580
      $region44: #{simple_conv_forward.6} parent=39 // pred_fallthru
        _
    $region40: #{simple_conv_forward.6} parent=5 // pred_fallthru
      _
  $region6: #{simple_conv_forward.6} parent=0 // loop_footer
    %s13 = sadd.s32 1, %s9
  $region7: #{simple_conv_forward.6} parent=0 // loop_footer_branch
    %8 = sbr.rel target = $region3
  $region8: #{simple_conv_forward.6} parent=0 // loop_exit
    _

// kernel: simple_conv_forward.7
$region0: #{simple_conv_forward.7}
  #allocation0 [shape = 'u32[]', space=smem, size = 0x4, offset = 0x4, fixed_abs, tag = 'smem constant byte address 0x4 - core index']
  #allocation1 [shape = 'u32[144,128]{1,0:T(1,128)}', space=vmem, size = 0x12000, scoped, tag = 'internal scratch']
  #allocation2 [shape = 'bf16[432,1]{1,0:T(16,128)(2,1)}', space=vmem, size = 0x1b000, scoped, tag = 'scratch operand']
  %s0 = inlined_call_operand.vmem [shape: bf16[2,1,16,8,8], index: 0, kind: input, shape index: {}]
  %s1 = inlined_call_operand.vmem [shape: bf16[8,432], index: 1, kind: input, shape index: {}]
  %s2 = inlined_call_operand.vmem [shape: f32[8,1], index: 2, kind: input, shape index: {}]
  %s3 = inlined_call_operand.vmem [shape: bf16[2,1,8,1], index: 3, kind: output, shape index: {}]
  %s4 = sld [smem:[#allocation0]]
  $region45: #{simple_conv_forward.7} parent=0
    _
  %s6 = ssub.s32 1, %s4
  %s7 = scalar_select 0, %s6, %s4
  loop: start=0, step=1, limit=4
  $region2: #{simple_conv_forward.7} parent=0 // loop_pre_header
    _
  $region3: #{simple_conv_forward.7} parent=0 // loop_header
    %s9 = sphi 0, %s13
    %p10 = scmp.ge.s32.totalorder %s9, 4
    %s16 = sphi 0, %s28
    %s17 = sphi 0, %s24
    %s18 = sphi 0, %s16
    %s19 = sphi 0, %s17
    %s20 = sphi 0, %s18
    %s21 = sphi 0, %s19
    %s33 = sphi 0, %s35
    %s36 = sphi 0, %s33
    %s37 = sphi 0, %s36
    %s53 = sphi 0, %s37
    %s57 = sphi 0, %s57
    %s59 = sphi 0, %s57
    %s60 = sphi 0, %s59
    %s74 = sphi 0, %s60
    %s78 = sphi 0, %s78
    %s80 = sphi 0, %s78
    %s81 = sphi 0, %s80
    %s95 = sphi 0, %s81
    %s103 = sphi 0, %s105
    %s106 = sphi 0, %s103
    %s107 = sphi 0, %s106
    %s123 = sphi 0, %s107
  $region4: #{simple_conv_forward.7} parent=0 // loop_header_branch
    %12 = sbr.rel (%p10) target = $region8
  $region5: #{simple_conv_forward.7} parent=0 // loop_body
    %s14 = ssub.s32 %s9, 1
    %s15 = ssub.s32 %s9, 2
    %s22 = sadd.s32 1, %s17
    %p23 = scmp.ge.s32.totalorder %s22, 1
    %s24 = scalar_select %p23, 0, %s22
    %s25 = sadd.s32 1, %s16
    %s26 = scalar_select %p23, %s25, %s16
    %p27 = scmp.ge.s32.totalorder %s26, 2
    %s28 = scalar_select %p27, 0, %s26
    %s29 = ssub.s32 %s16, %s28
    %s30 = ssub.s32 %s17, %s24
    %s31 = sor.u32 %s29, %s30
    %p32 = scmp.eq.s32.totalorder %s31, 0
    %s34 = sadd.s32 %s33, 1
    %s35 = scalar_select %p32, %s33, %s34
    %p38 = pneg %p32
    %p39 = scmp.eq.s32.totalorder %s9, 1
    %p40 = por %p38, %p39
    %p41 = scmp.ne.s32.totalorder %s33, %s36
    %p42 = scmp.eq.s32.totalorder %s9, 0
    %p43 = por %p41, %p42
    %p44 = scmp.ne.s32.totalorder %s33, %s36
    %p45 = scmp.eq.s32.totalorder %s14, 1
    %p46 = por %p44, %p45
    %p47 = scmp.ne.s32.totalorder %s36, %s37
    %p48 = scmp.eq.s32.totalorder %s14, 0
    %p49 = por %p47, %p48
    %p50 = scmp.ne.s32.totalorder %s36, %s37
    %p51 = scmp.eq.s32.totalorder %s15, 1
    %p52 = por %p50, %p51
    %p54 = scmp.ne.s32.totalorder %s37, %s53
    %p55 = scmp.eq.s32.totalorder %s15, 0
    %p56 = por %p54, %p55
    %s58 = sadd.s32 %s57, 1
    %p61 = scmp.eq.s32.totalorder %s9, 1
    %p62 = scmp.ne.s32.totalorder %s57, %s59
    %p63 = scmp.eq.s32.totalorder %s9, 0
    %p64 = por %p62, %p63
    %p65 = scmp.ne.s32.totalorder %s57, %s59
    %p66 = scmp.eq.s32.totalorder %s14, 1
    %p67 = por %p65, %p66
    %p68 = scmp.ne.s32.totalorder %s59, %s60
    %p69 = scmp.eq.s32.totalorder %s14, 0
    %p70 = por %p68, %p69
    %p71 = scmp.ne.s32.totalorder %s59, %s60
    %p72 = scmp.eq.s32.totalorder %s15, 1
    %p73 = por %p71, %p72
    %p75 = scmp.ne.s32.totalorder %s60, %s74
    %p76 = scmp.eq.s32.totalorder %s15, 0
    %p77 = por %p75, %p76
    %s79 = sadd.s32 %s78, 1
    %p82 = scmp.eq.s32.totalorder %s9, 1
    %p83 = scmp.ne.s32.totalorder %s78, %s80
    %p84 = scmp.eq.s32.totalorder %s9, 0
    %p85 = por %p83, %p84
    %p86 = scmp.ne.s32.totalorder %s78, %s80
    %p87 = scmp.eq.s32.totalorder %s14, 1
    %p88 = por %p86, %p87
    %p89 = scmp.ne.s32.totalorder %s80, %s81
    %p90 = scmp.eq.s32.totalorder %s14, 0
    %p91 = por %p89, %p90
    %p92 = scmp.ne.s32.totalorder %s80, %s81
    %p93 = scmp.eq.s32.totalorder %s15, 1
    %p94 = por %p92, %p93
    %p96 = scmp.ne.s32.totalorder %s81, %s95
    %p97 = scmp.eq.s32.totalorder %s15, 0
    %p98 = por %p96, %p97
    %s99 = ssub.s32 %s16, %s28
    %s100 = ssub.s32 %s17, %s24
    %s101 = sor.u32 %s99, %s100
    %p102 = scmp.eq.s32.totalorder %s101, 0
    %s104 = sadd.s32 %s103, 1
    %s105 = scalar_select %p102, %s103, %s104
    %p108 = pneg %p102
    %p109 = scmp.eq.s32.totalorder %s9, 1
    %p110 = por %p108, %p109
    %p111 = scmp.ne.s32.totalorder %s103, %s106
    %p112 = scmp.eq.s32.totalorder %s9, 0
    %p113 = por %p111, %p112
    %p114 = scmp.ne.s32.totalorder %s103, %s106
    %p115 = scmp.eq.s32.totalorder %s14, 1
    %p116 = por %p114, %p115
    %p117 = scmp.ne.s32.totalorder %s106, %s107
    %p118 = scmp.eq.s32.totalorder %s14, 0
    %p119 = por %p117, %p118
    %p120 = scmp.ne.s32.totalorder %s106, %s107
    %p121 = scmp.eq.s32.totalorder %s15, 1
    %p122 = por %p120, %p121
    %p124 = scmp.ne.s32.totalorder %s107, %s123
    %p125 = scmp.eq.s32.totalorder %s15, 0
    %p126 = por %p124, %p125
    %p127 = scmp.le.s32.totalorder 1, %s9
    %p128 = scmp.lt.s32.totalorder %s9, 3
    %p129 = pnand %p127, %p128
    %p130 = pneg %p129
    // Predicated region
    $region9: #{simple_conv_forward.7} parent=5 // pred_check
      _
    $region10: #{simple_conv_forward.7} parent=5 // pred_check_branch
      %132 = sbr.rel (%p129) target = $region12
    $region11: #{simple_conv_forward.7} parent=5 // pred_region
      %s133 = ssub.s32 %s9, 1
      // Predicated region
      $region13: #{simple_conv_forward.7} parent=11 // pred_check
        %p134 = pneg %p70
      $region14: #{simple_conv_forward.7} parent=11 // pred_check_branch
        %136 = sbr.rel (%p134) target = $region16
      $region15: #{simple_conv_forward.7} parent=11 // pred_region
        _
      $region16: #{simple_conv_forward.7} parent=11 // pred_fallthru
        _
      // Predicated region
      $region17: #{simple_conv_forward.7} parent=11 // pred_check
        %p137 = pneg %p91
      $region18: #{simple_conv_forward.7} parent=11 // pred_check_branch
        %139 = sbr.rel (%p137) target = $region20
      $region19: #{simple_conv_forward.7} parent=11 // pred_region
        _
      $region20: #{simple_conv_forward.7} parent=11 // pred_fallthru
        _
    $region12: #{simple_conv_forward.7} parent=5 // pred_fallthru
      _
    %p140 = scmp.lt.s32.totalorder %s9, 2
    // Predicated region
    $region21: #{simple_conv_forward.7} parent=5 // pred_check
      %p141 = pneg %p140
    $region22: #{simple_conv_forward.7} parent=5 // pred_check_branch
      %143 = sbr.rel (%p141) target = $region24
    $region23: #{simple_conv_forward.7} parent=5 // pred_region
      // Predicated region
      $region25: #{simple_conv_forward.7} parent=23 // pred_check
        %p144 = pneg %p43
      $region26: #{simple_conv_forward.7} parent=23 // pred_check_branch
        %146 = sbr.rel (%p144) target = $region28
      $region27: #{simple_conv_forward.7} parent=23 // pred_region
        %p147 = scmp.lt.s32.totalorder %s16, 1
        %s148 = scalar_select %p147, %s16, 1
        %p149 = scmp.lt.s32.totalorder %s17, 0
        %s150 = scalar_select %p149, %s17, 0
        %s151 = smul.addr %s150, 16
        %s152 = smul.addr %s148, 16
        %s153 = sadd.s32 %s151, %s152
        %s154 = smul.addr %s153, 4
        %s155 = scalar_lea.vmem %s0, %s154
      $region28: #{simple_conv_forward.7} parent=23 // pred_fallthru
        _
    $region24: #{simple_conv_forward.7} parent=5 // pred_fallthru
      _
    %p156 = scmp.le.s32.totalorder 1, %s9
    %p157 = scmp.lt.s32.totalorder %s9, 3
    %p158 = pnand %p156, %p157
    %p159 = pneg %p158
    // Predicated region
    $region29: #{simple_conv_forward.7} parent=5 // pred_check
      _
    $region30: #{simple_conv_forward.7} parent=5 // pred_check_branch
      %161 = sbr.rel (%p158) target = $region32
    $region31: #{simple_conv_forward.7} parent=5 // pred_region
      %s162 = ssub.s32 %s9, 1
      %p163 = scmp.lt.s32.totalorder %s18, 1
      %s164 = scalar_select %p163, %s18, 1
      %p165 = scmp.lt.s32.totalorder %s19, 0
      %s166 = scalar_select %p165, %s19, 0
      %s167 = smul.addr %s166, 16
      %s168 = smul.addr %s164, 16
      %s169 = sadd.s32 %s167, %s168
      %s170 = smul.addr %s169, 4
      %s171 = scalar_lea.vmem %s0, %s170
      %p172 = pneg %p49
      %p173 = pneg %p46
      %p174 = pneg %p70
      %p175 = pneg %p67
      %p176 = pneg %p91
      %p177 = pneg %p88
      %p178 = pneg %p119
      %p179 = pneg %p116
      %p180 = scmp.lt.s32.totalorder %s18, 1
      %s181 = scalar_select %p180, %s18, 1
      %p182 = scmp.lt.s32.totalorder %s19, 0
      %s183 = scalar_select %p182, %s19, 0
      %s184 = sadd.s32 %s183, %s181
      %s185 = smul.addr %s184, 4
      %s186 = scalar_lea.vmem %s3, %s185
      %p187 = scmp.lt.s32.totalorder %s18, 1
      %s188 = scalar_select %p187, %s18, 1
      %p189 = scmp.lt.s32.totalorder %s19, 0
      %s190 = scalar_select %p189, %s19, 0
      %s191 = smul.addr %s190, 16
      %s192 = smul.addr %s188, 16
      %s193 = sadd.s32 %s191, %s192
      %s194 = smul.addr %s193, 4
      %s195 = scalar_lea.vmem %s0, %s194
      %p196 = scmp.lt.s32.totalorder %s18, 1
      %s197 = scalar_select %p196, %s18, 1
      %p198 = scmp.lt.s32.totalorder %s19, 0
      %s199 = scalar_select %p198, %s19, 0
      %s200 = sadd.s32 %s199, %s197
      %s201 = smul.addr %s200, 4
      %s202 = scalar_lea.vmem %s3, %s201
      %v204 = vld [vmem:[%s195] sm:$0x1]
      %v205 = vld [vmem:[%s195 + $0x4] sm:$0x1]
      %v206 = vld [vmem:[%s195 + $0x8] sm:$0x1]
      %v207 = vld [vmem:[%s195 + $0xc] sm:$0x1]
      %v208 = vld [vmem:[%s195 + $0x10] sm:$0x1]
      %v209 = vld [vmem:[%s195 + $0x14] sm:$0x1]
      %v210 = vld [vmem:[%s195 + $0x18] sm:$0x1]
      %v211 = vld [vmem:[%s195 + $0x1c] sm:$0x1]
      %v212 = vld [vmem:[%s195 + $0x20] sm:$0x1]
      %v213 = vld [vmem:[%s195 + $0x24] sm:$0x1]
      %v214 = vld [vmem:[%s195 + $0x28] sm:$0x1]
      %v215 = vld [vmem:[%s195 + $0x2c] sm:$0x1]
      %v216 = vld [vmem:[%s195 + $0x30] sm:$0x1]
      %v217 = vld [vmem:[%s195 + $0x34] sm:$0x1]
      %v218 = vld [vmem:[%s195 + $0x38] sm:$0x1]
      %v219 = vld [vmem:[%s195 + $0x3c] sm:$0x1]
      %v236 = vunpack.c.l.b16 %v204
      %v237 = vunpack.c.l.b16 %v205
      %v238 = vunpack.c.l.b16 %v206
      %v239 = vunpack.c.l.b16 %v207
      %v240 = vunpack.c.l.b16 %v208
      %v241 = vunpack.c.l.b16 %v209
      %v242 = vunpack.c.l.b16 %v210
      %v243 = vunpack.c.l.b16 %v211
      %v244 = vunpack.c.l.b16 %v212
      %v245 = vunpack.c.l.b16 %v213
      %v246 = vunpack.c.l.b16 %v214
      %v247 = vunpack.c.l.b16 %v215
      %v248 = vunpack.c.l.b16 %v216
      %v249 = vunpack.c.l.b16 %v217
      %v250 = vunpack.c.l.b16 %v218
      %v251 = vunpack.c.l.b16 %v219
      %v252 = vpack.c.b16 %v236, %v236
      %v253 = vpack.c.b16 %v237, %v237
      %v254 = vpack.c.b16 %v238, %v238
      %v255 = vpack.c.b16 %v239, %v239
      %v256 = vpack.c.b16 %v240, %v240
      %v257 = vpack.c.b16 %v241, %v241
      %v258 = vpack.c.b16 %v242, %v242
      %v259 = vpack.c.b16 %v243, %v243
      %v260 = vpack.c.b16 %v244, %v244
      %v261 = vpack.c.b16 %v245, %v245
      %v262 = vpack.c.b16 %v246, %v246
      %v263 = vpack.c.b16 %v247, %v247
      %v264 = vpack.c.b16 %v248, %v248
      %v265 = vpack.c.b16 %v249, %v249
      %v266 = vpack.c.b16 %v250, %v250
      %v267 = vpack.c.b16 %v251, %v251
      %v268 = vunpack.c.l.b16 %v252
      %v269 = vunpack.c.l.b16 %v253
      %v270 = vunpack.c.l.b16 %v254
      %v271 = vunpack.c.l.b16 %v255
      %v272 = vunpack.c.l.b16 %v256
      %v273 = vunpack.c.l.b16 %v257
      %v274 = vunpack.c.l.b16 %v258
      %v275 = vunpack.c.l.b16 %v259
      %v276 = vunpack.c.l.b16 %v260
      %v277 = vunpack.c.l.b16 %v261
      %v278 = vunpack.c.l.b16 %v262
      %v279 = vunpack.c.l.b16 %v263
      %v280 = vunpack.c.l.b16 %v264
      %v281 = vunpack.c.l.b16 %v265
      %v282 = vunpack.c.l.b16 %v266
      %v283 = vunpack.c.l.b16 %v267
      %v284 = vrot.slane %v269, 7
      %vm285 = vcmask 1041409
      %v286 = vsel %vm285, %v284, %v268
      %v287 = vrot.slane %v270, 6
      %vm288 = vcmask 1042434
      %v289 = vsel %vm288, %v287, %v286
      %v290 = vrot.slane %v271, 5
      %vm291 = vcmask 1043459
      %v292 = vsel %vm291, %v290, %v289
      %v293 = vrot.slane %v272, 4
      %vm294 = vcmask 1044484
      %v295 = vsel %vm294, %v293, %v292
      %v296 = vrot.slane %v273, 3
      %vm297 = vcmask 1045509
      %v298 = vsel %vm297, %v296, %v295
      %v299 = vrot.slane %v274, 2
      %vm300 = vcmask 1046534
      %v301 = vsel %vm300, %v299, %v298
      %v302 = vrot.slane %v275, 1
      %vm303 = vcmask 1047559
      %v304 = vsel %vm303, %v302, %v301
      %v305 = vrot.slane %v277, 7
      %v306 = vsel %vm285, %v305, %v276
      %v307 = vrot.slane %v278, 6
      %v308 = vsel %vm288, %v307, %v306
      %v309 = vrot.slane %v279, 5
      %v310 = vsel %vm291, %v309, %v308
      %v311 = vrot.slane %v280, 4
      %v312 = vsel %vm294, %v311, %v310
      %v313 = vrot.slane %v281, 3
      %v314 = vsel %vm297, %v313, %v312
      %v315 = vrot.slane %v282, 2
      %v316 = vsel %vm300, %v315, %v314
      %v317 = vrot.slane %v283, 1
      %v318 = vsel %vm303, %v317, %v316
      %v319 = vpack.c.b16 %v318, %v304
      %vm321 = vcmask 7168
      %322 = vst.msk [vmem:[#allocation2] sm:$0xff] %vm321, %v319
      %v323 = vld [vmem:[%s195] sm:$0x1]
      %v324 = vld [vmem:[%s195 + $0x4] sm:$0x1]
      %v325 = vld [vmem:[%s195 + $0x8] sm:$0x1]
      %v326 = vld [vmem:[%s195 + $0xc] sm:$0x1]
      %v327 = vld [vmem:[%s195 + $0x10] sm:$0x1]
      %v328 = vld [vmem:[%s195 + $0x14] sm:$0x1]
      %v329 = vld [vmem:[%s195 + $0x18] sm:$0x1]
      %v330 = vld [vmem:[%s195 + $0x1c] sm:$0x1]
      %v331 = vld [vmem:[%s195 + $0x20] sm:$0x1]
      %v332 = vld [vmem:[%s195 + $0x24] sm:$0x1]
      %v333 = vld [vmem:[%s195 + $0x28] sm:$0x1]
      %v334 = vld [vmem:[%s195 + $0x2c] sm:$0x1]
      %v335 = vld [vmem:[%s195 + $0x30] sm:$0x1]
      %v336 = vld [vmem:[%s195 + $0x34] sm:$0x1]
      %v337 = vld [vmem:[%s195 + $0x38] sm:$0x1]
      %v338 = vld [vmem:[%s195 + $0x3c] sm:$0x1]
      %v355 = vunpack.c.l.b16 %v323
      %v356 = vunpack.c.l.b16 %v324
      %v357 = vunpack.c.l.b16 %v325
      %v358 = vunpack.c.l.b16 %v326
      %v359 = vunpack.c.l.b16 %v327
      %v360 = vunpack.c.l.b16 %v328
      %v361 = vunpack.c.l.b16 %v329
      %v362 = vunpack.c.l.b16 %v330
      %v363 = vunpack.c.l.b16 %v331
      %v364 = vunpack.c.l.b16 %v332
      %v365 = vunpack.c.l.b16 %v333
      %v366 = vunpack.c.l.b16 %v334
      %v367 = vunpack.c.l.b16 %v335
      %v368 = vunpack.c.l.b16 %v336
      %v369 = vunpack.c.l.b16 %v337
      %v370 = vunpack.c.l.b16 %v338
      %v371 = vpack.c.b16 %v355, %v355
      %v372 = vpack.c.b16 %v356, %v356
      %v373 = vpack.c.b16 %v357, %v357
      %v374 = vpack.c.b16 %v358, %v358
      %v375 = vpack.c.b16 %v359, %v359
      %v376 = vpack.c.b16 %v360, %v360
      %v377 = vpack.c.b16 %v361, %v361
      %v378 = vpack.c.b16 %v362, %v362
      %v379 = vpack.c.b16 %v363, %v363
      %v380 = vpack.c.b16 %v364, %v364
      %v381 = vpack.c.b16 %v365, %v365
      %v382 = vpack.c.b16 %v366, %v366
      %v383 = vpack.c.b16 %v367, %v367
      %v384 = vpack.c.b16 %v368, %v368
      %v385 = vpack.c.b16 %v369, %v369
      %v386 = vpack.c.b16 %v370, %v370
      %v387 = vunpack.c.l.b16 %v371
      %v388 = vunpack.c.l.b16 %v372
      %v389 = vunpack.c.l.b16 %v373
      %v390 = vunpack.c.l.b16 %v374
      %v391 = vunpack.c.l.b16 %v375
      %v392 = vunpack.c.l.b16 %v376
      %v393 = vunpack.c.l.b16 %v377
      %v394 = vunpack.c.l.b16 %v378
      %v395 = vunpack.c.l.b16 %v379
      %v396 = vunpack.c.l.b16 %v380
      %v397 = vunpack.c.l.b16 %v381
      %v398 = vunpack.c.l.b16 %v382
      %v399 = vunpack.c.l.b16 %v383
      %v400 = vunpack.c.l.b16 %v384
      %v401 = vunpack.c.l.b16 %v385
      %v402 = vunpack.c.l.b16 %v386
      %v403 = vrot.slane %v387, 1
      %v404 = vsel %vm285, %v388, %v403
      %v405 = vrot.slane %v389, 7
      %v406 = vsel %vm288, %v405, %v404
      %v407 = vrot.slane %v390, 6
      %v408 = vsel %vm291, %v407, %v406
      %v409 = vrot.slane %v391, 5
      %v410 = vsel %vm294, %v409, %v408
      %v411 = vrot.slane %v392, 4
      %v412 = vsel %vm297, %v411, %v410
      %v413 = vrot.slane %v393, 3
      %v414 = vsel %vm300, %v413, %v412
      %v415 = vrot.slane %v394, 2
      %v416 = vsel %vm303, %v415, %v414
      %v417 = vrot.slane %v395, 1
      %v418 = vsel %vm285, %v396, %v417
      %v419 = vrot.slane %v397, 7
      %v420 = vsel %vm288, %v419, %v418
      %v421 = vrot.slane %v398, 6
      %v422 = vsel %vm291, %v421, %v420
      %v423 = vrot.slane %v399, 5
      %v424 = vsel %vm294, %v423, %v422
      %v425 = vrot.slane %v400, 4
      %v426 = vsel %vm297, %v425, %v424
      %v427 = vrot.slane %v401, 3
      %v428 = vsel %vm300, %v427, %v426
      %v429 = vrot.slane %v402, 2
      %v430 = vsel %vm303, %v429, %v428
      %v431 = vpack.c.b16 %v430, %v416
      %433 = vst.msk [vmem:[#allocation2 + $0x8] sm:$0xff] %vm321, %v431
      %v434 = vld [vmem:[%s195] sm:$0x1]
      %v435 = vld [vmem:[%s195 + $0x4] sm:$0x1]
      %v436 = vld [vmem:[%s195 + $0x8] sm:$0x1]
      %v437 = vld [vmem:[%s195 + $0xc] sm:$0x1]
      %v438 = vld [vmem:[%s195 + $0x10] sm:$0x1]
      %v439 = vld [vmem:[%s195 + $0x14] sm:$0x1]
      %v440 = vld [vmem:[%s195 + $0x18] sm:$0x1]
      %v441 = vld [vmem:[%s195 + $0x1c] sm:$0x1]
      %v442 = vld [vmem:[%s195 + $0x20] sm:$0x1]
      %v443 = vld [vmem:[%s195 + $0x24] sm:$0x1]
      %v444 = vld [vmem:[%s195 + $0x28] sm:$0x1]
      %v445 = vld [vmem:[%s195 + $0x2c] sm:$0x1]
      %v446 = vld [vmem:[%s195 + $0x30] sm:$0x1]
      %v447 = vld [vmem:[%s195 + $0x34] sm:$0x1]
      %v448 = vld [vmem:[%s195 + $0x38] sm:$0x1]
      %v449 = vld [vmem:[%s195 + $0x3c] sm:$0x1]
      %v466 = vunpack.c.l.b16 %v434
      %v467 = vunpack.c.l.b16 %v435
      %v468 = vunpack.c.l.b16 %v436
      %v469 = vunpack.c.l.b16 %v437
      %v470 = vunpack.c.l.b16 %v438
      %v471 = vunpack.c.l.b16 %v439
      %v472 = vunpack.c.l.b16 %v440
      %v473 = vunpack.c.l.b16 %v441
      %v474 = vunpack.c.l.b16 %v442
      %v475 = vunpack.c.l.b16 %v443
      %v476 = vunpack.c.l.b16 %v444
      %v477 = vunpack.c.l.b16 %v445
      %v478 = vunpack.c.l.b16 %v446
      %v479 = vunpack.c.l.b16 %v447
      %v480 = vunpack.c.l.b16 %v448
      %v481 = vunpack.c.l.b16 %v449
      %v482 = vpack.c.b16 %v466, %v466
      %v483 = vpack.c.b16 %v467, %v467
      %v484 = vpack.c.b16 %v468, %v468
      %v485 = vpack.c.b16 %v469, %v469
      %v486 = vpack.c.b16 %v470, %v470
      %v487 = vpack.c.b16 %v471, %v471
      %v488 = vpack.c.b16 %v472, %v472
      %v489 = vpack.c.b16 %v473, %v473
      %v490 = vpack.c.b16 %v474, %v474
      %v491 = vpack.c.b16 %v475, %v475
      %v492 = vpack.c.b16 %v476, %v476
      %v493 = vpack.c.b16 %v477, %v477
      %v494 = vpack.c.b16 %v478, %v478
      %v495 = vpack.c.b16 %v479, %v479
      %v496 = vpack.c.b16 %v480, %v480
      %v497 = vpack.c.b16 %v481, %v481
      %v498 = vunpack.c.l.b16 %v482
      %v499 = vunpack.c.l.b16 %v483
      %v500 = vunpack.c.l.b16 %v484
      %v501 = vunpack.c.l.b16 %v485
      %v502 = vunpack.c.l.b16 %v486
      %v503 = vunpack.c.l.b16 %v487
      %v504 = vunpack.c.l.b16 %v488
      %v505 = vunpack.c.l.b16 %v489
      %v506 = vunpack.c.l.b16 %v490
      %v507 = vunpack.c.l.b16 %v491
      %v508 = vunpack.c.l.b16 %v492
      %v509 = vunpack.c.l.b16 %v493
      %v510 = vunpack.c.l.b16 %v494
      %v511 = vunpack.c.l.b16 %v495
      %v512 = vunpack.c.l.b16 %v496
      %v513 = vunpack.c.l.b16 %v497
      %v514 = vrot.slane %v499, 7
      %v515 = vsel %vm285, %v514, %v498
      %v516 = vrot.slane %v500, 6
      %v517 = vsel %vm288, %v516, %v515
      %v518 = vrot.slane %v501, 5
      %v519 = vsel %vm291, %v518, %v517
      %v520 = vrot.slane %v502, 4
      %v521 = vsel %vm294, %v520, %v519
      %v522 = vrot.slane %v503, 3
      %v523 = vsel %vm297, %v522, %v521
      %v524 = vrot.slane %v504, 2
      %v525 = vsel %vm300, %v524, %v523
      %v526 = vrot.slane %v505, 1
      %v527 = vsel %vm303, %v526, %v525
      %v528 = vrot.slane %v507, 7
      %v529 = vsel %vm285, %v528, %v506
      %v530 = vrot.slane %v508, 6
      %v531 = vsel %vm288, %v530, %v529
      %v532 = vrot.slane %v509, 5
      %v533 = vsel %vm291, %v532, %v531
      %v534 = vrot.slane %v510, 4
      %v535 = vsel %vm294, %v534, %v533
      %v536 = vrot.slane %v511, 3
      %v537 = vsel %vm297, %v536, %v535
      %v538 = vrot.slane %v512, 2
      %v539 = vsel %vm300, %v538, %v537
      %v540 = vrot.slane %v513, 1
      %v541 = vsel %vm303, %v540, %v539
      %v542 = vpack.c.b16 %v541, %v527
      %543 = vrot.lane.b32.xlu0 %v542, 127
      %v544 = vpop.permute.xlu0 %543
      %546 = vst.msk [vmem:[#allocation2 + $0x10] sm:$0xff] %vm321, %v544
      %v547 = vld [vmem:[%s195] sm:$0x2]
      %v548 = vld [vmem:[%s195 + $0x4] sm:$0x2]
      %v549 = vld [vmem:[%s195 + $0x8] sm:$0x2]
      %v550 = vld [vmem:[%s195 + $0xc] sm:$0x2]
      %v551 = vld [vmem:[%s195 + $0x10] sm:$0x2]
      %v552 = vld [vmem:[%s195 + $0x14] sm:$0x2]
      %v553 = vld [vmem:[%s195 + $0x18] sm:$0x2]
      %v554 = vld [vmem:[%s195 + $0x1c] sm:$0x2]
      %v555 = vld [vmem:[%s195 + $0x20] sm:$0x2]
      %v556 = vld [vmem:[%s195 + $0x24] sm:$0x2]
      %v557 = vld [vmem:[%s195 + $0x28] sm:$0x2]
      %v558 = vld [vmem:[%s195 + $0x2c] sm:$0x2]
      %v559 = vld [vmem:[%s195 + $0x30] sm:$0x2]
      %v560 = vld [vmem:[%s195 + $0x34] sm:$0x2]
      %v561 = vld [vmem:[%s195 + $0x38] sm:$0x2]
      %v562 = vld [vmem:[%s195 + $0x3c] sm:$0x2]
      %v579 = vunpack.c.l.b16 %v547
      %v580 = vunpack.c.l.b16 %v548
      %v581 = vunpack.c.l.b16 %v549
      %v582 = vunpack.c.l.b16 %v550
      %v583 = vunpack.c.l.b16 %v551
      %v584 = vunpack.c.l.b16 %v552
      %v585 = vunpack.c.l.b16 %v553
      %v586 = vunpack.c.l.b16 %v554
      %v587 = vunpack.c.l.b16 %v555
      %v588 = vunpack.c.l.b16 %v556
      %v589 = vunpack.c.l.b16 %v557
      %v590 = vunpack.c.l.b16 %v558
      %v591 = vunpack.c.l.b16 %v559
      %v592 = vunpack.c.l.b16 %v560
      %v593 = vunpack.c.l.b16 %v561
      %v594 = vunpack.c.l.b16 %v562
      %v595 = vpack.c.b16 %v579, %v579
      %v596 = vpack.c.b16 %v580, %v580
      %v597 = vpack.c.b16 %v581, %v581
      %v598 = vpack.c.b16 %v582, %v582
      %v599 = vpack.c.b16 %v583, %v583
      %v600 = vpack.c.b16 %v584, %v584
      %v601 = vpack.c.b16 %v585, %v585
      %v602 = vpack.c.b16 %v586, %v586
      %v603 = vpack.c.b16 %v587, %v587
      %v604 = vpack.c.b16 %v588, %v588
      %v605 = vpack.c.b16 %v589, %v589
      %v606 = vpack.c.b16 %v590, %v590
      %v607 = vpack.c.b16 %v591, %v591
      %v608 = vpack.c.b16 %v592, %v592
      %v609 = vpack.c.b16 %v593, %v593
      %v610 = vpack.c.b16 %v594, %v594
      %v611 = vunpack.c.l.b16 %v595
      %v612 = vunpack.c.l.b16 %v596
      %v613 = vunpack.c.l.b16 %v597
      %v614 = vunpack.c.l.b16 %v598
      %v615 = vunpack.c.l.b16 %v599
      %v616 = vunpack.c.l.b16 %v600
      %v617 = vunpack.c.l.b16 %v601
      %v618 = vunpack.c.l.b16 %v602
      %v619 = vunpack.c.l.b16 %v603
      %v620 = vunpack.c.l.b16 %v604
      %v621 = vunpack.c.l.b16 %v605
      %v622 = vunpack.c.l.b16 %v606
      %v623 = vunpack.c.l.b16 %v607
      %v624 = vunpack.c.l.b16 %v608
      %v625 = vunpack.c.l.b16 %v609
      %v626 = vunpack.c.l.b16 %v610
      %v627 = vrot.slane %v611, 2
      %v628 = vrot.slane %v612, 1
      %v629 = vsel %vm285, %v628, %v627
      %v630 = vsel %vm288, %v613, %v629
      %v631 = vrot.slane %v614, 7
      %v632 = vsel %vm291, %v631, %v630
      %v633 = vrot.slane %v615, 6
      %v634 = vsel %vm294, %v633, %v632
      %v635 = vrot.slane %v616, 5
      %v636 = vsel %vm297, %v635, %v634
      %v637 = vrot.slane %v617, 4
      %v638 = vsel %vm300, %v637, %v636
      %v639 = vrot.slane %v618, 3
      %v640 = vsel %vm303, %v639, %v638
      %v641 = vrot.slane %v619, 2
      %v642 = vrot.slane %v620, 1
      %v643 = vsel %vm285, %v642, %v641
      %v644 = vsel %vm288, %v621, %v643
      %v645 = vrot.slane %v622, 7
      %v646 = vsel %vm291, %v645, %v644
      %v647 = vrot.slane %v623, 6
      %v648 = vsel %vm294, %v647, %v646
      %v649 = vrot.slane %v624, 5
      %v650 = vsel %vm297, %v649, %v648
      %v651 = vrot.slane %v625, 4
      %v652 = vsel %vm300, %v651, %v650
      %v653 = vrot.slane %v626, 3
      %v654 = vsel %vm303, %v653, %v652
      %v655 = vpack.c.b16 %v654, %v640
      %657 = vst.msk [vmem:[#allocation2 + $0x18] sm:$0xff] %vm321, %v655
      %v658 = vld [vmem:[%s195] sm:$0x2]
      %v659 = vld [vmem:[%s195 + $0x4] sm:$0x2]
      %v660 = vld [vmem:[%s195 + $0x8] sm:$0x2]
      %v661 = vld [vmem:[%s195 + $0xc] sm:$0x2]
      %v662 = vld [vmem:[%s195 + $0x10] sm:$0x2]
      %v663 = vld [vmem:[%s195 + $0x14] sm:$0x2]
      %v664 = vld [vmem:[%s195 + $0x18] sm:$0x2]
      %v665 = vld [vmem:[%s195 + $0x1c] sm:$0x2]
      %v666 = vld [vmem:[%s195 + $0x20] sm:$0x2]
      %v667 = vld [vmem:[%s195 + $0x24] sm:$0x2]
      %v668 = vld [vmem:[%s195 + $0x28] sm:$0x2]
      %v669 = vld [vmem:[%s195 + $0x2c] sm:$0x2]
      %v670 = vld [vmem:[%s195 + $0x30] sm:$0x2]
      %v671 = vld [vmem:[%s195 + $0x34] sm:$0x2]
      %v672 = vld [vmem:[%s195 + $0x38] sm:$0x2]
      %v673 = vld [vmem:[%s195 + $0x3c] sm:$0x2]
      %v690 = vunpack.c.l.b16 %v658
      %v691 = vunpack.c.l.b16 %v659
      %v692 = vunpack.c.l.b16 %v660
      %v693 = vunpack.c.l.b16 %v661
      %v694 = vunpack.c.l.b16 %v662
      %v695 = vunpack.c.l.b16 %v663
      %v696 = vunpack.c.l.b16 %v664
      %v697 = vunpack.c.l.b16 %v665
      %v698 = vunpack.c.l.b16 %v666
      %v699 = vunpack.c.l.b16 %v667
      %v700 = vunpack.c.l.b16 %v668
      %v701 = vunpack.c.l.b16 %v669
      %v702 = vunpack.c.l.b16 %v670
      %v703 = vunpack.c.l.b16 %v671
      %v704 = vunpack.c.l.b16 %v672
      %v705 = vunpack.c.l.b16 %v673
      %v706 = vpack.c.b16 %v690, %v690
      %v707 = vpack.c.b16 %v691, %v691
      %v708 = vpack.c.b16 %v692, %v692
      %v709 = vpack.c.b16 %v693, %v693
      %v710 = vpack.c.b16 %v694, %v694
      %v711 = vpack.c.b16 %v695, %v695
      %v712 = vpack.c.b16 %v696, %v696
      %v713 = vpack.c.b16 %v697, %v697
      %v714 = vpack.c.b16 %v698, %v698
      %v715 = vpack.c.b16 %v699, %v699
      %v716 = vpack.c.b16 %v700, %v700
      %v717 = vpack.c.b16 %v701, %v701
      %v718 = vpack.c.b16 %v702, %v702
      %v719 = vpack.c.b16 %v703, %v703
      %v720 = vpack.c.b16 %v704, %v704
      %v721 = vpack.c.b16 %v705, %v705
      %v722 = vunpack.c.l.b16 %v706
      %v723 = vunpack.c.l.b16 %v707
      %v724 = vunpack.c.l.b16 %v708
      %v725 = vunpack.c.l.b16 %v709
      %v726 = vunpack.c.l.b16 %v710
      %v727 = vunpack.c.l.b16 %v711
      %v728 = vunpack.c.l.b16 %v712
      %v729 = vunpack.c.l.b16 %v713
      %v730 = vunpack.c.l.b16 %v714
      %v731 = vunpack.c.l.b16 %v715
      %v732 = vunpack.c.l.b16 %v716
      %v733 = vunpack.c.l.b16 %v717
      %v734 = vunpack.c.l.b16 %v718
      %v735 = vunpack.c.l.b16 %v719
      %v736 = vunpack.c.l.b16 %v720
      %v737 = vunpack.c.l.b16 %v721
      %v738 = vrot.slane %v722, 3
      %v739 = vrot.slane %v723, 2
      %v740 = vsel %vm285, %v739, %v738
      %v741 = vrot.slane %v724, 1
      %v742 = vsel %vm288, %v741, %v740
      %v743 = vsel %vm291, %v725, %v742
      %v744 = vrot.slane %v726, 7
      %v745 = vsel %vm294, %v744, %v743
      %v746 = vrot.slane %v727, 6
      %v747 = vsel %vm297, %v746, %v745
      %v748 = vrot.slane %v728, 5
      %v749 = vsel %vm300, %v748, %v747
      %v750 = vrot.slane %v729, 4
      %v751 = vsel %vm303, %v750, %v749
      %v752 = vrot.slane %v730, 3
      %v753 = vrot.slane %v731, 2
      %v754 = vsel %vm285, %v753, %v752
      %v755 = vrot.slane %v732, 1
      %v756 = vsel %vm288, %v755, %v754
      %v757 = vsel %vm291, %v733, %v756
      %v758 = vrot.slane %v734, 7
      %v759 = vsel %vm294, %v758, %v757
      %v760 = vrot.slane %v735, 6
      %v761 = vsel %vm297, %v760, %v759
      %v762 = vrot.slane %v736, 5
      %v763 = vsel %vm300, %v762, %v761
      %v764 = vrot.slane %v737, 4
      %v765 = vsel %vm303, %v764, %v763
      %v766 = vpack.c.b16 %v765, %v751
      %768 = vst.msk [vmem:[#allocation2 + $0x20] sm:$0xff] %vm321, %v766
      %v769 = vld [vmem:[%s195] sm:$0x2]
      %v770 = vld [vmem:[%s195 + $0x4] sm:$0x2]
      %v771 = vld [vmem:[%s195 + $0x8] sm:$0x2]
      %v772 = vld [vmem:[%s195 + $0xc] sm:$0x2]
      %v773 = vld [vmem:[%s195 + $0x10] sm:$0x2]
      %v774 = vld [vmem:[%s195 + $0x14] sm:$0x2]
      %v775 = vld [vmem:[%s195 + $0x18] sm:$0x2]
      %v776 = vld [vmem:[%s195 + $0x1c] sm:$0x2]
      %v777 = vld [vmem:[%s195 + $0x20] sm:$0x2]
      %v778 = vld [vmem:[%s195 + $0x24] sm:$0x2]
      %v779 = vld [vmem:[%s195 + $0x28] sm:$0x2]
      %v780 = vld [vmem:[%s195 + $0x2c] sm:$0x2]
      %v781 = vld [vmem:[%s195 + $0x30] sm:$0x2]
      %v782 = vld [vmem:[%s195 + $0x34] sm:$0x2]
      %v783 = vld [vmem:[%s195 + $0x38] sm:$0x2]
      %v784 = vld [vmem:[%s195 + $0x3c] sm:$0x2]
      %v801 = vunpack.c.l.b16 %v769
      %v802 = vunpack.c.l.b16 %v770
      %v803 = vunpack.c.l.b16 %v771
      %v804 = vunpack.c.l.b16 %v772
      %v805 = vunpack.c.l.b16 %v773
      %v806 = vunpack.c.l.b16 %v774
      %v807 = vunpack.c.l.b16 %v775
      %v808 = vunpack.c.l.b16 %v776
      %v809 = vunpack.c.l.b16 %v777
      %v810 = vunpack.c.l.b16 %v778
      %v811 = vunpack.c.l.b16 %v779
      %v812 = vunpack.c.l.b16 %v780
      %v813 = vunpack.c.l.b16 %v781
      %v814 = vunpack.c.l.b16 %v782
      %v815 = vunpack.c.l.b16 %v783
      %v816 = vunpack.c.l.b16 %v784
      %v817 = vpack.c.b16 %v801, %v801
      %v818 = vpack.c.b16 %v802, %v802
      %v819 = vpack.c.b16 %v803, %v803
      %v820 = vpack.c.b16 %v804, %v804
      %v821 = vpack.c.b16 %v805, %v805
      %v822 = vpack.c.b16 %v806, %v806
      %v823 = vpack.c.b16 %v807, %v807
      %v824 = vpack.c.b16 %v808, %v808
      %v825 = vpack.c.b16 %v809, %v809
      %v826 = vpack.c.b16 %v810, %v810
      %v827 = vpack.c.b16 %v811, %v811
      %v828 = vpack.c.b16 %v812, %v812
      %v829 = vpack.c.b16 %v813, %v813
      %v830 = vpack.c.b16 %v814, %v814
      %v831 = vpack.c.b16 %v815, %v815
      %v832 = vpack.c.b16 %v816, %v816
      %v833 = vunpack.c.l.b16 %v817
      %v834 = vunpack.c.l.b16 %v818
      %v835 = vunpack.c.l.b16 %v819
      %v836 = vunpack.c.l.b16 %v820
      %v837 = vunpack.c.l.b16 %v821
      %v838 = vunpack.c.l.b16 %v822
      %v839 = vunpack.c.l.b16 %v823
      %v840 = vunpack.c.l.b16 %v824
      %v841 = vunpack.c.l.b16 %v825
      %v842 = vunpack.c.l.b16 %v826
      %v843 = vunpack.c.l.b16 %v827
      %v844 = vunpack.c.l.b16 %v828
      %v845 = vunpack.c.l.b16 %v829
      %v846 = vunpack.c.l.b16 %v830
      %v847 = vunpack.c.l.b16 %v831
      %v848 = vunpack.c.l.b16 %v832
      %v849 = vrot.slane %v833, 2
      %v850 = vrot.slane %v834, 1
      %v851 = vsel %vm285, %v850, %v849
      %v852 = vsel %vm288, %v835, %v851
      %v853 = vrot.slane %v836, 7
      %v854 = vsel %vm291, %v853, %v852
      %v855 = vrot.slane %v837, 6
      %v856 = vsel %vm294, %v855, %v854
      %v857 = vrot.slane %v838, 5
      %v858 = vsel %vm297, %v857, %v856
      %v859 = vrot.slane %v839, 4
      %v860 = vsel %vm300, %v859, %v858
      %v861 = vrot.slane %v840, 3
      %v862 = vsel %vm303, %v861, %v860
      %v863 = vrot.slane %v841, 2
      %v864 = vrot.slane %v842, 1
      %v865 = vsel %vm285, %v864, %v863
      %v866 = vsel %vm288, %v843, %v865
      %v867 = vrot.slane %v844, 7
      %v868 = vsel %vm291, %v867, %v866
      %v869 = vrot.slane %v845, 6
      %v870 = vsel %vm294, %v869, %v868
      %v871 = vrot.slane %v846, 5
      %v872 = vsel %vm297, %v871, %v870
      %v873 = vrot.slane %v847, 4
      %v874 = vsel %vm300, %v873, %v872
      %v875 = vrot.slane %v848, 3
      %v876 = vsel %vm303, %v875, %v874
      %v877 = vpack.c.b16 %v876, %v862
      %878 = vrot.lane.b32.xlu0 %v877, 127
      %v879 = vpop.permute.xlu0 %878
      %881 = vst.msk [vmem:[#allocation2 + $0x28] sm:$0xff] %vm321, %v879
      %v882 = vld [vmem:[%s195] sm:$0x1]
      %v883 = vld [vmem:[%s195 + $0x4] sm:$0x1]
      %v884 = vld [vmem:[%s195 + $0x8] sm:$0x1]
      %v885 = vld [vmem:[%s195 + $0xc] sm:$0x1]
      %v886 = vld [vmem:[%s195 + $0x10] sm:$0x1]
      %v887 = vld [vmem:[%s195 + $0x14] sm:$0x1]
      %v888 = vld [vmem:[%s195 + $0x18] sm:$0x1]
      %v889 = vld [vmem:[%s195 + $0x1c] sm:$0x1]
      %v890 = vld [vmem:[%s195 + $0x20] sm:$0x1]
      %v891 = vld [vmem:[%s195 + $0x24] sm:$0x1]
      %v892 = vld [vmem:[%s195 + $0x28] sm:$0x1]
      %v893 = vld [vmem:[%s195 + $0x2c] sm:$0x1]
      %v894 = vld [vmem:[%s195 + $0x30] sm:$0x1]
      %v895 = vld [vmem:[%s195 + $0x34] sm:$0x1]
      %v896 = vld [vmem:[%s195 + $0x38] sm:$0x1]
      %v897 = vld [vmem:[%s195 + $0x3c] sm:$0x1]
      %v914 = vunpack.c.l.b16 %v882
      %v915 = vunpack.c.l.b16 %v883
      %v916 = vunpack.c.l.b16 %v884
      %v917 = vunpack.c.l.b16 %v885
      %v918 = vunpack.c.l.b16 %v886
      %v919 = vunpack.c.l.b16 %v887
      %v920 = vunpack.c.l.b16 %v888
      %v921 = vunpack.c.l.b16 %v889
      %v922 = vunpack.c.l.b16 %v890
      %v923 = vunpack.c.l.b16 %v891
      %v924 = vunpack.c.l.b16 %v892
      %v925 = vunpack.c.l.b16 %v893
      %v926 = vunpack.c.l.b16 %v894
      %v927 = vunpack.c.l.b16 %v895
      %v928 = vunpack.c.l.b16 %v896
      %v929 = vunpack.c.l.b16 %v897
      %v930 = vpack.c.b16 %v914, %v914
      %v931 = vpack.c.b16 %v915, %v915
      %v932 = vpack.c.b16 %v916, %v916
      %v933 = vpack.c.b16 %v917, %v917
      %v934 = vpack.c.b16 %v918, %v918
      %v935 = vpack.c.b16 %v919, %v919
      %v936 = vpack.c.b16 %v920, %v920
      %v937 = vpack.c.b16 %v921, %v921
      %v938 = vpack.c.b16 %v922, %v922
      %v939 = vpack.c.b16 %v923, %v923
      %v940 = vpack.c.b16 %v924, %v924
      %v941 = vpack.c.b16 %v925, %v925
      %v942 = vpack.c.b16 %v926, %v926
      %v943 = vpack.c.b16 %v927, %v927
      %v944 = vpack.c.b16 %v928, %v928
      %v945 = vpack.c.b16 %v929, %v929
      %v946 = vunpack.c.l.b16 %v930
      %v947 = vunpack.c.l.b16 %v931
      %v948 = vunpack.c.l.b16 %v932
      %v949 = vunpack.c.l.b16 %v933
      %v950 = vunpack.c.l.b16 %v934
      %v951 = vunpack.c.l.b16 %v935
      %v952 = vunpack.c.l.b16 %v936
      %v953 = vunpack.c.l.b16 %v937
      %v954 = vunpack.c.l.b16 %v938
      %v955 = vunpack.c.l.b16 %v939
      %v956 = vunpack.c.l.b16 %v940
      %v957 = vunpack.c.l.b16 %v941
      %v958 = vunpack.c.l.b16 %v942
      %v959 = vunpack.c.l.b16 %v943
      %v960 = vunpack.c.l.b16 %v944
      %v961 = vunpack.c.l.b16 %v945
      %v962 = vrot.slane %v947, 7
      %v963 = vsel %vm285, %v962, %v946
      %v964 = vrot.slane %v948, 6
      %v965 = vsel %vm288, %v964, %v963
      %v966 = vrot.slane %v949, 5
      %v967 = vsel %vm291, %v966, %v965
      %v968 = vrot.slane %v950, 4
      %v969 = vsel %vm294, %v968, %v967
      %v970 = vrot.slane %v951, 3
      %v971 = vsel %vm297, %v970, %v969
      %v972 = vrot.slane %v952, 2
      %v973 = vsel %vm300, %v972, %v971
      %v974 = vrot.slane %v953, 1
      %v975 = vsel %vm303, %v974, %v973
      %v976 = vrot.slane %v955, 7
      %v977 = vsel %vm285, %v976, %v954
      %v978 = vrot.slane %v956, 6
      %v979 = vsel %vm288, %v978, %v977
      %v980 = vrot.slane %v957, 5
      %v981 = vsel %vm291, %v980, %v979
      %v982 = vrot.slane %v958, 4
      %v983 = vsel %vm294, %v982, %v981
      %v984 = vrot.slane %v959, 3
      %v985 = vsel %vm297, %v984, %v983
      %v986 = vrot.slane %v960, 2
      %v987 = vsel %vm300, %v986, %v985
      %v988 = vrot.slane %v961, 1
      %v989 = vsel %vm303, %v988, %v987
      %v990 = vpack.c.b16 %v989, %v975
      %991 = vrot.lane.b32.xlu0 %v990, 126
      %v992 = vpop.permute.xlu0 %991
      %994 = vst.msk [vmem:[#allocation2 + $0x30] sm:$0xff] %vm321, %v992
      %v995 = vld [vmem:[%s195] sm:$0x1]
      %v996 = vld [vmem:[%s195 + $0x4] sm:$0x1]
      %v997 = vld [vmem:[%s195 + $0x8] sm:$0x1]
      %v998 = vld [vmem:[%s195 + $0xc] sm:$0x1]
      %v999 = vld [vmem:[%s195 + $0x10] sm:$0x1]
      %v1000 = vld [vmem:[%s195 + $0x14] sm:$0x1]
      %v1001 = vld [vmem:[%s195 + $0x18] sm:$0x1]
      %v1002 = vld [vmem:[%s195 + $0x1c] sm:$0x1]
      %v1003 = vld [vmem:[%s195 + $0x20] sm:$0x1]
      %v1004 = vld [vmem:[%s195 + $0x24] sm:$0x1]
      %v1005 = vld [vmem:[%s195 + $0x28] sm:$0x1]
      %v1006 = vld [vmem:[%s195 + $0x2c] sm:$0x1]
      %v1007 = vld [vmem:[%s195 + $0x30] sm:$0x1]
      %v1008 = vld [vmem:[%s195 + $0x34] sm:$0x1]
      %v1009 = vld [vmem:[%s195 + $0x38] sm:$0x1]
      %v1010 = vld [vmem:[%s195 + $0x3c] sm:$0x1]
      %v1027 = vunpack.c.l.b16 %v995
      %v1028 = vunpack.c.l.b16 %v996
      %v1029 = vunpack.c.l.b16 %v997
      %v1030 = vunpack.c.l.b16 %v998
      %v1031 = vunpack.c.l.b16 %v999
      %v1032 = vunpack.c.l.b16 %v1000
      %v1033 = vunpack.c.l.b16 %v1001
      %v1034 = vunpack.c.l.b16 %v1002
      %v1035 = vunpack.c.l.b16 %v1003
      %v1036 = vunpack.c.l.b16 %v1004
      %v1037 = vunpack.c.l.b16 %v1005
      %v1038 = vunpack.c.l.b16 %v1006
      %v1039 = vunpack.c.l.b16 %v1007
      %v1040 = vunpack.c.l.b16 %v1008
      %v1041 = vunpack.c.l.b16 %v1009
      %v1042 = vunpack.c.l.b16 %v1010
      %v1043 = vpack.c.b16 %v1027, %v1027
      %v1044 = vpack.c.b16 %v1028, %v1028
      %v1045 = vpack.c.b16 %v1029, %v1029
      %v1046 = vpack.c.b16 %v1030, %v1030
      %v1047 = vpack.c.b16 %v1031, %v1031
      %v1048 = vpack.c.b16 %v1032, %v1032
      %v1049 = vpack.c.b16 %v1033, %v1033
      %v1050 = vpack.c.b16 %v1034, %v1034
      %v1051 = vpack.c.b16 %v1035, %v1035
      %v1052 = vpack.c.b16 %v1036, %v1036
      %v1053 = vpack.c.b16 %v1037, %v1037
      %v1054 = vpack.c.b16 %v1038, %v1038
      %v1055 = vpack.c.b16 %v1039, %v1039
      %v1056 = vpack.c.b16 %v1040, %v1040
      %v1057 = vpack.c.b16 %v1041, %v1041
      %v1058 = vpack.c.b16 %v1042, %v1042
      %v1059 = vunpack.c.l.b16 %v1043
      %v1060 = vunpack.c.l.b16 %v1044
      %v1061 = vunpack.c.l.b16 %v1045
      %v1062 = vunpack.c.l.b16 %v1046
      %v1063 = vunpack.c.l.b16 %v1047
      %v1064 = vunpack.c.l.b16 %v1048
      %v1065 = vunpack.c.l.b16 %v1049
      %v1066 = vunpack.c.l.b16 %v1050
      %v1067 = vunpack.c.l.b16 %v1051
      %v1068 = vunpack.c.l.b16 %v1052
      %v1069 = vunpack.c.l.b16 %v1053
      %v1070 = vunpack.c.l.b16 %v1054
      %v1071 = vunpack.c.l.b16 %v1055
      %v1072 = vunpack.c.l.b16 %v1056
      %v1073 = vunpack.c.l.b16 %v1057
      %v1074 = vunpack.c.l.b16 %v1058
      %v1075 = vrot.slane %v1059, 1
      %v1076 = vsel %vm285, %v1060, %v1075
      %v1077 = vrot.slane %v1061, 7
      %v1078 = vsel %vm288, %v1077, %v1076
      %v1079 = vrot.slane %v1062, 6
      %v1080 = vsel %vm291, %v1079, %v1078
      %v1081 = vrot.slane %v1063, 5
      %v1082 = vsel %vm294, %v1081, %v1080
      %v1083 = vrot.slane %v1064, 4
      %v1084 = vsel %vm297, %v1083, %v1082
      %v1085 = vrot.slane %v1065, 3
      %v1086 = vsel %vm300, %v1085, %v1084
      %v1087 = vrot.slane %v1066, 2
      %v1088 = vsel %vm303, %v1087, %v1086
      %v1089 = vrot.slane %v1067, 1
      %v1090 = vsel %vm285, %v1068, %v1089
      %v1091 = vrot.slane %v1069, 7
      %v1092 = vsel %vm288, %v1091, %v1090
      %v1093 = vrot.slane %v1070, 6
      %v1094 = vsel %vm291, %v1093, %v1092
      %v1095 = vrot.slane %v1071, 5
      %v1096 = vsel %vm294, %v1095, %v1094
      %v1097 = vrot.slane %v1072, 4
      %v1098 = vsel %vm297, %v1097, %v1096
      %v1099 = vrot.slane %v1073, 3
      %v1100 = vsel %vm300, %v1099, %v1098
      %v1101 = vrot.slane %v1074, 2
      %v1102 = vsel %vm303, %v1101, %v1100
      %v1103 = vpack.c.b16 %v1102, %v1088
      %1104 = vrot.lane.b32.xlu0 %v1103, 126
      %v1105 = vpop.permute.xlu0 %1104
      %1107 = vst.msk [vmem:[#allocation2 + $0x38] sm:$0xff] %vm321, %v1105
      %v1108 = vld [vmem:[%s195] sm:$0x1]
      %v1109 = vld [vmem:[%s195 + $0x4] sm:$0x1]
      %v1110 = vld [vmem:[%s195 + $0x8] sm:$0x1]
      %v1111 = vld [vmem:[%s195 + $0xc] sm:$0x1]
      %v1112 = vld [vmem:[%s195 + $0x10] sm:$0x1]
      %v1113 = vld [vmem:[%s195 + $0x14] sm:$0x1]
      %v1114 = vld [vmem:[%s195 + $0x18] sm:$0x1]
      %v1115 = vld [vmem:[%s195 + $0x1c] sm:$0x1]
      %v1116 = vld [vmem:[%s195 + $0x20] sm:$0x1]
      %v1117 = vld [vmem:[%s195 + $0x24] sm:$0x1]
      %v1118 = vld [vmem:[%s195 + $0x28] sm:$0x1]
      %v1119 = vld [vmem:[%s195 + $0x2c] sm:$0x1]
      %v1120 = vld [vmem:[%s195 + $0x30] sm:$0x1]
      %v1121 = vld [vmem:[%s195 + $0x34] sm:$0x1]
      %v1122 = vld [vmem:[%s195 + $0x38] sm:$0x1]
      %v1123 = vld [vmem:[%s195 + $0x3c] sm:$0x1]
      %v1140 = vunpack.c.l.b16 %v1108
      %v1141 = vunpack.c.l.b16 %v1109
      %v1142 = vunpack.c.l.b16 %v1110
      %v1143 = vunpack.c.l.b16 %v1111
      %v1144 = vunpack.c.l.b16 %v1112
      %v1145 = vunpack.c.l.b16 %v1113
      %v1146 = vunpack.c.l.b16 %v1114
      %v1147 = vunpack.c.l.b16 %v1115
      %v1148 = vunpack.c.l.b16 %v1116
      %v1149 = vunpack.c.l.b16 %v1117
      %v1150 = vunpack.c.l.b16 %v1118
      %v1151 = vunpack.c.l.b16 %v1119
      %v1152 = vunpack.c.l.b16 %v1120
      %v1153 = vunpack.c.l.b16 %v1121
      %v1154 = vunpack.c.l.b16 %v1122
      %v1155 = vunpack.c.l.b16 %v1123
      %v1156 = vpack.c.b16 %v1140, %v1140
      %v1157 = vpack.c.b16 %v1141, %v1141
      %v1158 = vpack.c.b16 %v1142, %v1142
      %v1159 = vpack.c.b16 %v1143, %v1143
      %v1160 = vpack.c.b16 %v1144, %v1144
      %v1161 = vpack.c.b16 %v1145, %v1145
      %v1162 = vpack.c.b16 %v1146, %v1146
      %v1163 = vpack.c.b16 %v1147, %v1147
      %v1164 = vpack.c.b16 %v1148, %v1148
      %v1165 = vpack.c.b16 %v1149, %v1149
      %v1166 = vpack.c.b16 %v1150, %v1150
      %v1167 = vpack.c.b16 %v1151, %v1151
      %v1168 = vpack.c.b16 %v1152, %v1152
      %v1169 = vpack.c.b16 %v1153, %v1153
      %v1170 = vpack.c.b16 %v1154, %v1154
      %v1171 = vpack.c.b16 %v1155, %v1155
      %v1172 = vunpack.c.l.b16 %v1156
      %v1173 = vunpack.c.l.b16 %v1157
      %v1174 = vunpack.c.l.b16 %v1158
      %v1175 = vunpack.c.l.b16 %v1159
      %v1176 = vunpack.c.l.b16 %v1160
      %v1177 = vunpack.c.l.b16 %v1161
      %v1178 = vunpack.c.l.b16 %v1162
      %v1179 = vunpack.c.l.b16 %v1163
      %v1180 = vunpack.c.l.b16 %v1164
      %v1181 = vunpack.c.l.b16 %v1165
      %v1182 = vunpack.c.l.b16 %v1166
      %v1183 = vunpack.c.l.b16 %v1167
      %v1184 = vunpack.c.l.b16 %v1168
      %v1185 = vunpack.c.l.b16 %v1169
      %v1186 = vunpack.c.l.b16 %v1170
      %v1187 = vunpack.c.l.b16 %v1171
      %v1188 = vrot.slane %v1173, 7
      %v1189 = vsel %vm285, %v1188, %v1172
      %v1190 = vrot.slane %v1174, 6
      %v1191 = vsel %vm288, %v1190, %v1189
      %v1192 = vrot.slane %v1175, 5
      %v1193 = vsel %vm291, %v1192, %v1191
      %v1194 = vrot.slane %v1176, 4
      %v1195 = vsel %vm294, %v1194, %v1193
      %v1196 = vrot.slane %v1177, 3
      %v1197 = vsel %vm297, %v1196, %v1195
      %v1198 = vrot.slane %v1178, 2
      %v1199 = vsel %vm300, %v1198, %v1197
      %v1200 = vrot.slane %v1179, 1
      %v1201 = vsel %vm303, %v1200, %v1199
      %v1202 = vrot.slane %v1181, 7
      %v1203 = vsel %vm285, %v1202, %v1180
      %v1204 = vrot.slane %v1182, 6
      %v1205 = vsel %vm288, %v1204, %v1203
      %v1206 = vrot.slane %v1183, 5
      %v1207 = vsel %vm291, %v1206, %v1205
      %v1208 = vrot.slane %v1184, 4
      %v1209 = vsel %vm294, %v1208, %v1207
      %v1210 = vrot.slane %v1185, 3
      %v1211 = vsel %vm297, %v1210, %v1209
      %v1212 = vrot.slane %v1186, 2
      %v1213 = vsel %vm300, %v1212, %v1211
      %v1214 = vrot.slane %v1187, 1
      %v1215 = vsel %vm303, %v1214, %v1213
      %v1216 = vpack.c.b16 %v1215, %v1201
      %1217 = vrot.lane.b32.xlu0 %v1216, 125
      %v1218 = vpop.permute.xlu0 %1217
      %1220 = vst.msk [vmem:[#allocation2 + $0x40] sm:$0xff] %vm321, %v1218
      %v1221 = vld [vmem:[%s195] sm:$0x4]
      %v1222 = vld [vmem:[%s195 + $0x4] sm:$0x4]
      %v1223 = vld [vmem:[%s195 + $0x8] sm:$0x4]
      %v1224 = vld [vmem:[%s195 + $0xc] sm:$0x4]
      %v1225 = vld [vmem:[%s195 + $0x10] sm:$0x4]
      %v1226 = vld [vmem:[%s195 + $0x14] sm:$0x4]
      %v1227 = vld [vmem:[%s195 + $0x18] sm:$0x4]
      %v1228 = vld [vmem:[%s195 + $0x1c] sm:$0x4]
      %v1229 = vld [vmem:[%s195 + $0x20] sm:$0x4]
      %v1230 = vld [vmem:[%s195 + $0x24] sm:$0x4]
      %v1231 = vld [vmem:[%s195 + $0x28] sm:$0x4]
      %v1232 = vld [vmem:[%s195 + $0x2c] sm:$0x4]
      %v1233 = vld [vmem:[%s195 + $0x30] sm:$0x4]
      %v1234 = vld [vmem:[%s195 + $0x34] sm:$0x4]
      %v1235 = vld [vmem:[%s195 + $0x38] sm:$0x4]
      %v1236 = vld [vmem:[%s195 + $0x3c] sm:$0x4]
      %v1253 = vunpack.c.l.b16 %v1221
      %v1254 = vunpack.c.l.b16 %v1222
      %v1255 = vunpack.c.l.b16 %v1223
      %v1256 = vunpack.c.l.b16 %v1224
      %v1257 = vunpack.c.l.b16 %v1225
      %v1258 = vunpack.c.l.b16 %v1226
      %v1259 = vunpack.c.l.b16 %v1227
      %v1260 = vunpack.c.l.b16 %v1228
      %v1261 = vunpack.c.l.b16 %v1229
      %v1262 = vunpack.c.l.b16 %v1230
      %v1263 = vunpack.c.l.b16 %v1231
      %v1264 = vunpack.c.l.b16 %v1232
      %v1265 = vunpack.c.l.b16 %v1233
      %v1266 = vunpack.c.l.b16 %v1234
      %v1267 = vunpack.c.l.b16 %v1235
      %v1268 = vunpack.c.l.b16 %v1236
      %v1269 = vpack.c.b16 %v1253, %v1253
      %v1270 = vpack.c.b16 %v1254, %v1254
      %v1271 = vpack.c.b16 %v1255, %v1255
      %v1272 = vpack.c.b16 %v1256, %v1256
      %v1273 = vpack.c.b16 %v1257, %v1257
      %v1274 = vpack.c.b16 %v1258, %v1258
      %v1275 = vpack.c.b16 %v1259, %v1259
      %v1276 = vpack.c.b16 %v1260, %v1260
      %v1277 = vpack.c.b16 %v1261, %v1261
      %v1278 = vpack.c.b16 %v1262, %v1262
      %v1279 = vpack.c.b16 %v1263, %v1263
      %v1280 = vpack.c.b16 %v1264, %v1264
      %v1281 = vpack.c.b16 %v1265, %v1265
      %v1282 = vpack.c.b16 %v1266, %v1266
      %v1283 = vpack.c.b16 %v1267, %v1267
      %v1284 = vpack.c.b16 %v1268, %v1268
      %v1285 = vunpack.c.l.b16 %v1269
      %v1286 = vunpack.c.l.b16 %v1270
      %v1287 = vunpack.c.l.b16 %v1271
      %v1288 = vunpack.c.l.b16 %v1272
      %v1289 = vunpack.c.l.b16 %v1273
      %v1290 = vunpack.c.l.b16 %v1274
      %v1291 = vunpack.c.l.b16 %v1275
      %v1292 = vunpack.c.l.b16 %v1276
      %v1293 = vunpack.c.l.b16 %v1277
      %v1294 = vunpack.c.l.b16 %v1278
      %v1295 = vunpack.c.l.b16 %v1279
      %v1296 = vunpack.c.l.b16 %v1280
      %v1297 = vunpack.c.l.b16 %v1281
      %v1298 = vunpack.c.l.b16 %v1282
      %v1299 = vunpack.c.l.b16 %v1283
      %v1300 = vunpack.c.l.b16 %v1284
      %v1301 = vrot.slane %v1285, 4
      %v1302 = vrot.slane %v1286, 3
      %v1303 = vsel %vm285, %v1302, %v1301
      %v1304 = vrot.slane %v1287, 2
      %v1305 = vsel %vm288, %v1304, %v1303
      %v1306 = vrot.slane %v1288, 1
      %v1307 = vsel %vm291, %v1306, %v1305
      %v1308 = vsel %vm294, %v1289, %v1307
      %v1309 = vrot.slane %v1290, 7
      %v1310 = vsel %vm297, %v1309, %v1308
      %v1311 = vrot.slane %v1291, 6
      %v1312 = vsel %vm300, %v1311, %v1310
      %v1313 = vrot.slane %v1292, 5
      %v1314 = vsel %vm303, %v1313, %v1312
      %v1315 = vrot.slane %v1293, 4
      %v1316 = vrot.slane %v1294, 3
      %v1317 = vsel %vm285, %v1316, %v1315
      %v1318 = vrot.slane %v1295, 2
      %v1319 = vsel %vm288, %v1318, %v1317
      %v1320 = vrot.slane %v1296, 1
      %v1321 = vsel %vm291, %v1320, %v1319
      %v1322 = vsel %vm294, %v1297, %v1321
      %v1323 = vrot.slane %v1298, 7
      %v1324 = vsel %vm297, %v1323, %v1322
      %v1325 = vrot.slane %v1299, 6
      %v1326 = vsel %vm300, %v1325, %v1324
      %v1327 = vrot.slane %v1300, 5
      %v1328 = vsel %vm303, %v1327, %v1326
      %v1329 = vpack.c.b16 %v1328, %v1314
      %1331 = vst.msk [vmem:[#allocation2 + $0x48] sm:$0xff] %vm321, %v1329
      %v1332 = vld [vmem:[%s195] sm:$0x4]
      %v1333 = vld [vmem:[%s195 + $0x4] sm:$0x4]
      %v1334 = vld [vmem:[%s195 + $0x8] sm:$0x4]
      %v1335 = vld [vmem:[%s195 + $0xc] sm:$0x4]
      %v1336 = vld [vmem:[%s195 + $0x10] sm:$0x4]
      %v1337 = vld [vmem:[%s195 + $0x14] sm:$0x4]
      %v1338 = vld [vmem:[%s195 + $0x18] sm:$0x4]
      %v1339 = vld [vmem:[%s195 + $0x1c] sm:$0x4]
      %v1340 = vld [vmem:[%s195 + $0x20] sm:$0x4]
      %v1341 = vld [vmem:[%s195 + $0x24] sm:$0x4]
      %v1342 = vld [vmem:[%s195 + $0x28] sm:$0x4]
      %v1343 = vld [vmem:[%s195 + $0x2c] sm:$0x4]
      %v1344 = vld [vmem:[%s195 + $0x30] sm:$0x4]
      %v1345 = vld [vmem:[%s195 + $0x34] sm:$0x4]
      %v1346 = vld [vmem:[%s195 + $0x38] sm:$0x4]
      %v1347 = vld [vmem:[%s195 + $0x3c] sm:$0x4]
      %v1364 = vunpack.c.l.b16 %v1332
      %v1365 = vunpack.c.l.b16 %v1333
      %v1366 = vunpack.c.l.b16 %v1334
      %v1367 = vunpack.c.l.b16 %v1335
      %v1368 = vunpack.c.l.b16 %v1336
      %v1369 = vunpack.c.l.b16 %v1337
      %v1370 = vunpack.c.l.b16 %v1338
      %v1371 = vunpack.c.l.b16 %v1339
      %v1372 = vunpack.c.l.b16 %v1340
      %v1373 = vunpack.c.l.b16 %v1341
      %v1374 = vunpack.c.l.b16 %v1342
      %v1375 = vunpack.c.l.b16 %v1343
      %v1376 = vunpack.c.l.b16 %v1344
      %v1377 = vunpack.c.l.b16 %v1345
      %v1378 = vunpack.c.l.b16 %v1346
      %v1379 = vunpack.c.l.b16 %v1347
      %v1380 = vpack.c.b16 %v1364, %v1364
      %v1381 = vpack.c.b16 %v1365, %v1365
      %v1382 = vpack.c.b16 %v1366, %v1366
      %v1383 = vpack.c.b16 %v1367, %v1367
      %v1384 = vpack.c.b16 %v1368, %v1368
      %v1385 = vpack.c.b16 %v1369, %v1369
      %v1386 = vpack.c.b16 %v1370, %v1370
      %v1387 = vpack.c.b16 %v1371, %v1371
      %v1388 = vpack.c.b16 %v1372, %v1372
      %v1389 = vpack.c.b16 %v1373, %v1373
      %v1390 = vpack.c.b16 %v1374, %v1374
      %v1391 = vpack.c.b16 %v1375, %v1375
      %v1392 = vpack.c.b16 %v1376, %v1376
      %v1393 = vpack.c.b16 %v1377, %v1377
      %v1394 = vpack.c.b16 %v1378, %v1378
      %v1395 = vpack.c.b16 %v1379, %v1379
      %v1396 = vunpack.c.l.b16 %v1380
      %v1397 = vunpack.c.l.b16 %v1381
      %v1398 = vunpack.c.l.b16 %v1382
      %v1399 = vunpack.c.l.b16 %v1383
      %v1400 = vunpack.c.l.b16 %v1384
      %v1401 = vunpack.c.l.b16 %v1385
      %v1402 = vunpack.c.l.b16 %v1386
      %v1403 = vunpack.c.l.b16 %v1387
      %v1404 = vunpack.c.l.b16 %v1388
      %v1405 = vunpack.c.l.b16 %v1389
      %v1406 = vunpack.c.l.b16 %v1390
      %v1407 = vunpack.c.l.b16 %v1391
      %v1408 = vunpack.c.l.b16 %v1392
      %v1409 = vunpack.c.l.b16 %v1393
      %v1410 = vunpack.c.l.b16 %v1394
      %v1411 = vunpack.c.l.b16 %v1395
      %v1412 = vrot.slane %v1396, 5
      %v1413 = vrot.slane %v1397, 4
      %v1414 = vsel %vm285, %v1413, %v1412
      %v1415 = vrot.slane %v1398, 3
      %v1416 = vsel %vm288, %v1415, %v1414
      %v1417 = vrot.slane %v1399, 2
      %v1418 = vsel %vm291, %v1417, %v1416
      %v1419 = vrot.slane %v1400, 1
      %v1420 = vsel %vm294, %v1419, %v1418
      %v1421 = vsel %vm297, %v1401, %v1420
      %v1422 = vrot.slane %v1402, 7
      %v1423 = vsel %vm300, %v1422, %v1421
      %v1424 = vrot.slane %v1403, 6
      %v1425 = vsel %vm303, %v1424, %v1423
      %v1426 = vrot.slane %v1404, 5
      %v1427 = vrot.slane %v1405, 4
      %v1428 = vsel %vm285, %v1427, %v1426
      %v1429 = vrot.slane %v1406, 3
      %v1430 = vsel %vm288, %v1429, %v1428
      %v1431 = vrot.slane %v1407, 2
      %v1432 = vsel %vm291, %v1431, %v1430
      %v1433 = vrot.slane %v1408, 1
      %v1434 = vsel %vm294, %v1433, %v1432
      %v1435 = vsel %vm297, %v1409, %v1434
      %v1436 = vrot.slane %v1410, 7
      %v1437 = vsel %vm300, %v1436, %v1435
      %v1438 = vrot.slane %v1411, 6
      %v1439 = vsel %vm303, %v1438, %v1437
      %v1440 = vpack.c.b16 %v1439, %v1425
      %1442 = vst.msk [vmem:[#allocation2 + $0x50] sm:$0xff] %vm321, %v1440
      %v1443 = vld [vmem:[%s195] sm:$0x4]
      %v1444 = vld [vmem:[%s195 + $0x4] sm:$0x4]
      %v1445 = vld [vmem:[%s195 + $0x8] sm:$0x4]
      %v1446 = vld [vmem:[%s195 + $0xc] sm:$0x4]
      %v1447 = vld [vmem:[%s195 + $0x10] sm:$0x4]
      %v1448 = vld [vmem:[%s195 + $0x14] sm:$0x4]
      %v1449 = vld [vmem:[%s195 + $0x18] sm:$0x4]
      %v1450 = vld [vmem:[%s195 + $0x1c] sm:$0x4]
      %v1451 = vld [vmem:[%s195 + $0x20] sm:$0x4]
      %v1452 = vld [vmem:[%s195 + $0x24] sm:$0x4]
      %v1453 = vld [vmem:[%s195 + $0x28] sm:$0x4]
      %v1454 = vld [vmem:[%s195 + $0x2c] sm:$0x4]
      %v1455 = vld [vmem:[%s195 + $0x30] sm:$0x4]
      %v1456 = vld [vmem:[%s195 + $0x34] sm:$0x4]
      %v1457 = vld [vmem:[%s195 + $0x38] sm:$0x4]
      %v1458 = vld [vmem:[%s195 + $0x3c] sm:$0x4]
      %v1475 = vunpack.c.l.b16 %v1443
      %v1476 = vunpack.c.l.b16 %v1444
      %v1477 = vunpack.c.l.b16 %v1445
      %v1478 = vunpack.c.l.b16 %v1446
      %v1479 = vunpack.c.l.b16 %v1447
      %v1480 = vunpack.c.l.b16 %v1448
      %v1481 = vunpack.c.l.b16 %v1449
      %v1482 = vunpack.c.l.b16 %v1450
      %v1483 = vunpack.c.l.b16 %v1451
      %v1484 = vunpack.c.l.b16 %v1452
      %v1485 = vunpack.c.l.b16 %v1453
      %v1486 = vunpack.c.l.b16 %v1454
      %v1487 = vunpack.c.l.b16 %v1455
      %v1488 = vunpack.c.l.b16 %v1456
      %v1489 = vunpack.c.l.b16 %v1457
      %v1490 = vunpack.c.l.b16 %v1458
      %v1491 = vpack.c.b16 %v1475, %v1475
      %v1492 = vpack.c.b16 %v1476, %v1476
      %v1493 = vpack.c.b16 %v1477, %v1477
      %v1494 = vpack.c.b16 %v1478, %v1478
      %v1495 = vpack.c.b16 %v1479, %v1479
      %v1496 = vpack.c.b16 %v1480, %v1480
      %v1497 = vpack.c.b16 %v1481, %v1481
      %v1498 = vpack.c.b16 %v1482, %v1482
      %v1499 = vpack.c.b16 %v1483, %v1483
      %v1500 = vpack.c.b16 %v1484, %v1484
      %v1501 = vpack.c.b16 %v1485, %v1485
      %v1502 = vpack.c.b16 %v1486, %v1486
      %v1503 = vpack.c.b16 %v1487, %v1487
      %v1504 = vpack.c.b16 %v1488, %v1488
      %v1505 = vpack.c.b16 %v1489, %v1489
      %v1506 = vpack.c.b16 %v1490, %v1490
      %v1507 = vunpack.c.l.b16 %v1491
      %v1508 = vunpack.c.l.b16 %v1492
      %v1509 = vunpack.c.l.b16 %v1493
      %v1510 = vunpack.c.l.b16 %v1494
      %v1511 = vunpack.c.l.b16 %v1495
      %v1512 = vunpack.c.l.b16 %v1496
      %v1513 = vunpack.c.l.b16 %v1497
      %v1514 = vunpack.c.l.b16 %v1498
      %v1515 = vunpack.c.l.b16 %v1499
      %v1516 = vunpack.c.l.b16 %v1500
      %v1517 = vunpack.c.l.b16 %v1501
      %v1518 = vunpack.c.l.b16 %v1502
      %v1519 = vunpack.c.l.b16 %v1503
      %v1520 = vunpack.c.l.b16 %v1504
      %v1521 = vunpack.c.l.b16 %v1505
      %v1522 = vunpack.c.l.b16 %v1506
      %v1523 = vrot.slane %v1507, 4
      %v1524 = vrot.slane %v1508, 3
      %v1525 = vsel %vm285, %v1524, %v1523
      %v1526 = vrot.slane %v1509, 2
      %v1527 = vsel %vm288, %v1526, %v1525
      %v1528 = vrot.slane %v1510, 1
      %v1529 = vsel %vm291, %v1528, %v1527
      %v1530 = vsel %vm294, %v1511, %v1529
      %v1531 = vrot.slane %v1512, 7
      %v1532 = vsel %vm297, %v1531, %v1530
      %v1533 = vrot.slane %v1513, 6
      %v1534 = vsel %vm300, %v1533, %v1532
      %v1535 = vrot.slane %v1514, 5
      %v1536 = vsel %vm303, %v1535, %v1534
      %v1537 = vrot.slane %v1515, 4
      %v1538 = vrot.slane %v1516, 3
      %v1539 = vsel %vm285, %v1538, %v1537
      %v1540 = vrot.slane %v1517, 2
      %v1541 = vsel %vm288, %v1540, %v1539
      %v1542 = vrot.slane %v1518, 1
      %v1543 = vsel %vm291, %v1542, %v1541
      %v1544 = vsel %vm294, %v1519, %v1543
      %v1545 = vrot.slane %v1520, 7
      %v1546 = vsel %vm297, %v1545, %v1544
      %v1547 = vrot.slane %v1521, 6
      %v1548 = vsel %vm300, %v1547, %v1546
      %v1549 = vrot.slane %v1522, 5
      %v1550 = vsel %vm303, %v1549, %v1548
      %v1551 = vpack.c.b16 %v1550, %v1536
      %1552 = vrot.lane.b32.xlu0 %v1551, 127
      %v1553 = vpop.permute.xlu0 %1552
      %1555 = vst.msk [vmem:[#allocation2 + $0x58] sm:$0xff] %vm321, %v1553
      %v1556 = vld [vmem:[%s195] sm:$0x8]
      %v1557 = vld [vmem:[%s195 + $0x4] sm:$0x8]
      %v1558 = vld [vmem:[%s195 + $0x8] sm:$0x8]
      %v1559 = vld [vmem:[%s195 + $0xc] sm:$0x8]
      %v1560 = vld [vmem:[%s195 + $0x10] sm:$0x8]
      %v1561 = vld [vmem:[%s195 + $0x14] sm:$0x8]
      %v1562 = vld [vmem:[%s195 + $0x18] sm:$0x8]
      %v1563 = vld [vmem:[%s195 + $0x1c] sm:$0x8]
      %v1564 = vld [vmem:[%s195 + $0x20] sm:$0x8]
      %v1565 = vld [vmem:[%s195 + $0x24] sm:$0x8]
      %v1566 = vld [vmem:[%s195 + $0x28] sm:$0x8]
      %v1567 = vld [vmem:[%s195 + $0x2c] sm:$0x8]
      %v1568 = vld [vmem:[%s195 + $0x30] sm:$0x8]
      %v1569 = vld [vmem:[%s195 + $0x34] sm:$0x8]
      %v1570 = vld [vmem:[%s195 + $0x38] sm:$0x8]
      %v1571 = vld [vmem:[%s195 + $0x3c] sm:$0x8]
      %v1588 = vunpack.c.l.b16 %v1556
      %v1589 = vunpack.c.l.b16 %v1557
      %v1590 = vunpack.c.l.b16 %v1558
      %v1591 = vunpack.c.l.b16 %v1559
      %v1592 = vunpack.c.l.b16 %v1560
      %v1593 = vunpack.c.l.b16 %v1561
      %v1594 = vunpack.c.l.b16 %v1562
      %v1595 = vunpack.c.l.b16 %v1563
      %v1596 = vunpack.c.l.b16 %v1564
      %v1597 = vunpack.c.l.b16 %v1565
      %v1598 = vunpack.c.l.b16 %v1566
      %v1599 = vunpack.c.l.b16 %v1567
      %v1600 = vunpack.c.l.b16 %v1568
      %v1601 = vunpack.c.l.b16 %v1569
      %v1602 = vunpack.c.l.b16 %v1570
      %v1603 = vunpack.c.l.b16 %v1571
      %v1604 = vpack.c.b16 %v1588, %v1588
      %v1605 = vpack.c.b16 %v1589, %v1589
      %v1606 = vpack.c.b16 %v1590, %v1590
      %v1607 = vpack.c.b16 %v1591, %v1591
      %v1608 = vpack.c.b16 %v1592, %v1592
      %v1609 = vpack.c.b16 %v1593, %v1593
      %v1610 = vpack.c.b16 %v1594, %v1594
      %v1611 = vpack.c.b16 %v1595, %v1595
      %v1612 = vpack.c.b16 %v1596, %v1596
      %v1613 = vpack.c.b16 %v1597, %v1597
      %v1614 = vpack.c.b16 %v1598, %v1598
      %v1615 = vpack.c.b16 %v1599, %v1599
      %v1616 = vpack.c.b16 %v1600, %v1600
      %v1617 = vpack.c.b16 %v1601, %v1601
      %v1618 = vpack.c.b16 %v1602, %v1602
      %v1619 = vpack.c.b16 %v1603, %v1603
      %v1620 = vunpack.c.l.b16 %v1604
      %v1621 = vunpack.c.l.b16 %v1605
      %v1622 = vunpack.c.l.b16 %v1606
      %v1623 = vunpack.c.l.b16 %v1607
      %v1624 = vunpack.c.l.b16 %v1608
      %v1625 = vunpack.c.l.b16 %v1609
      %v1626 = vunpack.c.l.b16 %v1610
      %v1627 = vunpack.c.l.b16 %v1611
      %v1628 = vunpack.c.l.b16 %v1612
      %v1629 = vunpack.c.l.b16 %v1613
      %v1630 = vunpack.c.l.b16 %v1614
      %v1631 = vunpack.c.l.b16 %v1615
      %v1632 = vunpack.c.l.b16 %v1616
      %v1633 = vunpack.c.l.b16 %v1617
      %v1634 = vunpack.c.l.b16 %v1618
      %v1635 = vunpack.c.l.b16 %v1619
      %v1636 = vrot.slane %v1620, 6
      %v1637 = vrot.slane %v1621, 5
      %v1638 = vsel %vm285, %v1637, %v1636
      %v1639 = vrot.slane %v1622, 4
      %v1640 = vsel %vm288, %v1639, %v1638
      %v1641 = vrot.slane %v1623, 3
      %v1642 = vsel %vm291, %v1641, %v1640
      %v1643 = vrot.slane %v1624, 2
      %v1644 = vsel %vm294, %v1643, %v1642
      %v1645 = vrot.slane %v1625, 1
      %v1646 = vsel %vm297, %v1645, %v1644
      %v1647 = vsel %vm300, %v1626, %v1646
      %v1648 = vrot.slane %v1627, 7
      %v1649 = vsel %vm303, %v1648, %v1647
      %v1650 = vrot.slane %v1628, 6
      %v1651 = vrot.slane %v1629, 5
      %v1652 = vsel %vm285, %v1651, %v1650
      %v1653 = vrot.slane %v1630, 4
      %v1654 = vsel %vm288, %v1653, %v1652
      %v1655 = vrot.slane %v1631, 3
      %v1656 = vsel %vm291, %v1655, %v1654
      %v1657 = vrot.slane %v1632, 2
      %v1658 = vsel %vm294, %v1657, %v1656
      %v1659 = vrot.slane %v1633, 1
      %v1660 = vsel %vm297, %v1659, %v1658
      %v1661 = vsel %vm300, %v1634, %v1660
      %v1662 = vrot.slane %v1635, 7
      %v1663 = vsel %vm303, %v1662, %v1661
      %v1664 = vpack.c.b16 %v1663, %v1649
      %1666 = vst.msk [vmem:[#allocation2 + $0x60] sm:$0xff] %vm321, %v1664
      %v1667 = vld [vmem:[%s195] sm:$0x8]
      %v1668 = vld [vmem:[%s195 + $0x4] sm:$0x8]
      %v1669 = vld [vmem:[%s195 + $0x8] sm:$0x8]
      %v1670 = vld [vmem:[%s195 + $0xc] sm:$0x8]
      %v1671 = vld [vmem:[%s195 + $0x10] sm:$0x8]
      %v1672 = vld [vmem:[%s195 + $0x14] sm:$0x8]
      %v1673 = vld [vmem:[%s195 + $0x18] sm:$0x8]
      %v1674 = vld [vmem:[%s195 + $0x1c] sm:$0x8]
      %v1675 = vld [vmem:[%s195 + $0x20] sm:$0x8]
      %v1676 = vld [vmem:[%s195 + $0x24] sm:$0x8]
      %v1677 = vld [vmem:[%s195 + $0x28] sm:$0x8]
      %v1678 = vld [vmem:[%s195 + $0x2c] sm:$0x8]
      %v1679 = vld [vmem:[%s195 + $0x30] sm:$0x8]
      %v1680 = vld [vmem:[%s195 + $0x34] sm:$0x8]
      %v1681 = vld [vmem:[%s195 + $0x38] sm:$0x8]
      %v1682 = vld [vmem:[%s195 + $0x3c] sm:$0x8]
      %v1699 = vunpack.c.l.b16 %v1667
      %v1700 = vunpack.c.l.b16 %v1668
      %v1701 = vunpack.c.l.b16 %v1669
      %v1702 = vunpack.c.l.b16 %v1670
      %v1703 = vunpack.c.l.b16 %v1671
      %v1704 = vunpack.c.l.b16 %v1672
      %v1705 = vunpack.c.l.b16 %v1673
      %v1706 = vunpack.c.l.b16 %v1674
      %v1707 = vunpack.c.l.b16 %v1675
      %v1708 = vunpack.c.l.b16 %v1676
      %v1709 = vunpack.c.l.b16 %v1677
      %v1710 = vunpack.c.l.b16 %v1678
      %v1711 = vunpack.c.l.b16 %v1679
      %v1712 = vunpack.c.l.b16 %v1680
      %v1713 = vunpack.c.l.b16 %v1681
      %v1714 = vunpack.c.l.b16 %v1682
      %v1715 = vpack.c.b16 %v1699, %v1699
      %v1716 = vpack.c.b16 %v1700, %v1700
      %v1717 = vpack.c.b16 %v1701, %v1701
      %v1718 = vpack.c.b16 %v1702, %v1702
      %v1719 = vpack.c.b16 %v1703, %v1703
      %v1720 = vpack.c.b16 %v1704, %v1704
      %v1721 = vpack.c.b16 %v1705, %v1705
      %v1722 = vpack.c.b16 %v1706, %v1706
      %v1723 = vpack.c.b16 %v1707, %v1707
      %v1724 = vpack.c.b16 %v1708, %v1708
      %v1725 = vpack.c.b16 %v1709, %v1709
      %v1726 = vpack.c.b16 %v1710, %v1710
      %v1727 = vpack.c.b16 %v1711, %v1711
      %v1728 = vpack.c.b16 %v1712, %v1712
      %v1729 = vpack.c.b16 %v1713, %v1713
      %v1730 = vpack.c.b16 %v1714, %v1714
      %v1731 = vunpack.c.l.b16 %v1715
      %v1732 = vunpack.c.l.b16 %v1716
      %v1733 = vunpack.c.l.b16 %v1717
      %v1734 = vunpack.c.l.b16 %v1718
      %v1735 = vunpack.c.l.b16 %v1719
      %v1736 = vunpack.c.l.b16 %v1720
      %v1737 = vunpack.c.l.b16 %v1721
      %v1738 = vunpack.c.l.b16 %v1722
      %v1739 = vunpack.c.l.b16 %v1723
      %v1740 = vunpack.c.l.b16 %v1724
      %v1741 = vunpack.c.l.b16 %v1725
      %v1742 = vunpack.c.l.b16 %v1726
      %v1743 = vunpack.c.l.b16 %v1727
      %v1744 = vunpack.c.l.b16 %v1728
      %v1745 = vunpack.c.l.b16 %v1729
      %v1746 = vunpack.c.l.b16 %v1730
      %v1747 = vrot.slane %v1731, 7
      %v1748 = vrot.slane %v1732, 6
      %v1749 = vsel %vm285, %v1748, %v1747
      %v1750 = vrot.slane %v1733, 5
      %v1751 = vsel %vm288, %v1750, %v1749
      %v1752 = vrot.slane %v1734, 4
      %v1753 = vsel %vm291, %v1752, %v1751
      %v1754 = vrot.slane %v1735, 3
      %v1755 = vsel %vm294, %v1754, %v1753
      %v1756 = vrot.slane %v1736, 2
      %v1757 = vsel %vm297, %v1756, %v1755
      %v1758 = vrot.slane %v1737, 1
      %v1759 = vsel %vm300, %v1758, %v1757
      %v1760 = vsel %vm303, %v1738, %v1759
      %v1761 = vrot.slane %v1739, 7
      %v1762 = vrot.slane %v1740, 6
      %v1763 = vsel %vm285, %v1762, %v1761
      %v1764 = vrot.slane %v1741, 5
      %v1765 = vsel %vm288, %v1764, %v1763
      %v1766 = vrot.slane %v1742, 4
      %v1767 = vsel %vm291, %v1766, %v1765
      %v1768 = vrot.slane %v1743, 3
      %v1769 = vsel %vm294, %v1768, %v1767
      %v1770 = vrot.slane %v1744, 2
      %v1771 = vsel %vm297, %v1770, %v1769
      %v1772 = vrot.slane %v1745, 1
      %v1773 = vsel %vm300, %v1772, %v1771
      %v1774 = vsel %vm303, %v1746, %v1773
      %v1775 = vpack.c.b16 %v1774, %v1760
      %1777 = vst.msk [vmem:[#allocation2 + $0x68] sm:$0xff] %vm321, %v1775
      %v1778 = vld [vmem:[%s195] sm:$0x8]
      %v1779 = vld [vmem:[%s195 + $0x4] sm:$0x8]
      %v1780 = vld [vmem:[%s195 + $0x8] sm:$0x8]
      %v1781 = vld [vmem:[%s195 + $0xc] sm:$0x8]
      %v1782 = vld [vmem:[%s195 + $0x10] sm:$0x8]
      %v1783 = vld [vmem:[%s195 + $0x14] sm:$0x8]
      %v1784 = vld [vmem:[%s195 + $0x18] sm:$0x8]
      %v1785 = vld [vmem:[%s195 + $0x1c] sm:$0x8]
      %v1786 = vld [vmem:[%s195 + $0x20] sm:$0x8]
      %v1787 = vld [vmem:[%s195 + $0x24] sm:$0x8]
      %v1788 = vld [vmem:[%s195 + $0x28] sm:$0x8]
      %v1789 = vld [vmem:[%s195 + $0x2c] sm:$0x8]
      %v1790 = vld [vmem:[%s195 + $0x30] sm:$0x8]
      %v1791 = vld [vmem:[%s195 + $0x34] sm:$0x8]
      %v1792 = vld [vmem:[%s195 + $0x38] sm:$0x8]
      %v1793 = vld [vmem:[%s195 + $0x3c] sm:$0x8]
      %v1810 = vunpack.c.l.b16 %v1778
      %v1811 = vunpack.c.l.b16 %v1779
      %v1812 = vunpack.c.l.b16 %v1780
      %v1813 = vunpack.c.l.b16 %v1781
      %v1814 = vunpack.c.l.b16 %v1782
      %v1815 = vunpack.c.l.b16 %v1783
      %v1816 = vunpack.c.l.b16 %v1784
      %v1817 = vunpack.c.l.b16 %v1785
      %v1818 = vunpack.c.l.b16 %v1786
      %v1819 = vunpack.c.l.b16 %v1787
      %v1820 = vunpack.c.l.b16 %v1788
      %v1821 = vunpack.c.l.b16 %v1789
      %v1822 = vunpack.c.l.b16 %v1790
      %v1823 = vunpack.c.l.b16 %v1791
      %v1824 = vunpack.c.l.b16 %v1792
      %v1825 = vunpack.c.l.b16 %v1793
      %v1826 = vpack.c.b16 %v1810, %v1810
      %v1827 = vpack.c.b16 %v1811, %v1811
      %v1828 = vpack.c.b16 %v1812, %v1812
      %v1829 = vpack.c.b16 %v1813, %v1813
      %v1830 = vpack.c.b16 %v1814, %v1814
      %v1831 = vpack.c.b16 %v1815, %v1815
      %v1832 = vpack.c.b16 %v1816, %v1816
      %v1833 = vpack.c.b16 %v1817, %v1817
      %v1834 = vpack.c.b16 %v1818, %v1818
      %v1835 = vpack.c.b16 %v1819, %v1819
      %v1836 = vpack.c.b16 %v1820, %v1820
      %v1837 = vpack.c.b16 %v1821, %v1821
      %v1838 = vpack.c.b16 %v1822, %v1822
      %v1839 = vpack.c.b16 %v1823, %v1823
      %v1840 = vpack.c.b16 %v1824, %v1824
      %v1841 = vpack.c.b16 %v1825, %v1825
      %v1842 = vunpack.c.l.b16 %v1826
      %v1843 = vunpack.c.l.b16 %v1827
      %v1844 = vunpack.c.l.b16 %v1828
      %v1845 = vunpack.c.l.b16 %v1829
      %v1846 = vunpack.c.l.b16 %v1830
      %v1847 = vunpack.c.l.b16 %v1831
      %v1848 = vunpack.c.l.b16 %v1832
      %v1849 = vunpack.c.l.b16 %v1833
      %v1850 = vunpack.c.l.b16 %v1834
      %v1851 = vunpack.c.l.b16 %v1835
      %v1852 = vunpack.c.l.b16 %v1836
      %v1853 = vunpack.c.l.b16 %v1837
      %v1854 = vunpack.c.l.b16 %v1838
      %v1855 = vunpack.c.l.b16 %v1839
      %v1856 = vunpack.c.l.b16 %v1840
      %v1857 = vunpack.c.l.b16 %v1841
      %v1858 = vrot.slane %v1842, 6
      %v1859 = vrot.slane %v1843, 5
      %v1860 = vsel %vm285, %v1859, %v1858
      %v1861 = vrot.slane %v1844, 4
      %v1862 = vsel %vm288, %v1861, %v1860
      %v1863 = vrot.slane %v1845, 3
      %v1864 = vsel %vm291, %v1863, %v1862
      %v1865 = vrot.slane %v1846, 2
      %v1866 = vsel %vm294, %v1865, %v1864
      %v1867 = vrot.slane %v1847, 1
      %v1868 = vsel %vm297, %v1867, %v1866
      %v1869 = vsel %vm300, %v1848, %v1868
      %v1870 = vrot.slane %v1849, 7
      %v1871 = vsel %vm303, %v1870, %v1869
      %v1872 = vrot.slane %v1850, 6
      %v1873 = vrot.slane %v1851, 5
      %v1874 = vsel %vm285, %v1873, %v1872
      %v1875 = vrot.slane %v1852, 4
      %v1876 = vsel %vm288, %v1875, %v1874
      %v1877 = vrot.slane %v1853, 3
      %v1878 = vsel %vm291, %v1877, %v1876
      %v1879 = vrot.slane %v1854, 2
      %v1880 = vsel %vm294, %v1879, %v1878
      %v1881 = vrot.slane %v1855, 1
      %v1882 = vsel %vm297, %v1881, %v1880
      %v1883 = vsel %vm300, %v1856, %v1882
      %v1884 = vrot.slane %v1857, 7
      %v1885 = vsel %vm303, %v1884, %v1883
      %v1886 = vpack.c.b16 %v1885, %v1871
      %1887 = vrot.lane.b32.xlu0 %v1886, 127
      %v1888 = vpop.permute.xlu0 %1887
      %1890 = vst.msk [vmem:[#allocation2 + $0x70] sm:$0xff] %vm321, %v1888
      %v1891 = vld [vmem:[%s195] sm:$0x4]
      %v1892 = vld [vmem:[%s195 + $0x4] sm:$0x4]
      %v1893 = vld [vmem:[%s195 + $0x8] sm:$0x4]
      %v1894 = vld [vmem:[%s195 + $0xc] sm:$0x4]
      %v1895 = vld [vmem:[%s195 + $0x10] sm:$0x4]
      %v1896 = vld [vmem:[%s195 + $0x14] sm:$0x4]
      %v1897 = vld [vmem:[%s195 + $0x18] sm:$0x4]
      %v1898 = vld [vmem:[%s195 + $0x1c] sm:$0x4]
      %v1899 = vld [vmem:[%s195 + $0x20] sm:$0x4]
      %v1900 = vld [vmem:[%s195 + $0x24] sm:$0x4]
      %v1901 = vld [vmem:[%s195 + $0x28] sm:$0x4]
      %v1902 = vld [vmem:[%s195 + $0x2c] sm:$0x4]
      %v1903 = vld [vmem:[%s195 + $0x30] sm:$0x4]
      %v1904 = vld [vmem:[%s195 + $0x34] sm:$0x4]
      %v1905 = vld [vmem:[%s195 + $0x38] sm:$0x4]
      %v1906 = vld [vmem:[%s195 + $0x3c] sm:$0x4]
      %v1923 = vunpack.c.l.b16 %v1891
      %v1924 = vunpack.c.l.b16 %v1892
      %v1925 = vunpack.c.l.b16 %v1893
      %v1926 = vunpack.c.l.b16 %v1894
      %v1927 = vunpack.c.l.b16 %v1895
      %v1928 = vunpack.c.l.b16 %v1896
      %v1929 = vunpack.c.l.b16 %v1897
      %v1930 = vunpack.c.l.b16 %v1898
      %v1931 = vunpack.c.l.b16 %v1899
      %v1932 = vunpack.c.l.b16 %v1900
      %v1933 = vunpack.c.l.b16 %v1901
      %v1934 = vunpack.c.l.b16 %v1902
      %v1935 = vunpack.c.l.b16 %v1903
      %v1936 = vunpack.c.l.b16 %v1904
      %v1937 = vunpack.c.l.b16 %v1905
      %v1938 = vunpack.c.l.b16 %v1906
      %v1939 = vpack.c.b16 %v1923, %v1923
      %v1940 = vpack.c.b16 %v1924, %v1924
      %v1941 = vpack.c.b16 %v1925, %v1925
      %v1942 = vpack.c.b16 %v1926, %v1926
      %v1943 = vpack.c.b16 %v1927, %v1927
      %v1944 = vpack.c.b16 %v1928, %v1928
      %v1945 = vpack.c.b16 %v1929, %v1929
      %v1946 = vpack.c.b16 %v1930, %v1930
      %v1947 = vpack.c.b16 %v1931, %v1931
      %v1948 = vpack.c.b16 %v1932, %v1932
      %v1949 = vpack.c.b16 %v1933, %v1933
      %v1950 = vpack.c.b16 %v1934, %v1934
      %v1951 = vpack.c.b16 %v1935, %v1935
      %v1952 = vpack.c.b16 %v1936, %v1936
      %v1953 = vpack.c.b16 %v1937, %v1937
      %v1954 = vpack.c.b16 %v1938, %v1938
      %v1955 = vunpack.c.l.b16 %v1939
      %v1956 = vunpack.c.l.b16 %v1940
      %v1957 = vunpack.c.l.b16 %v1941
      %v1958 = vunpack.c.l.b16 %v1942
      %v1959 = vunpack.c.l.b16 %v1943
      %v1960 = vunpack.c.l.b16 %v1944
      %v1961 = vunpack.c.l.b16 %v1945
      %v1962 = vunpack.c.l.b16 %v1946
      %v1963 = vunpack.c.l.b16 %v1947
      %v1964 = vunpack.c.l.b16 %v1948
      %v1965 = vunpack.c.l.b16 %v1949
      %v1966 = vunpack.c.l.b16 %v1950
      %v1967 = vunpack.c.l.b16 %v1951
      %v1968 = vunpack.c.l.b16 %v1952
      %v1969 = vunpack.c.l.b16 %v1953
      %v1970 = vunpack.c.l.b16 %v1954
      %v1971 = vrot.slane %v1955, 4
      %v1972 = vrot.slane %v1956, 3
      %v1973 = vsel %vm285, %v1972, %v1971
      %v1974 = vrot.slane %v1957, 2
      %v1975 = vsel %vm288, %v1974, %v1973
      %v1976 = vrot.slane %v1958, 1
      %v1977 = vsel %vm291, %v1976, %v1975
      %v1978 = vsel %vm294, %v1959, %v1977
      %v1979 = vrot.slane %v1960, 7
      %v1980 = vsel %vm297, %v1979, %v1978
      %v1981 = vrot.slane %v1961, 6
      %v1982 = vsel %vm300, %v1981, %v1980
      %v1983 = vrot.slane %v1962, 5
      %v1984 = vsel %vm303, %v1983, %v1982
      %v1985 = vrot.slane %v1963, 4
      %v1986 = vrot.slane %v1964, 3
      %v1987 = vsel %vm285, %v1986, %v1985
      %v1988 = vrot.slane %v1965, 2
      %v1989 = vsel %vm288, %v1988, %v1987
      %v1990 = vrot.slane %v1966, 1
      %v1991 = vsel %vm291, %v1990, %v1989
      %v1992 = vsel %vm294, %v1967, %v1991
      %v1993 = vrot.slane %v1968, 7
      %v1994 = vsel %vm297, %v1993, %v1992
      %v1995 = vrot.slane %v1969, 6
      %v1996 = vsel %vm300, %v1995, %v1994
      %v1997 = vrot.slane %v1970, 5
      %v1998 = vsel %vm303, %v1997, %v1996
      %v1999 = vpack.c.b16 %v1998, %v1984
      %2000 = vrot.lane.b32.xlu0 %v1999, 126
      %v2001 = vpop.permute.xlu0 %2000
      %2003 = vst.msk [vmem:[#allocation2 + $0x78] sm:$0xff] %vm321, %v2001
      %v2004 = vld [vmem:[%s195] sm:$0x4]
      %v2005 = vld [vmem:[%s195 + $0x4] sm:$0x4]
      %v2006 = vld [vmem:[%s195 + $0x8] sm:$0x4]
      %v2007 = vld [vmem:[%s195 + $0xc] sm:$0x4]
      %v2008 = vld [vmem:[%s195 + $0x10] sm:$0x4]
      %v2009 = vld [vmem:[%s195 + $0x14] sm:$0x4]
      %v2010 = vld [vmem:[%s195 + $0x18] sm:$0x4]
      %v2011 = vld [vmem:[%s195 + $0x1c] sm:$0x4]
      %v2012 = vld [vmem:[%s195 + $0x20] sm:$0x4]
      %v2013 = vld [vmem:[%s195 + $0x24] sm:$0x4]
      %v2014 = vld [vmem:[%s195 + $0x28] sm:$0x4]
      %v2015 = vld [vmem:[%s195 + $0x2c] sm:$0x4]
      %v2016 = vld [vmem:[%s195 + $0x30] sm:$0x4]
      %v2017 = vld [vmem:[%s195 + $0x34] sm:$0x4]
      %v2018 = vld [vmem:[%s195 + $0x38] sm:$0x4]
      %v2019 = vld [vmem:[%s195 + $0x3c] sm:$0x4]
      %v2036 = vunpack.c.l.b16 %v2004
      %v2037 = vunpack.c.l.b16 %v2005
      %v2038 = vunpack.c.l.b16 %v2006
      %v2039 = vunpack.c.l.b16 %v2007
      %v2040 = vunpack.c.l.b16 %v2008
      %v2041 = vunpack.c.l.b16 %v2009
      %v2042 = vunpack.c.l.b16 %v2010
      %v2043 = vunpack.c.l.b16 %v2011
      %v2044 = vunpack.c.l.b16 %v2012
      %v2045 = vunpack.c.l.b16 %v2013
      %v2046 = vunpack.c.l.b16 %v2014
      %v2047 = vunpack.c.l.b16 %v2015
      %v2048 = vunpack.c.l.b16 %v2016
      %v2049 = vunpack.c.l.b16 %v2017
      %v2050 = vunpack.c.l.b16 %v2018
      %v2051 = vunpack.c.l.b16 %v2019
      %v2052 = vpack.c.b16 %v2036, %v2036
      %v2053 = vpack.c.b16 %v2037, %v2037
      %v2054 = vpack.c.b16 %v2038, %v2038
      %v2055 = vpack.c.b16 %v2039, %v2039
      %v2056 = vpack.c.b16 %v2040, %v2040
      %v2057 = vpack.c.b16 %v2041, %v2041
      %v2058 = vpack.c.b16 %v2042, %v2042
      %v2059 = vpack.c.b16 %v2043, %v2043
      %v2060 = vpack.c.b16 %v2044, %v2044
      %v2061 = vpack.c.b16 %v2045, %v2045
      %v2062 = vpack.c.b16 %v2046, %v2046
      %v2063 = vpack.c.b16 %v2047, %v2047
      %v2064 = vpack.c.b16 %v2048, %v2048
      %v2065 = vpack.c.b16 %v2049, %v2049
      %v2066 = vpack.c.b16 %v2050, %v2050
      %v2067 = vpack.c.b16 %v2051, %v2051
      %v2068 = vunpack.c.l.b16 %v2052
      %v2069 = vunpack.c.l.b16 %v2053
      %v2070 = vunpack.c.l.b16 %v2054
      %v2071 = vunpack.c.l.b16 %v2055
      %v2072 = vunpack.c.l.b16 %v2056
      %v2073 = vunpack.c.l.b16 %v2057
      %v2074 = vunpack.c.l.b16 %v2058
      %v2075 = vunpack.c.l.b16 %v2059
      %v2076 = vunpack.c.l.b16 %v2060
      %v2077 = vunpack.c.l.b16 %v2061
      %v2078 = vunpack.c.l.b16 %v2062
      %v2079 = vunpack.c.l.b16 %v2063
      %v2080 = vunpack.c.l.b16 %v2064
      %v2081 = vunpack.c.l.b16 %v2065
      %v2082 = vunpack.c.l.b16 %v2066
      %v2083 = vunpack.c.l.b16 %v2067
      %v2084 = vrot.slane %v2068, 5
      %v2085 = vrot.slane %v2069, 4
      %v2086 = vsel %vm285, %v2085, %v2084
      %v2087 = vrot.slane %v2070, 3
      %v2088 = vsel %vm288, %v2087, %v2086
      %v2089 = vrot.slane %v2071, 2
      %v2090 = vsel %vm291, %v2089, %v2088
      %v2091 = vrot.slane %v2072, 1
      %v2092 = vsel %vm294, %v2091, %v2090
      %v2093 = vsel %vm297, %v2073, %v2092
      %v2094 = vrot.slane %v2074, 7
      %v2095 = vsel %vm300, %v2094, %v2093
      %v2096 = vrot.slane %v2075, 6
      %v2097 = vsel %vm303, %v2096, %v2095
      %v2098 = vrot.slane %v2076, 5
      %v2099 = vrot.slane %v2077, 4
      %v2100 = vsel %vm285, %v2099, %v2098
      %v2101 = vrot.slane %v2078, 3
      %v2102 = vsel %vm288, %v2101, %v2100
      %v2103 = vrot.slane %v2079, 2
      %v2104 = vsel %vm291, %v2103, %v2102
      %v2105 = vrot.slane %v2080, 1
      %v2106 = vsel %vm294, %v2105, %v2104
      %v2107 = vsel %vm297, %v2081, %v2106
      %v2108 = vrot.slane %v2082, 7
      %v2109 = vsel %vm300, %v2108, %v2107
      %v2110 = vrot.slane %v2083, 6
      %v2111 = vsel %vm303, %v2110, %v2109
      %v2112 = vpack.c.b16 %v2111, %v2097
      %2113 = vrot.lane.b32.xlu0 %v2112, 126
      %v2114 = vpop.permute.xlu0 %2113
      %2116 = vst.msk [vmem:[#allocation2 + $0x80] sm:$0xff] %vm321, %v2114
      %v2117 = vld [vmem:[%s195] sm:$0x4]
      %v2118 = vld [vmem:[%s195 + $0x4] sm:$0x4]
      %v2119 = vld [vmem:[%s195 + $0x8] sm:$0x4]
      %v2120 = vld [vmem:[%s195 + $0xc] sm:$0x4]
      %v2121 = vld [vmem:[%s195 + $0x10] sm:$0x4]
      %v2122 = vld [vmem:[%s195 + $0x14] sm:$0x4]
      %v2123 = vld [vmem:[%s195 + $0x18] sm:$0x4]
      %v2124 = vld [vmem:[%s195 + $0x1c] sm:$0x4]
      %v2125 = vld [vmem:[%s195 + $0x20] sm:$0x4]
      %v2126 = vld [vmem:[%s195 + $0x24] sm:$0x4]
      %v2127 = vld [vmem:[%s195 + $0x28] sm:$0x4]
      %v2128 = vld [vmem:[%s195 + $0x2c] sm:$0x4]
      %v2129 = vld [vmem:[%s195 + $0x30] sm:$0x4]
      %v2130 = vld [vmem:[%s195 + $0x34] sm:$0x4]
      %v2131 = vld [vmem:[%s195 + $0x38] sm:$0x4]
      %v2132 = vld [vmem:[%s195 + $0x3c] sm:$0x4]
      %v2149 = vunpack.c.l.b16 %v2117
      %v2150 = vunpack.c.l.b16 %v2118
      %v2151 = vunpack.c.l.b16 %v2119
      %v2152 = vunpack.c.l.b16 %v2120
      %v2153 = vunpack.c.l.b16 %v2121
      %v2154 = vunpack.c.l.b16 %v2122
      %v2155 = vunpack.c.l.b16 %v2123
      %v2156 = vunpack.c.l.b16 %v2124
      %v2157 = vunpack.c.l.b16 %v2125
      %v2158 = vunpack.c.l.b16 %v2126
      %v2159 = vunpack.c.l.b16 %v2127
      %v2160 = vunpack.c.l.b16 %v2128
      %v2161 = vunpack.c.l.b16 %v2129
      %v2162 = vunpack.c.l.b16 %v2130
      %v2163 = vunpack.c.l.b16 %v2131
      %v2164 = vunpack.c.l.b16 %v2132
      %v2165 = vpack.c.b16 %v2149, %v2149
      %v2166 = vpack.c.b16 %v2150, %v2150
      %v2167 = vpack.c.b16 %v2151, %v2151
      %v2168 = vpack.c.b16 %v2152, %v2152
      %v2169 = vpack.c.b16 %v2153, %v2153
      %v2170 = vpack.c.b16 %v2154, %v2154
      %v2171 = vpack.c.b16 %v2155, %v2155
      %v2172 = vpack.c.b16 %v2156, %v2156
      %v2173 = vpack.c.b16 %v2157, %v2157
      %v2174 = vpack.c.b16 %v2158, %v2158
      %v2175 = vpack.c.b16 %v2159, %v2159
      %v2176 = vpack.c.b16 %v2160, %v2160
      %v2177 = vpack.c.b16 %v2161, %v2161
      %v2178 = vpack.c.b16 %v2162, %v2162
      %v2179 = vpack.c.b16 %v2163, %v2163
      %v2180 = vpack.c.b16 %v2164, %v2164
      %v2181 = vunpack.c.l.b16 %v2165
      %v2182 = vunpack.c.l.b16 %v2166
      %v2183 = vunpack.c.l.b16 %v2167
      %v2184 = vunpack.c.l.b16 %v2168
      %v2185 = vunpack.c.l.b16 %v2169
      %v2186 = vunpack.c.l.b16 %v2170
      %v2187 = vunpack.c.l.b16 %v2171
      %v2188 = vunpack.c.l.b16 %v2172
      %v2189 = vunpack.c.l.b16 %v2173
      %v2190 = vunpack.c.l.b16 %v2174
      %v2191 = vunpack.c.l.b16 %v2175
      %v2192 = vunpack.c.l.b16 %v2176
      %v2193 = vunpack.c.l.b16 %v2177
      %v2194 = vunpack.c.l.b16 %v2178
      %v2195 = vunpack.c.l.b16 %v2179
      %v2196 = vunpack.c.l.b16 %v2180
      %v2197 = vrot.slane %v2181, 4
      %v2198 = vrot.slane %v2182, 3
      %v2199 = vsel %vm285, %v2198, %v2197
      %v2200 = vrot.slane %v2183, 2
      %v2201 = vsel %vm288, %v2200, %v2199
      %v2202 = vrot.slane %v2184, 1
      %v2203 = vsel %vm291, %v2202, %v2201
      %v2204 = vsel %vm294, %v2185, %v2203
      %v2205 = vrot.slane %v2186, 7
      %v2206 = vsel %vm297, %v2205, %v2204
      %v2207 = vrot.slane %v2187, 6
      %v2208 = vsel %vm300, %v2207, %v2206
      %v2209 = vrot.slane %v2188, 5
      %v2210 = vsel %vm303, %v2209, %v2208
      %v2211 = vrot.slane %v2189, 4
      %v2212 = vrot.slane %v2190, 3
      %v2213 = vsel %vm285, %v2212, %v2211
      %v2214 = vrot.slane %v2191, 2
      %v2215 = vsel %vm288, %v2214, %v2213
      %v2216 = vrot.slane %v2192, 1
      %v2217 = vsel %vm291, %v2216, %v2215
      %v2218 = vsel %vm294, %v2193, %v2217
      %v2219 = vrot.slane %v2194, 7
      %v2220 = vsel %vm297, %v2219, %v2218
      %v2221 = vrot.slane %v2195, 6
      %v2222 = vsel %vm300, %v2221, %v2220
      %v2223 = vrot.slane %v2196, 5
      %v2224 = vsel %vm303, %v2223, %v2222
      %v2225 = vpack.c.b16 %v2224, %v2210
      %2226 = vrot.lane.b32.xlu0 %v2225, 125
      %v2227 = vpop.permute.xlu0 %2226
      %2229 = vst.msk [vmem:[#allocation2 + $0x88] sm:$0xff] %vm321, %v2227
      %v2230 = vld [vmem:[%s195] sm:$0x1]
      %v2231 = vld [vmem:[%s195 + $0x4] sm:$0x1]
      %v2232 = vld [vmem:[%s195 + $0x8] sm:$0x1]
      %v2233 = vld [vmem:[%s195 + $0xc] sm:$0x1]
      %v2234 = vld [vmem:[%s195 + $0x10] sm:$0x1]
      %v2235 = vld [vmem:[%s195 + $0x14] sm:$0x1]
      %v2236 = vld [vmem:[%s195 + $0x18] sm:$0x1]
      %v2237 = vld [vmem:[%s195 + $0x1c] sm:$0x1]
      %v2238 = vld [vmem:[%s195 + $0x20] sm:$0x1]
      %v2239 = vld [vmem:[%s195 + $0x24] sm:$0x1]
      %v2240 = vld [vmem:[%s195 + $0x28] sm:$0x1]
      %v2241 = vld [vmem:[%s195 + $0x2c] sm:$0x1]
      %v2242 = vld [vmem:[%s195 + $0x30] sm:$0x1]
      %v2243 = vld [vmem:[%s195 + $0x34] sm:$0x1]
      %v2244 = vld [vmem:[%s195 + $0x38] sm:$0x1]
      %v2245 = vld [vmem:[%s195 + $0x3c] sm:$0x1]
      %v2262 = vunpack.c.l.b16 %v2230
      %v2263 = vunpack.c.l.b16 %v2231
      %v2264 = vunpack.c.l.b16 %v2232
      %v2265 = vunpack.c.l.b16 %v2233
      %v2266 = vunpack.c.l.b16 %v2234
      %v2267 = vunpack.c.l.b16 %v2235
      %v2268 = vunpack.c.l.b16 %v2236
      %v2269 = vunpack.c.l.b16 %v2237
      %v2270 = vunpack.c.l.b16 %v2238
      %v2271 = vunpack.c.l.b16 %v2239
      %v2272 = vunpack.c.l.b16 %v2240
      %v2273 = vunpack.c.l.b16 %v2241
      %v2274 = vunpack.c.l.b16 %v2242
      %v2275 = vunpack.c.l.b16 %v2243
      %v2276 = vunpack.c.l.b16 %v2244
      %v2277 = vunpack.c.l.b16 %v2245
      %v2278 = vpack.c.b16 %v2262, %v2262
      %v2279 = vpack.c.b16 %v2263, %v2263
      %v2280 = vpack.c.b16 %v2264, %v2264
      %v2281 = vpack.c.b16 %v2265, %v2265
      %v2282 = vpack.c.b16 %v2266, %v2266
      %v2283 = vpack.c.b16 %v2267, %v2267
      %v2284 = vpack.c.b16 %v2268, %v2268
      %v2285 = vpack.c.b16 %v2269, %v2269
      %v2286 = vpack.c.b16 %v2270, %v2270
      %v2287 = vpack.c.b16 %v2271, %v2271
      %v2288 = vpack.c.b16 %v2272, %v2272
      %v2289 = vpack.c.b16 %v2273, %v2273
      %v2290 = vpack.c.b16 %v2274, %v2274
      %v2291 = vpack.c.b16 %v2275, %v2275
      %v2292 = vpack.c.b16 %v2276, %v2276
      %v2293 = vpack.c.b16 %v2277, %v2277
      %v2294 = vunpack.c.l.b16 %v2278
      %v2295 = vunpack.c.l.b16 %v2279
      %v2296 = vunpack.c.l.b16 %v2280
      %v2297 = vunpack.c.l.b16 %v2281
      %v2298 = vunpack.c.l.b16 %v2282
      %v2299 = vunpack.c.l.b16 %v2283
      %v2300 = vunpack.c.l.b16 %v2284
      %v2301 = vunpack.c.l.b16 %v2285
      %v2302 = vunpack.c.l.b16 %v2286
      %v2303 = vunpack.c.l.b16 %v2287
      %v2304 = vunpack.c.l.b16 %v2288
      %v2305 = vunpack.c.l.b16 %v2289
      %v2306 = vunpack.c.l.b16 %v2290
      %v2307 = vunpack.c.l.b16 %v2291
      %v2308 = vunpack.c.l.b16 %v2292
      %v2309 = vunpack.c.l.b16 %v2293
      %v2310 = vrot.slane %v2295, 7
      %v2311 = vsel %vm285, %v2310, %v2294
      %v2312 = vrot.slane %v2296, 6
      %v2313 = vsel %vm288, %v2312, %v2311
      %v2314 = vrot.slane %v2297, 5
      %v2315 = vsel %vm291, %v2314, %v2313
      %v2316 = vrot.slane %v2298, 4
      %v2317 = vsel %vm294, %v2316, %v2315
      %v2318 = vrot.slane %v2299, 3
      %v2319 = vsel %vm297, %v2318, %v2317
      %v2320 = vrot.slane %v2300, 2
      %v2321 = vsel %vm300, %v2320, %v2319
      %v2322 = vrot.slane %v2301, 1
      %v2323 = vsel %vm303, %v2322, %v2321
      %v2324 = vrot.slane %v2303, 7
      %v2325 = vsel %vm285, %v2324, %v2302
      %v2326 = vrot.slane %v2304, 6
      %v2327 = vsel %vm288, %v2326, %v2325
      %v2328 = vrot.slane %v2305, 5
      %v2329 = vsel %vm291, %v2328, %v2327
      %v2330 = vrot.slane %v2306, 4
      %v2331 = vsel %vm294, %v2330, %v2329
      %v2332 = vrot.slane %v2307, 3
      %v2333 = vsel %vm297, %v2332, %v2331
      %v2334 = vrot.slane %v2308, 2
      %v2335 = vsel %vm300, %v2334, %v2333
      %v2336 = vrot.slane %v2309, 1
      %v2337 = vsel %vm303, %v2336, %v2335
      %v2338 = vpack.c.b16 %v2337, %v2323
      %2339 = vrot.lane.b32.xlu0 %v2338, 124
      %v2340 = vpop.permute.xlu0 %2339
      %2342 = vst.msk [vmem:[#allocation2 + $0x90] sm:$0xff] %vm321, %v2340
      %v2343 = vld [vmem:[%s195] sm:$0x1]
      %v2344 = vld [vmem:[%s195 + $0x4] sm:$0x1]
      %v2345 = vld [vmem:[%s195 + $0x8] sm:$0x1]
      %v2346 = vld [vmem:[%s195 + $0xc] sm:$0x1]
      %v2347 = vld [vmem:[%s195 + $0x10] sm:$0x1]
      %v2348 = vld [vmem:[%s195 + $0x14] sm:$0x1]
      %v2349 = vld [vmem:[%s195 + $0x18] sm:$0x1]
      %v2350 = vld [vmem:[%s195 + $0x1c] sm:$0x1]
      %v2351 = vld [vmem:[%s195 + $0x20] sm:$0x1]
      %v2352 = vld [vmem:[%s195 + $0x24] sm:$0x1]
      %v2353 = vld [vmem:[%s195 + $0x28] sm:$0x1]
      %v2354 = vld [vmem:[%s195 + $0x2c] sm:$0x1]
      %v2355 = vld [vmem:[%s195 + $0x30] sm:$0x1]
      %v2356 = vld [vmem:[%s195 + $0x34] sm:$0x1]
      %v2357 = vld [vmem:[%s195 + $0x38] sm:$0x1]
      %v2358 = vld [vmem:[%s195 + $0x3c] sm:$0x1]
      %v2375 = vunpack.c.l.b16 %v2343
      %v2376 = vunpack.c.l.b16 %v2344
      %v2377 = vunpack.c.l.b16 %v2345
      %v2378 = vunpack.c.l.b16 %v2346
      %v2379 = vunpack.c.l.b16 %v2347
      %v2380 = vunpack.c.l.b16 %v2348
      %v2381 = vunpack.c.l.b16 %v2349
      %v2382 = vunpack.c.l.b16 %v2350
      %v2383 = vunpack.c.l.b16 %v2351
      %v2384 = vunpack.c.l.b16 %v2352
      %v2385 = vunpack.c.l.b16 %v2353
      %v2386 = vunpack.c.l.b16 %v2354
      %v2387 = vunpack.c.l.b16 %v2355
      %v2388 = vunpack.c.l.b16 %v2356
      %v2389 = vunpack.c.l.b16 %v2357
      %v2390 = vunpack.c.l.b16 %v2358
      %v2391 = vpack.c.b16 %v2375, %v2375
      %v2392 = vpack.c.b16 %v2376, %v2376
      %v2393 = vpack.c.b16 %v2377, %v2377
      %v2394 = vpack.c.b16 %v2378, %v2378
      %v2395 = vpack.c.b16 %v2379, %v2379
      %v2396 = vpack.c.b16 %v2380, %v2380
      %v2397 = vpack.c.b16 %v2381, %v2381
      %v2398 = vpack.c.b16 %v2382, %v2382
      %v2399 = vpack.c.b16 %v2383, %v2383
      %v2400 = vpack.c.b16 %v2384, %v2384
      %v2401 = vpack.c.b16 %v2385, %v2385
      %v2402 = vpack.c.b16 %v2386, %v2386
      %v2403 = vpack.c.b16 %v2387, %v2387
      %v2404 = vpack.c.b16 %v2388, %v2388
      %v2405 = vpack.c.b16 %v2389, %v2389
      %v2406 = vpack.c.b16 %v2390, %v2390
      %v2407 = vunpack.c.l.b16 %v2391
      %v2408 = vunpack.c.l.b16 %v2392
      %v2409 = vunpack.c.l.b16 %v2393
      %v2410 = vunpack.c.l.b16 %v2394
      %v2411 = vunpack.c.l.b16 %v2395
      %v2412 = vunpack.c.l.b16 %v2396
      %v2413 = vunpack.c.l.b16 %v2397
      %v2414 = vunpack.c.l.b16 %v2398
      %v2415 = vunpack.c.l.b16 %v2399
      %v2416 = vunpack.c.l.b16 %v2400
      %v2417 = vunpack.c.l.b16 %v2401
      %v2418 = vunpack.c.l.b16 %v2402
      %v2419 = vunpack.c.l.b16 %v2403
      %v2420 = vunpack.c.l.b16 %v2404
      %v2421 = vunpack.c.l.b16 %v2405
      %v2422 = vunpack.c.l.b16 %v2406
      %v2423 = vrot.slane %v2407, 1
      %v2424 = vsel %vm285, %v2408, %v2423
      %v2425 = vrot.slane %v2409, 7
      %v2426 = vsel %vm288, %v2425, %v2424
      %v2427 = vrot.slane %v2410, 6
      %v2428 = vsel %vm291, %v2427, %v2426
      %v2429 = vrot.slane %v2411, 5
      %v2430 = vsel %vm294, %v2429, %v2428
      %v2431 = vrot.slane %v2412, 4
      %v2432 = vsel %vm297, %v2431, %v2430
      %v2433 = vrot.slane %v2413, 3
      %v2434 = vsel %vm300, %v2433, %v2432
      %v2435 = vrot.slane %v2414, 2
      %v2436 = vsel %vm303, %v2435, %v2434
      %v2437 = vrot.slane %v2415, 1
      %v2438 = vsel %vm285, %v2416, %v2437
      %v2439 = vrot.slane %v2417, 7
      %v2440 = vsel %vm288, %v2439, %v2438
      %v2441 = vrot.slane %v2418, 6
      %v2442 = vsel %vm291, %v2441, %v2440
      %v2443 = vrot.slane %v2419, 5
      %v2444 = vsel %vm294, %v2443, %v2442
      %v2445 = vrot.slane %v2420, 4
      %v2446 = vsel %vm297, %v2445, %v2444
      %v2447 = vrot.slane %v2421, 3
      %v2448 = vsel %vm300, %v2447, %v2446
      %v2449 = vrot.slane %v2422, 2
      %v2450 = vsel %vm303, %v2449, %v2448
      %v2451 = vpack.c.b16 %v2450, %v2436
      %2452 = vrot.lane.b32.xlu0 %v2451, 124
      %v2453 = vpop.permute.xlu0 %2452
      %2455 = vst.msk [vmem:[#allocation2 + $0x98] sm:$0xff] %vm321, %v2453
      %v2456 = vld [vmem:[%s195] sm:$0x1]
      %v2457 = vld [vmem:[%s195 + $0x4] sm:$0x1]
      %v2458 = vld [vmem:[%s195 + $0x8] sm:$0x1]
      %v2459 = vld [vmem:[%s195 + $0xc] sm:$0x1]
      %v2460 = vld [vmem:[%s195 + $0x10] sm:$0x1]
      %v2461 = vld [vmem:[%s195 + $0x14] sm:$0x1]
      %v2462 = vld [vmem:[%s195 + $0x18] sm:$0x1]
      %v2463 = vld [vmem:[%s195 + $0x1c] sm:$0x1]
      %v2464 = vld [vmem:[%s195 + $0x20] sm:$0x1]
      %v2465 = vld [vmem:[%s195 + $0x24] sm:$0x1]
      %v2466 = vld [vmem:[%s195 + $0x28] sm:$0x1]
      %v2467 = vld [vmem:[%s195 + $0x2c] sm:$0x1]
      %v2468 = vld [vmem:[%s195 + $0x30] sm:$0x1]
      %v2469 = vld [vmem:[%s195 + $0x34] sm:$0x1]
      %v2470 = vld [vmem:[%s195 + $0x38] sm:$0x1]
      %v2471 = vld [vmem:[%s195 + $0x3c] sm:$0x1]
      %v2488 = vunpack.c.l.b16 %v2456
      %v2489 = vunpack.c.l.b16 %v2457
      %v2490 = vunpack.c.l.b16 %v2458
      %v2491 = vunpack.c.l.b16 %v2459
      %v2492 = vunpack.c.l.b16 %v2460
      %v2493 = vunpack.c.l.b16 %v2461
      %v2494 = vunpack.c.l.b16 %v2462
      %v2495 = vunpack.c.l.b16 %v2463
      %v2496 = vunpack.c.l.b16 %v2464
      %v2497 = vunpack.c.l.b16 %v2465
      %v2498 = vunpack.c.l.b16 %v2466
      %v2499 = vunpack.c.l.b16 %v2467
      %v2500 = vunpack.c.l.b16 %v2468
      %v2501 = vunpack.c.l.b16 %v2469
      %v2502 = vunpack.c.l.b16 %v2470
      %v2503 = vunpack.c.l.b16 %v2471
      %v2504 = vpack.c.b16 %v2488, %v2488
      %v2505 = vpack.c.b16 %v2489, %v2489
      %v2506 = vpack.c.b16 %v2490, %v2490
      %v2507 = vpack.c.b16 %v2491, %v2491
      %v2508 = vpack.c.b16 %v2492, %v2492
      %v2509 = vpack.c.b16 %v2493, %v2493
      %v2510 = vpack.c.b16 %v2494, %v2494
      %v2511 = vpack.c.b16 %v2495, %v2495
      %v2512 = vpack.c.b16 %v2496, %v2496
      %v2513 = vpack.c.b16 %v2497, %v2497
      %v2514 = vpack.c.b16 %v2498, %v2498
      %v2515 = vpack.c.b16 %v2499, %v2499
      %v2516 = vpack.c.b16 %v2500, %v2500
      %v2517 = vpack.c.b16 %v2501, %v2501
      %v2518 = vpack.c.b16 %v2502, %v2502
      %v2519 = vpack.c.b16 %v2503, %v2503
      %v2520 = vunpack.c.l.b16 %v2504
      %v2521 = vunpack.c.l.b16 %v2505
      %v2522 = vunpack.c.l.b16 %v2506
      %v2523 = vunpack.c.l.b16 %v2507
      %v2524 = vunpack.c.l.b16 %v2508
      %v2525 = vunpack.c.l.b16 %v2509
      %v2526 = vunpack.c.l.b16 %v2510
      %v2527 = vunpack.c.l.b16 %v2511
      %v2528 = vunpack.c.l.b16 %v2512
      %v2529 = vunpack.c.l.b16 %v2513
      %v2530 = vunpack.c.l.b16 %v2514
      %v2531 = vunpack.c.l.b16 %v2515
      %v2532 = vunpack.c.l.b16 %v2516
      %v2533 = vunpack.c.l.b16 %v2517
      %v2534 = vunpack.c.l.b16 %v2518
      %v2535 = vunpack.c.l.b16 %v2519
      %v2536 = vrot.slane %v2521, 7
      %v2537 = vsel %vm285, %v2536, %v2520
      %v2538 = vrot.slane %v2522, 6
      %v2539 = vsel %vm288, %v2538, %v2537
      %v2540 = vrot.slane %v2523, 5
      %v2541 = vsel %vm291, %v2540, %v2539
      %v2542 = vrot.slane %v2524, 4
      %v2543 = vsel %vm294, %v2542, %v2541
      %v2544 = vrot.slane %v2525, 3
      %v2545 = vsel %vm297, %v2544, %v2543
      %v2546 = vrot.slane %v2526, 2
      %v2547 = vsel %vm300, %v2546, %v2545
      %v2548 = vrot.slane %v2527, 1
      %v2549 = vsel %vm303, %v2548, %v2547
      %v2550 = vrot.slane %v2529, 7
      %v2551 = vsel %vm285, %v2550, %v2528
      %v2552 = vrot.slane %v2530, 6
      %v2553 = vsel %vm288, %v2552, %v2551
      %v2554 = vrot.slane %v2531, 5
      %v2555 = vsel %vm291, %v2554, %v2553
      %v2556 = vrot.slane %v2532, 4
      %v2557 = vsel %vm294, %v2556, %v2555
      %v2558 = vrot.slane %v2533, 3
      %v2559 = vsel %vm297, %v2558, %v2557
      %v2560 = vrot.slane %v2534, 2
      %v2561 = vsel %vm300, %v2560, %v2559
      %v2562 = vrot.slane %v2535, 1
      %v2563 = vsel %vm303, %v2562, %v2561
      %v2564 = vpack.c.b16 %v2563, %v2549
      %2565 = vrot.lane.b32.xlu0 %v2564, 123
      %v2566 = vpop.permute.xlu0 %2565
      %2568 = vst.msk [vmem:[#allocation2 + $0xa0] sm:$0xff] %vm321, %v2566
      %v2569 = vld [vmem:[%s195] sm:$0x2]
      %v2570 = vld [vmem:[%s195 + $0x4] sm:$0x2]
      %v2571 = vld [vmem:[%s195 + $0x8] sm:$0x2]
      %v2572 = vld [vmem:[%s195 + $0xc] sm:$0x2]
      %v2573 = vld [vmem:[%s195 + $0x10] sm:$0x2]
      %v2574 = vld [vmem:[%s195 + $0x14] sm:$0x2]
      %v2575 = vld [vmem:[%s195 + $0x18] sm:$0x2]
      %v2576 = vld [vmem:[%s195 + $0x1c] sm:$0x2]
      %v2577 = vld [vmem:[%s195 + $0x20] sm:$0x2]
      %v2578 = vld [vmem:[%s195 + $0x24] sm:$0x2]
      %v2579 = vld [vmem:[%s195 + $0x28] sm:$0x2]
      %v2580 = vld [vmem:[%s195 + $0x2c] sm:$0x2]
      %v2581 = vld [vmem:[%s195 + $0x30] sm:$0x2]
      %v2582 = vld [vmem:[%s195 + $0x34] sm:$0x2]
      %v2583 = vld [vmem:[%s195 + $0x38] sm:$0x2]
      %v2584 = vld [vmem:[%s195 + $0x3c] sm:$0x2]
      %v2601 = vunpack.c.l.b16 %v2569
      %v2602 = vunpack.c.l.b16 %v2570
      %v2603 = vunpack.c.l.b16 %v2571
      %v2604 = vunpack.c.l.b16 %v2572
      %v2605 = vunpack.c.l.b16 %v2573
      %v2606 = vunpack.c.l.b16 %v2574
      %v2607 = vunpack.c.l.b16 %v2575
      %v2608 = vunpack.c.l.b16 %v2576
      %v2609 = vunpack.c.l.b16 %v2577
      %v2610 = vunpack.c.l.b16 %v2578
      %v2611 = vunpack.c.l.b16 %v2579
      %v2612 = vunpack.c.l.b16 %v2580
      %v2613 = vunpack.c.l.b16 %v2581
      %v2614 = vunpack.c.l.b16 %v2582
      %v2615 = vunpack.c.l.b16 %v2583
      %v2616 = vunpack.c.l.b16 %v2584
      %v2617 = vpack.c.b16 %v2601, %v2601
      %v2618 = vpack.c.b16 %v2602, %v2602
      %v2619 = vpack.c.b16 %v2603, %v2603
      %v2620 = vpack.c.b16 %v2604, %v2604
      %v2621 = vpack.c.b16 %v2605, %v2605
      %v2622 = vpack.c.b16 %v2606, %v2606
      %v2623 = vpack.c.b16 %v2607, %v2607
      %v2624 = vpack.c.b16 %v2608, %v2608
      %v2625 = vpack.c.b16 %v2609, %v2609
      %v2626 = vpack.c.b16 %v2610, %v2610
      %v2627 = vpack.c.b16 %v2611, %v2611
      %v2628 = vpack.c.b16 %v2612, %v2612
      %v2629 = vpack.c.b16 %v2613, %v2613
      %v2630 = vpack.c.b16 %v2614, %v2614
      %v2631 = vpack.c.b16 %v2615, %v2615
      %v2632 = vpack.c.b16 %v2616, %v2616
      %v2633 = vunpack.c.l.b16 %v2617
      %v2634 = vunpack.c.l.b16 %v2618
      %v2635 = vunpack.c.l.b16 %v2619
      %v2636 = vunpack.c.l.b16 %v2620
      %v2637 = vunpack.c.l.b16 %v2621
      %v2638 = vunpack.c.l.b16 %v2622
      %v2639 = vunpack.c.l.b16 %v2623
      %v2640 = vunpack.c.l.b16 %v2624
      %v2641 = vunpack.c.l.b16 %v2625
      %v2642 = vunpack.c.l.b16 %v2626
      %v2643 = vunpack.c.l.b16 %v2627
      %v2644 = vunpack.c.l.b16 %v2628
      %v2645 = vunpack.c.l.b16 %v2629
      %v2646 = vunpack.c.l.b16 %v2630
      %v2647 = vunpack.c.l.b16 %v2631
      %v2648 = vunpack.c.l.b16 %v2632
      %v2649 = vrot.slane %v2633, 2
      %v2650 = vrot.slane %v2634, 1
      %v2651 = vsel %vm285, %v2650, %v2649
      %v2652 = vsel %vm288, %v2635, %v2651
      %v2653 = vrot.slane %v2636, 7
      %v2654 = vsel %vm291, %v2653, %v2652
      %v2655 = vrot.slane %v2637, 6
      %v2656 = vsel %vm294, %v2655, %v2654
      %v2657 = vrot.slane %v2638, 5
      %v2658 = vsel %vm297, %v2657, %v2656
      %v2659 = vrot.slane %v2639, 4
      %v2660 = vsel %vm300, %v2659, %v2658
      %v2661 = vrot.slane %v2640, 3
      %v2662 = vsel %vm303, %v2661, %v2660
      %v2663 = vrot.slane %v2641, 2
      %v2664 = vrot.slane %v2642, 1
      %v2665 = vsel %vm285, %v2664, %v2663
      %v2666 = vsel %vm288, %v2643, %v2665
      %v2667 = vrot.slane %v2644, 7
      %v2668 = vsel %vm291, %v2667, %v2666
      %v2669 = vrot.slane %v2645, 6
      %v2670 = vsel %vm294, %v2669, %v2668
      %v2671 = vrot.slane %v2646, 5
      %v2672 = vsel %vm297, %v2671, %v2670
      %v2673 = vrot.slane %v2647, 4
      %v2674 = vsel %vm300, %v2673, %v2672
      %v2675 = vrot.slane %v2648, 3
      %v2676 = vsel %vm303, %v2675, %v2674
      %v2677 = vpack.c.b16 %v2676, %v2662
      %2678 = vrot.lane.b32.xlu0 %v2677, 124
      %v2679 = vpop.permute.xlu0 %2678
      %2681 = vst.msk [vmem:[#allocation2 + $0xa8] sm:$0xff] %vm321, %v2679
      %v2682 = vld [vmem:[%s195] sm:$0x2]
      %v2683 = vld [vmem:[%s195 + $0x4] sm:$0x2]
      %v2684 = vld [vmem:[%s195 + $0x8] sm:$0x2]
      %v2685 = vld [vmem:[%s195 + $0xc] sm:$0x2]
      %v2686 = vld [vmem:[%s195 + $0x10] sm:$0x2]
      %v2687 = vld [vmem:[%s195 + $0x14] sm:$0x2]
      %v2688 = vld [vmem:[%s195 + $0x18] sm:$0x2]
      %v2689 = vld [vmem:[%s195 + $0x1c] sm:$0x2]
      %v2690 = vld [vmem:[%s195 + $0x20] sm:$0x2]
      %v2691 = vld [vmem:[%s195 + $0x24] sm:$0x2]
      %v2692 = vld [vmem:[%s195 + $0x28] sm:$0x2]
      %v2693 = vld [vmem:[%s195 + $0x2c] sm:$0x2]
      %v2694 = vld [vmem:[%s195 + $0x30] sm:$0x2]
      %v2695 = vld [vmem:[%s195 + $0x34] sm:$0x2]
      %v2696 = vld [vmem:[%s195 + $0x38] sm:$0x2]
      %v2697 = vld [vmem:[%s195 + $0x3c] sm:$0x2]
      %v2714 = vunpack.c.l.b16 %v2682
      %v2715 = vunpack.c.l.b16 %v2683
      %v2716 = vunpack.c.l.b16 %v2684
      %v2717 = vunpack.c.l.b16 %v2685
      %v2718 = vunpack.c.l.b16 %v2686
      %v2719 = vunpack.c.l.b16 %v2687
      %v2720 = vunpack.c.l.b16 %v2688
      %v2721 = vunpack.c.l.b16 %v2689
      %v2722 = vunpack.c.l.b16 %v2690
      %v2723 = vunpack.c.l.b16 %v2691
      %v2724 = vunpack.c.l.b16 %v2692
      %v2725 = vunpack.c.l.b16 %v2693
      %v2726 = vunpack.c.l.b16 %v2694
      %v2727 = vunpack.c.l.b16 %v2695
      %v2728 = vunpack.c.l.b16 %v2696
      %v2729 = vunpack.c.l.b16 %v2697
      %v2730 = vpack.c.b16 %v2714, %v2714
      %v2731 = vpack.c.b16 %v2715, %v2715
      %v2732 = vpack.c.b16 %v2716, %v2716
      %v2733 = vpack.c.b16 %v2717, %v2717
      %v2734 = vpack.c.b16 %v2718, %v2718
      %v2735 = vpack.c.b16 %v2719, %v2719
      %v2736 = vpack.c.b16 %v2720, %v2720
      %v2737 = vpack.c.b16 %v2721, %v2721
      %v2738 = vpack.c.b16 %v2722, %v2722
      %v2739 = vpack.c.b16 %v2723, %v2723
      %v2740 = vpack.c.b16 %v2724, %v2724
      %v2741 = vpack.c.b16 %v2725, %v2725
      %v2742 = vpack.c.b16 %v2726, %v2726
      %v2743 = vpack.c.b16 %v2727, %v2727
      %v2744 = vpack.c.b16 %v2728, %v2728
      %v2745 = vpack.c.b16 %v2729, %v2729
      %v2746 = vunpack.c.l.b16 %v2730
      %v2747 = vunpack.c.l.b16 %v2731
      %v2748 = vunpack.c.l.b16 %v2732
      %v2749 = vunpack.c.l.b16 %v2733
      %v2750 = vunpack.c.l.b16 %v2734
      %v2751 = vunpack.c.l.b16 %v2735
      %v2752 = vunpack.c.l.b16 %v2736
      %v2753 = vunpack.c.l.b16 %v2737
      %v2754 = vunpack.c.l.b16 %v2738
      %v2755 = vunpack.c.l.b16 %v2739
      %v2756 = vunpack.c.l.b16 %v2740
      %v2757 = vunpack.c.l.b16 %v2741
      %v2758 = vunpack.c.l.b16 %v2742
      %v2759 = vunpack.c.l.b16 %v2743
      %v2760 = vunpack.c.l.b16 %v2744
      %v2761 = vunpack.c.l.b16 %v2745
      %v2762 = vrot.slane %v2746, 3
      %v2763 = vrot.slane %v2747, 2
      %v2764 = vsel %vm285, %v2763, %v2762
      %v2765 = vrot.slane %v2748, 1
      %v2766 = vsel %vm288, %v2765, %v2764
      %v2767 = vsel %vm291, %v2749, %v2766
      %v2768 = vrot.slane %v2750, 7
      %v2769 = vsel %vm294, %v2768, %v2767
      %v2770 = vrot.slane %v2751, 6
      %v2771 = vsel %vm297, %v2770, %v2769
      %v2772 = vrot.slane %v2752, 5
      %v2773 = vsel %vm300, %v2772, %v2771
      %v2774 = vrot.slane %v2753, 4
      %v2775 = vsel %vm303, %v2774, %v2773
      %v2776 = vrot.slane %v2754, 3
      %v2777 = vrot.slane %v2755, 2
      %v2778 = vsel %vm285, %v2777, %v2776
      %v2779 = vrot.slane %v2756, 1
      %v2780 = vsel %vm288, %v2779, %v2778
      %v2781 = vsel %vm291, %v2757, %v2780
      %v2782 = vrot.slane %v2758, 7
      %v2783 = vsel %vm294, %v2782, %v2781
      %v2784 = vrot.slane %v2759, 6
      %v2785 = vsel %vm297, %v2784, %v2783
      %v2786 = vrot.slane %v2760, 5
      %v2787 = vsel %vm300, %v2786, %v2785
      %v2788 = vrot.slane %v2761, 4
      %v2789 = vsel %vm303, %v2788, %v2787
      %v2790 = vpack.c.b16 %v2789, %v2775
      %2791 = vrot.lane.b32.xlu0 %v2790, 124
      %v2792 = vpop.permute.xlu0 %2791
      %2794 = vst.msk [vmem:[#allocation2 + $0xb0] sm:$0xff] %vm321, %v2792
      %v2795 = vld [vmem:[%s195] sm:$0x2]
      %v2796 = vld [vmem:[%s195 + $0x4] sm:$0x2]
      %v2797 = vld [vmem:[%s195 + $0x8] sm:$0x2]
      %v2798 = vld [vmem:[%s195 + $0xc] sm:$0x2]
      %v2799 = vld [vmem:[%s195 + $0x10] sm:$0x2]
      %v2800 = vld [vmem:[%s195 + $0x14] sm:$0x2]
      %v2801 = vld [vmem:[%s195 + $0x18] sm:$0x2]
      %v2802 = vld [vmem:[%s195 + $0x1c] sm:$0x2]
      %v2803 = vld [vmem:[%s195 + $0x20] sm:$0x2]
      %v2804 = vld [vmem:[%s195 + $0x24] sm:$0x2]
      %v2805 = vld [vmem:[%s195 + $0x28] sm:$0x2]
      %v2806 = vld [vmem:[%s195 + $0x2c] sm:$0x2]
      %v2807 = vld [vmem:[%s195 + $0x30] sm:$0x2]
      %v2808 = vld [vmem:[%s195 + $0x34] sm:$0x2]
      %v2809 = vld [vmem:[%s195 + $0x38] sm:$0x2]
      %v2810 = vld [vmem:[%s195 + $0x3c] sm:$0x2]
      %v2827 = vunpack.c.l.b16 %v2795
      %v2828 = vunpack.c.l.b16 %v2796
      %v2829 = vunpack.c.l.b16 %v2797
      %v2830 = vunpack.c.l.b16 %v2798
      %v2831 = vunpack.c.l.b16 %v2799
      %v2832 = vunpack.c.l.b16 %v2800
      %v2833 = vunpack.c.l.b16 %v2801
      %v2834 = vunpack.c.l.b16 %v2802
      %v2835 = vunpack.c.l.b16 %v2803
      %v2836 = vunpack.c.l.b16 %v2804
      %v2837 = vunpack.c.l.b16 %v2805
      %v2838 = vunpack.c.l.b16 %v2806
      %v2839 = vunpack.c.l.b16 %v2807
      %v2840 = vunpack.c.l.b16 %v2808
      %v2841 = vunpack.c.l.b16 %v2809
      %v2842 = vunpack.c.l.b16 %v2810
      %v2843 = vpack.c.b16 %v2827, %v2827
      %v2844 = vpack.c.b16 %v2828, %v2828
      %v2845 = vpack.c.b16 %v2829, %v2829
      %v2846 = vpack.c.b16 %v2830, %v2830
      %v2847 = vpack.c.b16 %v2831, %v2831
      %v2848 = vpack.c.b16 %v2832, %v2832
      %v2849 = vpack.c.b16 %v2833, %v2833
      %v2850 = vpack.c.b16 %v2834, %v2834
      %v2851 = vpack.c.b16 %v2835, %v2835
      %v2852 = vpack.c.b16 %v2836, %v2836
      %v2853 = vpack.c.b16 %v2837, %v2837
      %v2854 = vpack.c.b16 %v2838, %v2838
      %v2855 = vpack.c.b16 %v2839, %v2839
      %v2856 = vpack.c.b16 %v2840, %v2840
      %v2857 = vpack.c.b16 %v2841, %v2841
      %v2858 = vpack.c.b16 %v2842, %v2842
      %v2859 = vunpack.c.l.b16 %v2843
      %v2860 = vunpack.c.l.b16 %v2844
      %v2861 = vunpack.c.l.b16 %v2845
      %v2862 = vunpack.c.l.b16 %v2846
      %v2863 = vunpack.c.l.b16 %v2847
      %v2864 = vunpack.c.l.b16 %v2848
      %v2865 = vunpack.c.l.b16 %v2849
      %v2866 = vunpack.c.l.b16 %v2850
      %v2867 = vunpack.c.l.b16 %v2851
      %v2868 = vunpack.c.l.b16 %v2852
      %v2869 = vunpack.c.l.b16 %v2853
      %v2870 = vunpack.c.l.b16 %v2854
      %v2871 = vunpack.c.l.b16 %v2855
      %v2872 = vunpack.c.l.b16 %v2856
      %v2873 = vunpack.c.l.b16 %v2857
      %v2874 = vunpack.c.l.b16 %v2858
      %v2875 = vrot.slane %v2859, 2
      %v2876 = vrot.slane %v2860, 1
      %v2877 = vsel %vm285, %v2876, %v2875
      %v2878 = vsel %vm288, %v2861, %v2877
      %v2879 = vrot.slane %v2862, 7
      %v2880 = vsel %vm291, %v2879, %v2878
      %v2881 = vrot.slane %v2863, 6
      %v2882 = vsel %vm294, %v2881, %v2880
      %v2883 = vrot.slane %v2864, 5
      %v2884 = vsel %vm297, %v2883, %v2882
      %v2885 = vrot.slane %v2865, 4
      %v2886 = vsel %vm300, %v2885, %v2884
      %v2887 = vrot.slane %v2866, 3
      %v2888 = vsel %vm303, %v2887, %v2886
      %v2889 = vrot.slane %v2867, 2
      %v2890 = vrot.slane %v2868, 1
      %v2891 = vsel %vm285, %v2890, %v2889
      %v2892 = vsel %vm288, %v2869, %v2891
      %v2893 = vrot.slane %v2870, 7
      %v2894 = vsel %vm291, %v2893, %v2892
      %v2895 = vrot.slane %v2871, 6
      %v2896 = vsel %vm294, %v2895, %v2894
      %v2897 = vrot.slane %v2872, 5
      %v2898 = vsel %vm297, %v2897, %v2896
      %v2899 = vrot.slane %v2873, 4
      %v2900 = vsel %vm300, %v2899, %v2898
      %v2901 = vrot.slane %v2874, 3
      %v2902 = vsel %vm303, %v2901, %v2900
      %v2903 = vpack.c.b16 %v2902, %v2888
      %2904 = vrot.lane.b32.xlu0 %v2903, 123
      %v2905 = vpop.permute.xlu0 %2904
      %2907 = vst.msk [vmem:[#allocation2 + $0xb8] sm:$0xff] %vm321, %v2905
      %v2908 = vld [vmem:[%s195] sm:$0x1]
      %v2909 = vld [vmem:[%s195 + $0x4] sm:$0x1]
      %v2910 = vld [vmem:[%s195 + $0x8] sm:$0x1]
      %v2911 = vld [vmem:[%s195 + $0xc] sm:$0x1]
      %v2912 = vld [vmem:[%s195 + $0x10] sm:$0x1]
      %v2913 = vld [vmem:[%s195 + $0x14] sm:$0x1]
      %v2914 = vld [vmem:[%s195 + $0x18] sm:$0x1]
      %v2915 = vld [vmem:[%s195 + $0x1c] sm:$0x1]
      %v2916 = vld [vmem:[%s195 + $0x20] sm:$0x1]
      %v2917 = vld [vmem:[%s195 + $0x24] sm:$0x1]
      %v2918 = vld [vmem:[%s195 + $0x28] sm:$0x1]
      %v2919 = vld [vmem:[%s195 + $0x2c] sm:$0x1]
      %v2920 = vld [vmem:[%s195 + $0x30] sm:$0x1]
      %v2921 = vld [vmem:[%s195 + $0x34] sm:$0x1]
      %v2922 = vld [vmem:[%s195 + $0x38] sm:$0x1]
      %v2923 = vld [vmem:[%s195 + $0x3c] sm:$0x1]
      %v2940 = vunpack.c.l.b16 %v2908
      %v2941 = vunpack.c.l.b16 %v2909
      %v2942 = vunpack.c.l.b16 %v2910
      %v2943 = vunpack.c.l.b16 %v2911
      %v2944 = vunpack.c.l.b16 %v2912
      %v2945 = vunpack.c.l.b16 %v2913
      %v2946 = vunpack.c.l.b16 %v2914
      %v2947 = vunpack.c.l.b16 %v2915
      %v2948 = vunpack.c.l.b16 %v2916
      %v2949 = vunpack.c.l.b16 %v2917
      %v2950 = vunpack.c.l.b16 %v2918
      %v2951 = vunpack.c.l.b16 %v2919
      %v2952 = vunpack.c.l.b16 %v2920
      %v2953 = vunpack.c.l.b16 %v2921
      %v2954 = vunpack.c.l.b16 %v2922
      %v2955 = vunpack.c.l.b16 %v2923
      %v2956 = vpack.c.b16 %v2940, %v2940
      %v2957 = vpack.c.b16 %v2941, %v2941
      %v2958 = vpack.c.b16 %v2942, %v2942
      %v2959 = vpack.c.b16 %v2943, %v2943
      %v2960 = vpack.c.b16 %v2944, %v2944
      %v2961 = vpack.c.b16 %v2945, %v2945
      %v2962 = vpack.c.b16 %v2946, %v2946
      %v2963 = vpack.c.b16 %v2947, %v2947
      %v2964 = vpack.c.b16 %v2948, %v2948
      %v2965 = vpack.c.b16 %v2949, %v2949
      %v2966 = vpack.c.b16 %v2950, %v2950
      %v2967 = vpack.c.b16 %v2951, %v2951
      %v2968 = vpack.c.b16 %v2952, %v2952
      %v2969 = vpack.c.b16 %v2953, %v2953
      %v2970 = vpack.c.b16 %v2954, %v2954
      %v2971 = vpack.c.b16 %v2955, %v2955
      %v2972 = vunpack.c.l.b16 %v2956
      %v2973 = vunpack.c.l.b16 %v2957
      %v2974 = vunpack.c.l.b16 %v2958
      %v2975 = vunpack.c.l.b16 %v2959
      %v2976 = vunpack.c.l.b16 %v2960
      %v2977 = vunpack.c.l.b16 %v2961
      %v2978 = vunpack.c.l.b16 %v2962
      %v2979 = vunpack.c.l.b16 %v2963
      %v2980 = vunpack.c.l.b16 %v2964
      %v2981 = vunpack.c.l.b16 %v2965
      %v2982 = vunpack.c.l.b16 %v2966
      %v2983 = vunpack.c.l.b16 %v2967
      %v2984 = vunpack.c.l.b16 %v2968
      %v2985 = vunpack.c.l.b16 %v2969
      %v2986 = vunpack.c.l.b16 %v2970
      %v2987 = vunpack.c.l.b16 %v2971
      %v2988 = vrot.slane %v2973, 7
      %v2989 = vsel %vm285, %v2988, %v2972
      %v2990 = vrot.slane %v2974, 6
      %v2991 = vsel %vm288, %v2990, %v2989
      %v2992 = vrot.slane %v2975, 5
      %v2993 = vsel %vm291, %v2992, %v2991
      %v2994 = vrot.slane %v2976, 4
      %v2995 = vsel %vm294, %v2994, %v2993
      %v2996 = vrot.slane %v2977, 3
      %v2997 = vsel %vm297, %v2996, %v2995
      %v2998 = vrot.slane %v2978, 2
      %v2999 = vsel %vm300, %v2998, %v2997
      %v3000 = vrot.slane %v2979, 1
      %v3001 = vsel %vm303, %v3000, %v2999
      %v3002 = vrot.slane %v2981, 7
      %v3003 = vsel %vm285, %v3002, %v2980
      %v3004 = vrot.slane %v2982, 6
      %v3005 = vsel %vm288, %v3004, %v3003
      %v3006 = vrot.slane %v2983, 5
      %v3007 = vsel %vm291, %v3006, %v3005
      %v3008 = vrot.slane %v2984, 4
      %v3009 = vsel %vm294, %v3008, %v3007
      %v3010 = vrot.slane %v2985, 3
      %v3011 = vsel %vm297, %v3010, %v3009
      %v3012 = vrot.slane %v2986, 2
      %v3013 = vsel %vm300, %v3012, %v3011
      %v3014 = vrot.slane %v2987, 1
      %v3015 = vsel %vm303, %v3014, %v3013
      %v3016 = vpack.c.b16 %v3015, %v3001
      %3017 = vrot.lane.b32.xlu0 %v3016, 122
      %v3018 = vpop.permute.xlu0 %3017
      %3020 = vst.msk [vmem:[#allocation2 + $0xc0] sm:$0xff] %vm321, %v3018
      %v3021 = vld [vmem:[%s195] sm:$0x1]
      %v3022 = vld [vmem:[%s195 + $0x4] sm:$0x1]
      %v3023 = vld [vmem:[%s195 + $0x8] sm:$0x1]
      %v3024 = vld [vmem:[%s195 + $0xc] sm:$0x1]
      %v3025 = vld [vmem:[%s195 + $0x10] sm:$0x1]
      %v3026 = vld [vmem:[%s195 + $0x14] sm:$0x1]
      %v3027 = vld [vmem:[%s195 + $0x18] sm:$0x1]
      %v3028 = vld [vmem:[%s195 + $0x1c] sm:$0x1]
      %v3029 = vld [vmem:[%s195 + $0x20] sm:$0x1]
      %v3030 = vld [vmem:[%s195 + $0x24] sm:$0x1]
      %v3031 = vld [vmem:[%s195 + $0x28] sm:$0x1]
      %v3032 = vld [vmem:[%s195 + $0x2c] sm:$0x1]
      %v3033 = vld [vmem:[%s195 + $0x30] sm:$0x1]
      %v3034 = vld [vmem:[%s195 + $0x34] sm:$0x1]
      %v3035 = vld [vmem:[%s195 + $0x38] sm:$0x1]
      %v3036 = vld [vmem:[%s195 + $0x3c] sm:$0x1]
      %v3053 = vunpack.c.l.b16 %v3021
      %v3054 = vunpack.c.l.b16 %v3022
      %v3055 = vunpack.c.l.b16 %v3023
      %v3056 = vunpack.c.l.b16 %v3024
      %v3057 = vunpack.c.l.b16 %v3025
      %v3058 = vunpack.c.l.b16 %v3026
      %v3059 = vunpack.c.l.b16 %v3027
      %v3060 = vunpack.c.l.b16 %v3028
      %v3061 = vunpack.c.l.b16 %v3029
      %v3062 = vunpack.c.l.b16 %v3030
      %v3063 = vunpack.c.l.b16 %v3031
      %v3064 = vunpack.c.l.b16 %v3032
      %v3065 = vunpack.c.l.b16 %v3033
      %v3066 = vunpack.c.l.b16 %v3034
      %v3067 = vunpack.c.l.b16 %v3035
      %v3068 = vunpack.c.l.b16 %v3036
      %v3069 = vpack.c.b16 %v3053, %v3053
      %v3070 = vpack.c.b16 %v3054, %v3054
      %v3071 = vpack.c.b16 %v3055, %v3055
      %v3072 = vpack.c.b16 %v3056, %v3056
      %v3073 = vpack.c.b16 %v3057, %v3057
      %v3074 = vpack.c.b16 %v3058, %v3058
      %v3075 = vpack.c.b16 %v3059, %v3059
      %v3076 = vpack.c.b16 %v3060, %v3060
      %v3077 = vpack.c.b16 %v3061, %v3061
      %v3078 = vpack.c.b16 %v3062, %v3062
      %v3079 = vpack.c.b16 %v3063, %v3063
      %v3080 = vpack.c.b16 %v3064, %v3064
      %v3081 = vpack.c.b16 %v3065, %v3065
      %v3082 = vpack.c.b16 %v3066, %v3066
      %v3083 = vpack.c.b16 %v3067, %v3067
      %v3084 = vpack.c.b16 %v3068, %v3068
      %v3085 = vunpack.c.l.b16 %v3069
      %v3086 = vunpack.c.l.b16 %v3070
      %v3087 = vunpack.c.l.b16 %v3071
      %v3088 = vunpack.c.l.b16 %v3072
      %v3089 = vunpack.c.l.b16 %v3073
      %v3090 = vunpack.c.l.b16 %v3074
      %v3091 = vunpack.c.l.b16 %v3075
      %v3092 = vunpack.c.l.b16 %v3076
      %v3093 = vunpack.c.l.b16 %v3077
      %v3094 = vunpack.c.l.b16 %v3078
      %v3095 = vunpack.c.l.b16 %v3079
      %v3096 = vunpack.c.l.b16 %v3080
      %v3097 = vunpack.c.l.b16 %v3081
      %v3098 = vunpack.c.l.b16 %v3082
      %v3099 = vunpack.c.l.b16 %v3083
      %v3100 = vunpack.c.l.b16 %v3084
      %v3101 = vrot.slane %v3085, 1
      %v3102 = vsel %vm285, %v3086, %v3101
      %v3103 = vrot.slane %v3087, 7
      %v3104 = vsel %vm288, %v3103, %v3102
      %v3105 = vrot.slane %v3088, 6
      %v3106 = vsel %vm291, %v3105, %v3104
      %v3107 = vrot.slane %v3089, 5
      %v3108 = vsel %vm294, %v3107, %v3106
      %v3109 = vrot.slane %v3090, 4
      %v3110 = vsel %vm297, %v3109, %v3108
      %v3111 = vrot.slane %v3091, 3
      %v3112 = vsel %vm300, %v3111, %v3110
      %v3113 = vrot.slane %v3092, 2
      %v3114 = vsel %vm303, %v3113, %v3112
      %v3115 = vrot.slane %v3093, 1
      %v3116 = vsel %vm285, %v3094, %v3115
      %v3117 = vrot.slane %v3095, 7
      %v3118 = vsel %vm288, %v3117, %v3116
      %v3119 = vrot.slane %v3096, 6
      %v3120 = vsel %vm291, %v3119, %v3118
      %v3121 = vrot.slane %v3097, 5
      %v3122 = vsel %vm294, %v3121, %v3120
      %v3123 = vrot.slane %v3098, 4
      %v3124 = vsel %vm297, %v3123, %v3122
      %v3125 = vrot.slane %v3099, 3
      %v3126 = vsel %vm300, %v3125, %v3124
      %v3127 = vrot.slane %v3100, 2
      %v3128 = vsel %vm303, %v3127, %v3126
      %v3129 = vpack.c.b16 %v3128, %v3114
      %3130 = vrot.lane.b32.xlu0 %v3129, 122
      %v3131 = vpop.permute.xlu0 %3130
      %3133 = vst.msk [vmem:[#allocation2 + $0xc8] sm:$0xff] %vm321, %v3131
      %v3134 = vld [vmem:[%s195] sm:$0x1]
      %v3135 = vld [vmem:[%s195 + $0x4] sm:$0x1]
      %v3136 = vld [vmem:[%s195 + $0x8] sm:$0x1]
      %v3137 = vld [vmem:[%s195 + $0xc] sm:$0x1]
      %v3138 = vld [vmem:[%s195 + $0x10] sm:$0x1]
      %v3139 = vld [vmem:[%s195 + $0x14] sm:$0x1]
      %v3140 = vld [vmem:[%s195 + $0x18] sm:$0x1]
      %v3141 = vld [vmem:[%s195 + $0x1c] sm:$0x1]
      %v3142 = vld [vmem:[%s195 + $0x20] sm:$0x1]
      %v3143 = vld [vmem:[%s195 + $0x24] sm:$0x1]
      %v3144 = vld [vmem:[%s195 + $0x28] sm:$0x1]
      %v3145 = vld [vmem:[%s195 + $0x2c] sm:$0x1]
      %v3146 = vld [vmem:[%s195 + $0x30] sm:$0x1]
      %v3147 = vld [vmem:[%s195 + $0x34] sm:$0x1]
      %v3148 = vld [vmem:[%s195 + $0x38] sm:$0x1]
      %v3149 = vld [vmem:[%s195 + $0x3c] sm:$0x1]
      %v3166 = vunpack.c.l.b16 %v3134
      %v3167 = vunpack.c.l.b16 %v3135
      %v3168 = vunpack.c.l.b16 %v3136
      %v3169 = vunpack.c.l.b16 %v3137
      %v3170 = vunpack.c.l.b16 %v3138
      %v3171 = vunpack.c.l.b16 %v3139
      %v3172 = vunpack.c.l.b16 %v3140
      %v3173 = vunpack.c.l.b16 %v3141
      %v3174 = vunpack.c.l.b16 %v3142
      %v3175 = vunpack.c.l.b16 %v3143
      %v3176 = vunpack.c.l.b16 %v3144
      %v3177 = vunpack.c.l.b16 %v3145
      %v3178 = vunpack.c.l.b16 %v3146
      %v3179 = vunpack.c.l.b16 %v3147
      %v3180 = vunpack.c.l.b16 %v3148
      %v3181 = vunpack.c.l.b16 %v3149
      %v3182 = vpack.c.b16 %v3166, %v3166
      %v3183 = vpack.c.b16 %v3167, %v3167
      %v3184 = vpack.c.b16 %v3168, %v3168
      %v3185 = vpack.c.b16 %v3169, %v3169
      %v3186 = vpack.c.b16 %v3170, %v3170
      %v3187 = vpack.c.b16 %v3171, %v3171
      %v3188 = vpack.c.b16 %v3172, %v3172
      %v3189 = vpack.c.b16 %v3173, %v3173
      %v3190 = vpack.c.b16 %v3174, %v3174
      %v3191 = vpack.c.b16 %v3175, %v3175
      %v3192 = vpack.c.b16 %v3176, %v3176
      %v3193 = vpack.c.b16 %v3177, %v3177
      %v3194 = vpack.c.b16 %v3178, %v3178
      %v3195 = vpack.c.b16 %v3179, %v3179
      %v3196 = vpack.c.b16 %v3180, %v3180
      %v3197 = vpack.c.b16 %v3181, %v3181
      %v3198 = vunpack.c.l.b16 %v3182
      %v3199 = vunpack.c.l.b16 %v3183
      %v3200 = vunpack.c.l.b16 %v3184
      %v3201 = vunpack.c.l.b16 %v3185
      %v3202 = vunpack.c.l.b16 %v3186
      %v3203 = vunpack.c.l.b16 %v3187
      %v3204 = vunpack.c.l.b16 %v3188
      %v3205 = vunpack.c.l.b16 %v3189
      %v3206 = vunpack.c.l.b16 %v3190
      %v3207 = vunpack.c.l.b16 %v3191
      %v3208 = vunpack.c.l.b16 %v3192
      %v3209 = vunpack.c.l.b16 %v3193
      %v3210 = vunpack.c.l.b16 %v3194
      %v3211 = vunpack.c.l.b16 %v3195
      %v3212 = vunpack.c.l.b16 %v3196
      %v3213 = vunpack.c.l.b16 %v3197
      %v3214 = vrot.slane %v3199, 7
      %v3215 = vsel %vm285, %v3214, %v3198
      %v3216 = vrot.slane %v3200, 6
      %v3217 = vsel %vm288, %v3216, %v3215
      %v3218 = vrot.slane %v3201, 5
      %v3219 = vsel %vm291, %v3218, %v3217
      %v3220 = vrot.slane %v3202, 4
      %v3221 = vsel %vm294, %v3220, %v3219
      %v3222 = vrot.slane %v3203, 3
      %v3223 = vsel %vm297, %v3222, %v3221
      %v3224 = vrot.slane %v3204, 2
      %v3225 = vsel %vm300, %v3224, %v3223
      %v3226 = vrot.slane %v3205, 1
      %v3227 = vsel %vm303, %v3226, %v3225
      %v3228 = vrot.slane %v3207, 7
      %v3229 = vsel %vm285, %v3228, %v3206
      %v3230 = vrot.slane %v3208, 6
      %v3231 = vsel %vm288, %v3230, %v3229
      %v3232 = vrot.slane %v3209, 5
      %v3233 = vsel %vm291, %v3232, %v3231
      %v3234 = vrot.slane %v3210, 4
      %v3235 = vsel %vm294, %v3234, %v3233
      %v3236 = vrot.slane %v3211, 3
      %v3237 = vsel %vm297, %v3236, %v3235
      %v3238 = vrot.slane %v3212, 2
      %v3239 = vsel %vm300, %v3238, %v3237
      %v3240 = vrot.slane %v3213, 1
      %v3241 = vsel %vm303, %v3240, %v3239
      %v3242 = vpack.c.b16 %v3241, %v3227
      %3243 = vrot.lane.b32.xlu0 %v3242, 121
      %v3244 = vpop.permute.xlu0 %3243
      %3246 = vst.msk [vmem:[#allocation2 + $0xd0] sm:$0xff] %vm321, %v3244
      %v3247 = vld [vmem:[%s1] sm:$0xff]
      %v3248 = vld [vmem:[%s1 + $0x8] sm:$0xff]
      %v3249 = vld [vmem:[#allocation2] sm:$0xff]
      %v3250 = vld [vmem:[#allocation2 + $0x8] sm:$0xff]
      %v3251 = vld [vmem:[#allocation2 + $0x10] sm:$0xff]
      %v3252 = vld [vmem:[#allocation2 + $0x18] sm:$0xff]
      %v3253 = vld [vmem:[#allocation2 + $0x20] sm:$0xff]
      %v3254 = vld [vmem:[#allocation2 + $0x28] sm:$0xff]
      %v3255 = vld [vmem:[#allocation2 + $0x30] sm:$0xff]
      %v3256 = vld [vmem:[#allocation2 + $0x38] sm:$0xff]
      %v3257 = vld [vmem:[#allocation2 + $0x40] sm:$0xff]
      %v3258 = vld [vmem:[#allocation2 + $0x48] sm:$0xff]
      %v3259 = vld [vmem:[#allocation2 + $0x50] sm:$0xff]
      %v3260 = vld [vmem:[#allocation2 + $0x58] sm:$0xff]
      %v3261 = vld [vmem:[#allocation2 + $0x60] sm:$0xff]
      %v3262 = vld [vmem:[#allocation2 + $0x68] sm:$0xff]
      %v3263 = vld [vmem:[#allocation2 + $0x70] sm:$0xff]
      %v3264 = vld [vmem:[#allocation2 + $0x78] sm:$0xff]
      %v3265 = vld [vmem:[#allocation2 + $0x80] sm:$0xff]
      %v3266 = vld [vmem:[#allocation2 + $0x88] sm:$0xff]
      %v3267 = vld [vmem:[#allocation2 + $0x90] sm:$0xff]
      %v3268 = vld [vmem:[#allocation2 + $0x98] sm:$0xff]
      %v3269 = vld [vmem:[#allocation2 + $0xa0] sm:$0xff]
      %v3270 = vld [vmem:[#allocation2 + $0xa8] sm:$0xff]
      %v3271 = vld [vmem:[#allocation2 + $0xb0] sm:$0xff]
      %v3272 = vld [vmem:[#allocation2 + $0xb8] sm:$0xff]
      %v3273 = vld [vmem:[#allocation2 + $0xc0] sm:$0xff]
      %v3274 = vld [vmem:[#allocation2 + $0xc8] sm:$0xff]
      %v3275 = vld [vmem:[#allocation2 + $0xd0] sm:$0xff]
      %v3276 = vld [vmem:[%s2] sm:$0xff]
      %v3279 = vunpack.c.l.b16 %v3247
      %v3280 = vunpack.c.h.b16 %v3247
      %v3281 = vunpack.c.l.b16 %v3248
      %v3282 = vunpack.c.h.b16 %v3248
      %v3283 = vpack.c.b16 %v3279, %v3279
      %v3284 = vpack.c.b16 %v3280, %v3280
      %v3285 = vpack.c.b16 %v3281, %v3281
      %v3286 = vpack.c.b16 %v3282, %v3282
      %vm3290 = vcmask 392192
      %v3292 = vsel %vm3290, %v3286, 0
      %3294 = vmatprep.subr.bf16.mxu0 0
      %3295 = vmatpush1.bf16.msra.mxu0 %v3249
      %3296 = vmatprep.subr.bf16.mxu0 0
      %3297 = vmatpush1.bf16.msra.mxu0 %v3250
      %3298 = vmatprep.subr.bf16.mxu0 0
      %3299 = vmatpush1.bf16.msra.mxu0 %v3251
      %3300 = vmatprep.subr.bf16.mxu0 0
      %3301 = vmatpush1.bf16.msra.mxu0 %v3252
      %3302 = vmatprep.subr.bf16.mxu0 0
      %3303 = vmatpush1.bf16.msra.mxu0 %v3253
      %3304 = vmatprep.subr.bf16.mxu0 0
      %3305 = vmatpush1.bf16.msra.mxu0 %v3254
      %3306 = vmatprep.subr.bf16.mxu0 0
      %3307 = vmatpush1.bf16.msra.mxu0 %v3255
      %3308 = vmatprep.subr.bf16.mxu0 0
      %3309 = vmatpush1.bf16.msra.mxu0 %v3256
      %3310 = vmatprep.subr.bf16.mxu0 0
      %3311 = vmatpush1.bf16.msra.mxu0 %v3257
      %3312 = vmatprep.subr.bf16.mxu0 0
      %3313 = vmatpush1.bf16.msra.mxu0 %v3258
      %3314 = vmatprep.subr.bf16.mxu0 0
      %3315 = vmatpush1.bf16.msra.mxu0 %v3259
      %3316 = vmatprep.subr.bf16.mxu0 0
      %3317 = vmatpush1.bf16.msra.mxu0 %v3260
      %3318 = vmatprep.subr.bf16.mxu0 0
      %3319 = vmatpush1.bf16.msra.mxu0 %v3261
      %3320 = vmatprep.subr.bf16.mxu0 0
      %3321 = vmatpush1.bf16.msra.mxu0 %v3262
      %3322 = vmatprep.subr.bf16.mxu0 0
      %3323 = vmatpush1.bf16.msra.mxu0 %v3263
      %3324 = vmatprep.subr.bf16.mxu0 0
      %3325 = vmatpush1.bf16.msra.mxu0 %v3264
      %3326 = vmatprep.mubr.bf16.mxu0 %v3284
      %3327 = vmatmul.mubr.bf16.gmra.mrb[0].mxu0 %v3283
      %v3328 = vpop.f32.mrb[0].mxu0
      %v3329 = vadd.f32 %v3276, %v3328
      %v3330 = vpop.f32.mrb[0].mxu0
      %v3331 = vpop.f32.mrb[0].mxu0
      %v3332 = vpop.f32.mrb[0].mxu0
      %3333 = vdwg.mxu0
      %3334 = vmatprep.subr.bf16.mxu0 0
      %3335 = vmatpush1.bf16.msra.mxu0 %v3265
      %3336 = vmatprep.subr.bf16.mxu0 0
      %3337 = vmatpush1.bf16.msra.mxu0 %v3266
      %3338 = vmatprep.subr.bf16.mxu0 0
      %3339 = vmatpush1.bf16.msra.mxu0 %v3267
      %3340 = vmatprep.subr.bf16.mxu0 0
      %3341 = vmatpush1.bf16.msra.mxu0 %v3268
      %3342 = vmatprep.subr.bf16.mxu0 0
      %3343 = vmatpush1.bf16.msra.mxu0 %v3269
      %3344 = vmatprep.subr.bf16.mxu0 0
      %3345 = vmatpush1.bf16.msra.mxu0 %v3270
      %3346 = vmatprep.subr.bf16.mxu0 0
      %3347 = vmatpush1.bf16.msra.mxu0 %v3271
      %3348 = vmatprep.subr.bf16.mxu0 0
      %3349 = vmatpush1.bf16.msra.mxu0 %v3272
      %3350 = vmatprep.subr.bf16.mxu0 0
      %3351 = vmatpush1.bf16.msra.mxu0 %v3273
      %3352 = vmatprep.subr.bf16.mxu0 0
      %3353 = vmatpush1.bf16.msra.mxu0 %v3274
      %3354 = vmatprep.subr.bf16.mxu0 0
      %3355 = vmatpush1.bf16.msra.mxu0 %v3275
      %3356 = vmatprep.subr.bf16.mxu0 0
      %3357 = vmatpush1.bf16.msra.mxu0 0
      %3358 = vmatprep.subr.bf16.mxu0 0
      %3359 = vmatpush1.bf16.msra.mxu0 0
      %3360 = vmatprep.subr.bf16.mxu0 0
      %3361 = vmatpush1.bf16.msra.mxu0 0
      %3362 = vmatprep.subr.bf16.mxu0 0
      %3363 = vmatpush1.bf16.msra.mxu0 0
      %3364 = vmatprep.subr.bf16.mxu0 0
      %3365 = vmatpush1.bf16.msra.mxu0 0
      %3366 = vmatprep.mubr.bf16.mxu0 %v3292
      %3367 = vmatmul.mubr.bf16.gmra.mrb[0].mxu0 %v3285
      %v3368 = vpop.f32.mrb[0].mxu0
      %v3369 = vadd.f32 %v3329, %v3368
      %v3370 = vpop.f32.mrb[0].mxu0
      %v3371 = vpop.f32.mrb[0].mxu0
      %v3372 = vpop.f32.mrb[0].mxu0
      %3373 = vdwg.mxu0
      %v3374 = vmax.f32 %v3369, 0.0
      %v3375 = vpack.c.bf16 %v3374, %v3374
      %vm3376 = vcmask 3072
      %3377 = vst.msk [vmem:[%s202] sm:$0xf] %vm3376, %v3375
      %p3378 = scmp.lt.s32.totalorder %s18, 1
      %s3379 = scalar_select %p3378, %s18, 1
      %p3380 = scmp.lt.s32.totalorder %s19, 0
      %s3381 = scalar_select %p3380, %s19, 0
      %s3382 = sadd.s32 %s3381, %s3379
      %s3383 = smul.addr %s3382, 4
      %s3384 = scalar_lea.vmem %s3, %s3383
      // Predicated region
      $region33: #{simple_conv_forward.7} parent=31 // pred_check
        %p3385 = pneg %p116
      $region34: #{simple_conv_forward.7} parent=31 // pred_check_branch
        %3387 = sbr.rel (%p3385) target = $region36
      $region35: #{simple_conv_forward.7} parent=31 // pred_region
        _
      $region36: #{simple_conv_forward.7} parent=31 // pred_fallthru
        _
    $region32: #{simple_conv_forward.7} parent=5 // pred_fallthru
      _
    %p3388 = scmp.le.s32.totalorder 2, %s9
    // Predicated region
    $region37: #{simple_conv_forward.7} parent=5 // pred_check
      %p3389 = pneg %p3388
    $region38: #{simple_conv_forward.7} parent=5 // pred_check_branch
      %3391 = sbr.rel (%p3389) target = $region40
    $region39: #{simple_conv_forward.7} parent=5 // pred_region
      %s3392 = ssub.s32 %s9, 2
      // Predicated region
      $region41: #{simple_conv_forward.7} parent=39 // pred_check
        %p3393 = pneg %p122
      $region42: #{simple_conv_forward.7} parent=39 // pred_check_branch
        %3395 = sbr.rel (%p3393) target = $region44
      $region43: #{simple_conv_forward.7} parent=39 // pred_region
        %p3396 = scmp.lt.s32.totalorder %s20, 1
        %s3397 = scalar_select %p3396, %s20, 1
        %p3398 = scmp.lt.s32.totalorder %s21, 0
        %s3399 = scalar_select %p3398, %s21, 0
        %s3400 = sadd.s32 %s3399, %s3397
        %s3401 = smul.addr %s3400, 4
        %s3402 = scalar_lea.vmem %s3, %s3401
      $region44: #{simple_conv_forward.7} parent=39 // pred_fallthru
        _
    $region40: #{simple_conv_forward.7} parent=5 // pred_fallthru
      _
  $region6: #{simple_conv_forward.7} parent=0 // loop_footer
    %s13 = sadd.s32 1, %s9
  $region7: #{simple_conv_forward.7} parent=0 // loop_footer_branch
    %8 = sbr.rel target = $region3
  $region8: #{simple_conv_forward.7} parent=0 // loop_exit
    _

</llo_original>
